<compile_context>
chip_gen: v7x
topology: tpu7x:2x2x1
jax: 0.10.0
libtpu: 0.0.40
codegen_flags: <defaults>
</compile_context>

<pallas_src>
import numpy as np
import jax
import jax.numpy as jnp
from jax import lax
from jax.experimental import pallas as pl
from jax.experimental.pallas import tpu as pltpu

C_IN = 256              # backbone / ROI channels (fixed by the module)
C_MID = 16              # conv1 / conv2 output channels
HW_ROI = 49             # 7 * 7
FEAT = C_MID * HW_ROI   # 784 = fc1 / fc2 input size


def _tree_sum(vals):
    """Pairwise (tree) sum of a Python list of arrays: log-depth add chain."""
    vals = list(vals)
    while len(vals) > 1:
        nxt = [a + b for a, b in zip(vals[0::2], vals[1::2])]
        if len(vals) % 2:
            nxt.append(vals[-1])
        vals = nxt
    return vals[0]


# ---------------------------------------------------------------------------
# Fused kernel: ROI reduction (every grid step) + full head (last step only)
# ---------------------------------------------------------------------------
def _fused_kernel(x_ref, convw_ref, convb_ref, p256_ref, w3_ref, p64_ref,
                  w4_ref, b4_ref, y_hbm, m_hbm, w12f_hbm,
                  out_ref,
                  xsum_ref, xsq_ref, y_buf, m_buf, w12f_buf, dma_sem):
    i = pl.program_id(0)
    nsteps = pl.num_programs(0)

    def const_copies():
        # Same descriptors rebuilt at start and wait sites.
        return (pltpu.make_async_copy(y_hbm, y_buf, dma_sem.at[0]),
                pltpu.make_async_copy(m_hbm, m_buf, dma_sem.at[1]),
                pltpu.make_async_copy(w12f_hbm, w12f_buf, dma_sem.at[2]))

    # ---- phase 1: accumulate sum over ROIs and a squared partial (VPU only) ----
    @pl.when(i == 0)
    def _():
        xsum_ref[...] = jnp.zeros_like(xsum_ref)
        xsq_ref[...] = jnp.zeros_like(xsq_ref)

    xb = x_ref[...]                                   # (block_r, 49, 256) lane-dense
    xsum_ref[...] += jnp.sum(xb, axis=0)              # (49, 256)
    xsq_ref[...] += jnp.sum(xb * xb, axis=0)          # (49, 256) vector partial

    # Start the head-constant DMAs one step before the last (overlaps with the
    # final x-block DMA; if the grid has a single step it simply runs in-order).
    @pl.when(i == jnp.maximum(nsteps - 2, 0))
    def _():
        for cp in const_copies():
            cp.start()

    # ---- phase 2 (last grid step only): the whole head ----
    @pl.when(i == nsteps - 1)
    def _():
        for cp in const_copies():
            cp.wait()

        # Collapse the squared partial to a scalar exactly once (XLU), then rsqrt (EUP).
        xss = jnp.sum(jnp.sum(xsq_ref[...], axis=1, keepdims=True),
                      axis=0, keepdims=True)                        # (1, 1)
        inv_xn = lax.rsqrt(xss)

        yT = y_buf[...]                                             # (P, 256) lane-dense
        yss = jnp.sum(jnp.sum(yT * yT, axis=1, keepdims=True),
                      axis=0, keepdims=True)                        # (1, 1)
        inv_yn = lax.rsqrt(yss)

        # sum_roi(x / ||x||) == sum_roi(x) / ||x|| (global Frobenius norm), so the
        # 1/norm scaling is applied to the 16-channel conv outputs (matmul is linear).
        xsT = xsum_ref[...]                                         # (49, 256)

        w1c = convw_ref[0:C_MID, :]                                 # (16, 256)
        w2c = convw_ref[C_MID:2 * C_MID, :]                         # (16, 256)
        dn = (((1,), (1,)), ((), ()))                               # contract last-with-last
        cx = (lax.dot_general(w1c, xsT, dn, preferred_element_type=jnp.float32)
              * inv_xn + convb_ref[0:C_MID, :])                     # (16, 49)
        cy = (lax.dot_general(w2c, yT, dn, preferred_element_type=jnp.float32)
              * inv_yn + convb_ref[C_MID:2 * C_MID, :])             # (16, P)

        # Bilinear resize to 7x7 as a matmul with the precomputed interp matrix.
        y7 = jnp.dot(cy, m_buf[...], preferred_element_type=jnp.float32)   # (16, 49)

        # fc1 / fc2 over the channel-major flattened (16*49,) features as per-channel
        # (1,49)@(49,256) matmuls, tree-summed (log-depth adds; the tail is latency-
        # bound).  A single (1,784) matmul would need an in-kernel lane relayout.
        p1 = [jnp.dot(cx[c:c + 1, :], w12f_buf[c],
                      preferred_element_type=jnp.float32) for c in range(C_MID)]
        p2 = [jnp.dot(y7[c:c + 1, :], w12f_buf[C_MID + c],
                      preferred_element_type=jnp.float32) for c in range(C_MID)]
        h1 = _tree_sum(p1) + p256_ref[0:1, :]                       # (1, 256)
        h2 = _tree_sum(p2) + p256_ref[1:2, :]                       # (1, 256)
        a1 = p256_ref[2:3, :]                                       # shared PReLU(256)
        h1 = jnp.where(h1 >= 0.0, h1, a1 * h1)
        h2 = jnp.where(h2 >= 0.0, h2, a1 * h2)

        # fc3 over the concatenated (1,512) vector as split matmuls (no concat).
        h3 = (jnp.dot(h1, w3_ref[0:256, :], preferred_element_type=jnp.float32)
              + jnp.dot(h2, w3_ref[256:512, :], preferred_element_type=jnp.float32)
              + p64_ref[0:1, :])
        a2 = p64_ref[1:2, :]                                        # PReLU(64)
        h3 = jnp.where(h3 >= 0.0, h3, a2 * h3)

        out_ref[...] = (jnp.dot(h3, w4_ref[...], preferred_element_type=jnp.float32)
                        + b4_ref[...])


# ---------------------------------------------------------------------------
# Host-side glue
# ---------------------------------------------------------------------------
def _bilinear_matrix(in_size, out_size):
    """PyTorch F.interpolate(mode='bilinear', align_corners=False) as (out, in)."""
    dst = np.arange(out_size, dtype=np.float64)
    scale = in_size / out_size
    src = np.maximum((dst + 0.5) * scale - 0.5, 0.0)
    i0 = np.minimum(np.floor(src).astype(np.int64), in_size - 1)
    i1 = np.minimum(i0 + 1, in_size - 1)
    frac = src - i0
    W = np.zeros((out_size, in_size), dtype=np.float32)
    W[np.arange(out_size), i0] += (1.0 - frac)
    W[np.arange(out_size), i1] += frac
    return W


def _round_up(v, m):
    return (v + m - 1) // m * m


def _vmem_limit_bytes(block_r, p, class_num):
    """Padding-aware VMEM estimate (f32, (8,128) tiles) + headroom, clamped."""
    def tile(s0, s1):
        return _round_up(s0, 8) * _round_up(s1, 128) * 4
    x_bufs = 2 * block_r * tile(HW_ROI, C_IN)                       # double-buffered x
    small = 2 * (tile(2 * C_MID, C_IN) + tile(2 * C_MID, 1) + tile(3, 256)
                 + tile(512, 64) + tile(2, 64) + tile(64, class_num)
                 + 2 * tile(1, class_num))                          # small consts + out
    scratch = (2 * tile(HW_ROI, C_IN)                               # xsum, xsq
               + tile(p, C_IN) + tile(p, HW_ROI)                    # y_buf, m_buf
               + 2 * C_MID * tile(HW_ROI, C_IN))                    # w12f_buf
    need = x_bufs + small + scratch
    return int(min(max(need + 16 * 2**20, 32 * 2**20), 48 * 2**20))


def init_params(key, class_num=4):
    ks = jax.random.split(key, 12)

    def u(k, shape, fan_in):
        bound = 1.0 / np.sqrt(fan_in)
        return jax.random.uniform(k, shape, jnp.float32, -bound, bound)

    return dict(
        conv1_w=u(ks[0], (C_MID, C_IN), C_IN), conv1_b=u(ks[1], (C_MID,), C_IN),
        conv2_w=u(ks[2], (C_MID, C_IN), C_IN), conv2_b=u(ks[3], (C_MID,), C_IN),
        fc1_w=u(ks[4], (256, FEAT), FEAT), fc1_b=u(ks[5], (256,), FEAT),
        fc2_w=u(ks[6], (256, FEAT), FEAT), fc2_b=u(ks[7], (256,), FEAT),
        prelu1=jnp.full((256,), 0.25, jnp.float32),
        fc3_w=u(ks[8], (64, 512), 512), fc3_b=u(ks[9], (64,), 512),
        prelu2=jnp.full((64,), 0.25, jnp.float32),
        fc4_w=u(ks[10], (class_num, 64), 64), fc4_b=u(ks[11], (class_num,), 64),
    )


def baseline_forward(params, x, y, block_r=128):
    R = x.shape[0]
    assert x.shape[1:] == (C_IN, 7, 7)
    assert y.shape[0] == 1 and y.shape[1] == C_IN
    Hy, Wy = int(y.shape[2]), int(y.shape[3])
    P = Hy * Wy
    class_num = params['fc4_w'].shape[0]

    block_r = max(1, min(block_r, R))
    n_blk = -(-R // block_r)
    R_pad = n_blk * block_r

    # x: (R,256,7,7) -> lane-dense (R_pad, 49, 256).  Zero padding is neutral for
    # both the ROI sum and the squared-norm accumulation.  (Ideally the producer
    # hands x over in this layout already; the transpose here is layout plumbing.)
    x3d = x.reshape(R, C_IN, HW_ROI).transpose(0, 2, 1).astype(jnp.float32)
    if R_pad != R:
        x3d = jnp.pad(x3d, ((0, R_pad - R), (0, 0), (0, 0)))

    # y lane-dense + parameter plumbing (pure layout glue, done host-side).
    y2dT = y.reshape(C_IN, P).T.astype(jnp.float32)                 # (P, 256)
    Mh = _bilinear_matrix(Hy, 7)                                    # (7, Hy)
    Mw = _bilinear_matrix(Wy, 7)                                    # (7, Wy)
    M = jnp.asarray(np.einsum('ih,jw->hwij', Mh, Mw).reshape(P, HW_ROI))

    convw = jnp.concatenate([params['conv1_w'], params['conv2_w']], axis=0)        # (32,256)
    convb = jnp.concatenate([params['conv1_b'], params['conv2_b']],
                            axis=0).reshape(2 * C_MID, 1)                          # (32,1)
    w1f = params['fc1_w'].reshape(256, C_MID, HW_ROI).transpose(1, 2, 0)           # (16,49,256)
    w2f = params['fc2_w'].reshape(256, C_MID, HW_ROI).transpose(1, 2, 0)           # (16,49,256)
    w12f = jnp.concatenate([w1f, w2f], axis=0)                                     # (32,49,256)
    p256 = jnp.stack([params['fc1_b'], params['fc2_b'], params['prelu1']], axis=0) # (3,256)
    w3 = params['fc3_w'].T                                                         # (512,64)
    p64 = jnp.stack([params['fc3_b'], params['prelu2']], axis=0)                   # (2,64)
    w4 = params['fc4_w'].T                                                         # (64,cls)
    b4 = params['fc4_b'].reshape(1, class_num)

    grid_spec = pltpu.PrefetchScalarGridSpec(
        num_scalar_prefetch=0,
        grid=(n_blk,),
        in_specs=[
            pl.BlockSpec((block_r, HW_ROI, C_IN), lambda i: (i, 0, 0)),  # x (tiled over ROIs)
            pl.BlockSpec((2 * C_MID, C_IN), lambda i: (0, 0)),           # conv1|conv2 weight
            pl.BlockSpec((2 * C_MID, 1), lambda i: (0, 0)),              # conv1|conv2 bias
            pl.BlockSpec((3, 256), lambda i: (0, 0)),                    # fc1_b|fc2_b|prelu1
            pl.BlockSpec((512, 64), lambda i: (0, 0)),                   # fc3 weight (T)
            pl.BlockSpec((2, 64), lambda i: (0, 0)),                     # fc3_b|prelu2
            pl.BlockSpec((64, class_num), lambda i: (0, 0)),             # fc4 weight (T)
            pl.BlockSpec((1, class_num), lambda i: (0, 0)),              # fc4 bias
            pl.BlockSpec(memory_space=pl.ANY),                           # y (P,256), manual DMA
            pl.BlockSpec(memory_space=pl.ANY),                           # M (P,49),  manual DMA
            pl.BlockSpec(memory_space=pl.ANY),                           # fc1|fc2 w, manual DMA
        ],
        out_specs=pl.BlockSpec((1, class_num), lambda i: (0, 0)),
        scratch_shapes=[
            pltpu.VMEM((HW_ROI, C_IN), jnp.float32),                 # running sum_roi(x)
            pltpu.VMEM((HW_ROI, C_IN), jnp.float32),                 # running sum(x*x) partial
            pltpu.VMEM((P, C_IN), jnp.float32),                      # y buffer
            pltpu.VMEM((P, HW_ROI), jnp.float32),                    # interp matrix buffer
            pltpu.VMEM((2 * C_MID, HW_ROI, C_IN), jnp.float32),      # fc1|fc2 weight buffer
            pltpu.SemaphoreType.DMA((3,)),
        ],
    )
    out = pl.pallas_call(
        _fused_kernel,
        out_shape=jax.ShapeDtypeStruct((1, class_num), jnp.float32),
        grid_spec=grid_spec,
        compiler_params=pltpu.CompilerParams(
            dimension_semantics=("arbitrary",),                      # ROI axis is a reduction
            vmem_limit_bytes=_vmem_limit_bytes(block_r, P, class_num)),
    )(x3d, convw, convb, p256, w3, p64, w4, b4, y2dT, M, w12f)
    return out


# ---------------------------------------------------------------------------
# Pure-JAX reference (mirrors the PyTorch forward) for a correctness check
# ---------------------------------------------------------------------------
def _reference(params, x, y):
    Hy, Wy = int(y.shape[2]), int(y.shape[3])
    xn = x / jnp.sqrt(jnp.sum(x * x))
    yn = y / jnp.sqrt(jnp.sum(y * y))
    xs = jnp.sum(xn, axis=0)                                        # (256,7,7)
    cx = jnp.einsum('cm,mhw->chw', params['conv1_w'], xs) + params['conv1_b'][:, None, None]
    cy = jnp.einsum('cm,mhw->chw', params['conv2_w'], yn[0]) + params['conv2_b'][:, None, None]
    Mh = jnp.asarray(_bilinear_matrix(Hy, 7))
    Mw = jnp.asarray(_bilinear_matrix(Wy, 7))
    cy7 = jnp.einsum('ih,jw,chw->cij', Mh, Mw, cy)                  # (16,7,7)
    h1 = cx.reshape(-1) @ params['fc1_w'].T + params['fc1_b']
    h2 = cy7.reshape(-1) @ params['fc2_w'].T + params['fc2_b']
    a1 = params['prelu1']
    h1 = jnp.where(h1 >= 0, h1, a1 * h1)
    h2 = jnp.where(h2 >= 0, h2, a1 * h2)
    h = jnp.concatenate([h1, h2])
    h3 = h @ params['fc3_w'].T + params['fc3_b']
    h3 = jnp.where(h3 >= 0, h3, params['prelu2'] * h3)
    out = h3 @ params['fc4_w'].T + params['fc4_b']
    return out.reshape(1, -1)


# TODO(synk): is_cat=True branch (fc1 over a flat roi_num vector) not implemented;
#             default is_cat=False forward path is what is reproduced here.
# TODO(synk): self.Pool = nn.AvgPool2d((184, 320)) is never used in forward(); omitted.
# TODO(synk): v7x second TensorCore (split ROI reduction across 2 TCs) not used;
#             single "arbitrary" reduction axis runs on one core.

if __name__ == "__main__":
    key = jax.random.PRNGKey(0)
    kx, ky, kp = jax.random.split(key, 3)

    R, Hy, Wy, class_num = 20, 14, 14, 4        # small roi_num; channels fixed at 256
    x = jax.random.normal(kx, (R, C_IN, 7, 7), jnp.float32)
    y = jax.random.normal(ky, (1, C_IN, Hy, Wy), jnp.float32)
    params = init_params(kp, class_num=class_num)

    # block_r=8 -> 3 grid steps with a padded final block: exercises the init /
    # accumulate / early-DMA-start / last-step-head phases of the kernel.
    out = baseline_forward(params, x, y, block_r=8)
    out = jax.block_until_ready(out)
    assert out.shape == (1, class_num)
    assert bool(jnp.all(jnp.isfinite(out)))

    ref = jax.block_until_ready(_reference(params, x, y))
    np.testing.assert_allclose(np.asarray(out), np.asarray(ref), rtol=5e-2, atol=5e-3)

    print("KERNEL_OK")
</pallas_src>

<mosaic_0001>
module attributes {stable_mosaic.version = 11 : i64} {
  func.func @_fused_kernel(%arg0: i32, %arg1: memref<8x49x256xf32, #tpu.memory_space<vmem>>, %arg2: memref<32x256xf32, #tpu.memory_space<vmem>>, %arg3: memref<32x1xf32, #tpu.memory_space<vmem>>, %arg4: memref<3x256xf32, #tpu.memory_space<vmem>>, %arg5: memref<512x64xf32, #tpu.memory_space<vmem>>, %arg6: memref<2x64xf32, #tpu.memory_space<vmem>>, %arg7: memref<64x4xf32, #tpu.memory_space<vmem>>, %arg8: memref<1x4xf32, #tpu.memory_space<vmem>>, %arg9: memref<196x256xf32, #tpu.memory_space<any>>, %arg10: memref<196x49xf32, #tpu.memory_space<any>>, %arg11: memref<32x49x256xf32, #tpu.memory_space<any>>, %arg12: memref<1x4xf32, #tpu.memory_space<vmem>>, %arg13: memref<49x256xf32, #tpu.memory_space<vmem>>, %arg14: memref<49x256xf32, #tpu.memory_space<vmem>>, %arg15: memref<196x256xf32, #tpu.memory_space<vmem>>, %arg16: memref<196x49xf32, #tpu.memory_space<vmem>>, %arg17: memref<32x49x256xf32, #tpu.memory_space<vmem>>, %arg18: memref<3x!tpu.dma_semaphore, #tpu.memory_space<semaphore_mem>>) attributes {dimension_semantics = [#tpu.dimension_semantics<arbitrary>], iteration_bounds = array<i64: 3>, scalar_prefetch = 0 : i64, scratch_operands = 6 : i64, tpu.core_type = #tpu.core_type<tc>, window_params = [{transform_indices = @transform_0, window_bounds = array<i64: 8, 49, 256>}, {pipeline_mode = #tpu.pipeline_mode<synchronous>, transform_indices = @transform_1, window_bounds = array<i64: 32, 256>}, {pipeline_mode = #tpu.pipeline_mode<synchronous>, transform_indices = @transform_2, window_bounds = array<i64: 32, 1>}, {pipeline_mode = #tpu.pipeline_mode<synchronous>, transform_indices = @transform_3, window_bounds = array<i64: 3, 256>}, {pipeline_mode = #tpu.pipeline_mode<synchronous>, transform_indices = @transform_4, window_bounds = array<i64: 512, 64>}, {pipeline_mode = #tpu.pipeline_mode<synchronous>, transform_indices = @transform_5, window_bounds = array<i64: 2, 64>}, {pipeline_mode = #tpu.pipeline_mode<synchronous>, transform_indices = @transform_6, window_bounds = array<i64: 64, 4>}, {pipeline_mode = #tpu.pipeline_mode<synchronous>, transform_indices = @transform_7, window_bounds = array<i64: 1, 4>}, {}, {}, {}, {pipeline_mode = #tpu.pipeline_mode<synchronous>, transform_indices = @transform_11, window_bounds = array<i64: 1, 4>}]} {
    %c0_i32 = arith.constant 0 : i32
    %0 = arith.cmpi eq, %arg0, %c0_i32 : i32
    %1 = arith.extui %0 : i1 to i32
    %c0_i32_0 = arith.constant 0 : i32
    %2 = arith.cmpi ne, %1, %c0_i32_0 : i32
    scf.if %2 {
      %cst_15 = arith.constant 0.000000e+00 : f32
      %20 = vector.broadcast %cst_15 : f32 to vector<49x256xf32>
      %c0_16 = arith.constant 0 : index
      %c0_17 = arith.constant 0 : index
      %21 = vector.load %arg13[%c0_16, %c0_17] : memref<49x256xf32, #tpu.memory_space<vmem>>, vector<49x256xf32>
      tpu.vector_store %arg13[%c0_16, %c0_17], %20 {strides = array<i32>} : memref<49x256xf32, #tpu.memory_space<vmem>>, vector<49x256xf32>,
      %cst_18 = arith.constant 0.000000e+00 : f32
      %22 = vector.broadcast %cst_18 : f32 to vector<49x256xf32>
      %c0_19 = arith.constant 0 : index
      %c0_20 = arith.constant 0 : index
      %23 = vector.load %arg14[%c0_19, %c0_20] : memref<49x256xf32, #tpu.memory_space<vmem>>, vector<49x256xf32>
      tpu.vector_store %arg14[%c0_19, %c0_20], %22 {strides = array<i32>} : memref<49x256xf32, #tpu.memory_space<vmem>>, vector<49x256xf32>,
    } else {
    }
    %c0 = arith.constant 0 : index
    %c0_1 = arith.constant 0 : index
    %c0_2 = arith.constant 0 : index
    %3 = vector.load %arg1[%c0, %c0_1, %c0_2] : memref<8x49x256xf32, #tpu.memory_space<vmem>>, vector<8x49x256xf32>
    %c0_3 = arith.constant 0 : index
    %c0_4 = arith.constant 0 : index
    %4 = vector.load %arg13[%c0_3, %c0_4] : memref<49x256xf32, #tpu.memory_space<vmem>>, vector<49x256xf32>
    %cst = arith.constant dense<0.000000e+00> : vector<49x256xf32>
    %5 = vector.multi_reduction <add>, %3, %cst [0] : vector<8x49x256xf32> to vector<49x256xf32>
    %6 = arith.addf %4, %5 : vector<49x256xf32>
    %c0_5 = arith.constant 0 : index
    %c0_6 = arith.constant 0 : index
    %7 = vector.load %arg13[%c0_5, %c0_6] : memref<49x256xf32, #tpu.memory_space<vmem>>, vector<49x256xf32>
    tpu.vector_store %arg13[%c0_5, %c0_6], %6 {strides = array<i32>} : memref<49x256xf32, #tpu.memory_space<vmem>>, vector<49x256xf32>,
    %c0_7 = arith.constant 0 : index
    %c0_8 = arith.constant 0 : index
    %8 = vector.load %arg14[%c0_7, %c0_8] : memref<49x256xf32, #tpu.memory_space<vmem>>, vector<49x256xf32>
    %9 = arith.mulf %3, %3 : vector<8x49x256xf32>
    %cst_9 = arith.constant dense<0.000000e+00> : vector<49x256xf32>
    %10 = vector.multi_reduction <add>, %9, %cst_9 [0] : vector<8x49x256xf32> to vector<49x256xf32>
    %11 = arith.addf %8, %10 : vector<49x256xf32>
    %c0_10 = arith.constant 0 : index
    %c0_11 = arith.constant 0 : index
    %12 = vector.load %arg14[%c0_10, %c0_11] : memref<49x256xf32, #tpu.memory_space<vmem>>, vector<49x256xf32>
    tpu.vector_store %arg14[%c0_10, %c0_11], %11 {strides = array<i32>} : memref<49x256xf32, #tpu.memory_space<vmem>>, vector<49x256xf32>,
    %c1_i32 = arith.constant 1 : i32
    %c0_i32_12 = arith.constant 0 : i32
    %13 = arith.maxsi %c1_i32, %c0_i32_12 : i32
    %14 = arith.cmpi eq, %arg0, %13 : i32
    %15 = arith.extui %14 : i1 to i32
    %c0_i32_13 = arith.constant 0 : i32
    %16 = arith.cmpi ne, %15, %c0_i32_13 : i32
    scf.if %16 {
      %c0_i32_15 = arith.constant 0 : i32
      %20 = tpu.memref_slice %arg18[%c0_i32_15] : memref<3x!tpu.dma_semaphore, #tpu.memory_space<semaphore_mem>> -> memref<1x!tpu.dma_semaphore, #tpu.memory_space<semaphore_mem>>
      %21 = tpu.memref_squeeze %20 : memref<1x!tpu.dma_semaphore, #tpu.memory_space<semaphore_mem>> -> memref<!tpu.dma_semaphore, #tpu.memory_space<semaphore_mem>>
      tpu.enqueue_dma source(%arg9 : memref<196x256xf32, #tpu.memory_space<any>>) target(%arg15 : memref<196x256xf32, #tpu.memory_space<vmem>>) target_semaphore(%21 : memref<!tpu.dma_semaphore, #tpu.memory_space<semaphore_mem>>)
      %c1_i32_16 = arith.constant 1 : i32
      %22 = tpu.memref_slice %arg18[%c1_i32_16] : memref<3x!tpu.dma_semaphore, #tpu.memory_space<semaphore_mem>> -> memref<1x!tpu.dma_semaphore, #tpu.memory_space<semaphore_mem>>
      %23 = tpu.memref_squeeze %22 : memref<1x!tpu.dma_semaphore, #tpu.memory_space<semaphore_mem>> -> memref<!tpu.dma_semaphore, #tpu.memory_space<semaphore_mem>>
      tpu.enqueue_dma source(%arg10 : memref<196x49xf32, #tpu.memory_space<any>>) target(%arg16 : memref<196x49xf32, #tpu.memory_space<vmem>>) target_semaphore(%23 : memref<!tpu.dma_semaphore, #tpu.memory_space<semaphore_mem>>)
      %c2_i32_17 = arith.constant 2 : i32
      %24 = tpu.memref_slice %arg18[%c2_i32_17] : memref<3x!tpu.dma_semaphore, #tpu.memory_space<semaphore_mem>> -> memref<1x!tpu.dma_semaphore, #tpu.memory_space<semaphore_mem>>
      %25 = tpu.memref_squeeze %24 : memref<1x!tpu.dma_semaphore, #tpu.memory_space<semaphore_mem>> -> memref<!tpu.dma_semaphore, #tpu.memory_space<semaphore_mem>>
      tpu.enqueue_dma source(%arg11 : memref<32x49x256xf32, #tpu.memory_space<any>>) target(%arg17 : memref<32x49x256xf32, #tpu.memory_space<vmem>>) target_semaphore(%25 : memref<!tpu.dma_semaphore, #tpu.memory_space<semaphore_mem>>)
    } else {
    }
    %c2_i32 = arith.constant 2 : i32
    %17 = arith.cmpi eq, %arg0, %c2_i32 : i32
    %18 = arith.extui %17 : i1 to i32
    %c0_i32_14 = arith.constant 0 : i32
    %19 = arith.cmpi ne, %18, %c0_i32_14 : i32
    scf.if %19 {
      %c0_i32_15 = arith.constant 0 : i32
      %20 = tpu.memref_slice %arg18[%c0_i32_15] : memref<3x!tpu.dma_semaphore, #tpu.memory_space<semaphore_mem>> -> memref<1x!tpu.dma_semaphore, #tpu.memory_space<semaphore_mem>>
      %21 = tpu.memref_squeeze %20 : memref<1x!tpu.dma_semaphore, #tpu.memory_space<semaphore_mem>> -> memref<!tpu.dma_semaphore, #tpu.memory_space<semaphore_mem>>
      tpu.wait_dma2 semaphore(%21 : memref<!tpu.dma_semaphore, #tpu.memory_space<semaphore_mem>>) src(%arg9 : memref<196x256xf32, #tpu.memory_space<any>>) dst(%arg15 : memref<196x256xf32, #tpu.memory_space<vmem>>)
      %c1_i32_16 = arith.constant 1 : i32
      %22 = tpu.memref_slice %arg18[%c1_i32_16] : memref<3x!tpu.dma_semaphore, #tpu.memory_space<semaphore_mem>> -> memref<1x!tpu.dma_semaphore, #tpu.memory_space<semaphore_mem>>
      %23 = tpu.memref_squeeze %22 : memref<1x!tpu.dma_semaphore, #tpu.memory_space<semaphore_mem>> -> memref<!tpu.dma_semaphore, #tpu.memory_space<semaphore_mem>>
      tpu.wait_dma2 semaphore(%23 : memref<!tpu.dma_semaphore, #tpu.memory_space<semaphore_mem>>) src(%arg10 : memref<196x49xf32, #tpu.memory_space<any>>) dst(%arg16 : memref<196x49xf32, #tpu.memory_space<vmem>>)
      %c2_i32_17 = arith.constant 2 : i32
      %24 = tpu.memref_slice %arg18[%c2_i32_17] : memref<3x!tpu.dma_semaphore, #tpu.memory_space<semaphore_mem>> -> memref<1x!tpu.dma_semaphore, #tpu.memory_space<semaphore_mem>>
      %25 = tpu.memref_squeeze %24 : memref<1x!tpu.dma_semaphore, #tpu.memory_space<semaphore_mem>> -> memref<!tpu.dma_semaphore, #tpu.memory_space<semaphore_mem>>
      tpu.wait_dma2 semaphore(%25 : memref<!tpu.dma_semaphore, #tpu.memory_space<semaphore_mem>>) src(%arg11 : memref<32x49x256xf32, #tpu.memory_space<any>>) dst(%arg17 : memref<32x49x256xf32, #tpu.memory_space<vmem>>)
      %c0_18 = arith.constant 0 : index
      %c0_19 = arith.constant 0 : index
      %26 = vector.load %arg14[%c0_18, %c0_19] : memref<49x256xf32, #tpu.memory_space<vmem>>, vector<49x256xf32>
      %cst_20 = arith.constant dense<0.000000e+00> : vector<49xf32>
      %27 = vector.multi_reduction <add>, %26, %cst_20 [1] : vector<49x256xf32> to vector<49xf32>
      %28 = vector.shape_cast %27 : vector<49xf32> to vector<49x1xf32>
      %cst_21 = arith.constant dense<0.000000e+00> : vector<1xf32>
      %29 = vector.multi_reduction <add>, %28, %cst_21 [0] : vector<49x1xf32> to vector<1xf32>
      %30 = vector.shape_cast %29 : vector<1xf32> to vector<1x1xf32>
      %31 = math.rsqrt %30 : vector<1x1xf32>
      %c0_22 = arith.constant 0 : index
      %c0_23 = arith.constant 0 : index
      %32 = vector.load %arg15[%c0_22, %c0_23] : memref<196x256xf32, #tpu.memory_space<vmem>>, vector<196x256xf32>
      %33 = arith.mulf %32, %32 : vector<196x256xf32>
      %cst_24 = arith.constant dense<0.000000e+00> : vector<196xf32>
      %34 = vector.multi_reduction <add>, %33, %cst_24 [1] : vector<196x256xf32> to vector<196xf32>
      %35 = vector.shape_cast %34 : vector<196xf32> to vector<196x1xf32>
      %cst_25 = arith.constant dense<0.000000e+00> : vector<1xf32>
      %36 = vector.multi_reduction <add>, %35, %cst_25 [0] : vector<196x1xf32> to vector<1xf32>
      %37 = vector.shape_cast %36 : vector<1xf32> to vector<1x1xf32>
      %38 = math.rsqrt %37 : vector<1x1xf32>
      %c0_26 = arith.constant 0 : index
      %c0_27 = arith.constant 0 : index
      %39 = vector.load %arg13[%c0_26, %c0_27] : memref<49x256xf32, #tpu.memory_space<vmem>>, vector<49x256xf32>
      %c0_28 = arith.constant 0 : index
      %c0_29 = arith.constant 0 : index
      %40 = vector.load %arg2[%c0_28, %c0_29] : memref<32x256xf32, #tpu.memory_space<vmem>>, vector<16x256xf32>
      %c16 = arith.constant 16 : index
      %c0_30 = arith.constant 0 : index
      %41 = vector.load %arg2[%c16, %c0_30] : memref<32x256xf32, #tpu.memory_space<vmem>>, vector<16x256xf32>
      %cst_31 = arith.constant dense<0.000000e+00> : vector<16x49xf32>
      %42 = tpu.matmul %40, %39, %cst_31 {dimension_numbers = #tpu.dot_dimension_numbers<[1], [1], [0], [0], [0, 0, 1, 0], [], []>} : vector<16x256xf32>, vector<49x256xf32>, vector<16x49xf32> -> vector<16x49xf32>
      %43 = vector.broadcast %31 : vector<1x1xf32> to vector<16x49xf32>
      %44 = arith.mulf %42, %43 : vector<16x49xf32>
      %c0_32 = arith.constant 0 : index
      %c0_33 = arith.constant 0 : index
      %45 = vector.load %arg3[%c0_32, %c0_33] : memref<32x1xf32, #tpu.memory_space<vmem>>, vector<16x1xf32>
      %46 = vector.broadcast %45 : vector<16x1xf32> to vector<16x49xf32>
      %47 = arith.addf %44, %46 : vector<16x49xf32>
      %cst_34 = arith.constant dense<0.000000e+00> : vector<16x196xf32>
      %48 = tpu.matmul %41, %32, %cst_34 {dimension_numbers = #tpu.dot_dimension_numbers<[1], [1], [0], [0], [0, 0, 1, 0], [], []>} : vector<16x256xf32>, vector<196x256xf32>, vector<16x196xf32> -> vector<16x196xf32>
      %49 = vector.broadcast %38 : vector<1x1xf32> to vector<16x196xf32>
      %50 = arith.mulf %48, %49 : vector<16x196xf32>
      %c16_35 = arith.constant 16 : index
      %c0_36 = arith.constant 0 : index
      %51 = vector.load %arg3[%c16_35, %c0_36] : memref<32x1xf32, #tpu.memory_space<vmem>>, vector<16x1xf32>
      %52 = vector.broadcast %51 : vector<16x1xf32> to vector<16x196xf32>
      %53 = arith.addf %50, %52 : vector<16x196xf32>
      %c0_37 = arith.constant 0 : index
      %c0_38 = arith.constant 0 : index
      %54 = vector.load %arg16[%c0_37, %c0_38] : memref<196x49xf32, #tpu.memory_space<vmem>>, vector<196x49xf32>
      %cst_39 = arith.constant dense<0.000000e+00> : vector<16x49xf32>
      %55 = tpu.matmul %53, %54, %cst_39 {dimension_numbers = #tpu.dot_dimension_numbers<[1], [0], [0], [1], [0, 0, 1, 1], [], []>} : vector<16x196xf32>, vector<196x49xf32>, vector<16x49xf32> -> vector<16x49xf32>
      %56 = vector.extract_strided_slice %47 {offsets = [0, 0], sizes = [1, 49], strides = [1, 1]} : vector<16x49xf32> to vector<1x49xf32>
      %c0_40 = arith.constant 0 : index
      %c0_41 = arith.constant 0 : index
      %c0_42 = arith.constant 0 : index
      %57 = vector.load %arg17[%c0_40, %c0_41, %c0_42] : memref<32x49x256xf32, #tpu.memory_space<vmem>>, vector<1x49x256xf32>
      %58 = vector.shape_cast %57 : vector<1x49x256xf32> to vector<49x256xf32>
      %cst_43 = arith.constant dense<0.000000e+00> : vector<1x256xf32>
      %59 = tpu.matmul %56, %58, %cst_43 {dimension_numbers = #tpu.dot_dimension_numbers<[1], [0], [0], [1], [0, 0, 1, 1], [], []>} : vector<1x49xf32>, vector<49x256xf32>, vector<1x256xf32> -> vector<1x256xf32>
      %60 = vector.extract_strided_slice %47 {offsets = [1, 0], sizes = [1, 49], strides = [1, 1]} : vector<16x49xf32> to vector<1x49xf32>
      %c1 = arith.constant 1 : index
      %c0_44 = arith.constant 0 : index
      %c0_45 = arith.constant 0 : index
      %61 = vector.load %arg17[%c1, %c0_44, %c0_45] : memref<32x49x256xf32, #tpu.memory_space<vmem>>, vector<1x49x256xf32>
      %62 = vector.shape_cast %61 : vector<1x49x256xf32> to vector<49x256xf32>
      %cst_46 = arith.constant dense<0.000000e+00> : vector<1x256xf32>
      %63 = tpu.matmul %60, %62, %cst_46 {dimension_numbers = #tpu.dot_dimension_numbers<[1], [0], [0], [1], [0, 0, 1, 1], [], []>} : vector<1x49xf32>, vector<49x256xf32>, vector<1x256xf32> -> vector<1x256xf32>
      %64 = vector.extract_strided_slice %47 {offsets = [2, 0], sizes = [1, 49], strides = [1, 1]} : vector<16x49xf32> to vector<1x49xf32>
      %c2 = arith.constant 2 : index
      %c0_47 = arith.constant 0 : index
      %c0_48 = arith.constant 0 : index
      %65 = vector.load %arg17[%c2, %c0_47, %c0_48] : memref<32x49x256xf32, #tpu.memory_space<vmem>>, vector<1x49x256xf32>
      %66 = vector.shape_cast %65 : vector<1x49x256xf32> to vector<49x256xf32>
      %cst_49 = arith.constant dense<0.000000e+00> : vector<1x256xf32>
      %67 = tpu.matmul %64, %66, %cst_49 {dimension_numbers = #tpu.dot_dimension_numbers<[1], [0], [0], [1], [0, 0, 1, 1], [], []>} : vector<1x49xf32>, vector<49x256xf32>, vector<1x256xf32> -> vector<1x256xf32>
      %68 = vector.extract_strided_slice %47 {offsets = [3, 0], sizes = [1, 49], strides = [1, 1]} : vector<16x49xf32> to vector<1x49xf32>
      %c3 = arith.constant 3 : index
      %c0_50 = arith.constant 0 : index
      %c0_51 = arith.constant 0 : index
      %69 = vector.load %arg17[%c3, %c0_50, %c0_51] : memref<32x49x256xf32, #tpu.memory_space<vmem>>, vector<1x49x256xf32>
      %70 = vector.shape_cast %69 : vector<1x49x256xf32> to vector<49x256xf32>
      %cst_52 = arith.constant dense<0.000000e+00> : vector<1x256xf32>
      %71 = tpu.matmul %68, %70, %cst_52 {dimension_numbers = #tpu.dot_dimension_numbers<[1], [0], [0], [1], [0, 0, 1, 1], [], []>} : vector<1x49xf32>, vector<49x256xf32>, vector<1x256xf32> -> vector<1x256xf32>
      %72 = vector.extract_strided_slice %47 {offsets = [4, 0], sizes = [1, 49], strides = [1, 1]} : vector<16x49xf32> to vector<1x49xf32>
      %c4 = arith.constant 4 : index
      %c0_53 = arith.constant 0 : index
      %c0_54 = arith.constant 0 : index
      %73 = vector.load %arg17[%c4, %c0_53, %c0_54] : memref<32x49x256xf32, #tpu.memory_space<vmem>>, vector<1x49x256xf32>
      %74 = vector.shape_cast %73 : vector<1x49x256xf32> to vector<49x256xf32>
      %cst_55 = arith.constant dense<0.000000e+00> : vector<1x256xf32>
      %75 = tpu.matmul %72, %74, %cst_55 {dimension_numbers = #tpu.dot_dimension_numbers<[1], [0], [0], [1], [0, 0, 1, 1], [], []>} : vector<1x49xf32>, vector<49x256xf32>, vector<1x256xf32> -> vector<1x256xf32>
      %76 = vector.extract_strided_slice %47 {offsets = [5, 0], sizes = [1, 49], strides = [1, 1]} : vector<16x49xf32> to vector<1x49xf32>
      %c5 = arith.constant 5 : index
      %c0_56 = arith.constant 0 : index
      %c0_57 = arith.constant 0 : index
      %77 = vector.load %arg17[%c5, %c0_56, %c0_57] : memref<32x49x256xf32, #tpu.memory_space<vmem>>, vector<1x49x256xf32>
      %78 = vector.shape_cast %77 : vector<1x49x256xf32> to vector<49x256xf32>
      %cst_58 = arith.constant dense<0.000000e+00> : vector<1x256xf32>
      %79 = tpu.matmul %76, %78, %cst_58 {dimension_numbers = #tpu.dot_dimension_numbers<[1], [0], [0], [1], [0, 0, 1, 1], [], []>} : vector<1x49xf32>, vector<49x256xf32>, vector<1x256xf32> -> vector<1x256xf32>
      %80 = vector.extract_strided_slice %47 {offsets = [6, 0], sizes = [1, 49], strides = [1, 1]} : vector<16x49xf32> to vector<1x49xf32>
      %c6 = arith.constant 6 : index
      %c0_59 = arith.constant 0 : index
      %c0_60 = arith.constant 0 : index
      %81 = vector.load %arg17[%c6, %c0_59, %c0_60] : memref<32x49x256xf32, #tpu.memory_space<vmem>>, vector<1x49x256xf32>
      %82 = vector.shape_cast %81 : vector<1x49x256xf32> to vector<49x256xf32>
      %cst_61 = arith.constant dense<0.000000e+00> : vector<1x256xf32>
      %83 = tpu.matmul %80, %82, %cst_61 {dimension_numbers = #tpu.dot_dimension_numbers<[1], [0], [0], [1], [0, 0, 1, 1], [], []>} : vector<1x49xf32>, vector<49x256xf32>, vector<1x256xf32> -> vector<1x256xf32>
      %84 = vector.extract_strided_slice %47 {offsets = [7, 0], sizes = [1, 49], strides = [1, 1]} : vector<16x49xf32> to vector<1x49xf32>
      %c7 = arith.constant 7 : index
      %c0_62 = arith.constant 0 : index
      %c0_63 = arith.constant 0 : index
      %85 = vector.load %arg17[%c7, %c0_62, %c0_63] : memref<32x49x256xf32, #tpu.memory_space<vmem>>, vector<1x49x256xf32>
      %86 = vector.shape_cast %85 : vector<1x49x256xf32> to vector<49x256xf32>
      %cst_64 = arith.constant dense<0.000000e+00> : vector<1x256xf32>
      %87 = tpu.matmul %84, %86, %cst_64 {dimension_numbers = #tpu.dot_dimension_numbers<[1], [0], [0], [1], [0, 0, 1, 1], [], []>} : vector<1x49xf32>, vector<49x256xf32>, vector<1x256xf32> -> vector<1x256xf32>
      %88 = vector.extract_strided_slice %47 {offsets = [8, 0], sizes = [1, 49], strides = [1, 1]} : vector<16x49xf32> to vector<1x49xf32>
      %c8 = arith.constant 8 : index
      %c0_65 = arith.constant 0 : index
      %c0_66 = arith.constant 0 : index
      %89 = vector.load %arg17[%c8, %c0_65, %c0_66] : memref<32x49x256xf32, #tpu.memory_space<vmem>>, vector<1x49x256xf32>
      %90 = vector.shape_cast %89 : vector<1x49x256xf32> to vector<49x256xf32>
      %cst_67 = arith.constant dense<0.000000e+00> : vector<1x256xf32>
      %91 = tpu.matmul %88, %90, %cst_67 {dimension_numbers = #tpu.dot_dimension_numbers<[1], [0], [0], [1], [0, 0, 1, 1], [], []>} : vector<1x49xf32>, vector<49x256xf32>, vector<1x256xf32> -> vector<1x256xf32>
      %92 = vector.extract_strided_slice %47 {offsets = [9, 0], sizes = [1, 49], strides = [1, 1]} : vector<16x49xf32> to vector<1x49xf32>
      %c9 = arith.constant 9 : index
      %c0_68 = arith.constant 0 : index
      %c0_69 = arith.constant 0 : index
      %93 = vector.load %arg17[%c9, %c0_68, %c0_69] : memref<32x49x256xf32, #tpu.memory_space<vmem>>, vector<1x49x256xf32>
      %94 = vector.shape_cast %93 : vector<1x49x256xf32> to vector<49x256xf32>
      %cst_70 = arith.constant dense<0.000000e+00> : vector<1x256xf32>
      %95 = tpu.matmul %92, %94, %cst_70 {dimension_numbers = #tpu.dot_dimension_numbers<[1], [0], [0], [1], [0, 0, 1, 1], [], []>} : vector<1x49xf32>, vector<49x256xf32>, vector<1x256xf32> -> vector<1x256xf32>
      %96 = vector.extract_strided_slice %47 {offsets = [10, 0], sizes = [1, 49], strides = [1, 1]} : vector<16x49xf32> to vector<1x49xf32>
      %c10 = arith.constant 10 : index
      %c0_71 = arith.constant 0 : index
      %c0_72 = arith.constant 0 : index
      %97 = vector.load %arg17[%c10, %c0_71, %c0_72] : memref<32x49x256xf32, #tpu.memory_space<vmem>>, vector<1x49x256xf32>
      %98 = vector.shape_cast %97 : vector<1x49x256xf32> to vector<49x256xf32>
      %cst_73 = arith.constant dense<0.000000e+00> : vector<1x256xf32>
      %99 = tpu.matmul %96, %98, %cst_73 {dimension_numbers = #tpu.dot_dimension_numbers<[1], [0], [0], [1], [0, 0, 1, 1], [], []>} : vector<1x49xf32>, vector<49x256xf32>, vector<1x256xf32> -> vector<1x256xf32>
      %100 = vector.extract_strided_slice %47 {offsets = [11, 0], sizes = [1, 49], strides = [1, 1]} : vector<16x49xf32> to vector<1x49xf32>
      %c11 = arith.constant 11 : index
      %c0_74 = arith.constant 0 : index
      %c0_75 = arith.constant 0 : index
      %101 = vector.load %arg17[%c11, %c0_74, %c0_75] : memref<32x49x256xf32, #tpu.memory_space<vmem>>, vector<1x49x256xf32>
      %102 = vector.shape_cast %101 : vector<1x49x256xf32> to vector<49x256xf32>
      %cst_76 = arith.constant dense<0.000000e+00> : vector<1x256xf32>
      %103 = tpu.matmul %100, %102, %cst_76 {dimension_numbers = #tpu.dot_dimension_numbers<[1], [0], [0], [1], [0, 0, 1, 1], [], []>} : vector<1x49xf32>, vector<49x256xf32>, vector<1x256xf32> -> vector<1x256xf32>
      %104 = vector.extract_strided_slice %47 {offsets = [12, 0], sizes = [1, 49], strides = [1, 1]} : vector<16x49xf32> to vector<1x49xf32>
      %c12 = arith.constant 12 : index
      %c0_77 = arith.constant 0 : index
      %c0_78 = arith.constant 0 : index
      %105 = vector.load %arg17[%c12, %c0_77, %c0_78] : memref<32x49x256xf32, #tpu.memory_space<vmem>>, vector<1x49x256xf32>
      %106 = vector.shape_cast %105 : vector<1x49x256xf32> to vector<49x256xf32>
      %cst_79 = arith.constant dense<0.000000e+00> : vector<1x256xf32>
      %107 = tpu.matmul %104, %106, %cst_79 {dimension_numbers = #tpu.dot_dimension_numbers<[1], [0], [0], [1], [0, 0, 1, 1], [], []>} : vector<1x49xf32>, vector<49x256xf32>, vector<1x256xf32> -> vector<1x256xf32>
      %108 = vector.extract_strided_slice %47 {offsets = [13, 0], sizes = [1, 49], strides = [1, 1]} : vector<16x49xf32> to vector<1x49xf32>
      %c13 = arith.constant 13 : index
      %c0_80 = arith.constant 0 : index
      %c0_81 = arith.constant 0 : index
      %109 = vector.load %arg17[%c13, %c0_80, %c0_81] : memref<32x49x256xf32, #tpu.memory_space<vmem>>, vector<1x49x256xf32>
      %110 = vector.shape_cast %109 : vector<1x49x256xf32> to vector<49x256xf32>
      %cst_82 = arith.constant dense<0.000000e+00> : vector<1x256xf32>
      %111 = tpu.matmul %108, %110, %cst_82 {dimension_numbers = #tpu.dot_dimension_numbers<[1], [0], [0], [1], [0, 0, 1, 1], [], []>} : vector<1x49xf32>, vector<49x256xf32>, vector<1x256xf32> -> vector<1x256xf32>
      %112 = vector.extract_strided_slice %47 {offsets = [14, 0], sizes = [1, 49], strides = [1, 1]} : vector<16x49xf32> to vector<1x49xf32>
      %c14 = arith.constant 14 : index
      %c0_83 = arith.constant 0 : index
      %c0_84 = arith.constant 0 : index
      %113 = vector.load %arg17[%c14, %c0_83, %c0_84] : memref<32x49x256xf32, #tpu.memory_space<vmem>>, vector<1x49x256xf32>
      %114 = vector.shape_cast %113 : vector<1x49x256xf32> to vector<49x256xf32>
      %cst_85 = arith.constant dense<0.000000e+00> : vector<1x256xf32>
      %115 = tpu.matmul %112, %114, %cst_85 {dimension_numbers = #tpu.dot_dimension_numbers<[1], [0], [0], [1], [0, 0, 1, 1], [], []>} : vector<1x49xf32>, vector<49x256xf32>, vector<1x256xf32> -> vector<1x256xf32>
      %116 = vector.extract_strided_slice %47 {offsets = [15, 0], sizes = [1, 49], strides = [1, 1]} : vector<16x49xf32> to vector<1x49xf32>
      %c15 = arith.constant 15 : index
      %c0_86 = arith.constant 0 : index
      %c0_87 = arith.constant 0 : index
      %117 = vector.load %arg17[%c15, %c0_86, %c0_87] : memref<32x49x256xf32, #tpu.memory_space<vmem>>, vector<1x49x256xf32>
      %118 = vector.shape_cast %117 : vector<1x49x256xf32> to vector<49x256xf32>
      %cst_88 = arith.constant dense<0.000000e+00> : vector<1x256xf32>
      %119 = tpu.matmul %116, %118, %cst_88 {dimension_numbers = #tpu.dot_dimension_numbers<[1], [0], [0], [1], [0, 0, 1, 1], [], []>} : vector<1x49xf32>, vector<49x256xf32>, vector<1x256xf32> -> vector<1x256xf32>
      %120 = vector.extract_strided_slice %55 {offsets = [0, 0], sizes = [1, 49], strides = [1, 1]} : vector<16x49xf32> to vector<1x49xf32>
      %c16_89 = arith.constant 16 : index
      %c0_90 = arith.constant 0 : index
      %c0_91 = arith.constant 0 : index
      %121 = vector.load %arg17[%c16_89, %c0_90, %c0_91] : memref<32x49x256xf32, #tpu.memory_space<vmem>>, vector<1x49x256xf32>
      %122 = vector.shape_cast %121 : vector<1x49x256xf32> to vector<49x256xf32>
      %cst_92 = arith.constant dense<0.000000e+00> : vector<1x256xf32>
      %123 = tpu.matmul %120, %122, %cst_92 {dimension_numbers = #tpu.dot_dimension_numbers<[1], [0], [0], [1], [0, 0, 1, 1], [], []>} : vector<1x49xf32>, vector<49x256xf32>, vector<1x256xf32> -> vector<1x256xf32>
      %124 = vector.extract_strided_slice %55 {offsets = [1, 0], sizes = [1, 49], strides = [1, 1]} : vector<16x49xf32> to vector<1x49xf32>
      %c17 = arith.constant 17 : index
      %c0_93 = arith.constant 0 : index
      %c0_94 = arith.constant 0 : index
      %125 = vector.load %arg17[%c17, %c0_93, %c0_94] : memref<32x49x256xf32, #tpu.memory_space<vmem>>, vector<1x49x256xf32>
      %126 = vector.shape_cast %125 : vector<1x49x256xf32> to vector<49x256xf32>
      %cst_95 = arith.constant dense<0.000000e+00> : vector<1x256xf32>
      %127 = tpu.matmul %124, %126, %cst_95 {dimension_numbers = #tpu.dot_dimension_numbers<[1], [0], [0], [1], [0, 0, 1, 1], [], []>} : vector<1x49xf32>, vector<49x256xf32>, vector<1x256xf32> -> vector<1x256xf32>
      %128 = vector.extract_strided_slice %55 {offsets = [2, 0], sizes = [1, 49], strides = [1, 1]} : vector<16x49xf32> to vector<1x49xf32>
      %c18 = arith.constant 18 : index
      %c0_96 = arith.constant 0 : index
      %c0_97 = arith.constant 0 : index
      %129 = vector.load %arg17[%c18, %c0_96, %c0_97] : memref<32x49x256xf32, #tpu.memory_space<vmem>>, vector<1x49x256xf32>
      %130 = vector.shape_cast %129 : vector<1x49x256xf32> to vector<49x256xf32>
      %cst_98 = arith.constant dense<0.000000e+00> : vector<1x256xf32>
      %131 = tpu.matmul %128, %130, %cst_98 {dimension_numbers = #tpu.dot_dimension_numbers<[1], [0], [0], [1], [0, 0, 1, 1], [], []>} : vector<1x49xf32>, vector<49x256xf32>, vector<1x256xf32> -> vector<1x256xf32>
      %132 = vector.extract_strided_slice %55 {offsets = [3, 0], sizes = [1, 49], strides = [1, 1]} : vector<16x49xf32> to vector<1x49xf32>
      %c19 = arith.constant 19 : index
      %c0_99 = arith.constant 0 : index
      %c0_100 = arith.constant 0 : index
      %133 = vector.load %arg17[%c19, %c0_99, %c0_100] : memref<32x49x256xf32, #tpu.memory_space<vmem>>, vector<1x49x256xf32>
      %134 = vector.shape_cast %133 : vector<1x49x256xf32> to vector<49x256xf32>
      %cst_101 = arith.constant dense<0.000000e+00> : vector<1x256xf32>
      %135 = tpu.matmul %132, %134, %cst_101 {dimension_numbers = #tpu.dot_dimension_numbers<[1], [0], [0], [1], [0, 0, 1, 1], [], []>} : vector<1x49xf32>, vector<49x256xf32>, vector<1x256xf32> -> vector<1x256xf32>
      %136 = vector.extract_strided_slice %55 {offsets = [4, 0], sizes = [1, 49], strides = [1, 1]} : vector<16x49xf32> to vector<1x49xf32>
      %c20 = arith.constant 20 : index
      %c0_102 = arith.constant 0 : index
      %c0_103 = arith.constant 0 : index
      %137 = vector.load %arg17[%c20, %c0_102, %c0_103] : memref<32x49x256xf32, #tpu.memory_space<vmem>>, vector<1x49x256xf32>
      %138 = vector.shape_cast %137 : vector<1x49x256xf32> to vector<49x256xf32>
      %cst_104 = arith.constant dense<0.000000e+00> : vector<1x256xf32>
      %139 = tpu.matmul %136, %138, %cst_104 {dimension_numbers = #tpu.dot_dimension_numbers<[1], [0], [0], [1], [0, 0, 1, 1], [], []>} : vector<1x49xf32>, vector<49x256xf32>, vector<1x256xf32> -> vector<1x256xf32>
      %140 = vector.extract_strided_slice %55 {offsets = [5, 0], sizes = [1, 49], strides = [1, 1]} : vector<16x49xf32> to vector<1x49xf32>
      %c21 = arith.constant 21 : index
      %c0_105 = arith.constant 0 : index
      %c0_106 = arith.constant 0 : index
      %141 = vector.load %arg17[%c21, %c0_105, %c0_106] : memref<32x49x256xf32, #tpu.memory_space<vmem>>, vector<1x49x256xf32>
      %142 = vector.shape_cast %141 : vector<1x49x256xf32> to vector<49x256xf32>
      %cst_107 = arith.constant dense<0.000000e+00> : vector<1x256xf32>
      %143 = tpu.matmul %140, %142, %cst_107 {dimension_numbers = #tpu.dot_dimension_numbers<[1], [0], [0], [1], [0, 0, 1, 1], [], []>} : vector<1x49xf32>, vector<49x256xf32>, vector<1x256xf32> -> vector<1x256xf32>
      %144 = vector.extract_strided_slice %55 {offsets = [6, 0], sizes = [1, 49], strides = [1, 1]} : vector<16x49xf32> to vector<1x49xf32>
      %c22 = arith.constant 22 : index
      %c0_108 = arith.constant 0 : index
      %c0_109 = arith.constant 0 : index
      %145 = vector.load %arg17[%c22, %c0_108, %c0_109] : memref<32x49x256xf32, #tpu.memory_space<vmem>>, vector<1x49x256xf32>
      %146 = vector.shape_cast %145 : vector<1x49x256xf32> to vector<49x256xf32>
      %cst_110 = arith.constant dense<0.000000e+00> : vector<1x256xf32>
      %147 = tpu.matmul %144, %146, %cst_110 {dimension_numbers = #tpu.dot_dimension_numbers<[1], [0], [0], [1], [0, 0, 1, 1], [], []>} : vector<1x49xf32>, vector<49x256xf32>, vector<1x256xf32> -> vector<1x256xf32>
      %148 = vector.extract_strided_slice %55 {offsets = [7, 0], sizes = [1, 49], strides = [1, 1]} : vector<16x49xf32> to vector<1x49xf32>
      %c23 = arith.constant 23 : index
      %c0_111 = arith.constant 0 : index
      %c0_112 = arith.constant 0 : index
      %149 = vector.load %arg17[%c23, %c0_111, %c0_112] : memref<32x49x256xf32, #tpu.memory_space<vmem>>, vector<1x49x256xf32>
      %150 = vector.shape_cast %149 : vector<1x49x256xf32> to vector<49x256xf32>
      %cst_113 = arith.constant dense<0.000000e+00> : vector<1x256xf32>
      %151 = tpu.matmul %148, %150, %cst_113 {dimension_numbers = #tpu.dot_dimension_numbers<[1], [0], [0], [1], [0, 0, 1, 1], [], []>} : vector<1x49xf32>, vector<49x256xf32>, vector<1x256xf32> -> vector<1x256xf32>
      %152 = vector.extract_strided_slice %55 {offsets = [8, 0], sizes = [1, 49], strides = [1, 1]} : vector<16x49xf32> to vector<1x49xf32>
      %c24 = arith.constant 24 : index
      %c0_114 = arith.constant 0 : index
      %c0_115 = arith.constant 0 : index
      %153 = vector.load %arg17[%c24, %c0_114, %c0_115] : memref<32x49x256xf32, #tpu.memory_space<vmem>>, vector<1x49x256xf32>
      %154 = vector.shape_cast %153 : vector<1x49x256xf32> to vector<49x256xf32>
      %cst_116 = arith.constant dense<0.000000e+00> : vector<1x256xf32>
      %155 = tpu.matmul %152, %154, %cst_116 {dimension_numbers = #tpu.dot_dimension_numbers<[1], [0], [0], [1], [0, 0, 1, 1], [], []>} : vector<1x49xf32>, vector<49x256xf32>, vector<1x256xf32> -> vector<1x256xf32>
      %156 = vector.extract_strided_slice %55 {offsets = [9, 0], sizes = [1, 49], strides = [1, 1]} : vector<16x49xf32> to vector<1x49xf32>
      %c25 = arith.constant 25 : index
      %c0_117 = arith.constant 0 : index
      %c0_118 = arith.constant 0 : index
      %157 = vector.load %arg17[%c25, %c0_117, %c0_118] : memref<32x49x256xf32, #tpu.memory_space<vmem>>, vector<1x49x256xf32>
      %158 = vector.shape_cast %157 : vector<1x49x256xf32> to vector<49x256xf32>
      %cst_119 = arith.constant dense<0.000000e+00> : vector<1x256xf32>
      %159 = tpu.matmul %156, %158, %cst_119 {dimension_numbers = #tpu.dot_dimension_numbers<[1], [0], [0], [1], [0, 0, 1, 1], [], []>} : vector<1x49xf32>, vector<49x256xf32>, vector<1x256xf32> -> vector<1x256xf32>
      %160 = vector.extract_strided_slice %55 {offsets = [10, 0], sizes = [1, 49], strides = [1, 1]} : vector<16x49xf32> to vector<1x49xf32>
      %c26 = arith.constant 26 : index
      %c0_120 = arith.constant 0 : index
      %c0_121 = arith.constant 0 : index
      %161 = vector.load %arg17[%c26, %c0_120, %c0_121] : memref<32x49x256xf32, #tpu.memory_space<vmem>>, vector<1x49x256xf32>
      %162 = vector.shape_cast %161 : vector<1x49x256xf32> to vector<49x256xf32>
      %cst_122 = arith.constant dense<0.000000e+00> : vector<1x256xf32>
      %163 = tpu.matmul %160, %162, %cst_122 {dimension_numbers = #tpu.dot_dimension_numbers<[1], [0], [0], [1], [0, 0, 1, 1], [], []>} : vector<1x49xf32>, vector<49x256xf32>, vector<1x256xf32> -> vector<1x256xf32>
      %164 = vector.extract_strided_slice %55 {offsets = [11, 0], sizes = [1, 49], strides = [1, 1]} : vector<16x49xf32> to vector<1x49xf32>
      %c27 = arith.constant 27 : index
      %c0_123 = arith.constant 0 : index
      %c0_124 = arith.constant 0 : index
      %165 = vector.load %arg17[%c27, %c0_123, %c0_124] : memref<32x49x256xf32, #tpu.memory_space<vmem>>, vector<1x49x256xf32>
      %166 = vector.shape_cast %165 : vector<1x49x256xf32> to vector<49x256xf32>
      %cst_125 = arith.constant dense<0.000000e+00> : vector<1x256xf32>
      %167 = tpu.matmul %164, %166, %cst_125 {dimension_numbers = #tpu.dot_dimension_numbers<[1], [0], [0], [1], [0, 0, 1, 1], [], []>} : vector<1x49xf32>, vector<49x256xf32>, vector<1x256xf32> -> vector<1x256xf32>
      %168 = vector.extract_strided_slice %55 {offsets = [12, 0], sizes = [1, 49], strides = [1, 1]} : vector<16x49xf32> to vector<1x49xf32>
      %c28 = arith.constant 28 : index
      %c0_126 = arith.constant 0 : index
      %c0_127 = arith.constant 0 : index
      %169 = vector.load %arg17[%c28, %c0_126, %c0_127] : memref<32x49x256xf32, #tpu.memory_space<vmem>>, vector<1x49x256xf32>
      %170 = vector.shape_cast %169 : vector<1x49x256xf32> to vector<49x256xf32>
      %cst_128 = arith.constant dense<0.000000e+00> : vector<1x256xf32>
      %171 = tpu.matmul %168, %170, %cst_128 {dimension_numbers = #tpu.dot_dimension_numbers<[1], [0], [0], [1], [0, 0, 1, 1], [], []>} : vector<1x49xf32>, vector<49x256xf32>, vector<1x256xf32> -> vector<1x256xf32>
      %172 = vector.extract_strided_slice %55 {offsets = [13, 0], sizes = [1, 49], strides = [1, 1]} : vector<16x49xf32> to vector<1x49xf32>
      %c29 = arith.constant 29 : index
      %c0_129 = arith.constant 0 : index
      %c0_130 = arith.constant 0 : index
      %173 = vector.load %arg17[%c29, %c0_129, %c0_130] : memref<32x49x256xf32, #tpu.memory_space<vmem>>, vector<1x49x256xf32>
      %174 = vector.shape_cast %173 : vector<1x49x256xf32> to vector<49x256xf32>
      %cst_131 = arith.constant dense<0.000000e+00> : vector<1x256xf32>
      %175 = tpu.matmul %172, %174, %cst_131 {dimension_numbers = #tpu.dot_dimension_numbers<[1], [0], [0], [1], [0, 0, 1, 1], [], []>} : vector<1x49xf32>, vector<49x256xf32>, vector<1x256xf32> -> vector<1x256xf32>
      %176 = vector.extract_strided_slice %55 {offsets = [14, 0], sizes = [1, 49], strides = [1, 1]} : vector<16x49xf32> to vector<1x49xf32>
      %c30 = arith.constant 30 : index
      %c0_132 = arith.constant 0 : index
      %c0_133 = arith.constant 0 : index
      %177 = vector.load %arg17[%c30, %c0_132, %c0_133] : memref<32x49x256xf32, #tpu.memory_space<vmem>>, vector<1x49x256xf32>
      %178 = vector.shape_cast %177 : vector<1x49x256xf32> to vector<49x256xf32>
      %cst_134 = arith.constant dense<0.000000e+00> : vector<1x256xf32>
      %179 = tpu.matmul %176, %178, %cst_134 {dimension_numbers = #tpu.dot_dimension_numbers<[1], [0], [0], [1], [0, 0, 1, 1], [], []>} : vector<1x49xf32>, vector<49x256xf32>, vector<1x256xf32> -> vector<1x256xf32>
      %180 = vector.extract_strided_slice %55 {offsets = [15, 0], sizes = [1, 49], strides = [1, 1]} : vector<16x49xf32> to vector<1x49xf32>
      %c31 = arith.constant 31 : index
      %c0_135 = arith.constant 0 : index
      %c0_136 = arith.constant 0 : index
      %181 = vector.load %arg17[%c31, %c0_135, %c0_136] : memref<32x49x256xf32, #tpu.memory_space<vmem>>, vector<1x49x256xf32>
      %182 = vector.shape_cast %181 : vector<1x49x256xf32> to vector<49x256xf32>
      %cst_137 = arith.constant dense<0.000000e+00> : vector<1x256xf32>
      %183 = tpu.matmul %180, %182, %cst_137 {dimension_numbers = #tpu.dot_dimension_numbers<[1], [0], [0], [1], [0, 0, 1, 1], [], []>} : vector<1x49xf32>, vector<49x256xf32>, vector<1x256xf32> -> vector<1x256xf32>
      %184 = arith.addf %59, %63 : vector<1x256xf32>
      %185 = arith.addf %67, %71 : vector<1x256xf32>
      %186 = arith.addf %75, %79 : vector<1x256xf32>
      %187 = arith.addf %83, %87 : vector<1x256xf32>
      %188 = arith.addf %91, %95 : vector<1x256xf32>
      %189 = arith.addf %99, %103 : vector<1x256xf32>
      %190 = arith.addf %107, %111 : vector<1x256xf32>
      %191 = arith.addf %115, %119 : vector<1x256xf32>
      %192 = arith.addf %184, %185 : vector<1x256xf32>
      %193 = arith.addf %186, %187 : vector<1x256xf32>
      %194 = arith.addf %188, %189 : vector<1x256xf32>
      %195 = arith.addf %190, %191 : vector<1x256xf32>
      %196 = arith.addf %192, %193 : vector<1x256xf32>
      %197 = arith.addf %194, %195 : vector<1x256xf32>
      %198 = arith.addf %196, %197 : vector<1x256xf32>
      %c0_138 = arith.constant 0 : index
      %c0_139 = arith.constant 0 : index
      %199 = vector.load %arg4[%c0_138, %c0_139] : memref<3x256xf32, #tpu.memory_space<vmem>>, vector<1x256xf32>
      %200 = arith.addf %198, %199 : vector<1x256xf32>
      %201 = arith.addf %123, %127 : vector<1x256xf32>
      %202 = arith.addf %131, %135 : vector<1x256xf32>
      %203 = arith.addf %139, %143 : vector<1x256xf32>
      %204 = arith.addf %147, %151 : vector<1x256xf32>
      %205 = arith.addf %155, %159 : vector<1x256xf32>
      %206 = arith.addf %163, %167 : vector<1x256xf32>
      %207 = arith.addf %171, %175 : vector<1x256xf32>
      %208 = arith.addf %179, %183 : vector<1x256xf32>
      %209 = arith.addf %201, %202 : vector<1x256xf32>
      %210 = arith.addf %203, %204 : vector<1x256xf32>
      %211 = arith.addf %205, %206 : vector<1x256xf32>
      %212 = arith.addf %207, %208 : vector<1x256xf32>
      %213 = arith.addf %209, %210 : vector<1x256xf32>
      %214 = arith.addf %211, %212 : vector<1x256xf32>
      %215 = arith.addf %213, %214 : vector<1x256xf32>
      %c1_140 = arith.constant 1 : index
      %c0_141 = arith.constant 0 : index
      %216 = vector.load %arg4[%c1_140, %c0_141] : memref<3x256xf32, #tpu.memory_space<vmem>>, vector<1x256xf32>
      %217 = arith.addf %215, %216 : vector<1x256xf32>
      %c2_142 = arith.constant 2 : index
      %c0_143 = arith.constant 0 : index
      %218 = vector.load %arg4[%c2_142, %c0_143] : memref<3x256xf32, #tpu.memory_space<vmem>>, vector<1x256xf32>
      %cst_144 = arith.constant 0.000000e+00 : f32
      %219 = vector.broadcast %cst_144 : f32 to vector<1x256xf32>
      %220 = arith.cmpf oge, %200, %219 : vector<1x256xf32>
      %221 = arith.mulf %218, %200 : vector<1x256xf32>
      %222 = arith.select %220, %200, %221 : vector<1x256xi1>, vector<1x256xf32>
      %cst_145 = arith.constant 0.000000e+00 : f32
      %223 = vector.broadcast %cst_145 : f32 to vector<1x256xf32>
      %224 = arith.cmpf oge, %217, %223 : vector<1x256xf32>
      %225 = arith.mulf %218, %217 : vector<1x256xf32>
      %226 = arith.select %224, %217, %225 : vector<1x256xi1>, vector<1x256xf32>
      %c0_146 = arith.constant 0 : index
      %c0_147 = arith.constant 0 : index
      %227 = vector.load %arg5[%c0_146, %c0_147] : memref<512x64xf32, #tpu.memory_space<vmem>>, vector<256x64xf32>
      %cst_148 = arith.constant dense<0.000000e+00> : vector<1x64xf32>
      %228 = tpu.matmul %222, %227, %cst_148 {dimension_numbers = #tpu.dot_dimension_numbers<[1], [0], [0], [1], [0, 0, 1, 1], [], []>} : vector<1x256xf32>, vector<256x64xf32>, vector<1x64xf32> -> vector<1x64xf32>
      %c256 = arith.constant 256 : index
      %c0_149 = arith.constant 0 : index
      %229 = vector.load %arg5[%c256, %c0_149] : memref<512x64xf32, #tpu.memory_space<vmem>>, vector<256x64xf32>
      %cst_150 = arith.constant dense<0.000000e+00> : vector<1x64xf32>
      %230 = tpu.matmul %226, %229, %cst_150 {dimension_numbers = #tpu.dot_dimension_numbers<[1], [0], [0], [1], [0, 0, 1, 1], [], []>} : vector<1x256xf32>, vector<256x64xf32>, vector<1x64xf32> -> vector<1x64xf32>
      %231 = arith.addf %228, %230 : vector<1x64xf32>
      %c0_151 = arith.constant 0 : index
      %c0_152 = arith.constant 0 : index
      %232 = vector.load %arg6[%c0_151, %c0_152] : memref<2x64xf32, #tpu.memory_space<vmem>>, vector<1x64xf32>
      %233 = arith.addf %231, %232 : vector<1x64xf32>
      %c1_153 = arith.constant 1 : index
      %c0_154 = arith.constant 0 : index
      %234 = vector.load %arg6[%c1_153, %c0_154] : memref<2x64xf32, #tpu.memory_space<vmem>>, vector<1x64xf32>
      %cst_155 = arith.constant 0.000000e+00 : f32
      %235 = vector.broadcast %cst_155 : f32 to vector<1x64xf32>
      %236 = arith.cmpf oge, %233, %235 : vector<1x64xf32>
      %237 = arith.mulf %234, %233 : vector<1x64xf32>
      %238 = arith.select %236, %233, %237 : vector<1x64xi1>, vector<1x64xf32>
      %c0_156 = arith.constant 0 : index
      %c0_157 = arith.constant 0 : index
      %239 = vector.load %arg7[%c0_156, %c0_157] : memref<64x4xf32, #tpu.memory_space<vmem>>, vector<64x4xf32>
      %cst_158 = arith.constant dense<0.000000e+00> : vector<1x4xf32>
      %240 = tpu.matmul %238, %239, %cst_158 {dimension_numbers = #tpu.dot_dimension_numbers<[1], [0], [0], [1], [0, 0, 1, 1], [], []>} : vector<1x64xf32>, vector<64x4xf32>, vector<1x4xf32> -> vector<1x4xf32>
      %c0_159 = arith.constant 0 : index
      %c0_160 = arith.constant 0 : index
      %241 = vector.load %arg8[%c0_159, %c0_160] : memref<1x4xf32, #tpu.memory_space<vmem>>, vector<1x4xf32>
      %242 = arith.addf %240, %241 : vector<1x4xf32>
      %c0_161 = arith.constant 0 : index
      %c0_162 = arith.constant 0 : index
      %243 = vector.load %arg12[%c0_161, %c0_162] : memref<1x4xf32, #tpu.memory_space<vmem>>, vector<1x4xf32>
      tpu.vector_store %arg12[%c0_161, %c0_162], %242 {strides = array<i32>} : memref<1x4xf32, #tpu.memory_space<vmem>>, vector<1x4xf32>,
    } else {
    }
    return
  }
  func.func @transform_0(%arg0: i32) -> (i32, i32, i32) {
    %c0_i32 = arith.constant 0 : i32
    %c0_i32_0 = arith.constant 0 : i32
    %c0_i32_1 = arith.constant 0 : i32
    return %arg0, %c0_i32, %c0_i32_0 : i32, i32, i32
  }
  func.func @transform_1(%arg0: i32) -> (i32, i32) {
    %c0_i32 = arith.constant 0 : i32
    %c0_i32_0 = arith.constant 0 : i32
    %c0_i32_1 = arith.constant 0 : i32
    return %c0_i32, %c0_i32_0 : i32, i32
  }
  func.func @transform_2(%arg0: i32) -> (i32, i32) {
    %c0_i32 = arith.constant 0 : i32
    %c0_i32_0 = arith.constant 0 : i32
    %c0_i32_1 = arith.constant 0 : i32
    return %c0_i32, %c0_i32_0 : i32, i32
  }
  func.func @transform_3(%arg0: i32) -> (i32, i32) {
    %c0_i32 = arith.constant 0 : i32
    %c0_i32_0 = arith.constant 0 : i32
    %c0_i32_1 = arith.constant 0 : i32
    return %c0_i32, %c0_i32_0 : i32, i32
  }
  func.func @transform_4(%arg0: i32) -> (i32, i32) {
    %c0_i32 = arith.constant 0 : i32
    %c0_i32_0 = arith.constant 0 : i32
    %c0_i32_1 = arith.constant 0 : i32
    return %c0_i32, %c0_i32_0 : i32, i32
  }
  func.func @transform_5(%arg0: i32) -> (i32, i32) {
    %c0_i32 = arith.constant 0 : i32
    %c0_i32_0 = arith.constant 0 : i32
    %c0_i32_1 = arith.constant 0 : i32
    return %c0_i32, %c0_i32_0 : i32, i32
  }
  func.func @transform_6(%arg0: i32) -> (i32, i32) {
    %c0_i32 = arith.constant 0 : i32
    %c0_i32_0 = arith.constant 0 : i32
    %c0_i32_1 = arith.constant 0 : i32
    return %c0_i32, %c0_i32_0 : i32, i32
  }
  func.func @transform_7(%arg0: i32) -> (i32, i32) {
    %c0_i32 = arith.constant 0 : i32
    %c0_i32_0 = arith.constant 0 : i32
    %c0_i32_1 = arith.constant 0 : i32
    return %c0_i32, %c0_i32_0 : i32, i32
  }
  func.func @transform_11(%arg0: i32) -> (i32, i32) {
    %c0_i32 = arith.constant 0 : i32
    %c0_i32_0 = arith.constant 0 : i32
    %c0_i32_1 = arith.constant 0 : i32
    return %c0_i32, %c0_i32_0 : i32, i32
  }
}

</mosaic_0001>

<llo_original>
// kernel: tpu_custom_call.1
$region0: #{tpu_custom_call.1}
  #allocation0 [shape = 'u32[]', space=smem, size = 0x4, offset = 0x4, fixed_abs, tag = 'smem constant byte address 0x4 - core index']
  #allocation1 [shape = 'u32[144,128]{1,0:T(1,128)}', space=vmem, size = 0x12000, scoped, tag = 'internal scratch']
  #allocation2 [shape = 'f32[49,256]{1,0:T(8,128)}', space=vmem, size = 0xe000, scoped, tag = 'scratch operand']
  #allocation3 [shape = 'f32[49,256]{1,0:T(8,128)}', space=vmem, size = 0xe000, scoped, tag = 'scratch operand']
  #allocation4 [shape = 'f32[196,256]{1,0:T(8,128)}', space=vmem, size = 0x32000, scoped, tag = 'scratch operand']
  #allocation5 [shape = 'f32[196,49]{1,0:T(8,128)}', space=vmem, size = 0x19000, scoped, tag = 'scratch operand']
  #allocation6 [shape = 'f32[32,49,256]{2,1,0:T(8,128)}', space=vmem, size = 0x1c0000, scoped, tag = 'scratch operand']
  #allocation7 [shape = 's32[3]{0}', space=sflag, size = 0xc, scoped, tag = 'scratch operand']
  #allocation10 [shape = 's32[]', space=sflag, size = 0x4, offset = 0, fixed_abs, tag = 'sflag constant byte address 0x0 - dummy sync flag']
  #allocation11 [shape = 's32[]', space=sflag, size = 0x4, offset = 0, fixed_abs, tag = 'sflag constant byte address 0x0 - dummy sync flag']
  #allocation12 [shape = 's32[]', space=sflag, size = 0x4, offset = 0, fixed_abs, tag = 'sflag constant byte address 0x0 - dummy sync flag']
  %s0 = inlined_call_operand.vmem [shape: f32[24,49,256], index: 0, kind: input, shape index: {}]
  %s1 = inlined_call_operand.vmem [shape: f32[32,256], index: 1, kind: input, shape index: {}]
  %s2 = inlined_call_operand.vmem [shape: f32[32,1], index: 2, kind: input, shape index: {}]
  %s3 = inlined_call_operand.vmem [shape: f32[3,256], index: 3, kind: input, shape index: {}]
  %s4 = inlined_call_operand.vmem [shape: f32[512,64], index: 4, kind: input, shape index: {}]
  %s5 = inlined_call_operand.vmem [shape: f32[2,64], index: 5, kind: input, shape index: {}]
  %s6 = inlined_call_operand.vmem [shape: f32[64,4], index: 6, kind: input, shape index: {}]
  %s7 = inlined_call_operand.vmem [shape: f32[1,4], index: 7, kind: input, shape index: {}]
  %s8 = inlined_call_operand.vmem [shape: f32[196,256], index: 8, kind: input, shape index: {}]
  %s9 = inlined_call_operand.vmem [shape: f32[196,49], index: 9, kind: input, shape index: {}]
  %s10 = inlined_call_operand.vmem [shape: f32[32,49,256], index: 10, kind: input, shape index: {}]
  %s11 = inlined_call_operand.hbm [shape: f32[1,4], index: 11, kind: output, shape index: {}]
  %s12 = sld [smem:[#allocation0]]
  $region182: #{tpu_custom_call.1} parent=0
    _
  %s14 = ssub.s32 1, %s12
  %s15 = scalar_select 0, %s14, %s12
  $region1: #{tpu_custom_call.1} parent=0
    #allocation8 [shape = 'u8[512]{0}', space=vmem, size = 0x400, scoped, tag = 'output window, operand 0, single buffered']
    #allocation9 [shape = 's32[2]{0}', space=sflag, size = 0x8, scoped, tag = 'scoped memory for tpu_custom_call.1']
    %16 = vsyncpa [#allocation9], 0
    loop: start=0, step=1, limit=5
    $region2: #{tpu_custom_call.1} parent=1 // loop_pre_header
      _
    $region3: #{tpu_custom_call.1} parent=1 // loop_header
      %s18 = sphi 0, %s22
      %p19 = scmp.ge.s32.totalorder %s18, 5
      %s28 = sphi 0, %s30
      %s31 = sphi 0, %s28
      %s32 = sphi 0, %s31
      %s48 = sphi 0, %s32
      %s52 = sphi 0, %s52
      %s54 = sphi 0, %s52
      %s55 = sphi 0, %s54
      %s69 = sphi 0, %s55
      %s73 = sphi 0, %s73
      %s75 = sphi 0, %s73
      %s76 = sphi 0, %s75
      %s90 = sphi 0, %s76
      %s94 = sphi 0, %s94
      %s96 = sphi 0, %s94
      %s97 = sphi 0, %s96
      %s111 = sphi 0, %s97
      %s115 = sphi 0, %s115
      %s117 = sphi 0, %s115
      %s118 = sphi 0, %s117
      %s132 = sphi 0, %s118
      %s136 = sphi 0, %s136
      %s138 = sphi 0, %s136
      %s139 = sphi 0, %s138
      %s153 = sphi 0, %s139
      %s157 = sphi 0, %s157
      %s159 = sphi 0, %s157
      %s160 = sphi 0, %s159
      %s174 = sphi 0, %s160
      %s178 = sphi 0, %s178
      %s180 = sphi 0, %s178
      %s181 = sphi 0, %s180
      %s195 = sphi 0, %s181
      %s199 = sphi 0, %s199
      %s201 = sphi 0, %s199
      %s202 = sphi 0, %s201
      %s216 = sphi 0, %s202
    $region4: #{tpu_custom_call.1} parent=1 // loop_header_branch
      %21 = sbr.rel (%p19) target = $region8
    $region5: #{tpu_custom_call.1} parent=1 // loop_body
      %s23 = ssub.s32 %s18, 1
      %s24 = ssub.s32 %s18, 2
      %s25 = sadd.s32 %s18, 1
      %s26 = ssub.s32 %s18, %s25
      %p27 = scmp.eq.s32.totalorder %s26, 0
      %s29 = sadd.s32 %s28, 1
      %s30 = scalar_select %p27, %s28, %s29
      %p33 = pneg %p27
      %p34 = scmp.eq.s32.totalorder %s18, 2
      %p35 = por %p33, %p34
      %p36 = scmp.ne.s32.totalorder %s28, %s31
      %p37 = scmp.eq.s32.totalorder %s18, 0
      %p38 = por %p36, %p37
      %p39 = scmp.ne.s32.totalorder %s28, %s31
      %p40 = scmp.eq.s32.totalorder %s23, 2
      %p41 = por %p39, %p40
      %p42 = scmp.ne.s32.totalorder %s31, %s32
      %p43 = scmp.eq.s32.totalorder %s23, 0
      %p44 = por %p42, %p43
      %p45 = scmp.ne.s32.totalorder %s31, %s32
      %p46 = scmp.eq.s32.totalorder %s24, 2
      %p47 = por %p45, %p46
      %p49 = scmp.ne.s32.totalorder %s32, %s48
      %p50 = scmp.eq.s32.totalorder %s24, 0
      %p51 = por %p49, %p50
      %s53 = sadd.s32 %s52, 1
      %p56 = scmp.eq.s32.totalorder %s18, 2
      %p57 = scmp.ne.s32.totalorder %s52, %s54
      %p58 = scmp.eq.s32.totalorder %s18, 0
      %p59 = por %p57, %p58
      %p60 = scmp.ne.s32.totalorder %s52, %s54
      %p61 = scmp.eq.s32.totalorder %s23, 2
      %p62 = por %p60, %p61
      %p63 = scmp.ne.s32.totalorder %s54, %s55
      %p64 = scmp.eq.s32.totalorder %s23, 0
      %p65 = por %p63, %p64
      %p66 = scmp.ne.s32.totalorder %s54, %s55
      %p67 = scmp.eq.s32.totalorder %s24, 2
      %p68 = por %p66, %p67
      %p70 = scmp.ne.s32.totalorder %s55, %s69
      %p71 = scmp.eq.s32.totalorder %s24, 0
      %p72 = por %p70, %p71
      %s74 = sadd.s32 %s73, 1
      %p77 = scmp.eq.s32.totalorder %s18, 2
      %p78 = scmp.ne.s32.totalorder %s73, %s75
      %p79 = scmp.eq.s32.totalorder %s18, 0
      %p80 = por %p78, %p79
      %p81 = scmp.ne.s32.totalorder %s73, %s75
      %p82 = scmp.eq.s32.totalorder %s23, 2
      %p83 = por %p81, %p82
      %p84 = scmp.ne.s32.totalorder %s75, %s76
      %p85 = scmp.eq.s32.totalorder %s23, 0
      %p86 = por %p84, %p85
      %p87 = scmp.ne.s32.totalorder %s75, %s76
      %p88 = scmp.eq.s32.totalorder %s24, 2
      %p89 = por %p87, %p88
      %p91 = scmp.ne.s32.totalorder %s76, %s90
      %p92 = scmp.eq.s32.totalorder %s24, 0
      %p93 = por %p91, %p92
      %s95 = sadd.s32 %s94, 1
      %p98 = scmp.eq.s32.totalorder %s18, 2
      %p99 = scmp.ne.s32.totalorder %s94, %s96
      %p100 = scmp.eq.s32.totalorder %s18, 0
      %p101 = por %p99, %p100
      %p102 = scmp.ne.s32.totalorder %s94, %s96
      %p103 = scmp.eq.s32.totalorder %s23, 2
      %p104 = por %p102, %p103
      %p105 = scmp.ne.s32.totalorder %s96, %s97
      %p106 = scmp.eq.s32.totalorder %s23, 0
      %p107 = por %p105, %p106
      %p108 = scmp.ne.s32.totalorder %s96, %s97
      %p109 = scmp.eq.s32.totalorder %s24, 2
      %p110 = por %p108, %p109
      %p112 = scmp.ne.s32.totalorder %s97, %s111
      %p113 = scmp.eq.s32.totalorder %s24, 0
      %p114 = por %p112, %p113
      %s116 = sadd.s32 %s115, 1
      %p119 = scmp.eq.s32.totalorder %s18, 2
      %p120 = scmp.ne.s32.totalorder %s115, %s117
      %p121 = scmp.eq.s32.totalorder %s18, 0
      %p122 = por %p120, %p121
      %p123 = scmp.ne.s32.totalorder %s115, %s117
      %p124 = scmp.eq.s32.totalorder %s23, 2
      %p125 = por %p123, %p124
      %p126 = scmp.ne.s32.totalorder %s117, %s118
      %p127 = scmp.eq.s32.totalorder %s23, 0
      %p128 = por %p126, %p127
      %p129 = scmp.ne.s32.totalorder %s117, %s118
      %p130 = scmp.eq.s32.totalorder %s24, 2
      %p131 = por %p129, %p130
      %p133 = scmp.ne.s32.totalorder %s118, %s132
      %p134 = scmp.eq.s32.totalorder %s24, 0
      %p135 = por %p133, %p134
      %s137 = sadd.s32 %s136, 1
      %p140 = scmp.eq.s32.totalorder %s18, 2
      %p141 = scmp.ne.s32.totalorder %s136, %s138
      %p142 = scmp.eq.s32.totalorder %s18, 0
      %p143 = por %p141, %p142
      %p144 = scmp.ne.s32.totalorder %s136, %s138
      %p145 = scmp.eq.s32.totalorder %s23, 2
      %p146 = por %p144, %p145
      %p147 = scmp.ne.s32.totalorder %s138, %s139
      %p148 = scmp.eq.s32.totalorder %s23, 0
      %p149 = por %p147, %p148
      %p150 = scmp.ne.s32.totalorder %s138, %s139
      %p151 = scmp.eq.s32.totalorder %s24, 2
      %p152 = por %p150, %p151
      %p154 = scmp.ne.s32.totalorder %s139, %s153
      %p155 = scmp.eq.s32.totalorder %s24, 0
      %p156 = por %p154, %p155
      %s158 = sadd.s32 %s157, 1
      %p161 = scmp.eq.s32.totalorder %s18, 2
      %p162 = scmp.ne.s32.totalorder %s157, %s159
      %p163 = scmp.eq.s32.totalorder %s18, 0
      %p164 = por %p162, %p163
      %p165 = scmp.ne.s32.totalorder %s157, %s159
      %p166 = scmp.eq.s32.totalorder %s23, 2
      %p167 = por %p165, %p166
      %p168 = scmp.ne.s32.totalorder %s159, %s160
      %p169 = scmp.eq.s32.totalorder %s23, 0
      %p170 = por %p168, %p169
      %p171 = scmp.ne.s32.totalorder %s159, %s160
      %p172 = scmp.eq.s32.totalorder %s24, 2
      %p173 = por %p171, %p172
      %p175 = scmp.ne.s32.totalorder %s160, %s174
      %p176 = scmp.eq.s32.totalorder %s24, 0
      %p177 = por %p175, %p176
      %s179 = sadd.s32 %s178, 1
      %p182 = scmp.eq.s32.totalorder %s18, 2
      %p183 = scmp.ne.s32.totalorder %s178, %s180
      %p184 = scmp.eq.s32.totalorder %s18, 0
      %p185 = por %p183, %p184
      %p186 = scmp.ne.s32.totalorder %s178, %s180
      %p187 = scmp.eq.s32.totalorder %s23, 2
      %p188 = por %p186, %p187
      %p189 = scmp.ne.s32.totalorder %s180, %s181
      %p190 = scmp.eq.s32.totalorder %s23, 0
      %p191 = por %p189, %p190
      %p192 = scmp.ne.s32.totalorder %s180, %s181
      %p193 = scmp.eq.s32.totalorder %s24, 2
      %p194 = por %p192, %p193
      %p196 = scmp.ne.s32.totalorder %s181, %s195
      %p197 = scmp.eq.s32.totalorder %s24, 0
      %p198 = por %p196, %p197
      %s200 = sadd.s32 %s199, 1
      %p203 = scmp.eq.s32.totalorder %s18, 2
      %p204 = scmp.ne.s32.totalorder %s199, %s201
      %p205 = scmp.eq.s32.totalorder %s18, 0
      %p206 = por %p204, %p205
      %p207 = scmp.ne.s32.totalorder %s199, %s201
      %p208 = scmp.eq.s32.totalorder %s23, 2
      %p209 = por %p207, %p208
      %p210 = scmp.ne.s32.totalorder %s201, %s202
      %p211 = scmp.eq.s32.totalorder %s23, 0
      %p212 = por %p210, %p211
      %p213 = scmp.ne.s32.totalorder %s201, %s202
      %p214 = scmp.eq.s32.totalorder %s24, 2
      %p215 = por %p213, %p214
      %p217 = scmp.ne.s32.totalorder %s202, %s216
      %p218 = scmp.eq.s32.totalorder %s24, 0
      %p219 = por %p217, %p218
      %p220 = scmp.le.s32.totalorder 1, %s18
      %p221 = scmp.lt.s32.totalorder %s18, 4
      %p222 = pnand %p220, %p221
      %p223 = pneg %p222
      // Predicated region
      $region9: #{tpu_custom_call.1} parent=5 // pred_check
        _
      $region10: #{tpu_custom_call.1} parent=5 // pred_check_branch
        %225 = sbr.rel (%p222) target = $region12
      $region11: #{tpu_custom_call.1} parent=5 // pred_region
        %s226 = ssub.s32 %s18, 1
        // Predicated region
        $region13: #{tpu_custom_call.1} parent=11 // pred_check
          %p227 = pneg %p65
        $region14: #{tpu_custom_call.1} parent=11 // pred_check_branch
          %229 = sbr.rel (%p227) target = $region16
        $region15: #{tpu_custom_call.1} parent=11 // pred_region
          _
        $region16: #{tpu_custom_call.1} parent=11 // pred_fallthru
          _
        // Predicated region
        $region17: #{tpu_custom_call.1} parent=11 // pred_check
          %p230 = pneg %p86
        $region18: #{tpu_custom_call.1} parent=11 // pred_check_branch
          %232 = sbr.rel (%p230) target = $region20
        $region19: #{tpu_custom_call.1} parent=11 // pred_region
          _
        $region20: #{tpu_custom_call.1} parent=11 // pred_fallthru
          _
        // Predicated region
        $region21: #{tpu_custom_call.1} parent=11 // pred_check
          %p233 = pneg %p107
        $region22: #{tpu_custom_call.1} parent=11 // pred_check_branch
          %235 = sbr.rel (%p233) target = $region24
        $region23: #{tpu_custom_call.1} parent=11 // pred_region
          _
        $region24: #{tpu_custom_call.1} parent=11 // pred_fallthru
          _
        // Predicated region
        $region25: #{tpu_custom_call.1} parent=11 // pred_check
          %p236 = pneg %p128
        $region26: #{tpu_custom_call.1} parent=11 // pred_check_branch
          %238 = sbr.rel (%p236) target = $region28
        $region27: #{tpu_custom_call.1} parent=11 // pred_region
          _
        $region28: #{tpu_custom_call.1} parent=11 // pred_fallthru
          _
        // Predicated region
        $region29: #{tpu_custom_call.1} parent=11 // pred_check
          %p239 = pneg %p149
        $region30: #{tpu_custom_call.1} parent=11 // pred_check_branch
          %241 = sbr.rel (%p239) target = $region32
        $region31: #{tpu_custom_call.1} parent=11 // pred_region
          _
        $region32: #{tpu_custom_call.1} parent=11 // pred_fallthru
          _
        // Predicated region
        $region33: #{tpu_custom_call.1} parent=11 // pred_check
          %p242 = pneg %p170
        $region34: #{tpu_custom_call.1} parent=11 // pred_check_branch
          %244 = sbr.rel (%p242) target = $region36
        $region35: #{tpu_custom_call.1} parent=11 // pred_region
          _
        $region36: #{tpu_custom_call.1} parent=11 // pred_fallthru
          _
        // Predicated region
        $region37: #{tpu_custom_call.1} parent=11 // pred_check
          %p245 = pneg %p191
        $region38: #{tpu_custom_call.1} parent=11 // pred_check_branch
          %247 = sbr.rel (%p245) target = $region40
        $region39: #{tpu_custom_call.1} parent=11 // pred_region
          _
        $region40: #{tpu_custom_call.1} parent=11 // pred_fallthru
          _
      $region12: #{tpu_custom_call.1} parent=5 // pred_fallthru
        _
      %p248 = scmp.lt.s32.totalorder %s18, 3
      // Predicated region
      $region41: #{tpu_custom_call.1} parent=5 // pred_check
        %p249 = pneg %p248
      $region42: #{tpu_custom_call.1} parent=5 // pred_check_branch
        %251 = sbr.rel (%p249) target = $region44
      $region43: #{tpu_custom_call.1} parent=5 // pred_region
        // Predicated region
        $region45: #{tpu_custom_call.1} parent=43 // pred_check
          %p252 = pneg %p38
        $region46: #{tpu_custom_call.1} parent=43 // pred_check_branch
          %254 = sbr.rel (%p252) target = $region48
        $region47: #{tpu_custom_call.1} parent=43 // pred_region
          %s255 = smul.u32 8, %s18
          %p256 = scmp.lt.s32.totalorder %s255, 23
          %s257 = scalar_select %p256, %s255, 23
          %s258 = smul.addr %s257, 14
          %s259 = smul.addr %s258, 8
          %s260 = scalar_lea.vmem %s0, %s259
          %s261 = smul.u32 8, %s18
        $region48: #{tpu_custom_call.1} parent=43 // pred_fallthru
          _
      $region44: #{tpu_custom_call.1} parent=5 // pred_fallthru
        _
      %p262 = scmp.le.s32.totalorder 1, %s18
      %p263 = scmp.lt.s32.totalorder %s18, 4
      %p264 = pnand %p262, %p263
      %p265 = pneg %p264
      // Predicated region
      $region49: #{tpu_custom_call.1} parent=5 // pred_check
        _
      $region50: #{tpu_custom_call.1} parent=5 // pred_check_branch
        %267 = sbr.rel (%p264) target = $region52
      $region51: #{tpu_custom_call.1} parent=5 // pred_region
        %s268 = ssub.s32 %s18, 1
        %s269 = smul.u32 8, %s23
        %p270 = scmp.lt.s32.totalorder %s269, 23
        %s271 = scalar_select %p270, %s269, 23
        %s272 = smul.addr %s271, 14
        %s273 = smul.addr %s272, 8
        %s274 = scalar_lea.vmem %s0, %s273
        %p275 = pneg %p44
        %p276 = pneg %p41
        %p277 = pneg %p65
        %p278 = pneg %p62
        %p279 = pneg %p86
        %p280 = pneg %p83
        %p281 = pneg %p107
        %p282 = pneg %p104
        %p283 = pneg %p128
        %p284 = pneg %p125
        %p285 = pneg %p149
        %p286 = pneg %p146
        %p287 = pneg %p170
        %p288 = pneg %p167
        %p289 = pneg %p191
        %p290 = pneg %p188
        %p291 = pneg %p212
        %p292 = pneg %p209
        %s293 = smul.u32 8, %s23
        %p294 = scmp.lt.s32.totalorder %s293, 23
        %s295 = scalar_select %p294, %s293, 23
        %s296 = smul.addr %s295, 14
        %s297 = smul.addr %s296, 8
        %s298 = scalar_lea.vmem %s0, %s297
        %s299 = smul.u32 8, %s23
        %p300 = scmp.eq.s32.totalorder %s23, 0
        // Predicated region
        $region53: #{tpu_custom_call.1} parent=51 // pred_check
          %p301 = pneg %p300
        $region54: #{tpu_custom_call.1} parent=51 // pred_check_branch
          %303 = sbr.rel (%p301) target = $region56
        $region55: #{tpu_custom_call.1} parent=51 // pred_region
          %304 = vst [vmem:[#allocation2] sm:$0xff] 0.0
          %305 = vst [vmem:[#allocation2 + $0x8] sm:$0xff] 0.0
          %306 = vst [vmem:[#allocation2 + $0x10] sm:$0xff] 0.0
          %307 = vst [vmem:[#allocation2 + $0x18] sm:$0xff] 0.0
          %308 = vst [vmem:[#allocation2 + $0x20] sm:$0xff] 0.0
          %309 = vst [vmem:[#allocation2 + $0x28] sm:$0xff] 0.0
          %310 = vst [vmem:[#allocation2 + $0x30] sm:$0xff] 0.0
          %311 = vst [vmem:[#allocation2 + $0x38] sm:$0xff] 0.0
          %312 = vst [vmem:[#allocation2 + $0x40] sm:$0xff] 0.0
          %313 = vst [vmem:[#allocation2 + $0x48] sm:$0xff] 0.0
          %314 = vst [vmem:[#allocation2 + $0x50] sm:$0xff] 0.0
          %315 = vst [vmem:[#allocation2 + $0x58] sm:$0xff] 0.0
          %316 = vst [vmem:[#allocation2 + $0x60] sm:$0x1] 0.0
          %317 = vst [vmem:[#allocation2 + $0x68] sm:$0x1] 0.0
          %318 = vst [vmem:[#allocation3] sm:$0xff] 0.0
          %319 = vst [vmem:[#allocation3 + $0x8] sm:$0xff] 0.0
          %320 = vst [vmem:[#allocation3 + $0x10] sm:$0xff] 0.0
          %321 = vst [vmem:[#allocation3 + $0x18] sm:$0xff] 0.0
          %322 = vst [vmem:[#allocation3 + $0x20] sm:$0xff] 0.0
          %323 = vst [vmem:[#allocation3 + $0x28] sm:$0xff] 0.0
          %324 = vst [vmem:[#allocation3 + $0x30] sm:$0xff] 0.0
          %325 = vst [vmem:[#allocation3 + $0x38] sm:$0xff] 0.0
          %326 = vst [vmem:[#allocation3 + $0x40] sm:$0xff] 0.0
          %327 = vst [vmem:[#allocation3 + $0x48] sm:$0xff] 0.0
          %328 = vst [vmem:[#allocation3 + $0x50] sm:$0xff] 0.0
          %329 = vst [vmem:[#allocation3 + $0x58] sm:$0xff] 0.0
          %330 = vst [vmem:[#allocation3 + $0x60] sm:$0x1] 0.0
          %331 = vst [vmem:[#allocation3 + $0x68] sm:$0x1] 0.0
        $region56: #{tpu_custom_call.1} parent=51 // pred_fallthru
          _
        %v332 = vld [vmem:[%s298] sm:$0xff]
        %v333 = vld [vmem:[%s298 + $0x8] sm:$0xff]
        %v334 = vld [vmem:[%s298 + $0x10] sm:$0xff]
        %v335 = vld [vmem:[%s298 + $0x18] sm:$0xff]
        %v336 = vld [vmem:[%s298 + $0x20] sm:$0xff]
        %v337 = vld [vmem:[%s298 + $0x28] sm:$0xff]
        %v338 = vld [vmem:[%s298 + $0x30] sm:$0xff]
        %v339 = vld [vmem:[%s298 + $0x38] sm:$0xff]
        %v340 = vld [vmem:[%s298 + $0x40] sm:$0xff]
        %v341 = vld [vmem:[%s298 + $0x48] sm:$0xff]
        %v342 = vld [vmem:[%s298 + $0x50] sm:$0xff]
        %v343 = vld [vmem:[%s298 + $0x58] sm:$0xff]
        %v344 = vld [vmem:[%s298 + $0x60] sm:$0x1]
        %v345 = vld [vmem:[%s298 + $0x68] sm:$0x1]
        %v346 = vld [vmem:[%s298 + $0x70] sm:$0xff]
        %v347 = vld [vmem:[%s298 + $0x78] sm:$0xff]
        %v348 = vld [vmem:[%s298 + $0x80] sm:$0xff]
        %v349 = vld [vmem:[%s298 + $0x88] sm:$0xff]
        %v350 = vld [vmem:[%s298 + $0x90] sm:$0xff]
        %v351 = vld [vmem:[%s298 + $0x98] sm:$0xff]
        %v352 = vld [vmem:[%s298 + $0xa0] sm:$0xff]
        %v353 = vld [vmem:[%s298 + $0xa8] sm:$0xff]
        %v354 = vld [vmem:[%s298 + $0xb0] sm:$0xff]
        %v355 = vld [vmem:[%s298 + $0xb8] sm:$0xff]
        %v356 = vld [vmem:[%s298 + $0xc0] sm:$0xff]
        %v357 = vld [vmem:[%s298 + $0xc8] sm:$0xff]
        %v358 = vld [vmem:[%s298 + $0xd0] sm:$0x1]
        %v359 = vld [vmem:[%s298 + $0xd8] sm:$0x1]
        %v360 = vld [vmem:[%s298 + $0xe0] sm:$0xff]
        %v361 = vld [vmem:[%s298 + $0xe8] sm:$0xff]
        %v362 = vld [vmem:[%s298 + $0xf0] sm:$0xff]
        %v363 = vld [vmem:[%s298 + $0xf8] sm:$0xff]
        %v364 = vld [vmem:[%s298 + $0x100] sm:$0xff]
        %v365 = vld [vmem:[%s298 + $0x108] sm:$0xff]
        %v366 = vld [vmem:[%s298 + $0x110] sm:$0xff]
        %v367 = vld [vmem:[%s298 + $0x118] sm:$0xff]
        %v368 = vld [vmem:[%s298 + $0x120] sm:$0xff]
        %v369 = vld [vmem:[%s298 + $0x128] sm:$0xff]
        %v370 = vld [vmem:[%s298 + $0x130] sm:$0xff]
        %v371 = vld [vmem:[%s298 + $0x138] sm:$0xff]
        %v372 = vld [vmem:[%s298 + $0x140] sm:$0x1]
        %v373 = vld [vmem:[%s298 + $0x148] sm:$0x1]
        %v374 = vld [vmem:[%s298 + $0x150] sm:$0xff]
        %v375 = vld [vmem:[%s298 + $0x158] sm:$0xff]
        %v376 = vld [vmem:[%s298 + $0x160] sm:$0xff]
        %v377 = vld [vmem:[%s298 + $0x168] sm:$0xff]
        %v378 = vld [vmem:[%s298 + $0x170] sm:$0xff]
        %v379 = vld [vmem:[%s298 + $0x178] sm:$0xff]
        %v380 = vld [vmem:[%s298 + $0x180] sm:$0xff]
        %v381 = vld [vmem:[%s298 + $0x188] sm:$0xff]
        %v382 = vld [vmem:[%s298 + $0x190] sm:$0xff]
        %v383 = vld [vmem:[%s298 + $0x198] sm:$0xff]
        %v384 = vld [vmem:[%s298 + $0x1a0] sm:$0xff]
        %v385 = vld [vmem:[%s298 + $0x1a8] sm:$0xff]
        %v386 = vld [vmem:[%s298 + $0x1b0] sm:$0x1]
        %v387 = vld [vmem:[%s298 + $0x1b8] sm:$0x1]
        %v388 = vld [vmem:[%s298 + $0x1c0] sm:$0xff]
        %v389 = vld [vmem:[%s298 + $0x1c8] sm:$0xff]
        %v390 = vld [vmem:[%s298 + $0x1d0] sm:$0xff]
        %v391 = vld [vmem:[%s298 + $0x1d8] sm:$0xff]
        %v392 = vld [vmem:[%s298 + $0x1e0] sm:$0xff]
        %v393 = vld [vmem:[%s298 + $0x1e8] sm:$0xff]
        %v394 = vld [vmem:[%s298 + $0x1f0] sm:$0xff]
        %v395 = vld [vmem:[%s298 + $0x1f8] sm:$0xff]
        %v396 = vld [vmem:[%s298 + $0x200] sm:$0xff]
        %v397 = vld [vmem:[%s298 + $0x208] sm:$0xff]
        %v398 = vld [vmem:[%s298 + $0x210] sm:$0xff]
        %v399 = vld [vmem:[%s298 + $0x218] sm:$0xff]
        %v400 = vld [vmem:[%s298 + $0x220] sm:$0x1]
        %v401 = vld [vmem:[%s298 + $0x228] sm:$0x1]
        %v402 = vld [vmem:[%s298 + $0x230] sm:$0xff]
        %v403 = vld [vmem:[%s298 + $0x238] sm:$0xff]
        %v404 = vld [vmem:[%s298 + $0x240] sm:$0xff]
        %v405 = vld [vmem:[%s298 + $0x248] sm:$0xff]
        %v406 = vld [vmem:[%s298 + $0x250] sm:$0xff]
        %v407 = vld [vmem:[%s298 + $0x258] sm:$0xff]
        %v408 = vld [vmem:[%s298 + $0x260] sm:$0xff]
        %v409 = vld [vmem:[%s298 + $0x268] sm:$0xff]
        %v410 = vld [vmem:[%s298 + $0x270] sm:$0xff]
        %v411 = vld [vmem:[%s298 + $0x278] sm:$0xff]
        %v412 = vld [vmem:[%s298 + $0x280] sm:$0xff]
        %v413 = vld [vmem:[%s298 + $0x288] sm:$0xff]
        %v414 = vld [vmem:[%s298 + $0x290] sm:$0x1]
        %v415 = vld [vmem:[%s298 + $0x298] sm:$0x1]
        %v416 = vld [vmem:[%s298 + $0x2a0] sm:$0xff]
        %v417 = vld [vmem:[%s298 + $0x2a8] sm:$0xff]
        %v418 = vld [vmem:[%s298 + $0x2b0] sm:$0xff]
        %v419 = vld [vmem:[%s298 + $0x2b8] sm:$0xff]
        %v420 = vld [vmem:[%s298 + $0x2c0] sm:$0xff]
        %v421 = vld [vmem:[%s298 + $0x2c8] sm:$0xff]
        %v422 = vld [vmem:[%s298 + $0x2d0] sm:$0xff]
        %v423 = vld [vmem:[%s298 + $0x2d8] sm:$0xff]
        %v424 = vld [vmem:[%s298 + $0x2e0] sm:$0xff]
        %v425 = vld [vmem:[%s298 + $0x2e8] sm:$0xff]
        %v426 = vld [vmem:[%s298 + $0x2f0] sm:$0xff]
        %v427 = vld [vmem:[%s298 + $0x2f8] sm:$0xff]
        %v428 = vld [vmem:[%s298 + $0x300] sm:$0x1]
        %v429 = vld [vmem:[%s298 + $0x308] sm:$0x1]
        %v430 = vld [vmem:[%s298 + $0x310] sm:$0xff]
        %v431 = vld [vmem:[%s298 + $0x318] sm:$0xff]
        %v432 = vld [vmem:[%s298 + $0x320] sm:$0xff]
        %v433 = vld [vmem:[%s298 + $0x328] sm:$0xff]
        %v434 = vld [vmem:[%s298 + $0x330] sm:$0xff]
        %v435 = vld [vmem:[%s298 + $0x338] sm:$0xff]
        %v436 = vld [vmem:[%s298 + $0x340] sm:$0xff]
        %v437 = vld [vmem:[%s298 + $0x348] sm:$0xff]
        %v438 = vld [vmem:[%s298 + $0x350] sm:$0xff]
        %v439 = vld [vmem:[%s298 + $0x358] sm:$0xff]
        %v440 = vld [vmem:[%s298 + $0x360] sm:$0xff]
        %v441 = vld [vmem:[%s298 + $0x368] sm:$0xff]
        %v442 = vld [vmem:[%s298 + $0x370] sm:$0x1]
        %v443 = vld [vmem:[%s298 + $0x378] sm:$0x1]
        %v444 = vld [vmem:[#allocation2] sm:$0xff]
        %v445 = vld [vmem:[#allocation2 + $0x8] sm:$0xff]
        %v446 = vld [vmem:[#allocation2 + $0x10] sm:$0xff]
        %v447 = vld [vmem:[#allocation2 + $0x18] sm:$0xff]
        %v448 = vld [vmem:[#allocation2 + $0x20] sm:$0xff]
        %v449 = vld [vmem:[#allocation2 + $0x28] sm:$0xff]
        %v450 = vld [vmem:[#allocation2 + $0x30] sm:$0xff]
        %v451 = vld [vmem:[#allocation2 + $0x38] sm:$0xff]
        %v452 = vld [vmem:[#allocation2 + $0x40] sm:$0xff]
        %v453 = vld [vmem:[#allocation2 + $0x48] sm:$0xff]
        %v454 = vld [vmem:[#allocation2 + $0x50] sm:$0xff]
        %v455 = vld [vmem:[#allocation2 + $0x58] sm:$0xff]
        %v456 = vld [vmem:[#allocation2 + $0x60] sm:$0x1]
        %v457 = vld [vmem:[#allocation2 + $0x68] sm:$0x1]
        %v458 = vadd.f32 %v332, %v346
        %v459 = vadd.f32 %v458, %v360
        %v460 = vadd.f32 %v459, %v374
        %v461 = vadd.f32 %v460, %v388
        %v462 = vadd.f32 %v461, %v402
        %v463 = vadd.f32 %v462, %v416
        %v464 = vadd.f32 %v463, %v430
        %v465 = vadd.f32 %v333, %v347
        %v466 = vadd.f32 %v465, %v361
        %v467 = vadd.f32 %v466, %v375
        %v468 = vadd.f32 %v467, %v389
        %v469 = vadd.f32 %v468, %v403
        %v470 = vadd.f32 %v469, %v417
        %v471 = vadd.f32 %v470, %v431
        %v472 = vadd.f32 %v334, %v348
        %v473 = vadd.f32 %v472, %v362
        %v474 = vadd.f32 %v473, %v376
        %v475 = vadd.f32 %v474, %v390
        %v476 = vadd.f32 %v475, %v404
        %v477 = vadd.f32 %v476, %v418
        %v478 = vadd.f32 %v477, %v432
        %v479 = vadd.f32 %v335, %v349
        %v480 = vadd.f32 %v479, %v363
        %v481 = vadd.f32 %v480, %v377
        %v482 = vadd.f32 %v481, %v391
        %v483 = vadd.f32 %v482, %v405
        %v484 = vadd.f32 %v483, %v419
        %v485 = vadd.f32 %v484, %v433
        %v486 = vadd.f32 %v336, %v350
        %v487 = vadd.f32 %v486, %v364
        %v488 = vadd.f32 %v487, %v378
        %v489 = vadd.f32 %v488, %v392
        %v490 = vadd.f32 %v489, %v406
        %v491 = vadd.f32 %v490, %v420
        %v492 = vadd.f32 %v491, %v434
        %v493 = vadd.f32 %v337, %v351
        %v494 = vadd.f32 %v493, %v365
        %v495 = vadd.f32 %v494, %v379
        %v496 = vadd.f32 %v495, %v393
        %v497 = vadd.f32 %v496, %v407
        %v498 = vadd.f32 %v497, %v421
        %v499 = vadd.f32 %v498, %v435
        %v500 = vadd.f32 %v338, %v352
        %v501 = vadd.f32 %v500, %v366
        %v502 = vadd.f32 %v501, %v380
        %v503 = vadd.f32 %v502, %v394
        %v504 = vadd.f32 %v503, %v408
        %v505 = vadd.f32 %v504, %v422
        %v506 = vadd.f32 %v505, %v436
        %v507 = vadd.f32 %v339, %v353
        %v508 = vadd.f32 %v507, %v367
        %v509 = vadd.f32 %v508, %v381
        %v510 = vadd.f32 %v509, %v395
        %v511 = vadd.f32 %v510, %v409
        %v512 = vadd.f32 %v511, %v423
        %v513 = vadd.f32 %v512, %v437
        %v514 = vadd.f32 %v340, %v354
        %v515 = vadd.f32 %v514, %v368
        %v516 = vadd.f32 %v515, %v382
        %v517 = vadd.f32 %v516, %v396
        %v518 = vadd.f32 %v517, %v410
        %v519 = vadd.f32 %v518, %v424
        %v520 = vadd.f32 %v519, %v438
        %v521 = vadd.f32 %v341, %v355
        %v522 = vadd.f32 %v521, %v369
        %v523 = vadd.f32 %v522, %v383
        %v524 = vadd.f32 %v523, %v397
        %v525 = vadd.f32 %v524, %v411
        %v526 = vadd.f32 %v525, %v425
        %v527 = vadd.f32 %v526, %v439
        %v528 = vadd.f32 %v342, %v356
        %v529 = vadd.f32 %v528, %v370
        %v530 = vadd.f32 %v529, %v384
        %v531 = vadd.f32 %v530, %v398
        %v532 = vadd.f32 %v531, %v412
        %v533 = vadd.f32 %v532, %v426
        %v534 = vadd.f32 %v533, %v440
        %v535 = vadd.f32 %v343, %v357
        %v536 = vadd.f32 %v535, %v371
        %v537 = vadd.f32 %v536, %v385
        %v538 = vadd.f32 %v537, %v399
        %v539 = vadd.f32 %v538, %v413
        %v540 = vadd.f32 %v539, %v427
        %v541 = vadd.f32 %v540, %v441
        %vm542 = vcmask 1040384
        %v543 = vsel %vm542, %v344, 0.0
        %v544 = vsel %vm542, %v358, 0.0
        %v545 = vadd.f32 %v543, %v544
        %v546 = vsel %vm542, %v372, 0.0
        %v547 = vadd.f32 %v545, %v546
        %v548 = vsel %vm542, %v386, 0.0
        %v549 = vadd.f32 %v547, %v548
        %v550 = vsel %vm542, %v400, 0.0
        %v551 = vadd.f32 %v549, %v550
        %v552 = vsel %vm542, %v414, 0.0
        %v553 = vadd.f32 %v551, %v552
        %v554 = vsel %vm542, %v428, 0.0
        %v555 = vadd.f32 %v553, %v554
        %v556 = vsel %vm542, %v442, 0.0
        %v557 = vadd.f32 %v555, %v556
        %v558 = vsel %vm542, %v345, 0.0
        %v559 = vsel %vm542, %v359, 0.0
        %v560 = vadd.f32 %v558, %v559
        %v561 = vsel %vm542, %v373, 0.0
        %v562 = vadd.f32 %v560, %v561
        %v563 = vsel %vm542, %v387, 0.0
        %v564 = vadd.f32 %v562, %v563
        %v565 = vsel %vm542, %v401, 0.0
        %v566 = vadd.f32 %v564, %v565
        %v567 = vsel %vm542, %v415, 0.0
        %v568 = vadd.f32 %v566, %v567
        %v569 = vsel %vm542, %v429, 0.0
        %v570 = vadd.f32 %v568, %v569
        %v571 = vsel %vm542, %v443, 0.0
        %v572 = vadd.f32 %v570, %v571
        %v573 = vadd.f32 %v444, %v464
        %v574 = vadd.f32 %v445, %v471
        %v575 = vadd.f32 %v446, %v478
        %v576 = vadd.f32 %v447, %v485
        %v577 = vadd.f32 %v448, %v492
        %v578 = vadd.f32 %v449, %v499
        %v579 = vadd.f32 %v450, %v506
        %v580 = vadd.f32 %v451, %v513
        %v581 = vadd.f32 %v452, %v520
        %v582 = vadd.f32 %v453, %v527
        %v583 = vadd.f32 %v454, %v534
        %v584 = vadd.f32 %v455, %v541
        %v585 = vadd.f32 %v456, %v557
        %v586 = vadd.f32 %v457, %v572
        %587 = vst [vmem:[#allocation2] sm:$0xff] %v573
        %588 = vst [vmem:[#allocation2 + $0x8] sm:$0xff] %v574
        %589 = vst [vmem:[#allocation2 + $0x10] sm:$0xff] %v575
        %590 = vst [vmem:[#allocation2 + $0x18] sm:$0xff] %v576
        %591 = vst [vmem:[#allocation2 + $0x20] sm:$0xff] %v577
        %592 = vst [vmem:[#allocation2 + $0x28] sm:$0xff] %v578
        %593 = vst [vmem:[#allocation2 + $0x30] sm:$0xff] %v579
        %594 = vst [vmem:[#allocation2 + $0x38] sm:$0xff] %v580
        %595 = vst [vmem:[#allocation2 + $0x40] sm:$0xff] %v581
        %596 = vst [vmem:[#allocation2 + $0x48] sm:$0xff] %v582
        %597 = vst [vmem:[#allocation2 + $0x50] sm:$0xff] %v583
        %598 = vst [vmem:[#allocation2 + $0x58] sm:$0xff] %v584
        %599 = vst [vmem:[#allocation2 + $0x60] sm:$0x1] %v585
        %600 = vst [vmem:[#allocation2 + $0x68] sm:$0x1] %v586
        %v601 = vld [vmem:[#allocation3] sm:$0xff]
        %v602 = vld [vmem:[#allocation3 + $0x8] sm:$0xff]
        %v603 = vld [vmem:[#allocation3 + $0x10] sm:$0xff]
        %v604 = vld [vmem:[#allocation3 + $0x18] sm:$0xff]
        %v605 = vld [vmem:[#allocation3 + $0x20] sm:$0xff]
        %v606 = vld [vmem:[#allocation3 + $0x28] sm:$0xff]
        %v607 = vld [vmem:[#allocation3 + $0x30] sm:$0xff]
        %v608 = vld [vmem:[#allocation3 + $0x38] sm:$0xff]
        %v609 = vld [vmem:[#allocation3 + $0x40] sm:$0xff]
        %v610 = vld [vmem:[#allocation3 + $0x48] sm:$0xff]
        %v611 = vld [vmem:[#allocation3 + $0x50] sm:$0xff]
        %v612 = vld [vmem:[#allocation3 + $0x58] sm:$0xff]
        %v613 = vld [vmem:[#allocation3 + $0x60] sm:$0x1]
        %v614 = vld [vmem:[#allocation3 + $0x68] sm:$0x1]
        %v615 = vmul.f32 %v332, %v332
        %v616 = vmul.f32 %v333, %v333
        %v617 = vmul.f32 %v334, %v334
        %v618 = vmul.f32 %v335, %v335
        %v619 = vmul.f32 %v336, %v336
        %v620 = vmul.f32 %v337, %v337
        %v621 = vmul.f32 %v338, %v338
        %v622 = vmul.f32 %v339, %v339
        %v623 = vmul.f32 %v340, %v340
        %v624 = vmul.f32 %v341, %v341
        %v625 = vmul.f32 %v342, %v342
        %v626 = vmul.f32 %v343, %v343
        %v627 = vmul.f32 %v344, %v344
        %v628 = vmul.f32 %v345, %v345
        %v629 = vmul.f32 %v346, %v346
        %v630 = vmul.f32 %v347, %v347
        %v631 = vmul.f32 %v348, %v348
        %v632 = vmul.f32 %v349, %v349
        %v633 = vmul.f32 %v350, %v350
        %v634 = vmul.f32 %v351, %v351
        %v635 = vmul.f32 %v352, %v352
        %v636 = vmul.f32 %v353, %v353
        %v637 = vmul.f32 %v354, %v354
        %v638 = vmul.f32 %v355, %v355
        %v639 = vmul.f32 %v356, %v356
        %v640 = vmul.f32 %v357, %v357
        %v641 = vmul.f32 %v358, %v358
        %v642 = vmul.f32 %v359, %v359
        %v643 = vmul.f32 %v360, %v360
        %v644 = vmul.f32 %v361, %v361
        %v645 = vmul.f32 %v362, %v362
        %v646 = vmul.f32 %v363, %v363
        %v647 = vmul.f32 %v364, %v364
        %v648 = vmul.f32 %v365, %v365
        %v649 = vmul.f32 %v366, %v366
        %v650 = vmul.f32 %v367, %v367
        %v651 = vmul.f32 %v368, %v368
        %v652 = vmul.f32 %v369, %v369
        %v653 = vmul.f32 %v370, %v370
        %v654 = vmul.f32 %v371, %v371
        %v655 = vmul.f32 %v372, %v372
        %v656 = vmul.f32 %v373, %v373
        %v657 = vmul.f32 %v374, %v374
        %v658 = vmul.f32 %v375, %v375
        %v659 = vmul.f32 %v376, %v376
        %v660 = vmul.f32 %v377, %v377
        %v661 = vmul.f32 %v378, %v378
        %v662 = vmul.f32 %v379, %v379
        %v663 = vmul.f32 %v380, %v380
        %v664 = vmul.f32 %v381, %v381
        %v665 = vmul.f32 %v382, %v382
        %v666 = vmul.f32 %v383, %v383
        %v667 = vmul.f32 %v384, %v384
        %v668 = vmul.f32 %v385, %v385
        %v669 = vmul.f32 %v386, %v386
        %v670 = vmul.f32 %v387, %v387
        %v671 = vmul.f32 %v388, %v388
        %v672 = vmul.f32 %v389, %v389
        %v673 = vmul.f32 %v390, %v390
        %v674 = vmul.f32 %v391, %v391
        %v675 = vmul.f32 %v392, %v392
        %v676 = vmul.f32 %v393, %v393
        %v677 = vmul.f32 %v394, %v394
        %v678 = vmul.f32 %v395, %v395
        %v679 = vmul.f32 %v396, %v396
        %v680 = vmul.f32 %v397, %v397
        %v681 = vmul.f32 %v398, %v398
        %v682 = vmul.f32 %v399, %v399
        %v683 = vmul.f32 %v400, %v400
        %v684 = vmul.f32 %v401, %v401
        %v685 = vmul.f32 %v402, %v402
        %v686 = vmul.f32 %v403, %v403
        %v687 = vmul.f32 %v404, %v404
        %v688 = vmul.f32 %v405, %v405
        %v689 = vmul.f32 %v406, %v406
        %v690 = vmul.f32 %v407, %v407
        %v691 = vmul.f32 %v408, %v408
        %v692 = vmul.f32 %v409, %v409
        %v693 = vmul.f32 %v410, %v410
        %v694 = vmul.f32 %v411, %v411
        %v695 = vmul.f32 %v412, %v412
        %v696 = vmul.f32 %v413, %v413
        %v697 = vmul.f32 %v414, %v414
        %v698 = vmul.f32 %v415, %v415
        %v699 = vmul.f32 %v416, %v416
        %v700 = vmul.f32 %v417, %v417
        %v701 = vmul.f32 %v418, %v418
        %v702 = vmul.f32 %v419, %v419
        %v703 = vmul.f32 %v420, %v420
        %v704 = vmul.f32 %v421, %v421
        %v705 = vmul.f32 %v422, %v422
        %v706 = vmul.f32 %v423, %v423
        %v707 = vmul.f32 %v424, %v424
        %v708 = vmul.f32 %v425, %v425
        %v709 = vmul.f32 %v426, %v426
        %v710 = vmul.f32 %v427, %v427
        %v711 = vmul.f32 %v428, %v428
        %v712 = vmul.f32 %v429, %v429
        %v713 = vmul.f32 %v430, %v430
        %v714 = vmul.f32 %v431, %v431
        %v715 = vmul.f32 %v432, %v432
        %v716 = vmul.f32 %v433, %v433
        %v717 = vmul.f32 %v434, %v434
        %v718 = vmul.f32 %v435, %v435
        %v719 = vmul.f32 %v436, %v436
        %v720 = vmul.f32 %v437, %v437
        %v721 = vmul.f32 %v438, %v438
        %v722 = vmul.f32 %v439, %v439
        %v723 = vmul.f32 %v440, %v440
        %v724 = vmul.f32 %v441, %v441
        %v725 = vmul.f32 %v442, %v442
        %v726 = vmul.f32 %v443, %v443
        %v727 = vadd.f32 %v615, %v629
        %v728 = vadd.f32 %v727, %v643
        %v729 = vadd.f32 %v728, %v657
        %v730 = vadd.f32 %v729, %v671
        %v731 = vadd.f32 %v730, %v685
        %v732 = vadd.f32 %v731, %v699
        %v733 = vadd.f32 %v732, %v713
        %v734 = vadd.f32 %v616, %v630
        %v735 = vadd.f32 %v734, %v644
        %v736 = vadd.f32 %v735, %v658
        %v737 = vadd.f32 %v736, %v672
        %v738 = vadd.f32 %v737, %v686
        %v739 = vadd.f32 %v738, %v700
        %v740 = vadd.f32 %v739, %v714
        %v741 = vadd.f32 %v617, %v631
        %v742 = vadd.f32 %v741, %v645
        %v743 = vadd.f32 %v742, %v659
        %v744 = vadd.f32 %v743, %v673
        %v745 = vadd.f32 %v744, %v687
        %v746 = vadd.f32 %v745, %v701
        %v747 = vadd.f32 %v746, %v715
        %v748 = vadd.f32 %v618, %v632
        %v749 = vadd.f32 %v748, %v646
        %v750 = vadd.f32 %v749, %v660
        %v751 = vadd.f32 %v750, %v674
        %v752 = vadd.f32 %v751, %v688
        %v753 = vadd.f32 %v752, %v702
        %v754 = vadd.f32 %v753, %v716
        %v755 = vadd.f32 %v619, %v633
        %v756 = vadd.f32 %v755, %v647
        %v757 = vadd.f32 %v756, %v661
        %v758 = vadd.f32 %v757, %v675
        %v759 = vadd.f32 %v758, %v689
        %v760 = vadd.f32 %v759, %v703
        %v761 = vadd.f32 %v760, %v717
        %v762 = vadd.f32 %v620, %v634
        %v763 = vadd.f32 %v762, %v648
        %v764 = vadd.f32 %v763, %v662
        %v765 = vadd.f32 %v764, %v676
        %v766 = vadd.f32 %v765, %v690
        %v767 = vadd.f32 %v766, %v704
        %v768 = vadd.f32 %v767, %v718
        %v769 = vadd.f32 %v621, %v635
        %v770 = vadd.f32 %v769, %v649
        %v771 = vadd.f32 %v770, %v663
        %v772 = vadd.f32 %v771, %v677
        %v773 = vadd.f32 %v772, %v691
        %v774 = vadd.f32 %v773, %v705
        %v775 = vadd.f32 %v774, %v719
        %v776 = vadd.f32 %v622, %v636
        %v777 = vadd.f32 %v776, %v650
        %v778 = vadd.f32 %v777, %v664
        %v779 = vadd.f32 %v778, %v678
        %v780 = vadd.f32 %v779, %v692
        %v781 = vadd.f32 %v780, %v706
        %v782 = vadd.f32 %v781, %v720
        %v783 = vadd.f32 %v623, %v637
        %v784 = vadd.f32 %v783, %v651
        %v785 = vadd.f32 %v784, %v665
        %v786 = vadd.f32 %v785, %v679
        %v787 = vadd.f32 %v786, %v693
        %v788 = vadd.f32 %v787, %v707
        %v789 = vadd.f32 %v788, %v721
        %v790 = vadd.f32 %v624, %v638
        %v791 = vadd.f32 %v790, %v652
        %v792 = vadd.f32 %v791, %v666
        %v793 = vadd.f32 %v792, %v680
        %v794 = vadd.f32 %v793, %v694
        %v795 = vadd.f32 %v794, %v708
        %v796 = vadd.f32 %v795, %v722
        %v797 = vadd.f32 %v625, %v639
        %v798 = vadd.f32 %v797, %v653
        %v799 = vadd.f32 %v798, %v667
        %v800 = vadd.f32 %v799, %v681
        %v801 = vadd.f32 %v800, %v695
        %v802 = vadd.f32 %v801, %v709
        %v803 = vadd.f32 %v802, %v723
        %v804 = vadd.f32 %v626, %v640
        %v805 = vadd.f32 %v804, %v654
        %v806 = vadd.f32 %v805, %v668
        %v807 = vadd.f32 %v806, %v682
        %v808 = vadd.f32 %v807, %v696
        %v809 = vadd.f32 %v808, %v710
        %v810 = vadd.f32 %v809, %v724
        %v811 = vsel %vm542, %v627, 0.0
        %v812 = vsel %vm542, %v641, 0.0
        %v813 = vadd.f32 %v811, %v812
        %v814 = vsel %vm542, %v655, 0.0
        %v815 = vadd.f32 %v813, %v814
        %v816 = vsel %vm542, %v669, 0.0
        %v817 = vadd.f32 %v815, %v816
        %v818 = vsel %vm542, %v683, 0.0
        %v819 = vadd.f32 %v817, %v818
        %v820 = vsel %vm542, %v697, 0.0
        %v821 = vadd.f32 %v819, %v820
        %v822 = vsel %vm542, %v711, 0.0
        %v823 = vadd.f32 %v821, %v822
        %v824 = vsel %vm542, %v725, 0.0
        %v825 = vadd.f32 %v823, %v824
        %v826 = vsel %vm542, %v628, 0.0
        %v827 = vsel %vm542, %v642, 0.0
        %v828 = vadd.f32 %v826, %v827
        %v829 = vsel %vm542, %v656, 0.0
        %v830 = vadd.f32 %v828, %v829
        %v831 = vsel %vm542, %v670, 0.0
        %v832 = vadd.f32 %v830, %v831
        %v833 = vsel %vm542, %v684, 0.0
        %v834 = vadd.f32 %v832, %v833
        %v835 = vsel %vm542, %v698, 0.0
        %v836 = vadd.f32 %v834, %v835
        %v837 = vsel %vm542, %v712, 0.0
        %v838 = vadd.f32 %v836, %v837
        %v839 = vsel %vm542, %v726, 0.0
        %v840 = vadd.f32 %v838, %v839
        %v841 = vadd.f32 %v601, %v733
        %v842 = vadd.f32 %v602, %v740
        %v843 = vadd.f32 %v603, %v747
        %v844 = vadd.f32 %v604, %v754
        %v845 = vadd.f32 %v605, %v761
        %v846 = vadd.f32 %v606, %v768
        %v847 = vadd.f32 %v607, %v775
        %v848 = vadd.f32 %v608, %v782
        %v849 = vadd.f32 %v609, %v789
        %v850 = vadd.f32 %v610, %v796
        %v851 = vadd.f32 %v611, %v803
        %v852 = vadd.f32 %v612, %v810
        %v853 = vadd.f32 %v613, %v825
        %v854 = vadd.f32 %v614, %v840
        %855 = vst [vmem:[#allocation3] sm:$0xff] %v841
        %856 = vst [vmem:[#allocation3 + $0x8] sm:$0xff] %v842
        %857 = vst [vmem:[#allocation3 + $0x10] sm:$0xff] %v843
        %858 = vst [vmem:[#allocation3 + $0x18] sm:$0xff] %v844
        %859 = vst [vmem:[#allocation3 + $0x20] sm:$0xff] %v845
        %860 = vst [vmem:[#allocation3 + $0x28] sm:$0xff] %v846
        %861 = vst [vmem:[#allocation3 + $0x30] sm:$0xff] %v847
        %862 = vst [vmem:[#allocation3 + $0x38] sm:$0xff] %v848
        %863 = vst [vmem:[#allocation3 + $0x40] sm:$0xff] %v849
        %864 = vst [vmem:[#allocation3 + $0x48] sm:$0xff] %v850
        %865 = vst [vmem:[#allocation3 + $0x50] sm:$0xff] %v851
        %866 = vst [vmem:[#allocation3 + $0x58] sm:$0xff] %v852
        %867 = vst [vmem:[#allocation3 + $0x60] sm:$0x1] %v853
        %868 = vst [vmem:[#allocation3 + $0x68] sm:$0x1] %v854
        %p869 = scmp.eq.s32.totalorder %s23, 1
        // Predicated region
        $region57: #{tpu_custom_call.1} parent=51 // pred_check
          %p870 = pneg %p869
        $region58: #{tpu_custom_call.1} parent=51 // pred_check_branch
          %872 = sbr.rel (%p870) target = $region60
        $region59: #{tpu_custom_call.1} parent=51 // pred_region
          %p874 = scmp.lt.u32.totalorder 400, 8
          %p875 = pneg %p874
          // Predicated region
          $region61: #{tpu_custom_call.1} parent=59 // pred_check
            _
          $region62: #{tpu_custom_call.1} parent=59 // pred_check_branch
            %877 = sbr.rel (%p874) target = $region64
          $region63: #{tpu_custom_call.1} parent=59 // pred_region
            %s892 = sand.u32 400, 7
            %p893 = scmp.eq.s32.totalorder %s892, 0
            // Predicated region
            $region76: #{tpu_custom_call.1} parent=63 // pred_check
              %p894 = pneg %p893
            $region77: #{tpu_custom_call.1} parent=63 // pred_check_branch
              %896 = sbr.rel (%p894) target = $region79
            $region78: #{tpu_custom_call.1} parent=63 // pred_region
              loop: start=0, step=1, limit=1
              $region80: #{tpu_custom_call.1} parent=78 // loop_pre_header
                _
              $region81: #{tpu_custom_call.1} parent=78 // loop_header
                %s898 = sphi 0, %s902
                %p899 = scmp.ge.s32.totalorder %s898, 1
                %s903 = sphi %s8, %s8
                %s904 = sphi [#allocation4], [#allocation4]
              $region82: #{tpu_custom_call.1} parent=78 // loop_header_branch
                %901 = sbr.rel (%p899) target = $region86
              $region83: #{tpu_custom_call.1} parent=78 // loop_body
                %v905 = vld [vmem:[%s903] sm:$0xff]
                %906 = vst [vmem:[%s904] sm:$0xff] %v905
                %v907 = vld [vmem:[%s903 + $0x8] sm:$0xff]
                %908 = vst [vmem:[%s904 + $0x8] sm:$0xff] %v907
                %v909 = vld [vmem:[%s903 + $0x10] sm:$0xff]
                %910 = vst [vmem:[%s904 + $0x10] sm:$0xff] %v909
                %v911 = vld [vmem:[%s903 + $0x18] sm:$0xff]
                %912 = vst [vmem:[%s904 + $0x18] sm:$0xff] %v911
                %v913 = vld [vmem:[%s903 + $0x20] sm:$0xff]
                %914 = vst [vmem:[%s904 + $0x20] sm:$0xff] %v913
                %v915 = vld [vmem:[%s903 + $0x28] sm:$0xff]
                %916 = vst [vmem:[%s904 + $0x28] sm:$0xff] %v915
                %v917 = vld [vmem:[%s903 + $0x30] sm:$0xff]
                %918 = vst [vmem:[%s904 + $0x30] sm:$0xff] %v917
                %v919 = vld [vmem:[%s903 + $0x38] sm:$0xff]
                %920 = vst [vmem:[%s904 + $0x38] sm:$0xff] %v919
                %v921 = vld [vmem:[%s903 + $0x40] sm:$0xff]
                %922 = vst [vmem:[%s904 + $0x40] sm:$0xff] %v921
                %v923 = vld [vmem:[%s903 + $0x48] sm:$0xff]
                %924 = vst [vmem:[%s904 + $0x48] sm:$0xff] %v923
                %v925 = vld [vmem:[%s903 + $0x50] sm:$0xff]
                %926 = vst [vmem:[%s904 + $0x50] sm:$0xff] %v925
                %v927 = vld [vmem:[%s903 + $0x58] sm:$0xff]
                %928 = vst [vmem:[%s904 + $0x58] sm:$0xff] %v927
                %v929 = vld [vmem:[%s903 + $0x60] sm:$0xff]
                %930 = vst [vmem:[%s904 + $0x60] sm:$0xff] %v929
                %v931 = vld [vmem:[%s903 + $0x68] sm:$0xff]
                %932 = vst [vmem:[%s904 + $0x68] sm:$0xff] %v931
                %v933 = vld [vmem:[%s903 + $0x70] sm:$0xff]
                %934 = vst [vmem:[%s904 + $0x70] sm:$0xff] %v933
                %v935 = vld [vmem:[%s903 + $0x78] sm:$0xff]
                %936 = vst [vmem:[%s904 + $0x78] sm:$0xff] %v935
                %v937 = vld [vmem:[%s903 + $0x80] sm:$0xff]
                %938 = vst [vmem:[%s904 + $0x80] sm:$0xff] %v937
                %v939 = vld [vmem:[%s903 + $0x88] sm:$0xff]
                %940 = vst [vmem:[%s904 + $0x88] sm:$0xff] %v939
                %v941 = vld [vmem:[%s903 + $0x90] sm:$0xff]
                %942 = vst [vmem:[%s904 + $0x90] sm:$0xff] %v941
                %v943 = vld [vmem:[%s903 + $0x98] sm:$0xff]
                %944 = vst [vmem:[%s904 + $0x98] sm:$0xff] %v943
                %v945 = vld [vmem:[%s903 + $0xa0] sm:$0xff]
                %946 = vst [vmem:[%s904 + $0xa0] sm:$0xff] %v945
                %v947 = vld [vmem:[%s903 + $0xa8] sm:$0xff]
                %948 = vst [vmem:[%s904 + $0xa8] sm:$0xff] %v947
                %v949 = vld [vmem:[%s903 + $0xb0] sm:$0xff]
                %950 = vst [vmem:[%s904 + $0xb0] sm:$0xff] %v949
                %v951 = vld [vmem:[%s903 + $0xb8] sm:$0xff]
                %952 = vst [vmem:[%s904 + $0xb8] sm:$0xff] %v951
                %v953 = vld [vmem:[%s903 + $0xc0] sm:$0xff]
                %954 = vst [vmem:[%s904 + $0xc0] sm:$0xff] %v953
                %v955 = vld [vmem:[%s903 + $0xc8] sm:$0xff]
                %956 = vst [vmem:[%s904 + $0xc8] sm:$0xff] %v955
                %v957 = vld [vmem:[%s903 + $0xd0] sm:$0xff]
                %958 = vst [vmem:[%s904 + $0xd0] sm:$0xff] %v957
                %v959 = vld [vmem:[%s903 + $0xd8] sm:$0xff]
                %960 = vst [vmem:[%s904 + $0xd8] sm:$0xff] %v959
                %v961 = vld [vmem:[%s903 + $0xe0] sm:$0xff]
                %962 = vst [vmem:[%s904 + $0xe0] sm:$0xff] %v961
                %v963 = vld [vmem:[%s903 + $0xe8] sm:$0xff]
                %964 = vst [vmem:[%s904 + $0xe8] sm:$0xff] %v963
                %v965 = vld [vmem:[%s903 + $0xf0] sm:$0xff]
                %966 = vst [vmem:[%s904 + $0xf0] sm:$0xff] %v965
                %v967 = vld [vmem:[%s903 + $0xf8] sm:$0xff]
                %968 = vst [vmem:[%s904 + $0xf8] sm:$0xff] %v967
                %v969 = vld [vmem:[%s903 + $0x100] sm:$0xff]
                %970 = vst [vmem:[%s904 + $0x100] sm:$0xff] %v969
                %v971 = vld [vmem:[%s903 + $0x108] sm:$0xff]
                %972 = vst [vmem:[%s904 + $0x108] sm:$0xff] %v971
                %v973 = vld [vmem:[%s903 + $0x110] sm:$0xff]
                %974 = vst [vmem:[%s904 + $0x110] sm:$0xff] %v973
                %v975 = vld [vmem:[%s903 + $0x118] sm:$0xff]
                %976 = vst [vmem:[%s904 + $0x118] sm:$0xff] %v975
                %v977 = vld [vmem:[%s903 + $0x120] sm:$0xff]
                %978 = vst [vmem:[%s904 + $0x120] sm:$0xff] %v977
                %v979 = vld [vmem:[%s903 + $0x128] sm:$0xff]
                %980 = vst [vmem:[%s904 + $0x128] sm:$0xff] %v979
                %v981 = vld [vmem:[%s903 + $0x130] sm:$0xff]
                %982 = vst [vmem:[%s904 + $0x130] sm:$0xff] %v981
                %v983 = vld [vmem:[%s903 + $0x138] sm:$0xff]
                %984 = vst [vmem:[%s904 + $0x138] sm:$0xff] %v983
                %v985 = vld [vmem:[%s903 + $0x140] sm:$0xff]
                %986 = vst [vmem:[%s904 + $0x140] sm:$0xff] %v985
                %v987 = vld [vmem:[%s903 + $0x148] sm:$0xff]
                %988 = vst [vmem:[%s904 + $0x148] sm:$0xff] %v987
                %v989 = vld [vmem:[%s903 + $0x150] sm:$0xff]
                %990 = vst [vmem:[%s904 + $0x150] sm:$0xff] %v989
                %v991 = vld [vmem:[%s903 + $0x158] sm:$0xff]
                %992 = vst [vmem:[%s904 + $0x158] sm:$0xff] %v991
                %v993 = vld [vmem:[%s903 + $0x160] sm:$0xff]
                %994 = vst [vmem:[%s904 + $0x160] sm:$0xff] %v993
                %v995 = vld [vmem:[%s903 + $0x168] sm:$0xff]
                %996 = vst [vmem:[%s904 + $0x168] sm:$0xff] %v995
                %v997 = vld [vmem:[%s903 + $0x170] sm:$0xff]
                %998 = vst [vmem:[%s904 + $0x170] sm:$0xff] %v997
                %v999 = vld [vmem:[%s903 + $0x178] sm:$0xff]
                %1000 = vst [vmem:[%s904 + $0x178] sm:$0xff] %v999
                %v1001 = vld [vmem:[%s903 + $0x180] sm:$0xff]
                %1002 = vst [vmem:[%s904 + $0x180] sm:$0xff] %v1001
                %v1003 = vld [vmem:[%s903 + $0x188] sm:$0xff]
                %1004 = vst [vmem:[%s904 + $0x188] sm:$0xff] %v1003
              $region84: #{tpu_custom_call.1} parent=78 // loop_footer
                %s902 = sadd.s32 1, %s898
              $region85: #{tpu_custom_call.1} parent=78 // loop_footer_branch
                %897 = sbr.rel target = $region81
              $region86: #{tpu_custom_call.1} parent=78 // loop_exit
                _
            $region79: #{tpu_custom_call.1} parent=63 // pred_fallthru
              _
            %p1005 = pneg %p893
            // Predicated region
            $region87: #{tpu_custom_call.1} parent=63 // pred_check
              _
            $region88: #{tpu_custom_call.1} parent=63 // pred_check_branch
              %1007 = sbr.rel (%p893) target = $region90
            $region89: #{tpu_custom_call.1} parent=63 // pred_region
              %s1008 = sand.u32 400, 7
            $region90: #{tpu_custom_call.1} parent=63 // pred_fallthru
              _
          $region64: #{tpu_custom_call.1} parent=59 // pred_fallthru
            _
          // Predicated region
          $region65: #{tpu_custom_call.1} parent=59 // pred_check
            %p878 = pneg %p874
          $region66: #{tpu_custom_call.1} parent=59 // pred_check_branch
            %880 = sbr.rel (%p878) target = $region68
          $region67: #{tpu_custom_call.1} parent=59 // pred_region
            %s881 = sshllo.u32 0, 400
            loop: start=0, step=1, limit=1
            $region69: #{tpu_custom_call.1} parent=67 // loop_pre_header
              _
            $region70: #{tpu_custom_call.1} parent=67 // loop_header
              %s883 = sphi 0, %s887
              %p884 = scmp.ge.s32.totalorder %s883, 1
              %s888 = sphi %s8, %s8
              %s889 = sphi [#allocation4], [#allocation4]
            $region71: #{tpu_custom_call.1} parent=67 // loop_header_branch
              %886 = sbr.rel (%p884) target = $region75
            $region72: #{tpu_custom_call.1} parent=67 // loop_body
              %v890 = vld [vmem:[%s888] sm:%s881]
              %891 = vst [vmem:[%s889] sm:%s881] %v890
            $region73: #{tpu_custom_call.1} parent=67 // loop_footer
              %s887 = sadd.s32 1, %s883
            $region74: #{tpu_custom_call.1} parent=67 // loop_footer_branch
              %882 = sbr.rel target = $region70
            $region75: #{tpu_custom_call.1} parent=67 // loop_exit
              _
          $region68: #{tpu_custom_call.1} parent=59 // pred_fallthru
            _
          // Predicated region
          $region91: #{tpu_custom_call.1} parent=59 // pred_check
            _
          $region92: #{tpu_custom_call.1} parent=59 // pred_check_branch
            %1011 = sbr.rel (0) target = $region94
          $region93: #{tpu_custom_call.1} parent=59 // pred_region
            %1012 = vsyncadd [#allocation7], 6400
          $region94: #{tpu_custom_call.1} parent=59 // pred_fallthru
            _
          %s1013 = scalar_lea.sflag [#allocation7], 1
          %p1015 = scmp.lt.u32.totalorder 196, 8
          %p1016 = pneg %p1015
          // Predicated region
          $region95: #{tpu_custom_call.1} parent=59 // pred_check
            _
          $region96: #{tpu_custom_call.1} parent=59 // pred_check_branch
            %1018 = sbr.rel (%p1015) target = $region98
          $region97: #{tpu_custom_call.1} parent=59 // pred_region
            %s1033 = sand.u32 196, 7
            %p1034 = scmp.eq.s32.totalorder %s1033, 0
            %p1035 = pneg %p1034
            // Predicated region
            $region110: #{tpu_custom_call.1} parent=97 // pred_check
              _
            $region111: #{tpu_custom_call.1} parent=97 // pred_check_branch
              %1037 = sbr.rel (%p1034) target = $region113
            $region112: #{tpu_custom_call.1} parent=97 // pred_region
              %s1038 = sand.u32 196, 7
              %s1039 = ssub.s32 196, %s1038
              %s1040 = scalar_lea.vmem %s9, %s1039
              %s1041 = ssub.s32 196, %s1038
              %s1042 = scalar_lea.vmem [#allocation5], %s1041
              loop: start=0, step=1, limit=1
              $region114: #{tpu_custom_call.1} parent=112 // loop_pre_header
                _
              $region115: #{tpu_custom_call.1} parent=112 // loop_header
                %s1044 = sphi 0, %s1048
                %p1045 = scmp.ge.s32.totalorder %s1044, 1
                %s1049 = sphi %s9, %s9
                %s1050 = sphi [#allocation5], [#allocation5]
              $region116: #{tpu_custom_call.1} parent=112 // loop_header_branch
                %1047 = sbr.rel (%p1045) target = $region120
              $region117: #{tpu_custom_call.1} parent=112 // loop_body
                %v1051 = vld [vmem:[%s1049] sm:$0xff]
                %1052 = vst [vmem:[%s1050] sm:$0xff] %v1051
                %v1053 = vld [vmem:[%s1049 + $0x8] sm:$0xff]
                %1054 = vst [vmem:[%s1050 + $0x8] sm:$0xff] %v1053
                %v1055 = vld [vmem:[%s1049 + $0x10] sm:$0xff]
                %1056 = vst [vmem:[%s1050 + $0x10] sm:$0xff] %v1055
                %v1057 = vld [vmem:[%s1049 + $0x18] sm:$0xff]
                %1058 = vst [vmem:[%s1050 + $0x18] sm:$0xff] %v1057
                %v1059 = vld [vmem:[%s1049 + $0x20] sm:$0xff]
                %1060 = vst [vmem:[%s1050 + $0x20] sm:$0xff] %v1059
                %v1061 = vld [vmem:[%s1049 + $0x28] sm:$0xff]
                %1062 = vst [vmem:[%s1050 + $0x28] sm:$0xff] %v1061
                %v1063 = vld [vmem:[%s1049 + $0x30] sm:$0xff]
                %1064 = vst [vmem:[%s1050 + $0x30] sm:$0xff] %v1063
                %v1065 = vld [vmem:[%s1049 + $0x38] sm:$0xff]
                %1066 = vst [vmem:[%s1050 + $0x38] sm:$0xff] %v1065
                %v1067 = vld [vmem:[%s1049 + $0x40] sm:$0xff]
                %1068 = vst [vmem:[%s1050 + $0x40] sm:$0xff] %v1067
                %v1069 = vld [vmem:[%s1049 + $0x48] sm:$0xff]
                %1070 = vst [vmem:[%s1050 + $0x48] sm:$0xff] %v1069
                %v1071 = vld [vmem:[%s1049 + $0x50] sm:$0xff]
                %1072 = vst [vmem:[%s1050 + $0x50] sm:$0xff] %v1071
                %v1073 = vld [vmem:[%s1049 + $0x58] sm:$0xff]
                %1074 = vst [vmem:[%s1050 + $0x58] sm:$0xff] %v1073
                %v1075 = vld [vmem:[%s1049 + $0x60] sm:$0xff]
                %1076 = vst [vmem:[%s1050 + $0x60] sm:$0xff] %v1075
                %v1077 = vld [vmem:[%s1049 + $0x68] sm:$0xff]
                %1078 = vst [vmem:[%s1050 + $0x68] sm:$0xff] %v1077
                %v1079 = vld [vmem:[%s1049 + $0x70] sm:$0xff]
                %1080 = vst [vmem:[%s1050 + $0x70] sm:$0xff] %v1079
                %v1081 = vld [vmem:[%s1049 + $0x78] sm:$0xff]
                %1082 = vst [vmem:[%s1050 + $0x78] sm:$0xff] %v1081
                %v1083 = vld [vmem:[%s1049 + $0x80] sm:$0xff]
                %1084 = vst [vmem:[%s1050 + $0x80] sm:$0xff] %v1083
                %v1085 = vld [vmem:[%s1049 + $0x88] sm:$0xff]
                %1086 = vst [vmem:[%s1050 + $0x88] sm:$0xff] %v1085
                %v1087 = vld [vmem:[%s1049 + $0x90] sm:$0xff]
                %1088 = vst [vmem:[%s1050 + $0x90] sm:$0xff] %v1087
                %v1089 = vld [vmem:[%s1049 + $0x98] sm:$0xff]
                %1090 = vst [vmem:[%s1050 + $0x98] sm:$0xff] %v1089
                %v1091 = vld [vmem:[%s1049 + $0xa0] sm:$0xff]
                %1092 = vst [vmem:[%s1050 + $0xa0] sm:$0xff] %v1091
                %v1093 = vld [vmem:[%s1049 + $0xa8] sm:$0xff]
                %1094 = vst [vmem:[%s1050 + $0xa8] sm:$0xff] %v1093
                %v1095 = vld [vmem:[%s1049 + $0xb0] sm:$0xff]
                %1096 = vst [vmem:[%s1050 + $0xb0] sm:$0xff] %v1095
                %v1097 = vld [vmem:[%s1049 + $0xb8] sm:$0xff]
                %1098 = vst [vmem:[%s1050 + $0xb8] sm:$0xff] %v1097
              $region118: #{tpu_custom_call.1} parent=112 // loop_footer
                %s1048 = sadd.s32 1, %s1044
              $region119: #{tpu_custom_call.1} parent=112 // loop_footer_branch
                %1043 = sbr.rel target = $region115
              $region120: #{tpu_custom_call.1} parent=112 // loop_exit
                _
              %s1099 = sshllo.u32 0, %s1038
              loop: start=0, step=1, limit=1
              $region121: #{tpu_custom_call.1} parent=112 // loop_pre_header
                _
              $region122: #{tpu_custom_call.1} parent=112 // loop_header
                %s1101 = sphi 0, %s1105
                %p1102 = scmp.ge.s32.totalorder %s1101, 1
                %s1106 = sphi %s1040, %s1040
                %s1107 = sphi %s1042, %s1042
              $region123: #{tpu_custom_call.1} parent=112 // loop_header_branch
                %1104 = sbr.rel (%p1102) target = $region127
              $region124: #{tpu_custom_call.1} parent=112 // loop_body
                %v1108 = vld [vmem:[%s1106] sm:%s1099]
                %1109 = vst [vmem:[%s1107] sm:%s1099] %v1108
              $region125: #{tpu_custom_call.1} parent=112 // loop_footer
                %s1105 = sadd.s32 1, %s1101
              $region126: #{tpu_custom_call.1} parent=112 // loop_footer_branch
                %1100 = sbr.rel target = $region122
              $region127: #{tpu_custom_call.1} parent=112 // loop_exit
                _
            $region113: #{tpu_custom_call.1} parent=97 // pred_fallthru
              _
          $region98: #{tpu_custom_call.1} parent=59 // pred_fallthru
            _
          // Predicated region
          $region99: #{tpu_custom_call.1} parent=59 // pred_check
            %p1019 = pneg %p1015
          $region100: #{tpu_custom_call.1} parent=59 // pred_check_branch
            %1021 = sbr.rel (%p1019) target = $region102
          $region101: #{tpu_custom_call.1} parent=59 // pred_region
            %s1022 = sshllo.u32 0, 196
            loop: start=0, step=1, limit=1
            $region103: #{tpu_custom_call.1} parent=101 // loop_pre_header
              _
            $region104: #{tpu_custom_call.1} parent=101 // loop_header
              %s1024 = sphi 0, %s1028
              %p1025 = scmp.ge.s32.totalorder %s1024, 1
              %s1029 = sphi %s9, %s9
              %s1030 = sphi [#allocation5], [#allocation5]
            $region105: #{tpu_custom_call.1} parent=101 // loop_header_branch
              %1027 = sbr.rel (%p1025) target = $region109
            $region106: #{tpu_custom_call.1} parent=101 // loop_body
              %v1031 = vld [vmem:[%s1029] sm:%s1022]
              %1032 = vst [vmem:[%s1030] sm:%s1022] %v1031
            $region107: #{tpu_custom_call.1} parent=101 // loop_footer
              %s1028 = sadd.s32 1, %s1024
            $region108: #{tpu_custom_call.1} parent=101 // loop_footer_branch
              %1023 = sbr.rel target = $region104
            $region109: #{tpu_custom_call.1} parent=101 // loop_exit
              _
          $region102: #{tpu_custom_call.1} parent=59 // pred_fallthru
            _
          // Predicated region
          $region128: #{tpu_custom_call.1} parent=59 // pred_check
            _
          $region129: #{tpu_custom_call.1} parent=59 // pred_check_branch
            %1112 = sbr.rel (0) target = $region131
          $region130: #{tpu_custom_call.1} parent=59 // pred_region
            %1113 = vsyncadd %s1013, 3136
          $region131: #{tpu_custom_call.1} parent=59 // pred_fallthru
            _
          %s1114 = scalar_lea.sflag [#allocation7], 2
          %p1116 = scmp.lt.u32.totalorder 3584, 8
          %p1117 = pneg %p1116
          // Predicated region
          $region132: #{tpu_custom_call.1} parent=59 // pred_check
            _
          $region133: #{tpu_custom_call.1} parent=59 // pred_check_branch
            %1119 = sbr.rel (%p1116) target = $region135
          $region134: #{tpu_custom_call.1} parent=59 // pred_region
            %s1134 = sand.u32 3584, 7
            %p1135 = scmp.eq.s32.totalorder %s1134, 0
            // Predicated region
            $region147: #{tpu_custom_call.1} parent=134 // pred_check
              %p1136 = pneg %p1135
            $region148: #{tpu_custom_call.1} parent=134 // pred_check_branch
              %1138 = sbr.rel (%p1136) target = $region150
            $region149: #{tpu_custom_call.1} parent=134 // pred_region
              loop: start=0, step=1, limit=1
              $region151: #{tpu_custom_call.1} parent=149 // loop_pre_header
                _
              $region152: #{tpu_custom_call.1} parent=149 // loop_header
                %s1140 = sphi 0, %s1144
                %p1141 = scmp.ge.s32.totalorder %s1140, 1
                %s1145 = sphi %s10, %s10
                %s1146 = sphi [#allocation6], [#allocation6]
              $region153: #{tpu_custom_call.1} parent=149 // loop_header_branch
                %1143 = sbr.rel (%p1141) target = $region157
              $region154: #{tpu_custom_call.1} parent=149 // loop_body
                %v1147 = vld [vmem:[%s1145] sm:$0xff]
                %1148 = vst [vmem:[%s1146] sm:$0xff] %v1147
                %v1149 = vld [vmem:[%s1145 + $0x8] sm:$0xff]
                %1150 = vst [vmem:[%s1146 + $0x8] sm:$0xff] %v1149
                %v1151 = vld [vmem:[%s1145 + $0x10] sm:$0xff]
                %1152 = vst [vmem:[%s1146 + $0x10] sm:$0xff] %v1151
                %v1153 = vld [vmem:[%s1145 + $0x18] sm:$0xff]
                %1154 = vst [vmem:[%s1146 + $0x18] sm:$0xff] %v1153
                %v1155 = vld [vmem:[%s1145 + $0x20] sm:$0xff]
                %1156 = vst [vmem:[%s1146 + $0x20] sm:$0xff] %v1155
                %v1157 = vld [vmem:[%s1145 + $0x28] sm:$0xff]
                %1158 = vst [vmem:[%s1146 + $0x28] sm:$0xff] %v1157
                %v1159 = vld [vmem:[%s1145 + $0x30] sm:$0xff]
                %1160 = vst [vmem:[%s1146 + $0x30] sm:$0xff] %v1159
                %v1161 = vld [vmem:[%s1145 + $0x38] sm:$0xff]
                %1162 = vst [vmem:[%s1146 + $0x38] sm:$0xff] %v1161
                %v1163 = vld [vmem:[%s1145 + $0x40] sm:$0xff]
                %1164 = vst [vmem:[%s1146 + $0x40] sm:$0xff] %v1163
                %v1165 = vld [vmem:[%s1145 + $0x48] sm:$0xff]
                %1166 = vst [vmem:[%s1146 + $0x48] sm:$0xff] %v1165
                %v1167 = vld [vmem:[%s1145 + $0x50] sm:$0xff]
                %1168 = vst [vmem:[%s1146 + $0x50] sm:$0xff] %v1167
                %v1169 = vld [vmem:[%s1145 + $0x58] sm:$0xff]
                %1170 = vst [vmem:[%s1146 + $0x58] sm:$0xff] %v1169
                %v1171 = vld [vmem:[%s1145 + $0x60] sm:$0xff]
                %1172 = vst [vmem:[%s1146 + $0x60] sm:$0xff] %v1171
                %v1173 = vld [vmem:[%s1145 + $0x68] sm:$0xff]
                %1174 = vst [vmem:[%s1146 + $0x68] sm:$0xff] %v1173
                %v1175 = vld [vmem:[%s1145 + $0x70] sm:$0xff]
                %1176 = vst [vmem:[%s1146 + $0x70] sm:$0xff] %v1175
                %v1177 = vld [vmem:[%s1145 + $0x78] sm:$0xff]
                %1178 = vst [vmem:[%s1146 + $0x78] sm:$0xff] %v1177
                %v1179 = vld [vmem:[%s1145 + $0x80] sm:$0xff]
                %1180 = vst [vmem:[%s1146 + $0x80] sm:$0xff] %v1179
                %v1181 = vld [vmem:[%s1145 + $0x88] sm:$0xff]
                %1182 = vst [vmem:[%s1146 + $0x88] sm:$0xff] %v1181
                %v1183 = vld [vmem:[%s1145 + $0x90] sm:$0xff]
                %1184 = vst [vmem:[%s1146 + $0x90] sm:$0xff] %v1183
                %v1185 = vld [vmem:[%s1145 + $0x98] sm:$0xff]
                %1186 = vst [vmem:[%s1146 + $0x98] sm:$0xff] %v1185
                %v1187 = vld [vmem:[%s1145 + $0xa0] sm:$0xff]
                %1188 = vst [vmem:[%s1146 + $0xa0] sm:$0xff] %v1187
                %v1189 = vld [vmem:[%s1145 + $0xa8] sm:$0xff]
                %1190 = vst [vmem:[%s1146 + $0xa8] sm:$0xff] %v1189
                %v1191 = vld [vmem:[%s1145 + $0xb0] sm:$0xff]
                %1192 = vst [vmem:[%s1146 + $0xb0] sm:$0xff] %v1191
                %v1193 = vld [vmem:[%s1145 + $0xb8] sm:$0xff]
                %1194 = vst [vmem:[%s1146 + $0xb8] sm:$0xff] %v1193
                %v1195 = vld [vmem:[%s1145 + $0xc0] sm:$0xff]
                %1196 = vst [vmem:[%s1146 + $0xc0] sm:$0xff] %v1195
                %v1197 = vld [vmem:[%s1145 + $0xc8] sm:$0xff]
                %1198 = vst [vmem:[%s1146 + $0xc8] sm:$0xff] %v1197
                %v1199 = vld [vmem:[%s1145 + $0xd0] sm:$0xff]
                %1200 = vst [vmem:[%s1146 + $0xd0] sm:$0xff] %v1199
                %v1201 = vld [vmem:[%s1145 + $0xd8] sm:$0xff]
                %1202 = vst [vmem:[%s1146 + $0xd8] sm:$0xff] %v1201
                %v1203 = vld [vmem:[%s1145 + $0xe0] sm:$0xff]
                %1204 = vst [vmem:[%s1146 + $0xe0] sm:$0xff] %v1203
                %v1205 = vld [vmem:[%s1145 + $0xe8] sm:$0xff]
                %1206 = vst [vmem:[%s1146 + $0xe8] sm:$0xff] %v1205
                %v1207 = vld [vmem:[%s1145 + $0xf0] sm:$0xff]
                %1208 = vst [vmem:[%s1146 + $0xf0] sm:$0xff] %v1207
                %v1209 = vld [vmem:[%s1145 + $0xf8] sm:$0xff]
                %1210 = vst [vmem:[%s1146 + $0xf8] sm:$0xff] %v1209
                %v1211 = vld [vmem:[%s1145 + $0x100] sm:$0xff]
                %1212 = vst [vmem:[%s1146 + $0x100] sm:$0xff] %v1211
                %v1213 = vld [vmem:[%s1145 + $0x108] sm:$0xff]
                %1214 = vst [vmem:[%s1146 + $0x108] sm:$0xff] %v1213
                %v1215 = vld [vmem:[%s1145 + $0x110] sm:$0xff]
                %1216 = vst [vmem:[%s1146 + $0x110] sm:$0xff] %v1215
                %v1217 = vld [vmem:[%s1145 + $0x118] sm:$0xff]
                %1218 = vst [vmem:[%s1146 + $0x118] sm:$0xff] %v1217
                %v1219 = vld [vmem:[%s1145 + $0x120] sm:$0xff]
                %1220 = vst [vmem:[%s1146 + $0x120] sm:$0xff] %v1219
                %v1221 = vld [vmem:[%s1145 + $0x128] sm:$0xff]
                %1222 = vst [vmem:[%s1146 + $0x128] sm:$0xff] %v1221
                %v1223 = vld [vmem:[%s1145 + $0x130] sm:$0xff]
                %1224 = vst [vmem:[%s1146 + $0x130] sm:$0xff] %v1223
                %v1225 = vld [vmem:[%s1145 + $0x138] sm:$0xff]
                %1226 = vst [vmem:[%s1146 + $0x138] sm:$0xff] %v1225
                %v1227 = vld [vmem:[%s1145 + $0x140] sm:$0xff]
                %1228 = vst [vmem:[%s1146 + $0x140] sm:$0xff] %v1227
                %v1229 = vld [vmem:[%s1145 + $0x148] sm:$0xff]
                %1230 = vst [vmem:[%s1146 + $0x148] sm:$0xff] %v1229
                %v1231 = vld [vmem:[%s1145 + $0x150] sm:$0xff]
                %1232 = vst [vmem:[%s1146 + $0x150] sm:$0xff] %v1231
                %v1233 = vld [vmem:[%s1145 + $0x158] sm:$0xff]
                %1234 = vst [vmem:[%s1146 + $0x158] sm:$0xff] %v1233
                %v1235 = vld [vmem:[%s1145 + $0x160] sm:$0xff]
                %1236 = vst [vmem:[%s1146 + $0x160] sm:$0xff] %v1235
                %v1237 = vld [vmem:[%s1145 + $0x168] sm:$0xff]
                %1238 = vst [vmem:[%s1146 + $0x168] sm:$0xff] %v1237
                %v1239 = vld [vmem:[%s1145 + $0x170] sm:$0xff]
                %1240 = vst [vmem:[%s1146 + $0x170] sm:$0xff] %v1239
                %v1241 = vld [vmem:[%s1145 + $0x178] sm:$0xff]
                %1242 = vst [vmem:[%s1146 + $0x178] sm:$0xff] %v1241
                %v1243 = vld [vmem:[%s1145 + $0x180] sm:$0xff]
                %1244 = vst [vmem:[%s1146 + $0x180] sm:$0xff] %v1243
                %v1245 = vld [vmem:[%s1145 + $0x188] sm:$0xff]
                %1246 = vst [vmem:[%s1146 + $0x188] sm:$0xff] %v1245
                %v1247 = vld [vmem:[%s1145 + $0x190] sm:$0xff]
                %1248 = vst [vmem:[%s1146 + $0x190] sm:$0xff] %v1247
                %v1249 = vld [vmem:[%s1145 + $0x198] sm:$0xff]
                %1250 = vst [vmem:[%s1146 + $0x198] sm:$0xff] %v1249
                %v1251 = vld [vmem:[%s1145 + $0x1a0] sm:$0xff]
                %1252 = vst [vmem:[%s1146 + $0x1a0] sm:$0xff] %v1251
                %v1253 = vld [vmem:[%s1145 + $0x1a8] sm:$0xff]
                %1254 = vst [vmem:[%s1146 + $0x1a8] sm:$0xff] %v1253
                %v1255 = vld [vmem:[%s1145 + $0x1b0] sm:$0xff]
                %1256 = vst [vmem:[%s1146 + $0x1b0] sm:$0xff] %v1255
                %v1257 = vld [vmem:[%s1145 + $0x1b8] sm:$0xff]
                %1258 = vst [vmem:[%s1146 + $0x1b8] sm:$0xff] %v1257
                %v1259 = vld [vmem:[%s1145 + $0x1c0] sm:$0xff]
                %1260 = vst [vmem:[%s1146 + $0x1c0] sm:$0xff] %v1259
                %v1261 = vld [vmem:[%s1145 + $0x1c8] sm:$0xff]
                %1262 = vst [vmem:[%s1146 + $0x1c8] sm:$0xff] %v1261
                %v1263 = vld [vmem:[%s1145 + $0x1d0] sm:$0xff]
                %1264 = vst [vmem:[%s1146 + $0x1d0] sm:$0xff] %v1263
                %v1265 = vld [vmem:[%s1145 + $0x1d8] sm:$0xff]
                %1266 = vst [vmem:[%s1146 + $0x1d8] sm:$0xff] %v1265
                %v1267 = vld [vmem:[%s1145 + $0x1e0] sm:$0xff]
                %1268 = vst [vmem:[%s1146 + $0x1e0] sm:$0xff] %v1267
                %v1269 = vld [vmem:[%s1145 + $0x1e8] sm:$0xff]
                %1270 = vst [vmem:[%s1146 + $0x1e8] sm:$0xff] %v1269
                %v1271 = vld [vmem:[%s1145 + $0x1f0] sm:$0xff]
                %1272 = vst [vmem:[%s1146 + $0x1f0] sm:$0xff] %v1271
                %v1273 = vld [vmem:[%s1145 + $0x1f8] sm:$0xff]
                %1274 = vst [vmem:[%s1146 + $0x1f8] sm:$0xff] %v1273
                %v1275 = vld [vmem:[%s1145 + $0x200] sm:$0xff]
                %1276 = vst [vmem:[%s1146 + $0x200] sm:$0xff] %v1275
                %v1277 = vld [vmem:[%s1145 + $0x208] sm:$0xff]
                %1278 = vst [vmem:[%s1146 + $0x208] sm:$0xff] %v1277
                %v1279 = vld [vmem:[%s1145 + $0x210] sm:$0xff]
                %1280 = vst [vmem:[%s1146 + $0x210] sm:$0xff] %v1279
                %v1281 = vld [vmem:[%s1145 + $0x218] sm:$0xff]
                %1282 = vst [vmem:[%s1146 + $0x218] sm:$0xff] %v1281
                %v1283 = vld [vmem:[%s1145 + $0x220] sm:$0xff]
                %1284 = vst [vmem:[%s1146 + $0x220] sm:$0xff] %v1283
                %v1285 = vld [vmem:[%s1145 + $0x228] sm:$0xff]
                %1286 = vst [vmem:[%s1146 + $0x228] sm:$0xff] %v1285
                %v1287 = vld [vmem:[%s1145 + $0x230] sm:$0xff]
                %1288 = vst [vmem:[%s1146 + $0x230] sm:$0xff] %v1287
                %v1289 = vld [vmem:[%s1145 + $0x238] sm:$0xff]
                %1290 = vst [vmem:[%s1146 + $0x238] sm:$0xff] %v1289
                %v1291 = vld [vmem:[%s1145 + $0x240] sm:$0xff]
                %1292 = vst [vmem:[%s1146 + $0x240] sm:$0xff] %v1291
                %v1293 = vld [vmem:[%s1145 + $0x248] sm:$0xff]
                %1294 = vst [vmem:[%s1146 + $0x248] sm:$0xff] %v1293
                %v1295 = vld [vmem:[%s1145 + $0x250] sm:$0xff]
                %1296 = vst [vmem:[%s1146 + $0x250] sm:$0xff] %v1295
                %v1297 = vld [vmem:[%s1145 + $0x258] sm:$0xff]
                %1298 = vst [vmem:[%s1146 + $0x258] sm:$0xff] %v1297
                %v1299 = vld [vmem:[%s1145 + $0x260] sm:$0xff]
                %1300 = vst [vmem:[%s1146 + $0x260] sm:$0xff] %v1299
                %v1301 = vld [vmem:[%s1145 + $0x268] sm:$0xff]
                %1302 = vst [vmem:[%s1146 + $0x268] sm:$0xff] %v1301
                %v1303 = vld [vmem:[%s1145 + $0x270] sm:$0xff]
                %1304 = vst [vmem:[%s1146 + $0x270] sm:$0xff] %v1303
                %v1305 = vld [vmem:[%s1145 + $0x278] sm:$0xff]
                %1306 = vst [vmem:[%s1146 + $0x278] sm:$0xff] %v1305
                %v1307 = vld [vmem:[%s1145 + $0x280] sm:$0xff]
                %1308 = vst [vmem:[%s1146 + $0x280] sm:$0xff] %v1307
                %v1309 = vld [vmem:[%s1145 + $0x288] sm:$0xff]
                %1310 = vst [vmem:[%s1146 + $0x288] sm:$0xff] %v1309
                %v1311 = vld [vmem:[%s1145 + $0x290] sm:$0xff]
                %1312 = vst [vmem:[%s1146 + $0x290] sm:$0xff] %v1311
                %v1313 = vld [vmem:[%s1145 + $0x298] sm:$0xff]
                %1314 = vst [vmem:[%s1146 + $0x298] sm:$0xff] %v1313
                %v1315 = vld [vmem:[%s1145 + $0x2a0] sm:$0xff]
                %1316 = vst [vmem:[%s1146 + $0x2a0] sm:$0xff] %v1315
                %v1317 = vld [vmem:[%s1145 + $0x2a8] sm:$0xff]
                %1318 = vst [vmem:[%s1146 + $0x2a8] sm:$0xff] %v1317
                %v1319 = vld [vmem:[%s1145 + $0x2b0] sm:$0xff]
                %1320 = vst [vmem:[%s1146 + $0x2b0] sm:$0xff] %v1319
                %v1321 = vld [vmem:[%s1145 + $0x2b8] sm:$0xff]
                %1322 = vst [vmem:[%s1146 + $0x2b8] sm:$0xff] %v1321
                %v1323 = vld [vmem:[%s1145 + $0x2c0] sm:$0xff]
                %1324 = vst [vmem:[%s1146 + $0x2c0] sm:$0xff] %v1323
                %v1325 = vld [vmem:[%s1145 + $0x2c8] sm:$0xff]
                %1326 = vst [vmem:[%s1146 + $0x2c8] sm:$0xff] %v1325
                %v1327 = vld [vmem:[%s1145 + $0x2d0] sm:$0xff]
                %1328 = vst [vmem:[%s1146 + $0x2d0] sm:$0xff] %v1327
                %v1329 = vld [vmem:[%s1145 + $0x2d8] sm:$0xff]
                %1330 = vst [vmem:[%s1146 + $0x2d8] sm:$0xff] %v1329
                %v1331 = vld [vmem:[%s1145 + $0x2e0] sm:$0xff]
                %1332 = vst [vmem:[%s1146 + $0x2e0] sm:$0xff] %v1331
                %v1333 = vld [vmem:[%s1145 + $0x2e8] sm:$0xff]
                %1334 = vst [vmem:[%s1146 + $0x2e8] sm:$0xff] %v1333
                %v1335 = vld [vmem:[%s1145 + $0x2f0] sm:$0xff]
                %1336 = vst [vmem:[%s1146 + $0x2f0] sm:$0xff] %v1335
                %v1337 = vld [vmem:[%s1145 + $0x2f8] sm:$0xff]
                %1338 = vst [vmem:[%s1146 + $0x2f8] sm:$0xff] %v1337
                %v1339 = vld [vmem:[%s1145 + $0x300] sm:$0xff]
                %1340 = vst [vmem:[%s1146 + $0x300] sm:$0xff] %v1339
                %v1341 = vld [vmem:[%s1145 + $0x308] sm:$0xff]
                %1342 = vst [vmem:[%s1146 + $0x308] sm:$0xff] %v1341
                %v1343 = vld [vmem:[%s1145 + $0x310] sm:$0xff]
                %1344 = vst [vmem:[%s1146 + $0x310] sm:$0xff] %v1343
                %v1345 = vld [vmem:[%s1145 + $0x318] sm:$0xff]
                %1346 = vst [vmem:[%s1146 + $0x318] sm:$0xff] %v1345
                %v1347 = vld [vmem:[%s1145 + $0x320] sm:$0xff]
                %1348 = vst [vmem:[%s1146 + $0x320] sm:$0xff] %v1347
                %v1349 = vld [vmem:[%s1145 + $0x328] sm:$0xff]
                %1350 = vst [vmem:[%s1146 + $0x328] sm:$0xff] %v1349
                %v1351 = vld [vmem:[%s1145 + $0x330] sm:$0xff]
                %1352 = vst [vmem:[%s1146 + $0x330] sm:$0xff] %v1351
                %v1353 = vld [vmem:[%s1145 + $0x338] sm:$0xff]
                %1354 = vst [vmem:[%s1146 + $0x338] sm:$0xff] %v1353
                %v1355 = vld [vmem:[%s1145 + $0x340] sm:$0xff]
                %1356 = vst [vmem:[%s1146 + $0x340] sm:$0xff] %v1355
                %v1357 = vld [vmem:[%s1145 + $0x348] sm:$0xff]
                %1358 = vst [vmem:[%s1146 + $0x348] sm:$0xff] %v1357
                %v1359 = vld [vmem:[%s1145 + $0x350] sm:$0xff]
                %1360 = vst [vmem:[%s1146 + $0x350] sm:$0xff] %v1359
                %v1361 = vld [vmem:[%s1145 + $0x358] sm:$0xff]
                %1362 = vst [vmem:[%s1146 + $0x358] sm:$0xff] %v1361
                %v1363 = vld [vmem:[%s1145 + $0x360] sm:$0xff]
                %1364 = vst [vmem:[%s1146 + $0x360] sm:$0xff] %v1363
                %v1365 = vld [vmem:[%s1145 + $0x368] sm:$0xff]
                %1366 = vst [vmem:[%s1146 + $0x368] sm:$0xff] %v1365
                %v1367 = vld [vmem:[%s1145 + $0x370] sm:$0xff]
                %1368 = vst [vmem:[%s1146 + $0x370] sm:$0xff] %v1367
                %v1369 = vld [vmem:[%s1145 + $0x378] sm:$0xff]
                %1370 = vst [vmem:[%s1146 + $0x378] sm:$0xff] %v1369
                %v1371 = vld [vmem:[%s1145 + $0x380] sm:$0xff]
                %1372 = vst [vmem:[%s1146 + $0x380] sm:$0xff] %v1371
                %v1373 = vld [vmem:[%s1145 + $0x388] sm:$0xff]
                %1374 = vst [vmem:[%s1146 + $0x388] sm:$0xff] %v1373
                %v1375 = vld [vmem:[%s1145 + $0x390] sm:$0xff]
                %1376 = vst [vmem:[%s1146 + $0x390] sm:$0xff] %v1375
                %v1377 = vld [vmem:[%s1145 + $0x398] sm:$0xff]
                %1378 = vst [vmem:[%s1146 + $0x398] sm:$0xff] %v1377
                %v1379 = vld [vmem:[%s1145 + $0x3a0] sm:$0xff]
                %1380 = vst [vmem:[%s1146 + $0x3a0] sm:$0xff] %v1379
                %v1381 = vld [vmem:[%s1145 + $0x3a8] sm:$0xff]
                %1382 = vst [vmem:[%s1146 + $0x3a8] sm:$0xff] %v1381
                %v1383 = vld [vmem:[%s1145 + $0x3b0] sm:$0xff]
                %1384 = vst [vmem:[%s1146 + $0x3b0] sm:$0xff] %v1383
                %v1385 = vld [vmem:[%s1145 + $0x3b8] sm:$0xff]
                %1386 = vst [vmem:[%s1146 + $0x3b8] sm:$0xff] %v1385
                %v1387 = vld [vmem:[%s1145 + $0x3c0] sm:$0xff]
                %1388 = vst [vmem:[%s1146 + $0x3c0] sm:$0xff] %v1387
                %v1389 = vld [vmem:[%s1145 + $0x3c8] sm:$0xff]
                %1390 = vst [vmem:[%s1146 + $0x3c8] sm:$0xff] %v1389
                %v1391 = vld [vmem:[%s1145 + $0x3d0] sm:$0xff]
                %1392 = vst [vmem:[%s1146 + $0x3d0] sm:$0xff] %v1391
                %v1393 = vld [vmem:[%s1145 + $0x3d8] sm:$0xff]
                %1394 = vst [vmem:[%s1146 + $0x3d8] sm:$0xff] %v1393
                %v1395 = vld [vmem:[%s1145 + $0x3e0] sm:$0xff]
                %1396 = vst [vmem:[%s1146 + $0x3e0] sm:$0xff] %v1395
                %v1397 = vld [vmem:[%s1145 + $0x3e8] sm:$0xff]
                %1398 = vst [vmem:[%s1146 + $0x3e8] sm:$0xff] %v1397
                %v1399 = vld [vmem:[%s1145 + $0x3f0] sm:$0xff]
                %1400 = vst [vmem:[%s1146 + $0x3f0] sm:$0xff] %v1399
                %v1401 = vld [vmem:[%s1145 + $0x3f8] sm:$0xff]
                %1402 = vst [vmem:[%s1146 + $0x3f8] sm:$0xff] %v1401
                %v1403 = vld [vmem:[%s1145 + $0x400] sm:$0xff]
                %1404 = vst [vmem:[%s1146 + $0x400] sm:$0xff] %v1403
                %v1405 = vld [vmem:[%s1145 + $0x408] sm:$0xff]
                %1406 = vst [vmem:[%s1146 + $0x408] sm:$0xff] %v1405
                %v1407 = vld [vmem:[%s1145 + $0x410] sm:$0xff]
                %1408 = vst [vmem:[%s1146 + $0x410] sm:$0xff] %v1407
                %v1409 = vld [vmem:[%s1145 + $0x418] sm:$0xff]
                %1410 = vst [vmem:[%s1146 + $0x418] sm:$0xff] %v1409
                %v1411 = vld [vmem:[%s1145 + $0x420] sm:$0xff]
                %1412 = vst [vmem:[%s1146 + $0x420] sm:$0xff] %v1411
                %v1413 = vld [vmem:[%s1145 + $0x428] sm:$0xff]
                %1414 = vst [vmem:[%s1146 + $0x428] sm:$0xff] %v1413
                %v1415 = vld [vmem:[%s1145 + $0x430] sm:$0xff]
                %1416 = vst [vmem:[%s1146 + $0x430] sm:$0xff] %v1415
                %v1417 = vld [vmem:[%s1145 + $0x438] sm:$0xff]
                %1418 = vst [vmem:[%s1146 + $0x438] sm:$0xff] %v1417
                %v1419 = vld [vmem:[%s1145 + $0x440] sm:$0xff]
                %1420 = vst [vmem:[%s1146 + $0x440] sm:$0xff] %v1419
                %v1421 = vld [vmem:[%s1145 + $0x448] sm:$0xff]
                %1422 = vst [vmem:[%s1146 + $0x448] sm:$0xff] %v1421
                %v1423 = vld [vmem:[%s1145 + $0x450] sm:$0xff]
                %1424 = vst [vmem:[%s1146 + $0x450] sm:$0xff] %v1423
                %v1425 = vld [vmem:[%s1145 + $0x458] sm:$0xff]
                %1426 = vst [vmem:[%s1146 + $0x458] sm:$0xff] %v1425
                %v1427 = vld [vmem:[%s1145 + $0x460] sm:$0xff]
                %1428 = vst [vmem:[%s1146 + $0x460] sm:$0xff] %v1427
                %v1429 = vld [vmem:[%s1145 + $0x468] sm:$0xff]
                %1430 = vst [vmem:[%s1146 + $0x468] sm:$0xff] %v1429
                %v1431 = vld [vmem:[%s1145 + $0x470] sm:$0xff]
                %1432 = vst [vmem:[%s1146 + $0x470] sm:$0xff] %v1431
                %v1433 = vld [vmem:[%s1145 + $0x478] sm:$0xff]
                %1434 = vst [vmem:[%s1146 + $0x478] sm:$0xff] %v1433
                %v1435 = vld [vmem:[%s1145 + $0x480] sm:$0xff]
                %1436 = vst [vmem:[%s1146 + $0x480] sm:$0xff] %v1435
                %v1437 = vld [vmem:[%s1145 + $0x488] sm:$0xff]
                %1438 = vst [vmem:[%s1146 + $0x488] sm:$0xff] %v1437
                %v1439 = vld [vmem:[%s1145 + $0x490] sm:$0xff]
                %1440 = vst [vmem:[%s1146 + $0x490] sm:$0xff] %v1439
                %v1441 = vld [vmem:[%s1145 + $0x498] sm:$0xff]
                %1442 = vst [vmem:[%s1146 + $0x498] sm:$0xff] %v1441
                %v1443 = vld [vmem:[%s1145 + $0x4a0] sm:$0xff]
                %1444 = vst [vmem:[%s1146 + $0x4a0] sm:$0xff] %v1443
                %v1445 = vld [vmem:[%s1145 + $0x4a8] sm:$0xff]
                %1446 = vst [vmem:[%s1146 + $0x4a8] sm:$0xff] %v1445
                %v1447 = vld [vmem:[%s1145 + $0x4b0] sm:$0xff]
                %1448 = vst [vmem:[%s1146 + $0x4b0] sm:$0xff] %v1447
                %v1449 = vld [vmem:[%s1145 + $0x4b8] sm:$0xff]
                %1450 = vst [vmem:[%s1146 + $0x4b8] sm:$0xff] %v1449
                %v1451 = vld [vmem:[%s1145 + $0x4c0] sm:$0xff]
                %1452 = vst [vmem:[%s1146 + $0x4c0] sm:$0xff] %v1451
                %v1453 = vld [vmem:[%s1145 + $0x4c8] sm:$0xff]
                %1454 = vst [vmem:[%s1146 + $0x4c8] sm:$0xff] %v1453
                %v1455 = vld [vmem:[%s1145 + $0x4d0] sm:$0xff]
                %1456 = vst [vmem:[%s1146 + $0x4d0] sm:$0xff] %v1455
                %v1457 = vld [vmem:[%s1145 + $0x4d8] sm:$0xff]
                %1458 = vst [vmem:[%s1146 + $0x4d8] sm:$0xff] %v1457
                %v1459 = vld [vmem:[%s1145 + $0x4e0] sm:$0xff]
                %1460 = vst [vmem:[%s1146 + $0x4e0] sm:$0xff] %v1459
                %v1461 = vld [vmem:[%s1145 + $0x4e8] sm:$0xff]
                %1462 = vst [vmem:[%s1146 + $0x4e8] sm:$0xff] %v1461
                %v1463 = vld [vmem:[%s1145 + $0x4f0] sm:$0xff]
                %1464 = vst [vmem:[%s1146 + $0x4f0] sm:$0xff] %v1463
                %v1465 = vld [vmem:[%s1145 + $0x4f8] sm:$0xff]
                %1466 = vst [vmem:[%s1146 + $0x4f8] sm:$0xff] %v1465
                %v1467 = vld [vmem:[%s1145 + $0x500] sm:$0xff]
                %1468 = vst [vmem:[%s1146 + $0x500] sm:$0xff] %v1467
                %v1469 = vld [vmem:[%s1145 + $0x508] sm:$0xff]
                %1470 = vst [vmem:[%s1146 + $0x508] sm:$0xff] %v1469
                %v1471 = vld [vmem:[%s1145 + $0x510] sm:$0xff]
                %1472 = vst [vmem:[%s1146 + $0x510] sm:$0xff] %v1471
                %v1473 = vld [vmem:[%s1145 + $0x518] sm:$0xff]
                %1474 = vst [vmem:[%s1146 + $0x518] sm:$0xff] %v1473
                %v1475 = vld [vmem:[%s1145 + $0x520] sm:$0xff]
                %1476 = vst [vmem:[%s1146 + $0x520] sm:$0xff] %v1475
                %v1477 = vld [vmem:[%s1145 + $0x528] sm:$0xff]
                %1478 = vst [vmem:[%s1146 + $0x528] sm:$0xff] %v1477
                %v1479 = vld [vmem:[%s1145 + $0x530] sm:$0xff]
                %1480 = vst [vmem:[%s1146 + $0x530] sm:$0xff] %v1479
                %v1481 = vld [vmem:[%s1145 + $0x538] sm:$0xff]
                %1482 = vst [vmem:[%s1146 + $0x538] sm:$0xff] %v1481
                %v1483 = vld [vmem:[%s1145 + $0x540] sm:$0xff]
                %1484 = vst [vmem:[%s1146 + $0x540] sm:$0xff] %v1483
                %v1485 = vld [vmem:[%s1145 + $0x548] sm:$0xff]
                %1486 = vst [vmem:[%s1146 + $0x548] sm:$0xff] %v1485
                %v1487 = vld [vmem:[%s1145 + $0x550] sm:$0xff]
                %1488 = vst [vmem:[%s1146 + $0x550] sm:$0xff] %v1487
                %v1489 = vld [vmem:[%s1145 + $0x558] sm:$0xff]
                %1490 = vst [vmem:[%s1146 + $0x558] sm:$0xff] %v1489
                %v1491 = vld [vmem:[%s1145 + $0x560] sm:$0xff]
                %1492 = vst [vmem:[%s1146 + $0x560] sm:$0xff] %v1491
                %v1493 = vld [vmem:[%s1145 + $0x568] sm:$0xff]
                %1494 = vst [vmem:[%s1146 + $0x568] sm:$0xff] %v1493
                %v1495 = vld [vmem:[%s1145 + $0x570] sm:$0xff]
                %1496 = vst [vmem:[%s1146 + $0x570] sm:$0xff] %v1495
                %v1497 = vld [vmem:[%s1145 + $0x578] sm:$0xff]
                %1498 = vst [vmem:[%s1146 + $0x578] sm:$0xff] %v1497
                %v1499 = vld [vmem:[%s1145 + $0x580] sm:$0xff]
                %1500 = vst [vmem:[%s1146 + $0x580] sm:$0xff] %v1499
                %v1501 = vld [vmem:[%s1145 + $0x588] sm:$0xff]
                %1502 = vst [vmem:[%s1146 + $0x588] sm:$0xff] %v1501
                %v1503 = vld [vmem:[%s1145 + $0x590] sm:$0xff]
                %1504 = vst [vmem:[%s1146 + $0x590] sm:$0xff] %v1503
                %v1505 = vld [vmem:[%s1145 + $0x598] sm:$0xff]
                %1506 = vst [vmem:[%s1146 + $0x598] sm:$0xff] %v1505
                %v1507 = vld [vmem:[%s1145 + $0x5a0] sm:$0xff]
                %1508 = vst [vmem:[%s1146 + $0x5a0] sm:$0xff] %v1507
                %v1509 = vld [vmem:[%s1145 + $0x5a8] sm:$0xff]
                %1510 = vst [vmem:[%s1146 + $0x5a8] sm:$0xff] %v1509
                %v1511 = vld [vmem:[%s1145 + $0x5b0] sm:$0xff]
                %1512 = vst [vmem:[%s1146 + $0x5b0] sm:$0xff] %v1511
                %v1513 = vld [vmem:[%s1145 + $0x5b8] sm:$0xff]
                %1514 = vst [vmem:[%s1146 + $0x5b8] sm:$0xff] %v1513
                %v1515 = vld [vmem:[%s1145 + $0x5c0] sm:$0xff]
                %1516 = vst [vmem:[%s1146 + $0x5c0] sm:$0xff] %v1515
                %v1517 = vld [vmem:[%s1145 + $0x5c8] sm:$0xff]
                %1518 = vst [vmem:[%s1146 + $0x5c8] sm:$0xff] %v1517
                %v1519 = vld [vmem:[%s1145 + $0x5d0] sm:$0xff]
                %1520 = vst [vmem:[%s1146 + $0x5d0] sm:$0xff] %v1519
                %v1521 = vld [vmem:[%s1145 + $0x5d8] sm:$0xff]
                %1522 = vst [vmem:[%s1146 + $0x5d8] sm:$0xff] %v1521
                %v1523 = vld [vmem:[%s1145 + $0x5e0] sm:$0xff]
                %1524 = vst [vmem:[%s1146 + $0x5e0] sm:$0xff] %v1523
                %v1525 = vld [vmem:[%s1145 + $0x5e8] sm:$0xff]
                %1526 = vst [vmem:[%s1146 + $0x5e8] sm:$0xff] %v1525
                %v1527 = vld [vmem:[%s1145 + $0x5f0] sm:$0xff]
                %1528 = vst [vmem:[%s1146 + $0x5f0] sm:$0xff] %v1527
                %v1529 = vld [vmem:[%s1145 + $0x5f8] sm:$0xff]
                %1530 = vst [vmem:[%s1146 + $0x5f8] sm:$0xff] %v1529
                %v1531 = vld [vmem:[%s1145 + $0x600] sm:$0xff]
                %1532 = vst [vmem:[%s1146 + $0x600] sm:$0xff] %v1531
                %v1533 = vld [vmem:[%s1145 + $0x608] sm:$0xff]
                %1534 = vst [vmem:[%s1146 + $0x608] sm:$0xff] %v1533
                %v1535 = vld [vmem:[%s1145 + $0x610] sm:$0xff]
                %1536 = vst [vmem:[%s1146 + $0x610] sm:$0xff] %v1535
                %v1537 = vld [vmem:[%s1145 + $0x618] sm:$0xff]
                %1538 = vst [vmem:[%s1146 + $0x618] sm:$0xff] %v1537
                %v1539 = vld [vmem:[%s1145 + $0x620] sm:$0xff]
                %1540 = vst [vmem:[%s1146 + $0x620] sm:$0xff] %v1539
                %v1541 = vld [vmem:[%s1145 + $0x628] sm:$0xff]
                %1542 = vst [vmem:[%s1146 + $0x628] sm:$0xff] %v1541
                %v1543 = vld [vmem:[%s1145 + $0x630] sm:$0xff]
                %1544 = vst [vmem:[%s1146 + $0x630] sm:$0xff] %v1543
                %v1545 = vld [vmem:[%s1145 + $0x638] sm:$0xff]
                %1546 = vst [vmem:[%s1146 + $0x638] sm:$0xff] %v1545
                %v1547 = vld [vmem:[%s1145 + $0x640] sm:$0xff]
                %1548 = vst [vmem:[%s1146 + $0x640] sm:$0xff] %v1547
                %v1549 = vld [vmem:[%s1145 + $0x648] sm:$0xff]
                %1550 = vst [vmem:[%s1146 + $0x648] sm:$0xff] %v1549
                %v1551 = vld [vmem:[%s1145 + $0x650] sm:$0xff]
                %1552 = vst [vmem:[%s1146 + $0x650] sm:$0xff] %v1551
                %v1553 = vld [vmem:[%s1145 + $0x658] sm:$0xff]
                %1554 = vst [vmem:[%s1146 + $0x658] sm:$0xff] %v1553
                %v1555 = vld [vmem:[%s1145 + $0x660] sm:$0xff]
                %1556 = vst [vmem:[%s1146 + $0x660] sm:$0xff] %v1555
                %v1557 = vld [vmem:[%s1145 + $0x668] sm:$0xff]
                %1558 = vst [vmem:[%s1146 + $0x668] sm:$0xff] %v1557
                %v1559 = vld [vmem:[%s1145 + $0x670] sm:$0xff]
                %1560 = vst [vmem:[%s1146 + $0x670] sm:$0xff] %v1559
                %v1561 = vld [vmem:[%s1145 + $0x678] sm:$0xff]
                %1562 = vst [vmem:[%s1146 + $0x678] sm:$0xff] %v1561
                %v1563 = vld [vmem:[%s1145 + $0x680] sm:$0xff]
                %1564 = vst [vmem:[%s1146 + $0x680] sm:$0xff] %v1563
                %v1565 = vld [vmem:[%s1145 + $0x688] sm:$0xff]
                %1566 = vst [vmem:[%s1146 + $0x688] sm:$0xff] %v1565
                %v1567 = vld [vmem:[%s1145 + $0x690] sm:$0xff]
                %1568 = vst [vmem:[%s1146 + $0x690] sm:$0xff] %v1567
                %v1569 = vld [vmem:[%s1145 + $0x698] sm:$0xff]
                %1570 = vst [vmem:[%s1146 + $0x698] sm:$0xff] %v1569
                %v1571 = vld [vmem:[%s1145 + $0x6a0] sm:$0xff]
                %1572 = vst [vmem:[%s1146 + $0x6a0] sm:$0xff] %v1571
                %v1573 = vld [vmem:[%s1145 + $0x6a8] sm:$0xff]
                %1574 = vst [vmem:[%s1146 + $0x6a8] sm:$0xff] %v1573
                %v1575 = vld [vmem:[%s1145 + $0x6b0] sm:$0xff]
                %1576 = vst [vmem:[%s1146 + $0x6b0] sm:$0xff] %v1575
                %v1577 = vld [vmem:[%s1145 + $0x6b8] sm:$0xff]
                %1578 = vst [vmem:[%s1146 + $0x6b8] sm:$0xff] %v1577
                %v1579 = vld [vmem:[%s1145 + $0x6c0] sm:$0xff]
                %1580 = vst [vmem:[%s1146 + $0x6c0] sm:$0xff] %v1579
                %v1581 = vld [vmem:[%s1145 + $0x6c8] sm:$0xff]
                %1582 = vst [vmem:[%s1146 + $0x6c8] sm:$0xff] %v1581
                %v1583 = vld [vmem:[%s1145 + $0x6d0] sm:$0xff]
                %1584 = vst [vmem:[%s1146 + $0x6d0] sm:$0xff] %v1583
                %v1585 = vld [vmem:[%s1145 + $0x6d8] sm:$0xff]
                %1586 = vst [vmem:[%s1146 + $0x6d8] sm:$0xff] %v1585
                %v1587 = vld [vmem:[%s1145 + $0x6e0] sm:$0xff]
                %1588 = vst [vmem:[%s1146 + $0x6e0] sm:$0xff] %v1587
                %v1589 = vld [vmem:[%s1145 + $0x6e8] sm:$0xff]
                %1590 = vst [vmem:[%s1146 + $0x6e8] sm:$0xff] %v1589
                %v1591 = vld [vmem:[%s1145 + $0x6f0] sm:$0xff]
                %1592 = vst [vmem:[%s1146 + $0x6f0] sm:$0xff] %v1591
                %v1593 = vld [vmem:[%s1145 + $0x6f8] sm:$0xff]
                %1594 = vst [vmem:[%s1146 + $0x6f8] sm:$0xff] %v1593
                %v1595 = vld [vmem:[%s1145 + $0x700] sm:$0xff]
                %1596 = vst [vmem:[%s1146 + $0x700] sm:$0xff] %v1595
                %v1597 = vld [vmem:[%s1145 + $0x708] sm:$0xff]
                %1598 = vst [vmem:[%s1146 + $0x708] sm:$0xff] %v1597
                %v1599 = vld [vmem:[%s1145 + $0x710] sm:$0xff]
                %1600 = vst [vmem:[%s1146 + $0x710] sm:$0xff] %v1599
                %v1601 = vld [vmem:[%s1145 + $0x718] sm:$0xff]
                %1602 = vst [vmem:[%s1146 + $0x718] sm:$0xff] %v1601
                %v1603 = vld [vmem:[%s1145 + $0x720] sm:$0xff]
                %1604 = vst [vmem:[%s1146 + $0x720] sm:$0xff] %v1603
                %v1605 = vld [vmem:[%s1145 + $0x728] sm:$0xff]
                %1606 = vst [vmem:[%s1146 + $0x728] sm:$0xff] %v1605
                %v1607 = vld [vmem:[%s1145 + $0x730] sm:$0xff]
                %1608 = vst [vmem:[%s1146 + $0x730] sm:$0xff] %v1607
                %v1609 = vld [vmem:[%s1145 + $0x738] sm:$0xff]
                %1610 = vst [vmem:[%s1146 + $0x738] sm:$0xff] %v1609
                %v1611 = vld [vmem:[%s1145 + $0x740] sm:$0xff]
                %1612 = vst [vmem:[%s1146 + $0x740] sm:$0xff] %v1611
                %v1613 = vld [vmem:[%s1145 + $0x748] sm:$0xff]
                %1614 = vst [vmem:[%s1146 + $0x748] sm:$0xff] %v1613
                %v1615 = vld [vmem:[%s1145 + $0x750] sm:$0xff]
                %1616 = vst [vmem:[%s1146 + $0x750] sm:$0xff] %v1615
                %v1617 = vld [vmem:[%s1145 + $0x758] sm:$0xff]
                %1618 = vst [vmem:[%s1146 + $0x758] sm:$0xff] %v1617
                %v1619 = vld [vmem:[%s1145 + $0x760] sm:$0xff]
                %1620 = vst [vmem:[%s1146 + $0x760] sm:$0xff] %v1619
                %v1621 = vld [vmem:[%s1145 + $0x768] sm:$0xff]
                %1622 = vst [vmem:[%s1146 + $0x768] sm:$0xff] %v1621
                %v1623 = vld [vmem:[%s1145 + $0x770] sm:$0xff]
                %1624 = vst [vmem:[%s1146 + $0x770] sm:$0xff] %v1623
                %v1625 = vld [vmem:[%s1145 + $0x778] sm:$0xff]
                %1626 = vst [vmem:[%s1146 + $0x778] sm:$0xff] %v1625
                %v1627 = vld [vmem:[%s1145 + $0x780] sm:$0xff]
                %1628 = vst [vmem:[%s1146 + $0x780] sm:$0xff] %v1627
                %v1629 = vld [vmem:[%s1145 + $0x788] sm:$0xff]
                %1630 = vst [vmem:[%s1146 + $0x788] sm:$0xff] %v1629
                %v1631 = vld [vmem:[%s1145 + $0x790] sm:$0xff]
                %1632 = vst [vmem:[%s1146 + $0x790] sm:$0xff] %v1631
                %v1633 = vld [vmem:[%s1145 + $0x798] sm:$0xff]
                %1634 = vst [vmem:[%s1146 + $0x798] sm:$0xff] %v1633
                %v1635 = vld [vmem:[%s1145 + $0x7a0] sm:$0xff]
                %1636 = vst [vmem:[%s1146 + $0x7a0] sm:$0xff] %v1635
                %v1637 = vld [vmem:[%s1145 + $0x7a8] sm:$0xff]
                %1638 = vst [vmem:[%s1146 + $0x7a8] sm:$0xff] %v1637
                %v1639 = vld [vmem:[%s1145 + $0x7b0] sm:$0xff]
                %1640 = vst [vmem:[%s1146 + $0x7b0] sm:$0xff] %v1639
                %v1641 = vld [vmem:[%s1145 + $0x7b8] sm:$0xff]
                %1642 = vst [vmem:[%s1146 + $0x7b8] sm:$0xff] %v1641
                %v1643 = vld [vmem:[%s1145 + $0x7c0] sm:$0xff]
                %1644 = vst [vmem:[%s1146 + $0x7c0] sm:$0xff] %v1643
                %v1645 = vld [vmem:[%s1145 + $0x7c8] sm:$0xff]
                %1646 = vst [vmem:[%s1146 + $0x7c8] sm:$0xff] %v1645
                %v1647 = vld [vmem:[%s1145 + $0x7d0] sm:$0xff]
                %1648 = vst [vmem:[%s1146 + $0x7d0] sm:$0xff] %v1647
                %v1649 = vld [vmem:[%s1145 + $0x7d8] sm:$0xff]
                %1650 = vst [vmem:[%s1146 + $0x7d8] sm:$0xff] %v1649
                %v1651 = vld [vmem:[%s1145 + $0x7e0] sm:$0xff]
                %1652 = vst [vmem:[%s1146 + $0x7e0] sm:$0xff] %v1651
                %v1653 = vld [vmem:[%s1145 + $0x7e8] sm:$0xff]
                %1654 = vst [vmem:[%s1146 + $0x7e8] sm:$0xff] %v1653
                %v1655 = vld [vmem:[%s1145 + $0x7f0] sm:$0xff]
                %1656 = vst [vmem:[%s1146 + $0x7f0] sm:$0xff] %v1655
                %v1657 = vld [vmem:[%s1145 + $0x7f8] sm:$0xff]
                %1658 = vst [vmem:[%s1146 + $0x7f8] sm:$0xff] %v1657
                %v1659 = vld [vmem:[%s1145 + $0x800] sm:$0xff]
                %1660 = vst [vmem:[%s1146 + $0x800] sm:$0xff] %v1659
                %v1661 = vld [vmem:[%s1145 + $0x808] sm:$0xff]
                %1662 = vst [vmem:[%s1146 + $0x808] sm:$0xff] %v1661
                %v1663 = vld [vmem:[%s1145 + $0x810] sm:$0xff]
                %1664 = vst [vmem:[%s1146 + $0x810] sm:$0xff] %v1663
                %v1665 = vld [vmem:[%s1145 + $0x818] sm:$0xff]
                %1666 = vst [vmem:[%s1146 + $0x818] sm:$0xff] %v1665
                %v1667 = vld [vmem:[%s1145 + $0x820] sm:$0xff]
                %1668 = vst [vmem:[%s1146 + $0x820] sm:$0xff] %v1667
                %v1669 = vld [vmem:[%s1145 + $0x828] sm:$0xff]
                %1670 = vst [vmem:[%s1146 + $0x828] sm:$0xff] %v1669
                %v1671 = vld [vmem:[%s1145 + $0x830] sm:$0xff]
                %1672 = vst [vmem:[%s1146 + $0x830] sm:$0xff] %v1671
                %v1673 = vld [vmem:[%s1145 + $0x838] sm:$0xff]
                %1674 = vst [vmem:[%s1146 + $0x838] sm:$0xff] %v1673
                %v1675 = vld [vmem:[%s1145 + $0x840] sm:$0xff]
                %1676 = vst [vmem:[%s1146 + $0x840] sm:$0xff] %v1675
                %v1677 = vld [vmem:[%s1145 + $0x848] sm:$0xff]
                %1678 = vst [vmem:[%s1146 + $0x848] sm:$0xff] %v1677
                %v1679 = vld [vmem:[%s1145 + $0x850] sm:$0xff]
                %1680 = vst [vmem:[%s1146 + $0x850] sm:$0xff] %v1679
                %v1681 = vld [vmem:[%s1145 + $0x858] sm:$0xff]
                %1682 = vst [vmem:[%s1146 + $0x858] sm:$0xff] %v1681
                %v1683 = vld [vmem:[%s1145 + $0x860] sm:$0xff]
                %1684 = vst [vmem:[%s1146 + $0x860] sm:$0xff] %v1683
                %v1685 = vld [vmem:[%s1145 + $0x868] sm:$0xff]
                %1686 = vst [vmem:[%s1146 + $0x868] sm:$0xff] %v1685
                %v1687 = vld [vmem:[%s1145 + $0x870] sm:$0xff]
                %1688 = vst [vmem:[%s1146 + $0x870] sm:$0xff] %v1687
                %v1689 = vld [vmem:[%s1145 + $0x878] sm:$0xff]
                %1690 = vst [vmem:[%s1146 + $0x878] sm:$0xff] %v1689
                %v1691 = vld [vmem:[%s1145 + $0x880] sm:$0xff]
                %1692 = vst [vmem:[%s1146 + $0x880] sm:$0xff] %v1691
                %v1693 = vld [vmem:[%s1145 + $0x888] sm:$0xff]
                %1694 = vst [vmem:[%s1146 + $0x888] sm:$0xff] %v1693
                %v1695 = vld [vmem:[%s1145 + $0x890] sm:$0xff]
                %1696 = vst [vmem:[%s1146 + $0x890] sm:$0xff] %v1695
                %v1697 = vld [vmem:[%s1145 + $0x898] sm:$0xff]
                %1698 = vst [vmem:[%s1146 + $0x898] sm:$0xff] %v1697
                %v1699 = vld [vmem:[%s1145 + $0x8a0] sm:$0xff]
                %1700 = vst [vmem:[%s1146 + $0x8a0] sm:$0xff] %v1699
                %v1701 = vld [vmem:[%s1145 + $0x8a8] sm:$0xff]
                %1702 = vst [vmem:[%s1146 + $0x8a8] sm:$0xff] %v1701
                %v1703 = vld [vmem:[%s1145 + $0x8b0] sm:$0xff]
                %1704 = vst [vmem:[%s1146 + $0x8b0] sm:$0xff] %v1703
                %v1705 = vld [vmem:[%s1145 + $0x8b8] sm:$0xff]
                %1706 = vst [vmem:[%s1146 + $0x8b8] sm:$0xff] %v1705
                %v1707 = vld [vmem:[%s1145 + $0x8c0] sm:$0xff]
                %1708 = vst [vmem:[%s1146 + $0x8c0] sm:$0xff] %v1707
                %v1709 = vld [vmem:[%s1145 + $0x8c8] sm:$0xff]
                %1710 = vst [vmem:[%s1146 + $0x8c8] sm:$0xff] %v1709
                %v1711 = vld [vmem:[%s1145 + $0x8d0] sm:$0xff]
                %1712 = vst [vmem:[%s1146 + $0x8d0] sm:$0xff] %v1711
                %v1713 = vld [vmem:[%s1145 + $0x8d8] sm:$0xff]
                %1714 = vst [vmem:[%s1146 + $0x8d8] sm:$0xff] %v1713
                %v1715 = vld [vmem:[%s1145 + $0x8e0] sm:$0xff]
                %1716 = vst [vmem:[%s1146 + $0x8e0] sm:$0xff] %v1715
                %v1717 = vld [vmem:[%s1145 + $0x8e8] sm:$0xff]
                %1718 = vst [vmem:[%s1146 + $0x8e8] sm:$0xff] %v1717
                %v1719 = vld [vmem:[%s1145 + $0x8f0] sm:$0xff]
                %1720 = vst [vmem:[%s1146 + $0x8f0] sm:$0xff] %v1719
                %v1721 = vld [vmem:[%s1145 + $0x8f8] sm:$0xff]
                %1722 = vst [vmem:[%s1146 + $0x8f8] sm:$0xff] %v1721
                %v1723 = vld [vmem:[%s1145 + $0x900] sm:$0xff]
                %1724 = vst [vmem:[%s1146 + $0x900] sm:$0xff] %v1723
                %v1725 = vld [vmem:[%s1145 + $0x908] sm:$0xff]
                %1726 = vst [vmem:[%s1146 + $0x908] sm:$0xff] %v1725
                %v1727 = vld [vmem:[%s1145 + $0x910] sm:$0xff]
                %1728 = vst [vmem:[%s1146 + $0x910] sm:$0xff] %v1727
                %v1729 = vld [vmem:[%s1145 + $0x918] sm:$0xff]
                %1730 = vst [vmem:[%s1146 + $0x918] sm:$0xff] %v1729
                %v1731 = vld [vmem:[%s1145 + $0x920] sm:$0xff]
                %1732 = vst [vmem:[%s1146 + $0x920] sm:$0xff] %v1731
                %v1733 = vld [vmem:[%s1145 + $0x928] sm:$0xff]
                %1734 = vst [vmem:[%s1146 + $0x928] sm:$0xff] %v1733
                %v1735 = vld [vmem:[%s1145 + $0x930] sm:$0xff]
                %1736 = vst [vmem:[%s1146 + $0x930] sm:$0xff] %v1735
                %v1737 = vld [vmem:[%s1145 + $0x938] sm:$0xff]
                %1738 = vst [vmem:[%s1146 + $0x938] sm:$0xff] %v1737
                %v1739 = vld [vmem:[%s1145 + $0x940] sm:$0xff]
                %1740 = vst [vmem:[%s1146 + $0x940] sm:$0xff] %v1739
                %v1741 = vld [vmem:[%s1145 + $0x948] sm:$0xff]
                %1742 = vst [vmem:[%s1146 + $0x948] sm:$0xff] %v1741
                %v1743 = vld [vmem:[%s1145 + $0x950] sm:$0xff]
                %1744 = vst [vmem:[%s1146 + $0x950] sm:$0xff] %v1743
                %v1745 = vld [vmem:[%s1145 + $0x958] sm:$0xff]
                %1746 = vst [vmem:[%s1146 + $0x958] sm:$0xff] %v1745
                %v1747 = vld [vmem:[%s1145 + $0x960] sm:$0xff]
                %1748 = vst [vmem:[%s1146 + $0x960] sm:$0xff] %v1747
                %v1749 = vld [vmem:[%s1145 + $0x968] sm:$0xff]
                %1750 = vst [vmem:[%s1146 + $0x968] sm:$0xff] %v1749
                %v1751 = vld [vmem:[%s1145 + $0x970] sm:$0xff]
                %1752 = vst [vmem:[%s1146 + $0x970] sm:$0xff] %v1751
                %v1753 = vld [vmem:[%s1145 + $0x978] sm:$0xff]
                %1754 = vst [vmem:[%s1146 + $0x978] sm:$0xff] %v1753
                %v1755 = vld [vmem:[%s1145 + $0x980] sm:$0xff]
                %1756 = vst [vmem:[%s1146 + $0x980] sm:$0xff] %v1755
                %v1757 = vld [vmem:[%s1145 + $0x988] sm:$0xff]
                %1758 = vst [vmem:[%s1146 + $0x988] sm:$0xff] %v1757
                %v1759 = vld [vmem:[%s1145 + $0x990] sm:$0xff]
                %1760 = vst [vmem:[%s1146 + $0x990] sm:$0xff] %v1759
                %v1761 = vld [vmem:[%s1145 + $0x998] sm:$0xff]
                %1762 = vst [vmem:[%s1146 + $0x998] sm:$0xff] %v1761
                %v1763 = vld [vmem:[%s1145 + $0x9a0] sm:$0xff]
                %1764 = vst [vmem:[%s1146 + $0x9a0] sm:$0xff] %v1763
                %v1765 = vld [vmem:[%s1145 + $0x9a8] sm:$0xff]
                %1766 = vst [vmem:[%s1146 + $0x9a8] sm:$0xff] %v1765
                %v1767 = vld [vmem:[%s1145 + $0x9b0] sm:$0xff]
                %1768 = vst [vmem:[%s1146 + $0x9b0] sm:$0xff] %v1767
                %v1769 = vld [vmem:[%s1145 + $0x9b8] sm:$0xff]
                %1770 = vst [vmem:[%s1146 + $0x9b8] sm:$0xff] %v1769
                %v1771 = vld [vmem:[%s1145 + $0x9c0] sm:$0xff]
                %1772 = vst [vmem:[%s1146 + $0x9c0] sm:$0xff] %v1771
                %v1773 = vld [vmem:[%s1145 + $0x9c8] sm:$0xff]
                %1774 = vst [vmem:[%s1146 + $0x9c8] sm:$0xff] %v1773
                %v1775 = vld [vmem:[%s1145 + $0x9d0] sm:$0xff]
                %1776 = vst [vmem:[%s1146 + $0x9d0] sm:$0xff] %v1775
                %v1777 = vld [vmem:[%s1145 + $0x9d8] sm:$0xff]
                %1778 = vst [vmem:[%s1146 + $0x9d8] sm:$0xff] %v1777
                %v1779 = vld [vmem:[%s1145 + $0x9e0] sm:$0xff]
                %1780 = vst [vmem:[%s1146 + $0x9e0] sm:$0xff] %v1779
                %v1781 = vld [vmem:[%s1145 + $0x9e8] sm:$0xff]
                %1782 = vst [vmem:[%s1146 + $0x9e8] sm:$0xff] %v1781
                %v1783 = vld [vmem:[%s1145 + $0x9f0] sm:$0xff]
                %1784 = vst [vmem:[%s1146 + $0x9f0] sm:$0xff] %v1783
                %v1785 = vld [vmem:[%s1145 + $0x9f8] sm:$0xff]
                %1786 = vst [vmem:[%s1146 + $0x9f8] sm:$0xff] %v1785
                %v1787 = vld [vmem:[%s1145 + $0xa00] sm:$0xff]
                %1788 = vst [vmem:[%s1146 + $0xa00] sm:$0xff] %v1787
                %v1789 = vld [vmem:[%s1145 + $0xa08] sm:$0xff]
                %1790 = vst [vmem:[%s1146 + $0xa08] sm:$0xff] %v1789
                %v1791 = vld [vmem:[%s1145 + $0xa10] sm:$0xff]
                %1792 = vst [vmem:[%s1146 + $0xa10] sm:$0xff] %v1791
                %v1793 = vld [vmem:[%s1145 + $0xa18] sm:$0xff]
                %1794 = vst [vmem:[%s1146 + $0xa18] sm:$0xff] %v1793
                %v1795 = vld [vmem:[%s1145 + $0xa20] sm:$0xff]
                %1796 = vst [vmem:[%s1146 + $0xa20] sm:$0xff] %v1795
                %v1797 = vld [vmem:[%s1145 + $0xa28] sm:$0xff]
                %1798 = vst [vmem:[%s1146 + $0xa28] sm:$0xff] %v1797
                %v1799 = vld [vmem:[%s1145 + $0xa30] sm:$0xff]
                %1800 = vst [vmem:[%s1146 + $0xa30] sm:$0xff] %v1799
                %v1801 = vld [vmem:[%s1145 + $0xa38] sm:$0xff]
                %1802 = vst [vmem:[%s1146 + $0xa38] sm:$0xff] %v1801
                %v1803 = vld [vmem:[%s1145 + $0xa40] sm:$0xff]
                %1804 = vst [vmem:[%s1146 + $0xa40] sm:$0xff] %v1803
                %v1805 = vld [vmem:[%s1145 + $0xa48] sm:$0xff]
                %1806 = vst [vmem:[%s1146 + $0xa48] sm:$0xff] %v1805
                %v1807 = vld [vmem:[%s1145 + $0xa50] sm:$0xff]
                %1808 = vst [vmem:[%s1146 + $0xa50] sm:$0xff] %v1807
                %v1809 = vld [vmem:[%s1145 + $0xa58] sm:$0xff]
                %1810 = vst [vmem:[%s1146 + $0xa58] sm:$0xff] %v1809
                %v1811 = vld [vmem:[%s1145 + $0xa60] sm:$0xff]
                %1812 = vst [vmem:[%s1146 + $0xa60] sm:$0xff] %v1811
                %v1813 = vld [vmem:[%s1145 + $0xa68] sm:$0xff]
                %1814 = vst [vmem:[%s1146 + $0xa68] sm:$0xff] %v1813
                %v1815 = vld [vmem:[%s1145 + $0xa70] sm:$0xff]
                %1816 = vst [vmem:[%s1146 + $0xa70] sm:$0xff] %v1815
                %v1817 = vld [vmem:[%s1145 + $0xa78] sm:$0xff]
                %1818 = vst [vmem:[%s1146 + $0xa78] sm:$0xff] %v1817
                %v1819 = vld [vmem:[%s1145 + $0xa80] sm:$0xff]
                %1820 = vst [vmem:[%s1146 + $0xa80] sm:$0xff] %v1819
                %v1821 = vld [vmem:[%s1145 + $0xa88] sm:$0xff]
                %1822 = vst [vmem:[%s1146 + $0xa88] sm:$0xff] %v1821
                %v1823 = vld [vmem:[%s1145 + $0xa90] sm:$0xff]
                %1824 = vst [vmem:[%s1146 + $0xa90] sm:$0xff] %v1823
                %v1825 = vld [vmem:[%s1145 + $0xa98] sm:$0xff]
                %1826 = vst [vmem:[%s1146 + $0xa98] sm:$0xff] %v1825
                %v1827 = vld [vmem:[%s1145 + $0xaa0] sm:$0xff]
                %1828 = vst [vmem:[%s1146 + $0xaa0] sm:$0xff] %v1827
                %v1829 = vld [vmem:[%s1145 + $0xaa8] sm:$0xff]
                %1830 = vst [vmem:[%s1146 + $0xaa8] sm:$0xff] %v1829
                %v1831 = vld [vmem:[%s1145 + $0xab0] sm:$0xff]
                %1832 = vst [vmem:[%s1146 + $0xab0] sm:$0xff] %v1831
                %v1833 = vld [vmem:[%s1145 + $0xab8] sm:$0xff]
                %1834 = vst [vmem:[%s1146 + $0xab8] sm:$0xff] %v1833
                %v1835 = vld [vmem:[%s1145 + $0xac0] sm:$0xff]
                %1836 = vst [vmem:[%s1146 + $0xac0] sm:$0xff] %v1835
                %v1837 = vld [vmem:[%s1145 + $0xac8] sm:$0xff]
                %1838 = vst [vmem:[%s1146 + $0xac8] sm:$0xff] %v1837
                %v1839 = vld [vmem:[%s1145 + $0xad0] sm:$0xff]
                %1840 = vst [vmem:[%s1146 + $0xad0] sm:$0xff] %v1839
                %v1841 = vld [vmem:[%s1145 + $0xad8] sm:$0xff]
                %1842 = vst [vmem:[%s1146 + $0xad8] sm:$0xff] %v1841
                %v1843 = vld [vmem:[%s1145 + $0xae0] sm:$0xff]
                %1844 = vst [vmem:[%s1146 + $0xae0] sm:$0xff] %v1843
                %v1845 = vld [vmem:[%s1145 + $0xae8] sm:$0xff]
                %1846 = vst [vmem:[%s1146 + $0xae8] sm:$0xff] %v1845
                %v1847 = vld [vmem:[%s1145 + $0xaf0] sm:$0xff]
                %1848 = vst [vmem:[%s1146 + $0xaf0] sm:$0xff] %v1847
                %v1849 = vld [vmem:[%s1145 + $0xaf8] sm:$0xff]
                %1850 = vst [vmem:[%s1146 + $0xaf8] sm:$0xff] %v1849
                %v1851 = vld [vmem:[%s1145 + $0xb00] sm:$0xff]
                %1852 = vst [vmem:[%s1146 + $0xb00] sm:$0xff] %v1851
                %v1853 = vld [vmem:[%s1145 + $0xb08] sm:$0xff]
                %1854 = vst [vmem:[%s1146 + $0xb08] sm:$0xff] %v1853
                %v1855 = vld [vmem:[%s1145 + $0xb10] sm:$0xff]
                %1856 = vst [vmem:[%s1146 + $0xb10] sm:$0xff] %v1855
                %v1857 = vld [vmem:[%s1145 + $0xb18] sm:$0xff]
                %1858 = vst [vmem:[%s1146 + $0xb18] sm:$0xff] %v1857
                %v1859 = vld [vmem:[%s1145 + $0xb20] sm:$0xff]
                %1860 = vst [vmem:[%s1146 + $0xb20] sm:$0xff] %v1859
                %v1861 = vld [vmem:[%s1145 + $0xb28] sm:$0xff]
                %1862 = vst [vmem:[%s1146 + $0xb28] sm:$0xff] %v1861
                %v1863 = vld [vmem:[%s1145 + $0xb30] sm:$0xff]
                %1864 = vst [vmem:[%s1146 + $0xb30] sm:$0xff] %v1863
                %v1865 = vld [vmem:[%s1145 + $0xb38] sm:$0xff]
                %1866 = vst [vmem:[%s1146 + $0xb38] sm:$0xff] %v1865
                %v1867 = vld [vmem:[%s1145 + $0xb40] sm:$0xff]
                %1868 = vst [vmem:[%s1146 + $0xb40] sm:$0xff] %v1867
                %v1869 = vld [vmem:[%s1145 + $0xb48] sm:$0xff]
                %1870 = vst [vmem:[%s1146 + $0xb48] sm:$0xff] %v1869
                %v1871 = vld [vmem:[%s1145 + $0xb50] sm:$0xff]
                %1872 = vst [vmem:[%s1146 + $0xb50] sm:$0xff] %v1871
                %v1873 = vld [vmem:[%s1145 + $0xb58] sm:$0xff]
                %1874 = vst [vmem:[%s1146 + $0xb58] sm:$0xff] %v1873
                %v1875 = vld [vmem:[%s1145 + $0xb60] sm:$0xff]
                %1876 = vst [vmem:[%s1146 + $0xb60] sm:$0xff] %v1875
                %v1877 = vld [vmem:[%s1145 + $0xb68] sm:$0xff]
                %1878 = vst [vmem:[%s1146 + $0xb68] sm:$0xff] %v1877
                %v1879 = vld [vmem:[%s1145 + $0xb70] sm:$0xff]
                %1880 = vst [vmem:[%s1146 + $0xb70] sm:$0xff] %v1879
                %v1881 = vld [vmem:[%s1145 + $0xb78] sm:$0xff]
                %1882 = vst [vmem:[%s1146 + $0xb78] sm:$0xff] %v1881
                %v1883 = vld [vmem:[%s1145 + $0xb80] sm:$0xff]
                %1884 = vst [vmem:[%s1146 + $0xb80] sm:$0xff] %v1883
                %v1885 = vld [vmem:[%s1145 + $0xb88] sm:$0xff]
                %1886 = vst [vmem:[%s1146 + $0xb88] sm:$0xff] %v1885
                %v1887 = vld [vmem:[%s1145 + $0xb90] sm:$0xff]
                %1888 = vst [vmem:[%s1146 + $0xb90] sm:$0xff] %v1887
                %v1889 = vld [vmem:[%s1145 + $0xb98] sm:$0xff]
                %1890 = vst [vmem:[%s1146 + $0xb98] sm:$0xff] %v1889
                %v1891 = vld [vmem:[%s1145 + $0xba0] sm:$0xff]
                %1892 = vst [vmem:[%s1146 + $0xba0] sm:$0xff] %v1891
                %v1893 = vld [vmem:[%s1145 + $0xba8] sm:$0xff]
                %1894 = vst [vmem:[%s1146 + $0xba8] sm:$0xff] %v1893
                %v1895 = vld [vmem:[%s1145 + $0xbb0] sm:$0xff]
                %1896 = vst [vmem:[%s1146 + $0xbb0] sm:$0xff] %v1895
                %v1897 = vld [vmem:[%s1145 + $0xbb8] sm:$0xff]
                %1898 = vst [vmem:[%s1146 + $0xbb8] sm:$0xff] %v1897
                %v1899 = vld [vmem:[%s1145 + $0xbc0] sm:$0xff]
                %1900 = vst [vmem:[%s1146 + $0xbc0] sm:$0xff] %v1899
                %v1901 = vld [vmem:[%s1145 + $0xbc8] sm:$0xff]
                %1902 = vst [vmem:[%s1146 + $0xbc8] sm:$0xff] %v1901
                %v1903 = vld [vmem:[%s1145 + $0xbd0] sm:$0xff]
                %1904 = vst [vmem:[%s1146 + $0xbd0] sm:$0xff] %v1903
                %v1905 = vld [vmem:[%s1145 + $0xbd8] sm:$0xff]
                %1906 = vst [vmem:[%s1146 + $0xbd8] sm:$0xff] %v1905
                %v1907 = vld [vmem:[%s1145 + $0xbe0] sm:$0xff]
                %1908 = vst [vmem:[%s1146 + $0xbe0] sm:$0xff] %v1907
                %v1909 = vld [vmem:[%s1145 + $0xbe8] sm:$0xff]
                %1910 = vst [vmem:[%s1146 + $0xbe8] sm:$0xff] %v1909
                %v1911 = vld [vmem:[%s1145 + $0xbf0] sm:$0xff]
                %1912 = vst [vmem:[%s1146 + $0xbf0] sm:$0xff] %v1911
                %v1913 = vld [vmem:[%s1145 + $0xbf8] sm:$0xff]
                %1914 = vst [vmem:[%s1146 + $0xbf8] sm:$0xff] %v1913
                %v1915 = vld [vmem:[%s1145 + $0xc00] sm:$0xff]
                %1916 = vst [vmem:[%s1146 + $0xc00] sm:$0xff] %v1915
                %v1917 = vld [vmem:[%s1145 + $0xc08] sm:$0xff]
                %1918 = vst [vmem:[%s1146 + $0xc08] sm:$0xff] %v1917
                %v1919 = vld [vmem:[%s1145 + $0xc10] sm:$0xff]
                %1920 = vst [vmem:[%s1146 + $0xc10] sm:$0xff] %v1919
                %v1921 = vld [vmem:[%s1145 + $0xc18] sm:$0xff]
                %1922 = vst [vmem:[%s1146 + $0xc18] sm:$0xff] %v1921
                %v1923 = vld [vmem:[%s1145 + $0xc20] sm:$0xff]
                %1924 = vst [vmem:[%s1146 + $0xc20] sm:$0xff] %v1923
                %v1925 = vld [vmem:[%s1145 + $0xc28] sm:$0xff]
                %1926 = vst [vmem:[%s1146 + $0xc28] sm:$0xff] %v1925
                %v1927 = vld [vmem:[%s1145 + $0xc30] sm:$0xff]
                %1928 = vst [vmem:[%s1146 + $0xc30] sm:$0xff] %v1927
                %v1929 = vld [vmem:[%s1145 + $0xc38] sm:$0xff]
                %1930 = vst [vmem:[%s1146 + $0xc38] sm:$0xff] %v1929
                %v1931 = vld [vmem:[%s1145 + $0xc40] sm:$0xff]
                %1932 = vst [vmem:[%s1146 + $0xc40] sm:$0xff] %v1931
                %v1933 = vld [vmem:[%s1145 + $0xc48] sm:$0xff]
                %1934 = vst [vmem:[%s1146 + $0xc48] sm:$0xff] %v1933
                %v1935 = vld [vmem:[%s1145 + $0xc50] sm:$0xff]
                %1936 = vst [vmem:[%s1146 + $0xc50] sm:$0xff] %v1935
                %v1937 = vld [vmem:[%s1145 + $0xc58] sm:$0xff]
                %1938 = vst [vmem:[%s1146 + $0xc58] sm:$0xff] %v1937
                %v1939 = vld [vmem:[%s1145 + $0xc60] sm:$0xff]
                %1940 = vst [vmem:[%s1146 + $0xc60] sm:$0xff] %v1939
                %v1941 = vld [vmem:[%s1145 + $0xc68] sm:$0xff]
                %1942 = vst [vmem:[%s1146 + $0xc68] sm:$0xff] %v1941
                %v1943 = vld [vmem:[%s1145 + $0xc70] sm:$0xff]
                %1944 = vst [vmem:[%s1146 + $0xc70] sm:$0xff] %v1943
                %v1945 = vld [vmem:[%s1145 + $0xc78] sm:$0xff]
                %1946 = vst [vmem:[%s1146 + $0xc78] sm:$0xff] %v1945
                %v1947 = vld [vmem:[%s1145 + $0xc80] sm:$0xff]
                %1948 = vst [vmem:[%s1146 + $0xc80] sm:$0xff] %v1947
                %v1949 = vld [vmem:[%s1145 + $0xc88] sm:$0xff]
                %1950 = vst [vmem:[%s1146 + $0xc88] sm:$0xff] %v1949
                %v1951 = vld [vmem:[%s1145 + $0xc90] sm:$0xff]
                %1952 = vst [vmem:[%s1146 + $0xc90] sm:$0xff] %v1951
                %v1953 = vld [vmem:[%s1145 + $0xc98] sm:$0xff]
                %1954 = vst [vmem:[%s1146 + $0xc98] sm:$0xff] %v1953
                %v1955 = vld [vmem:[%s1145 + $0xca0] sm:$0xff]
                %1956 = vst [vmem:[%s1146 + $0xca0] sm:$0xff] %v1955
                %v1957 = vld [vmem:[%s1145 + $0xca8] sm:$0xff]
                %1958 = vst [vmem:[%s1146 + $0xca8] sm:$0xff] %v1957
                %v1959 = vld [vmem:[%s1145 + $0xcb0] sm:$0xff]
                %1960 = vst [vmem:[%s1146 + $0xcb0] sm:$0xff] %v1959
                %v1961 = vld [vmem:[%s1145 + $0xcb8] sm:$0xff]
                %1962 = vst [vmem:[%s1146 + $0xcb8] sm:$0xff] %v1961
                %v1963 = vld [vmem:[%s1145 + $0xcc0] sm:$0xff]
                %1964 = vst [vmem:[%s1146 + $0xcc0] sm:$0xff] %v1963
                %v1965 = vld [vmem:[%s1145 + $0xcc8] sm:$0xff]
                %1966 = vst [vmem:[%s1146 + $0xcc8] sm:$0xff] %v1965
                %v1967 = vld [vmem:[%s1145 + $0xcd0] sm:$0xff]
                %1968 = vst [vmem:[%s1146 + $0xcd0] sm:$0xff] %v1967
                %v1969 = vld [vmem:[%s1145 + $0xcd8] sm:$0xff]
                %1970 = vst [vmem:[%s1146 + $0xcd8] sm:$0xff] %v1969
                %v1971 = vld [vmem:[%s1145 + $0xce0] sm:$0xff]
                %1972 = vst [vmem:[%s1146 + $0xce0] sm:$0xff] %v1971
                %v1973 = vld [vmem:[%s1145 + $0xce8] sm:$0xff]
                %1974 = vst [vmem:[%s1146 + $0xce8] sm:$0xff] %v1973
                %v1975 = vld [vmem:[%s1145 + $0xcf0] sm:$0xff]
                %1976 = vst [vmem:[%s1146 + $0xcf0] sm:$0xff] %v1975
                %v1977 = vld [vmem:[%s1145 + $0xcf8] sm:$0xff]
                %1978 = vst [vmem:[%s1146 + $0xcf8] sm:$0xff] %v1977
                %v1979 = vld [vmem:[%s1145 + $0xd00] sm:$0xff]
                %1980 = vst [vmem:[%s1146 + $0xd00] sm:$0xff] %v1979
                %v1981 = vld [vmem:[%s1145 + $0xd08] sm:$0xff]
                %1982 = vst [vmem:[%s1146 + $0xd08] sm:$0xff] %v1981
                %v1983 = vld [vmem:[%s1145 + $0xd10] sm:$0xff]
                %1984 = vst [vmem:[%s1146 + $0xd10] sm:$0xff] %v1983
                %v1985 = vld [vmem:[%s1145 + $0xd18] sm:$0xff]
                %1986 = vst [vmem:[%s1146 + $0xd18] sm:$0xff] %v1985
                %v1987 = vld [vmem:[%s1145 + $0xd20] sm:$0xff]
                %1988 = vst [vmem:[%s1146 + $0xd20] sm:$0xff] %v1987
                %v1989 = vld [vmem:[%s1145 + $0xd28] sm:$0xff]
                %1990 = vst [vmem:[%s1146 + $0xd28] sm:$0xff] %v1989
                %v1991 = vld [vmem:[%s1145 + $0xd30] sm:$0xff]
                %1992 = vst [vmem:[%s1146 + $0xd30] sm:$0xff] %v1991
                %v1993 = vld [vmem:[%s1145 + $0xd38] sm:$0xff]
                %1994 = vst [vmem:[%s1146 + $0xd38] sm:$0xff] %v1993
                %v1995 = vld [vmem:[%s1145 + $0xd40] sm:$0xff]
                %1996 = vst [vmem:[%s1146 + $0xd40] sm:$0xff] %v1995
                %v1997 = vld [vmem:[%s1145 + $0xd48] sm:$0xff]
                %1998 = vst [vmem:[%s1146 + $0xd48] sm:$0xff] %v1997
                %v1999 = vld [vmem:[%s1145 + $0xd50] sm:$0xff]
                %2000 = vst [vmem:[%s1146 + $0xd50] sm:$0xff] %v1999
                %v2001 = vld [vmem:[%s1145 + $0xd58] sm:$0xff]
                %2002 = vst [vmem:[%s1146 + $0xd58] sm:$0xff] %v2001
                %v2003 = vld [vmem:[%s1145 + $0xd60] sm:$0xff]
                %2004 = vst [vmem:[%s1146 + $0xd60] sm:$0xff] %v2003
                %v2005 = vld [vmem:[%s1145 + $0xd68] sm:$0xff]
                %2006 = vst [vmem:[%s1146 + $0xd68] sm:$0xff] %v2005
                %v2007 = vld [vmem:[%s1145 + $0xd70] sm:$0xff]
                %2008 = vst [vmem:[%s1146 + $0xd70] sm:$0xff] %v2007
                %v2009 = vld [vmem:[%s1145 + $0xd78] sm:$0xff]
                %2010 = vst [vmem:[%s1146 + $0xd78] sm:$0xff] %v2009
                %v2011 = vld [vmem:[%s1145 + $0xd80] sm:$0xff]
                %2012 = vst [vmem:[%s1146 + $0xd80] sm:$0xff] %v2011
                %v2013 = vld [vmem:[%s1145 + $0xd88] sm:$0xff]
                %2014 = vst [vmem:[%s1146 + $0xd88] sm:$0xff] %v2013
                %v2015 = vld [vmem:[%s1145 + $0xd90] sm:$0xff]
                %2016 = vst [vmem:[%s1146 + $0xd90] sm:$0xff] %v2015
                %v2017 = vld [vmem:[%s1145 + $0xd98] sm:$0xff]
                %2018 = vst [vmem:[%s1146 + $0xd98] sm:$0xff] %v2017
                %v2019 = vld [vmem:[%s1145 + $0xda0] sm:$0xff]
                %2020 = vst [vmem:[%s1146 + $0xda0] sm:$0xff] %v2019
                %v2021 = vld [vmem:[%s1145 + $0xda8] sm:$0xff]
                %2022 = vst [vmem:[%s1146 + $0xda8] sm:$0xff] %v2021
                %v2023 = vld [vmem:[%s1145 + $0xdb0] sm:$0xff]
                %2024 = vst [vmem:[%s1146 + $0xdb0] sm:$0xff] %v2023
                %v2025 = vld [vmem:[%s1145 + $0xdb8] sm:$0xff]
                %2026 = vst [vmem:[%s1146 + $0xdb8] sm:$0xff] %v2025
                %v2027 = vld [vmem:[%s1145 + $0xdc0] sm:$0xff]
                %2028 = vst [vmem:[%s1146 + $0xdc0] sm:$0xff] %v2027
                %v2029 = vld [vmem:[%s1145 + $0xdc8] sm:$0xff]
                %2030 = vst [vmem:[%s1146 + $0xdc8] sm:$0xff] %v2029
                %v2031 = vld [vmem:[%s1145 + $0xdd0] sm:$0xff]
                %2032 = vst [vmem:[%s1146 + $0xdd0] sm:$0xff] %v2031
                %v2033 = vld [vmem:[%s1145 + $0xdd8] sm:$0xff]
                %2034 = vst [vmem:[%s1146 + $0xdd8] sm:$0xff] %v2033
                %v2035 = vld [vmem:[%s1145 + $0xde0] sm:$0xff]
                %2036 = vst [vmem:[%s1146 + $0xde0] sm:$0xff] %v2035
                %v2037 = vld [vmem:[%s1145 + $0xde8] sm:$0xff]
                %2038 = vst [vmem:[%s1146 + $0xde8] sm:$0xff] %v2037
                %v2039 = vld [vmem:[%s1145 + $0xdf0] sm:$0xff]
                %2040 = vst [vmem:[%s1146 + $0xdf0] sm:$0xff] %v2039
                %v2041 = vld [vmem:[%s1145 + $0xdf8] sm:$0xff]
                %2042 = vst [vmem:[%s1146 + $0xdf8] sm:$0xff] %v2041
              $region155: #{tpu_custom_call.1} parent=149 // loop_footer
                %s1144 = sadd.s32 1, %s1140
              $region156: #{tpu_custom_call.1} parent=149 // loop_footer_branch
                %1139 = sbr.rel target = $region152
              $region157: #{tpu_custom_call.1} parent=149 // loop_exit
                _
            $region150: #{tpu_custom_call.1} parent=134 // pred_fallthru
              _
            %p2043 = pneg %p1135
            // Predicated region
            $region158: #{tpu_custom_call.1} parent=134 // pred_check
              _
            $region159: #{tpu_custom_call.1} parent=134 // pred_check_branch
              %2045 = sbr.rel (%p1135) target = $region161
            $region160: #{tpu_custom_call.1} parent=134 // pred_region
              %s2046 = sand.u32 3584, 7
            $region161: #{tpu_custom_call.1} parent=134 // pred_fallthru
              _
          $region135: #{tpu_custom_call.1} parent=59 // pred_fallthru
            _
          // Predicated region
          $region136: #{tpu_custom_call.1} parent=59 // pred_check
            %p1120 = pneg %p1116
          $region137: #{tpu_custom_call.1} parent=59 // pred_check_branch
            %1122 = sbr.rel (%p1120) target = $region139
          $region138: #{tpu_custom_call.1} parent=59 // pred_region
            %s1123 = sshllo.u32 0, 3584
            loop: start=0, step=1, limit=1
            $region140: #{tpu_custom_call.1} parent=138 // loop_pre_header
              _
            $region141: #{tpu_custom_call.1} parent=138 // loop_header
              %s1125 = sphi 0, %s1129
              %p1126 = scmp.ge.s32.totalorder %s1125, 1
              %s1130 = sphi %s10, %s10
              %s1131 = sphi [#allocation6], [#allocation6]
            $region142: #{tpu_custom_call.1} parent=138 // loop_header_branch
              %1128 = sbr.rel (%p1126) target = $region146
            $region143: #{tpu_custom_call.1} parent=138 // loop_body
              %v1132 = vld [vmem:[%s1130] sm:%s1123]
              %1133 = vst [vmem:[%s1131] sm:%s1123] %v1132
            $region144: #{tpu_custom_call.1} parent=138 // loop_footer
              %s1129 = sadd.s32 1, %s1125
            $region145: #{tpu_custom_call.1} parent=138 // loop_footer_branch
              %1124 = sbr.rel target = $region141
            $region146: #{tpu_custom_call.1} parent=138 // loop_exit
              _
          $region139: #{tpu_custom_call.1} parent=59 // pred_fallthru
            _
          // Predicated region
          $region162: #{tpu_custom_call.1} parent=59 // pred_check
            _
          $region163: #{tpu_custom_call.1} parent=59 // pred_check_branch
            %2049 = sbr.rel (0) target = $region165
          $region164: #{tpu_custom_call.1} parent=59 // pred_region
            %2050 = vsyncadd %s1114, 57344
          $region165: #{tpu_custom_call.1} parent=59 // pred_fallthru
            _
        $region60: #{tpu_custom_call.1} parent=51 // pred_fallthru
          _
        %p2051 = scmp.eq.s32.totalorder %s23, 2
        // Predicated region
        $region166: #{tpu_custom_call.1} parent=51 // pred_check
          %p2052 = pneg %p2051
        $region167: #{tpu_custom_call.1} parent=51 // pred_check_branch
          %2054 = sbr.rel (%p2052) target = $region169
        $region168: #{tpu_custom_call.1} parent=51 // pred_region
          %s2055 = smul.u32 8, 25
          %s2056 = smul.u32 %s2055, 2
          %s2057 = sshll.u32 %s2056, 4
          %2058 = dma.done [#allocation7], %s2057
          %s2059 = scalar_lea.sflag [#allocation7], 1
          %s2060 = smul.u32 196, 1
          %s2061 = sshll.u32 %s2060, 4
          %2062 = dma.done %s2059, %s2061
          %s2063 = scalar_lea.sflag [#allocation7], 2
          %s2064 = smul.u32 8, 32
          %s2065 = smul.u32 %s2064, 7
          %s2066 = smul.u32 %s2065, 2
          %s2067 = sshll.u32 %s2066, 4
          %2068 = dma.done %s2063, %s2067
          %v2069 = vld [vmem:[#allocation3] sm:$0xff]
          %v2070 = vld [vmem:[#allocation3 + $0x8] sm:$0xff]
          %v2071 = vld [vmem:[#allocation3 + $0x10] sm:$0xff]
          %v2072 = vld [vmem:[#allocation3 + $0x18] sm:$0xff]
          %v2073 = vld [vmem:[#allocation3 + $0x20] sm:$0xff]
          %v2074 = vld [vmem:[#allocation3 + $0x28] sm:$0xff]
          %v2075 = vld [vmem:[#allocation3 + $0x30] sm:$0xff]
          %v2076 = vld [vmem:[#allocation3 + $0x38] sm:$0xff]
          %v2077 = vld [vmem:[#allocation3 + $0x40] sm:$0xff]
          %v2078 = vld [vmem:[#allocation3 + $0x48] sm:$0xff]
          %v2079 = vld [vmem:[#allocation3 + $0x50] sm:$0xff]
          %v2080 = vld [vmem:[#allocation3 + $0x58] sm:$0xff]
          %v2081 = vld [vmem:[#allocation3 + $0x60] sm:$0x1]
          %v2082 = vld [vmem:[#allocation3 + $0x68] sm:$0x1]
          %v2083 = vadd.f32 %v2069, %v2070
          %2084 = vadd.xlane.f32.xlu0 %v2083
          %v2085 = vpop.xlane.xlu0 %2084
          %v2086 = vadd.f32 %v2071, %v2072
          %2087 = vadd.xlane.f32.xlu0 %v2086
          %v2088 = vpop.xlane.xlu0 %2087
          %v2089 = vadd.f32 %v2073, %v2074
          %2090 = vadd.xlane.f32.xlu0 %v2089
          %v2091 = vpop.xlane.xlu0 %2090
          %v2092 = vadd.f32 %v2075, %v2076
          %2093 = vadd.xlane.f32.xlu0 %v2092
          %v2094 = vpop.xlane.xlu0 %2093
          %v2095 = vadd.f32 %v2077, %v2078
          %2096 = vadd.xlane.f32.xlu0 %v2095
          %v2097 = vpop.xlane.xlu0 %2096
          %v2098 = vadd.f32 %v2079, %v2080
          %2099 = vadd.xlane.f32.xlu0 %v2098
          %v2100 = vpop.xlane.xlu0 %2099
          %v2101 = vsel %vm542, %v2081, 0.0
          %v2102 = vsel %vm542, %v2082, 0.0
          %v2103 = vadd.f32 %v2101, %v2102
          %2104 = vadd.xlane.f32.xlu0 %v2103
          %v2105 = vpop.xlane.xlu0 %2104
          %v2106 = vadd.f32 %v2085, %v2088
          %v2107 = vadd.f32 %v2106, %v2091
          %v2108 = vadd.f32 %v2107, %v2094
          %v2109 = vadd.f32 %v2108, %v2097
          %v2110 = vadd.f32 %v2109, %v2100
          %v2111 = vsel %vm542, %v2105, 0.0
          %v2112 = vadd.f32 %v2110, %v2111
          %v2113 = vrot.slane %v2112, 4
          %v2114 = vadd.f32 %v2112, %v2113
          %v2115 = vrot.slane %v2114, 2
          %v2116 = vadd.f32 %v2114, %v2115
          %v2117 = vrot.slane %v2116, 1
          %v2118 = vadd.f32 %v2116, %v2117
          %v2119 = vrsqrt.pop %v2118
          %v2120 = vld [vmem:[#allocation4] sm:$0xff]
          %v2121 = vld [vmem:[#allocation4 + $0x8] sm:$0xff]
          %v2122 = vld [vmem:[#allocation4 + $0x10] sm:$0xff]
          %v2123 = vld [vmem:[#allocation4 + $0x18] sm:$0xff]
          %v2124 = vld [vmem:[#allocation4 + $0x20] sm:$0xff]
          %v2125 = vld [vmem:[#allocation4 + $0x28] sm:$0xff]
          %v2126 = vld [vmem:[#allocation4 + $0x30] sm:$0xff]
          %v2127 = vld [vmem:[#allocation4 + $0x38] sm:$0xff]
          %v2128 = vld [vmem:[#allocation4 + $0x40] sm:$0xff]
          %v2129 = vld [vmem:[#allocation4 + $0x48] sm:$0xff]
          %v2130 = vld [vmem:[#allocation4 + $0x50] sm:$0xff]
          %v2131 = vld [vmem:[#allocation4 + $0x58] sm:$0xff]
          %v2132 = vld [vmem:[#allocation4 + $0x60] sm:$0xff]
          %v2133 = vld [vmem:[#allocation4 + $0x68] sm:$0xff]
          %v2134 = vld [vmem:[#allocation4 + $0x70] sm:$0xff]
          %v2135 = vld [vmem:[#allocation4 + $0x78] sm:$0xff]
          %v2136 = vld [vmem:[#allocation4 + $0x80] sm:$0xff]
          %v2137 = vld [vmem:[#allocation4 + $0x88] sm:$0xff]
          %v2138 = vld [vmem:[#allocation4 + $0x90] sm:$0xff]
          %v2139 = vld [vmem:[#allocation4 + $0x98] sm:$0xff]
          %v2140 = vld [vmem:[#allocation4 + $0xa0] sm:$0xff]
          %v2141 = vld [vmem:[#allocation4 + $0xa8] sm:$0xff]
          %v2142 = vld [vmem:[#allocation4 + $0xb0] sm:$0xff]
          %v2143 = vld [vmem:[#allocation4 + $0xb8] sm:$0xff]
          %v2144 = vld [vmem:[#allocation4 + $0xc0] sm:$0xff]
          %v2145 = vld [vmem:[#allocation4 + $0xc8] sm:$0xff]
          %v2146 = vld [vmem:[#allocation4 + $0xd0] sm:$0xff]
          %v2147 = vld [vmem:[#allocation4 + $0xd8] sm:$0xff]
          %v2148 = vld [vmem:[#allocation4 + $0xe0] sm:$0xff]
          %v2149 = vld [vmem:[#allocation4 + $0xe8] sm:$0xff]
          %v2150 = vld [vmem:[#allocation4 + $0xf0] sm:$0xff]
          %v2151 = vld [vmem:[#allocation4 + $0xf8] sm:$0xff]
          %v2152 = vld [vmem:[#allocation4 + $0x100] sm:$0xff]
          %v2153 = vld [vmem:[#allocation4 + $0x108] sm:$0xff]
          %v2154 = vld [vmem:[#allocation4 + $0x110] sm:$0xff]
          %v2155 = vld [vmem:[#allocation4 + $0x118] sm:$0xff]
          %v2156 = vld [vmem:[#allocation4 + $0x120] sm:$0xff]
          %v2157 = vld [vmem:[#allocation4 + $0x128] sm:$0xff]
          %v2158 = vld [vmem:[#allocation4 + $0x130] sm:$0xff]
          %v2159 = vld [vmem:[#allocation4 + $0x138] sm:$0xff]
          %v2160 = vld [vmem:[#allocation4 + $0x140] sm:$0xff]
          %v2161 = vld [vmem:[#allocation4 + $0x148] sm:$0xff]
          %v2162 = vld [vmem:[#allocation4 + $0x150] sm:$0xff]
          %v2163 = vld [vmem:[#allocation4 + $0x158] sm:$0xff]
          %v2164 = vld [vmem:[#allocation4 + $0x160] sm:$0xff]
          %v2165 = vld [vmem:[#allocation4 + $0x168] sm:$0xff]
          %v2166 = vld [vmem:[#allocation4 + $0x170] sm:$0xff]
          %v2167 = vld [vmem:[#allocation4 + $0x178] sm:$0xff]
          %v2168 = vld [vmem:[#allocation4 + $0x180] sm:$0xf]
          %v2169 = vld [vmem:[#allocation4 + $0x188] sm:$0xf]
          %v2170 = vmul.f32 %v2120, %v2120
          %v2171 = vmul.f32 %v2121, %v2121
          %v2172 = vmul.f32 %v2122, %v2122
          %v2173 = vmul.f32 %v2123, %v2123
          %v2174 = vmul.f32 %v2124, %v2124
          %v2175 = vmul.f32 %v2125, %v2125
          %v2176 = vmul.f32 %v2126, %v2126
          %v2177 = vmul.f32 %v2127, %v2127
          %v2178 = vmul.f32 %v2128, %v2128
          %v2179 = vmul.f32 %v2129, %v2129
          %v2180 = vmul.f32 %v2130, %v2130
          %v2181 = vmul.f32 %v2131, %v2131
          %v2182 = vmul.f32 %v2132, %v2132
          %v2183 = vmul.f32 %v2133, %v2133
          %v2184 = vmul.f32 %v2134, %v2134
          %v2185 = vmul.f32 %v2135, %v2135
          %v2186 = vmul.f32 %v2136, %v2136
          %v2187 = vmul.f32 %v2137, %v2137
          %v2188 = vmul.f32 %v2138, %v2138
          %v2189 = vmul.f32 %v2139, %v2139
          %v2190 = vmul.f32 %v2140, %v2140
          %v2191 = vmul.f32 %v2141, %v2141
          %v2192 = vmul.f32 %v2142, %v2142
          %v2193 = vmul.f32 %v2143, %v2143
          %v2194 = vmul.f32 %v2144, %v2144
          %v2195 = vmul.f32 %v2145, %v2145
          %v2196 = vmul.f32 %v2146, %v2146
          %v2197 = vmul.f32 %v2147, %v2147
          %v2198 = vmul.f32 %v2148, %v2148
          %v2199 = vmul.f32 %v2149, %v2149
          %v2200 = vmul.f32 %v2150, %v2150
          %v2201 = vmul.f32 %v2151, %v2151
          %v2202 = vmul.f32 %v2152, %v2152
          %v2203 = vmul.f32 %v2153, %v2153
          %v2204 = vmul.f32 %v2154, %v2154
          %v2205 = vmul.f32 %v2155, %v2155
          %v2206 = vmul.f32 %v2156, %v2156
          %v2207 = vmul.f32 %v2157, %v2157
          %v2208 = vmul.f32 %v2158, %v2158
          %v2209 = vmul.f32 %v2159, %v2159
          %v2210 = vmul.f32 %v2160, %v2160
          %v2211 = vmul.f32 %v2161, %v2161
          %v2212 = vmul.f32 %v2162, %v2162
          %v2213 = vmul.f32 %v2163, %v2163
          %v2214 = vmul.f32 %v2164, %v2164
          %v2215 = vmul.f32 %v2165, %v2165
          %v2216 = vmul.f32 %v2166, %v2166
          %v2217 = vmul.f32 %v2167, %v2167
          %v2218 = vmul.f32 %v2168, %v2168
          %v2219 = vmul.f32 %v2169, %v2169
          %v2220 = vadd.f32 %v2170, %v2171
          %2221 = vadd.xlane.f32.xlu0 %v2220
          %v2222 = vpop.xlane.xlu0 %2221
          %v2223 = vadd.f32 %v2172, %v2173
          %2224 = vadd.xlane.f32.xlu0 %v2223
          %v2225 = vpop.xlane.xlu0 %2224
          %v2226 = vadd.f32 %v2174, %v2175
          %2227 = vadd.xlane.f32.xlu0 %v2226
          %v2228 = vpop.xlane.xlu0 %2227
          %v2229 = vadd.f32 %v2176, %v2177
          %2230 = vadd.xlane.f32.xlu0 %v2229
          %v2231 = vpop.xlane.xlu0 %2230
          %v2232 = vadd.f32 %v2178, %v2179
          %2233 = vadd.xlane.f32.xlu0 %v2232
          %v2234 = vpop.xlane.xlu0 %2233
          %v2235 = vadd.f32 %v2180, %v2181
          %2236 = vadd.xlane.f32.xlu0 %v2235
          %v2237 = vpop.xlane.xlu0 %2236
          %v2238 = vadd.f32 %v2182, %v2183
          %2239 = vadd.xlane.f32.xlu0 %v2238
          %v2240 = vpop.xlane.xlu0 %2239
          %v2241 = vadd.f32 %v2184, %v2185
          %2242 = vadd.xlane.f32.xlu0 %v2241
          %v2243 = vpop.xlane.xlu0 %2242
          %v2244 = vadd.f32 %v2186, %v2187
          %2245 = vadd.xlane.f32.xlu0 %v2244
          %v2246 = vpop.xlane.xlu0 %2245
          %v2247 = vadd.f32 %v2188, %v2189
          %2248 = vadd.xlane.f32.xlu0 %v2247
          %v2249 = vpop.xlane.xlu0 %2248
          %v2250 = vadd.f32 %v2190, %v2191
          %2251 = vadd.xlane.f32.xlu0 %v2250
          %v2252 = vpop.xlane.xlu0 %2251
          %v2253 = vadd.f32 %v2192, %v2193
          %2254 = vadd.xlane.f32.xlu0 %v2253
          %v2255 = vpop.xlane.xlu0 %2254
          %v2256 = vadd.f32 %v2194, %v2195
          %2257 = vadd.xlane.f32.xlu0 %v2256
          %v2258 = vpop.xlane.xlu0 %2257
          %v2259 = vadd.f32 %v2196, %v2197
          %2260 = vadd.xlane.f32.xlu0 %v2259
          %v2261 = vpop.xlane.xlu0 %2260
          %v2262 = vadd.f32 %v2198, %v2199
          %2263 = vadd.xlane.f32.xlu0 %v2262
          %v2264 = vpop.xlane.xlu0 %2263
          %v2265 = vadd.f32 %v2200, %v2201
          %2266 = vadd.xlane.f32.xlu0 %v2265
          %v2267 = vpop.xlane.xlu0 %2266
          %v2268 = vadd.f32 %v2202, %v2203
          %2269 = vadd.xlane.f32.xlu0 %v2268
          %v2270 = vpop.xlane.xlu0 %2269
          %v2271 = vadd.f32 %v2204, %v2205
          %2272 = vadd.xlane.f32.xlu0 %v2271
          %v2273 = vpop.xlane.xlu0 %2272
          %v2274 = vadd.f32 %v2206, %v2207
          %2275 = vadd.xlane.f32.xlu0 %v2274
          %v2276 = vpop.xlane.xlu0 %2275
          %v2277 = vadd.f32 %v2208, %v2209
          %2278 = vadd.xlane.f32.xlu0 %v2277
          %v2279 = vpop.xlane.xlu0 %2278
          %v2280 = vadd.f32 %v2210, %v2211
          %2281 = vadd.xlane.f32.xlu0 %v2280
          %v2282 = vpop.xlane.xlu0 %2281
          %v2283 = vadd.f32 %v2212, %v2213
          %2284 = vadd.xlane.f32.xlu0 %v2283
          %v2285 = vpop.xlane.xlu0 %2284
          %v2286 = vadd.f32 %v2214, %v2215
          %2287 = vadd.xlane.f32.xlu0 %v2286
          %v2288 = vpop.xlane.xlu0 %2287
          %v2289 = vadd.f32 %v2216, %v2217
          %2290 = vadd.xlane.f32.xlu0 %v2289
          %v2291 = vpop.xlane.xlu0 %2290
          %vm2292 = vcmask 1043456
          %v2293 = vsel %vm2292, %v2218, 0.0
          %v2294 = vsel %vm2292, %v2219, 0.0
          %v2295 = vadd.f32 %v2293, %v2294
          %2296 = vadd.xlane.f32.xlu0 %v2295
          %v2297 = vpop.xlane.xlu0 %2296
          %v2298 = vadd.f32 %v2222, %v2225
          %v2299 = vadd.f32 %v2298, %v2228
          %v2300 = vadd.f32 %v2299, %v2231
          %v2301 = vadd.f32 %v2300, %v2234
          %v2302 = vadd.f32 %v2301, %v2237
          %v2303 = vadd.f32 %v2302, %v2240
          %v2304 = vadd.f32 %v2303, %v2243
          %v2305 = vadd.f32 %v2304, %v2246
          %v2306 = vadd.f32 %v2305, %v2249
          %v2307 = vadd.f32 %v2306, %v2252
          %v2308 = vadd.f32 %v2307, %v2255
          %v2309 = vadd.f32 %v2308, %v2258
          %v2310 = vadd.f32 %v2309, %v2261
          %v2311 = vadd.f32 %v2310, %v2264
          %v2312 = vadd.f32 %v2311, %v2267
          %v2313 = vadd.f32 %v2312, %v2270
          %v2314 = vadd.f32 %v2313, %v2273
          %v2315 = vadd.f32 %v2314, %v2276
          %v2316 = vadd.f32 %v2315, %v2279
          %v2317 = vadd.f32 %v2316, %v2282
          %v2318 = vadd.f32 %v2317, %v2285
          %v2319 = vadd.f32 %v2318, %v2288
          %v2320 = vadd.f32 %v2319, %v2291
          %v2321 = vsel %vm2292, %v2297, 0.0
          %v2322 = vadd.f32 %v2320, %v2321
          %v2323 = vrot.slane %v2322, 4
          %v2324 = vadd.f32 %v2322, %v2323
          %v2325 = vrot.slane %v2324, 2
          %v2326 = vadd.f32 %v2324, %v2325
          %v2327 = vrot.slane %v2326, 1
          %v2328 = vadd.f32 %v2326, %v2327
          %v2329 = vrsqrt.pop %v2328
          %v2330 = vld [vmem:[#allocation2] sm:$0xff]
          %v2331 = vld [vmem:[#allocation2 + $0x8] sm:$0xff]
          %v2332 = vld [vmem:[#allocation2 + $0x10] sm:$0xff]
          %v2333 = vld [vmem:[#allocation2 + $0x18] sm:$0xff]
          %v2334 = vld [vmem:[#allocation2 + $0x20] sm:$0xff]
          %v2335 = vld [vmem:[#allocation2 + $0x28] sm:$0xff]
          %v2336 = vld [vmem:[#allocation2 + $0x30] sm:$0xff]
          %v2337 = vld [vmem:[#allocation2 + $0x38] sm:$0xff]
          %v2338 = vld [vmem:[#allocation2 + $0x40] sm:$0xff]
          %v2339 = vld [vmem:[#allocation2 + $0x48] sm:$0xff]
          %v2340 = vld [vmem:[#allocation2 + $0x50] sm:$0xff]
          %v2341 = vld [vmem:[#allocation2 + $0x58] sm:$0xff]
          %v2342 = vld [vmem:[#allocation2 + $0x60] sm:$0x1]
          %v2343 = vld [vmem:[#allocation2 + $0x68] sm:$0x1]
          %v2344 = vld [vmem:[%s1] sm:$0xff]
          %v2345 = vld [vmem:[%s1 + $0x8] sm:$0xff]
          %v2346 = vld [vmem:[%s1 + $0x10] sm:$0xff]
          %v2347 = vld [vmem:[%s1 + $0x18] sm:$0xff]
          %v2348 = vld [vmem:[%s1 + $0x20] sm:$0xff]
          %v2349 = vld [vmem:[%s1 + $0x28] sm:$0xff]
          %v2350 = vld [vmem:[%s1 + $0x30] sm:$0xff]
          %v2351 = vld [vmem:[%s1 + $0x38] sm:$0xff]
          %2352 = vmatprep.subr.mxu0 %v2331
          %2353 = vmatpush1.xpose.msra.mxu0 %v2330
          %2354 = vmatprep.subr.mxu0 %v2333
          %2355 = vmatpush1.xpose.msra.mxu0 %v2332
          %2356 = vmatprep.subr.mxu0 %v2335
          %2357 = vmatpush1.xpose.msra.mxu0 %v2334
          %2358 = vmatprep.subr.mxu0 %v2337
          %2359 = vmatpush1.xpose.msra.mxu0 %v2336
          %2360 = vmatprep.subr.mxu0 %v2339
          %2361 = vmatpush1.xpose.msra.mxu0 %v2338
          %2362 = vmatprep.subr.mxu0 %v2341
          %2363 = vmatpush1.xpose.msra.mxu0 %v2340
          %2364 = vmatprep.subr.mxu0 %v2343
          %2365 = vmatpush1.xpose.msra.mxu0 %v2342
          %2366 = vmatprep.subr.mxu0 0.0
          %2367 = vmatpush1.xpose.msra.mxu0 0.0
          %2368 = vmatprep.subr.mxu0 0.0
          %2369 = vmatpush1.xpose.msra.mxu0 0.0
          %2370 = vmatprep.subr.mxu0 0.0
          %2371 = vmatpush1.xpose.msra.mxu0 0.0
          %2372 = vmatprep.subr.mxu0 0.0
          %2373 = vmatpush1.xpose.msra.mxu0 0.0
          %2374 = vmatprep.subr.mxu0 0.0
          %2375 = vmatpush1.xpose.msra.mxu0 0.0
          %2376 = vmatprep.subr.mxu0 0.0
          %2377 = vmatpush1.xpose.msra.mxu0 0.0
          %2378 = vmatprep.subr.mxu0 0.0
          %2379 = vmatpush1.xpose.msra.mxu0 0.0
          %2380 = vmatprep.subr.mxu0 0.0
          %2381 = vmatpush1.xpose.msra.mxu0 0.0
          %2382 = vmatprep.subr.mxu0 0.0
          %2383 = vmatpush1.xpose.msra.mxu0 0.0
          %2384 = vmatprep.subr.mxu0 0.0
          %2385 = vmatpush1.xpose.msra.mxu0 0.0
          %2386 = vmatprep.subr.mxu0 0.0
          %2387 = vmatpush1.xpose.msra.mxu0 0.0
          %2388 = vmatprep.subr.mxu0 0.0
          %2389 = vmatpush1.xpose.msra.mxu0 0.0
          %2390 = vmatprep.subr.mxu0 0.0
          %2391 = vmatpush1.xpose.msra.mxu0 0.0
          %2392 = vmatprep.subr.mxu0 0.0
          %2393 = vmatpush1.xpose.msra.mxu0 0.0
          %2394 = vmatprep.subr.mxu0 0.0
          %2395 = vmatpush1.xpose.msra.mxu0 0.0
          %2396 = vmatprep.subr.mxu0 0.0
          %2397 = vmatpush1.xpose.msra.mxu0 0.0
          %2398 = vmatprep.subr.mxu0 0.0
          %2399 = vmatpush1.xpose.msra.mxu0 0.0
          %2400 = vmatprep.subr.mxu0 0.0
          %2401 = vmatpush1.xpose.msra.mxu0 0.0
          %2402 = vmatprep.subr.mxu0 0.0
          %2403 = vmatpush1.xpose.msra.mxu0 0.0
          %2404 = vmatprep.subr.mxu0 0.0
          %2405 = vmatpush1.xpose.msra.mxu0 0.0
          %2406 = vmatprep.subr.mxu0 0.0
          %2407 = vmatpush1.xpose.msra.mxu0 0.0
          %2408 = vmatprep.subr.mxu0 0.0
          %2409 = vmatpush1.xpose.msra.mxu0 0.0
          %2410 = vmatprep.subr.mxu0 0.0
          %2411 = vmatpush1.xpose.msra.mxu0 0.0
          %2412 = vmatprep.subr.mxu0 0.0
          %2413 = vmatpush1.xpose.msra.mxu0 0.0
          %2414 = vmatprep.subr.mxu0 0.0
          %2415 = vmatpush1.xpose.msra.mxu0 0.0
          %2416 = vmatprep.mubr.f32.mxu0 %v2345
          %2417 = vmatmul.mubr.f32.gmra.mrb[0].mxu0 %v2344
          %v2418 = vpop.f32.mrb[0].mxu0
          %v2419 = vadd.f32 0.0, %v2418
          %v2420 = vpop.f32.mrb[0].mxu0
          %2421 = vmatprep.mubr.f32.mxu0 %v2347
          %2422 = vmatmul.mubr.f32.gmra.mrb[0].mxu0 %v2346
          %v2423 = vpop.f32.mrb[0].mxu0
          %v2424 = vadd.f32 0.0, %v2423
          %v2425 = vpop.f32.mrb[0].mxu0
          %2426 = vdwg.mxu0
          %v2427 = vmul.f32 %v2419, %v2119
          %v2428 = vmul.f32 %v2424, %v2119
          %v2429 = vld [vmem:[%s2] sm:$0xff]
          %v2430 = vld [vmem:[%s2 + $0x8] sm:$0xff]
          %2432 = vset.pattern.permute.xlu0 0
          %2433 = vperm.xlu0 %2432, %v2429
          %v2434 = vpop.permute.xlu0 %2433
          %2437 = vset.pattern.permute.xlu0 0
          %2438 = vperm.xlu0 %2437, %v2430
          %v2439 = vpop.permute.xlu0 %2438
          %v2441 = vadd.f32 %v2427, %v2434
          %v2442 = vadd.f32 %v2428, %v2439
          %2443 = vmatprep.subr.mxu0 %v2121
          %2444 = vmatpush1.xpose.msra.mxu0 %v2120
          %2445 = vmatprep.subr.mxu0 %v2123
          %2446 = vmatpush1.xpose.msra.mxu0 %v2122
          %2447 = vmatprep.subr.mxu0 %v2125
          %2448 = vmatpush1.xpose.msra.mxu0 %v2124
          %2449 = vmatprep.subr.mxu0 %v2127
          %2450 = vmatpush1.xpose.msra.mxu0 %v2126
          %2451 = vmatprep.subr.mxu0 %v2129
          %2452 = vmatpush1.xpose.msra.mxu0 %v2128
          %2453 = vmatprep.subr.mxu0 %v2131
          %2454 = vmatpush1.xpose.msra.mxu0 %v2130
          %2455 = vmatprep.subr.mxu0 %v2133
          %2456 = vmatpush1.xpose.msra.mxu0 %v2132
          %2457 = vmatprep.subr.mxu0 %v2135
          %2458 = vmatpush1.xpose.msra.mxu0 %v2134
          %2459 = vmatprep.subr.mxu0 %v2137
          %2460 = vmatpush1.xpose.msra.mxu0 %v2136
          %2461 = vmatprep.subr.mxu0 %v2139
          %2462 = vmatpush1.xpose.msra.mxu0 %v2138
          %2463 = vmatprep.subr.mxu0 %v2141
          %2464 = vmatpush1.xpose.msra.mxu0 %v2140
          %2465 = vmatprep.subr.mxu0 %v2143
          %2466 = vmatpush1.xpose.msra.mxu0 %v2142
          %2467 = vmatprep.subr.mxu0 %v2145
          %2468 = vmatpush1.xpose.msra.mxu0 %v2144
          %2469 = vmatprep.subr.mxu0 %v2147
          %2470 = vmatpush1.xpose.msra.mxu0 %v2146
          %2471 = vmatprep.subr.mxu0 %v2149
          %2472 = vmatpush1.xpose.msra.mxu0 %v2148
          %2473 = vmatprep.subr.mxu0 %v2151
          %2474 = vmatpush1.xpose.msra.mxu0 %v2150
          %2475 = vmatprep.subr.mxu0 %v2153
          %2476 = vmatpush1.xpose.msra.mxu0 %v2152
          %2477 = vmatprep.subr.mxu0 %v2155
          %2478 = vmatpush1.xpose.msra.mxu0 %v2154
          %2479 = vmatprep.subr.mxu0 %v2157
          %2480 = vmatpush1.xpose.msra.mxu0 %v2156
          %2481 = vmatprep.subr.mxu0 %v2159
          %2482 = vmatpush1.xpose.msra.mxu0 %v2158
          %2483 = vmatprep.subr.mxu0 %v2161
          %2484 = vmatpush1.xpose.msra.mxu0 %v2160
          %2485 = vmatprep.subr.mxu0 %v2163
          %2486 = vmatpush1.xpose.msra.mxu0 %v2162
          %2487 = vmatprep.subr.mxu0 %v2165
          %2488 = vmatpush1.xpose.msra.mxu0 %v2164
          %2489 = vmatprep.subr.mxu0 %v2167
          %2490 = vmatpush1.xpose.msra.mxu0 %v2166
          %2491 = vmatprep.subr.mxu0 %v2169
          %2492 = vmatpush1.xpose.msra.mxu0 %v2168
          %2493 = vmatprep.subr.mxu0 0.0
          %2494 = vmatpush1.xpose.msra.mxu0 0.0
          %2495 = vmatprep.subr.mxu0 0.0
          %2496 = vmatpush1.xpose.msra.mxu0 0.0
          %2497 = vmatprep.subr.mxu0 0.0
          %2498 = vmatpush1.xpose.msra.mxu0 0.0
          %2499 = vmatprep.subr.mxu0 0.0
          %2500 = vmatpush1.xpose.msra.mxu0 0.0
          %2501 = vmatprep.subr.mxu0 0.0
          %2502 = vmatpush1.xpose.msra.mxu0 0.0
          %2503 = vmatprep.subr.mxu0 0.0
          %2504 = vmatpush1.xpose.msra.mxu0 0.0
          %2505 = vmatprep.subr.mxu0 0.0
          %2506 = vmatpush1.xpose.msra.mxu0 0.0
          %2507 = vmatprep.mubr.f32.mxu0 %v2349
          %2508 = vmatmul.mubr.f32.gmra.mrb[0].mxu0 %v2348
          %v2509 = vpop.f32.mrb[0].mxu0
          %v2510 = vadd.f32 0.0, %v2509
          %v2511 = vpop.f32.mrb[0].mxu0
          %v2512 = vadd.f32 0.0, %v2511
          %2513 = vmatprep.mubr.f32.mxu0 %v2351
          %2514 = vmatmul.mubr.f32.gmra.mrb[0].mxu0 %v2350
          %v2515 = vpop.f32.mrb[0].mxu0
          %v2516 = vadd.f32 0.0, %v2515
          %v2517 = vpop.f32.mrb[0].mxu0
          %v2518 = vadd.f32 0.0, %v2517
          %2519 = vdwg.mxu0
          %v2520 = vmul.f32 %v2510, %v2329
          %v2521 = vmul.f32 %v2512, %v2329
          %v2522 = vmul.f32 %v2516, %v2329
          %v2523 = vmul.f32 %v2518, %v2329
          %v2524 = vld [vmem:[%s2 + $0x10] sm:$0xff]
          %v2525 = vld [vmem:[%s2 + $0x18] sm:$0xff]
          %2527 = vset.pattern.permute.xlu0 0
          %2528 = vperm.xlu0 %2527, %v2524
          %v2529 = vpop.permute.xlu0 %2528
          %2532 = vset.pattern.permute.xlu0 0
          %2533 = vperm.xlu0 %2532, %v2525
          %v2534 = vpop.permute.xlu0 %2533
          %v2536 = vadd.f32 %v2520, %v2529
          %v2537 = vadd.f32 %v2521, %v2529
          %v2538 = vadd.f32 %v2522, %v2534
          %v2539 = vadd.f32 %v2523, %v2534
          %v2540 = vld [vmem:[#allocation5] sm:$0xff]
          %v2541 = vld [vmem:[#allocation5 + $0x8] sm:$0xff]
          %v2542 = vld [vmem:[#allocation5 + $0x10] sm:$0xff]
          %v2543 = vld [vmem:[#allocation5 + $0x18] sm:$0xff]
          %v2544 = vld [vmem:[#allocation5 + $0x20] sm:$0xff]
          %v2545 = vld [vmem:[#allocation5 + $0x28] sm:$0xff]
          %v2546 = vld [vmem:[#allocation5 + $0x30] sm:$0xff]
          %v2547 = vld [vmem:[#allocation5 + $0x38] sm:$0xff]
          %v2548 = vld [vmem:[#allocation5 + $0x40] sm:$0xff]
          %v2549 = vld [vmem:[#allocation5 + $0x48] sm:$0xff]
          %v2550 = vld [vmem:[#allocation5 + $0x50] sm:$0xff]
          %v2551 = vld [vmem:[#allocation5 + $0x58] sm:$0xff]
          %v2552 = vld [vmem:[#allocation5 + $0x60] sm:$0xff]
          %v2553 = vld [vmem:[#allocation5 + $0x68] sm:$0xff]
          %v2554 = vld [vmem:[#allocation5 + $0x70] sm:$0xff]
          %v2555 = vld [vmem:[#allocation5 + $0x78] sm:$0xff]
          %v2556 = vld [vmem:[#allocation5 + $0x80] sm:$0xff]
          %v2557 = vld [vmem:[#allocation5 + $0x88] sm:$0xff]
          %v2558 = vld [vmem:[#allocation5 + $0x90] sm:$0xff]
          %v2559 = vld [vmem:[#allocation5 + $0x98] sm:$0xff]
          %v2560 = vld [vmem:[#allocation5 + $0xa0] sm:$0xff]
          %v2561 = vld [vmem:[#allocation5 + $0xa8] sm:$0xff]
          %v2562 = vld [vmem:[#allocation5 + $0xb0] sm:$0xff]
          %v2563 = vld [vmem:[#allocation5 + $0xb8] sm:$0xff]
          %v2564 = vld [vmem:[#allocation5 + $0xc0] sm:$0xf]
          %vm2565 = vcmask 556032
          %v2567 = vsel %vm2565, %v2537, 0
          %v2570 = vsel %vm2565, %v2539, 0
          %v2573 = vsel %vm2292, %v2564, 0
          %2575 = vmatprep.subr.mxu0 0.0
          %2576 = vmatpush1.msra.mxu0 %v2540
          %2577 = vmatprep.subr.mxu0 0.0
          %2578 = vmatpush1.msra.mxu0 %v2541
          %2579 = vmatprep.subr.mxu0 0.0
          %2580 = vmatpush1.msra.mxu0 %v2542
          %2581 = vmatprep.subr.mxu0 0.0
          %2582 = vmatpush1.msra.mxu0 %v2543
          %2583 = vmatprep.subr.mxu0 0.0
          %2584 = vmatpush1.msra.mxu0 %v2544
          %2585 = vmatprep.subr.mxu0 0.0
          %2586 = vmatpush1.msra.mxu0 %v2545
          %2587 = vmatprep.subr.mxu0 0.0
          %2588 = vmatpush1.msra.mxu0 %v2546
          %2589 = vmatprep.subr.mxu0 0.0
          %2590 = vmatpush1.msra.mxu0 %v2547
          %2591 = vmatprep.subr.mxu0 0.0
          %2592 = vmatpush1.msra.mxu0 %v2548
          %2593 = vmatprep.subr.mxu0 0.0
          %2594 = vmatpush1.msra.mxu0 %v2549
          %2595 = vmatprep.subr.mxu0 0.0
          %2596 = vmatpush1.msra.mxu0 %v2550
          %2597 = vmatprep.subr.mxu0 0.0
          %2598 = vmatpush1.msra.mxu0 %v2551
          %2599 = vmatprep.subr.mxu0 0.0
          %2600 = vmatpush1.msra.mxu0 %v2552
          %2601 = vmatprep.subr.mxu0 0.0
          %2602 = vmatpush1.msra.mxu0 %v2553
          %2603 = vmatprep.subr.mxu0 0.0
          %2604 = vmatpush1.msra.mxu0 %v2554
          %2605 = vmatprep.subr.mxu0 0.0
          %2606 = vmatpush1.msra.mxu0 %v2555
          %2607 = vmatprep.subr.mxu0 0.0
          %2608 = vmatpush1.msra.mxu0 %v2556
          %2609 = vmatprep.subr.mxu0 0.0
          %2610 = vmatpush1.msra.mxu0 %v2557
          %2611 = vmatprep.subr.mxu0 0.0
          %2612 = vmatpush1.msra.mxu0 %v2558
          %2613 = vmatprep.subr.mxu0 0.0
          %2614 = vmatpush1.msra.mxu0 %v2559
          %2615 = vmatprep.subr.mxu0 0.0
          %2616 = vmatpush1.msra.mxu0 %v2560
          %2617 = vmatprep.subr.mxu0 0.0
          %2618 = vmatpush1.msra.mxu0 %v2561
          %2619 = vmatprep.subr.mxu0 0.0
          %2620 = vmatpush1.msra.mxu0 %v2562
          %2621 = vmatprep.subr.mxu0 0.0
          %2622 = vmatpush1.msra.mxu0 %v2563
          %2623 = vmatprep.subr.mxu0 0.0
          %2624 = vmatpush1.msra.mxu0 %v2573
          %2625 = vmatprep.subr.mxu0 0.0
          %2626 = vmatpush1.msra.mxu0 0.0
          %2627 = vmatprep.subr.mxu0 0.0
          %2628 = vmatpush1.msra.mxu0 0.0
          %2629 = vmatprep.subr.mxu0 0.0
          %2630 = vmatpush1.msra.mxu0 0.0
          %2631 = vmatprep.subr.mxu0 0.0
          %2632 = vmatpush1.msra.mxu0 0.0
          %2633 = vmatprep.subr.mxu0 0.0
          %2634 = vmatpush1.msra.mxu0 0.0
          %2635 = vmatprep.subr.mxu0 0.0
          %2636 = vmatpush1.msra.mxu0 0.0
          %2637 = vmatprep.subr.mxu0 0.0
          %2638 = vmatpush1.msra.mxu0 0.0
          %2639 = vmatprep.mubr.f32.mxu0 %v2567
          %2640 = vmatmul.mubr.f32.gmra.mrb[0].mxu0 %v2536
          %v2641 = vpop.f32.mrb[0].mxu0
          %v2642 = vadd.f32 0.0, %v2641
          %v2643 = vpop.f32.mrb[0].mxu0
          %2644 = vmatprep.mubr.f32.mxu0 %v2570
          %2645 = vmatmul.mubr.f32.gmra.mrb[0].mxu0 %v2538
          %v2646 = vpop.f32.mrb[0].mxu0
          %v2647 = vadd.f32 0.0, %v2646
          %v2648 = vpop.f32.mrb[0].mxu0
          %2649 = vdwg.mxu0
          %v2650 = vld [vmem:[#allocation6] sm:$0xff]
          %v2651 = vld [vmem:[#allocation6 + $0x8] sm:$0xff]
          %v2652 = vld [vmem:[#allocation6 + $0x10] sm:$0xff]
          %v2653 = vld [vmem:[#allocation6 + $0x18] sm:$0xff]
          %v2654 = vld [vmem:[#allocation6 + $0x20] sm:$0xff]
          %v2655 = vld [vmem:[#allocation6 + $0x28] sm:$0xff]
          %v2656 = vld [vmem:[#allocation6 + $0x30] sm:$0xff]
          %v2657 = vld [vmem:[#allocation6 + $0x38] sm:$0xff]
          %v2658 = vld [vmem:[#allocation6 + $0x40] sm:$0xff]
          %v2659 = vld [vmem:[#allocation6 + $0x48] sm:$0xff]
          %v2660 = vld [vmem:[#allocation6 + $0x50] sm:$0xff]
          %v2661 = vld [vmem:[#allocation6 + $0x58] sm:$0xff]
          %v2662 = vld [vmem:[#allocation6 + $0x60] sm:$0x1]
          %v2663 = vld [vmem:[#allocation6 + $0x68] sm:$0x1]
          %s2664 = scalar_lea.vmem [#allocation6], 112
          %v2665 = vld [vmem:[%s2664] sm:$0xff]
          %v2666 = vld [vmem:[%s2664 + $0x8] sm:$0xff]
          %v2667 = vld [vmem:[%s2664 + $0x10] sm:$0xff]
          %v2668 = vld [vmem:[%s2664 + $0x18] sm:$0xff]
          %v2669 = vld [vmem:[%s2664 + $0x20] sm:$0xff]
          %v2670 = vld [vmem:[%s2664 + $0x28] sm:$0xff]
          %v2671 = vld [vmem:[%s2664 + $0x30] sm:$0xff]
          %v2672 = vld [vmem:[%s2664 + $0x38] sm:$0xff]
          %v2673 = vld [vmem:[%s2664 + $0x40] sm:$0xff]
          %v2674 = vld [vmem:[%s2664 + $0x48] sm:$0xff]
          %v2675 = vld [vmem:[%s2664 + $0x50] sm:$0xff]
          %v2676 = vld [vmem:[%s2664 + $0x58] sm:$0xff]
          %v2677 = vld [vmem:[%s2664 + $0x60] sm:$0x1]
          %v2678 = vld [vmem:[%s2664 + $0x68] sm:$0x1]
          %v2680 = vrot.slane %v2441, 1
          %vm2681 = vcmask 400384
          %v2682 = vsel %vm2681, %v2680, 0
          %v2685 = vsel %vm542, %v2677, 0
          %v2688 = vsel %vm542, %v2678, 0
          %2690 = vmatprep.subr.mxu0 %v2666
          %2691 = vmatpush1.msra.mxu0 %v2665
          %2692 = vmatprep.subr.mxu0 %v2668
          %2693 = vmatpush1.msra.mxu0 %v2667
          %2694 = vmatprep.subr.mxu0 %v2670
          %2695 = vmatpush1.msra.mxu0 %v2669
          %2696 = vmatprep.subr.mxu0 %v2672
          %2697 = vmatpush1.msra.mxu0 %v2671
          %2698 = vmatprep.subr.mxu0 %v2674
          %2699 = vmatpush1.msra.mxu0 %v2673
          %2700 = vmatprep.subr.mxu0 %v2676
          %2701 = vmatpush1.msra.mxu0 %v2675
          %2702 = vmatprep.subr.mxu0 %v2688
          %2703 = vmatpush1.msra.mxu0 %v2685
          %2704 = vmatprep.subr.mxu0 0.0
          %2705 = vmatpush1.msra.mxu0 0.0
          %2706 = vmatprep.subr.mxu0 0.0
          %2707 = vmatpush1.msra.mxu0 0.0
          %2708 = vmatprep.subr.mxu0 0.0
          %2709 = vmatpush1.msra.mxu0 0.0
          %2710 = vmatprep.subr.mxu0 0.0
          %2711 = vmatpush1.msra.mxu0 0.0
          %2712 = vmatprep.subr.mxu0 0.0
          %2713 = vmatpush1.msra.mxu0 0.0
          %2714 = vmatprep.subr.mxu0 0.0
          %2715 = vmatpush1.msra.mxu0 0.0
          %2716 = vmatprep.subr.mxu0 0.0
          %2717 = vmatpush1.msra.mxu0 0.0
          %2718 = vmatprep.subr.mxu0 0.0
          %2719 = vmatpush1.msra.mxu0 0.0
          %2720 = vmatprep.subr.mxu0 0.0
          %2721 = vmatpush1.msra.mxu0 0.0
          %2722 = vmatprep.subr.mxu0 0.0
          %2723 = vmatpush1.msra.mxu0 0.0
          %2724 = vmatprep.subr.mxu0 0.0
          %2725 = vmatpush1.msra.mxu0 0.0
          %2726 = vmatprep.subr.mxu0 0.0
          %2727 = vmatpush1.msra.mxu0 0.0
          %2728 = vmatprep.subr.mxu0 0.0
          %2729 = vmatpush1.msra.mxu0 0.0
          %2730 = vmatprep.subr.mxu0 0.0
          %2731 = vmatpush1.msra.mxu0 0.0
          %2732 = vmatprep.subr.mxu0 0.0
          %2733 = vmatpush1.msra.mxu0 0.0
          %2734 = vmatprep.subr.mxu0 0.0
          %2735 = vmatpush1.msra.mxu0 0.0
          %2736 = vmatprep.subr.mxu0 0.0
          %2737 = vmatpush1.msra.mxu0 0.0
          %2738 = vmatprep.subr.mxu0 0.0
          %2739 = vmatpush1.msra.mxu0 0.0
          %2740 = vmatprep.subr.mxu0 0.0
          %2741 = vmatpush1.msra.mxu0 0.0
          %2742 = vmatprep.subr.mxu0 0.0
          %2743 = vmatpush1.msra.mxu0 0.0
          %2744 = vmatprep.subr.mxu0 0.0
          %2745 = vmatpush1.msra.mxu0 0.0
          %2746 = vmatprep.subr.mxu0 0.0
          %2747 = vmatpush1.msra.mxu0 0.0
          %2748 = vmatprep.subr.mxu0 0.0
          %2749 = vmatpush1.msra.mxu0 0.0
          %2750 = vmatprep.subr.mxu0 0.0
          %2751 = vmatpush1.msra.mxu0 0.0
          %2752 = vmatprep.subr.mxu0 0.0
          %2753 = vmatpush1.msra.mxu0 0.0
          %2754 = vmatprep.mubr.f32.mxu0 0.0
          %2755 = vmatmul.mubr.f32.gmra.mrb[0].mxu0 %v2682
          %v2756 = vpop.f32.mrb[0].mxu0
          %v2757 = vadd.f32 0.0, %v2756
          %v2758 = vpop.f32.mrb[0].mxu0
          %v2759 = vadd.f32 0.0, %v2758
          %2760 = vdwg.mxu0
          %s2761 = scalar_lea.vmem [#allocation6], 224
          %v2762 = vld [vmem:[%s2761] sm:$0xff]
          %v2763 = vld [vmem:[%s2761 + $0x8] sm:$0xff]
          %v2764 = vld [vmem:[%s2761 + $0x10] sm:$0xff]
          %v2765 = vld [vmem:[%s2761 + $0x18] sm:$0xff]
          %v2766 = vld [vmem:[%s2761 + $0x20] sm:$0xff]
          %v2767 = vld [vmem:[%s2761 + $0x28] sm:$0xff]
          %v2768 = vld [vmem:[%s2761 + $0x30] sm:$0xff]
          %v2769 = vld [vmem:[%s2761 + $0x38] sm:$0xff]
          %v2770 = vld [vmem:[%s2761 + $0x40] sm:$0xff]
          %v2771 = vld [vmem:[%s2761 + $0x48] sm:$0xff]
          %v2772 = vld [vmem:[%s2761 + $0x50] sm:$0xff]
          %v2773 = vld [vmem:[%s2761 + $0x58] sm:$0xff]
          %v2774 = vld [vmem:[%s2761 + $0x60] sm:$0x1]
          %v2775 = vld [vmem:[%s2761 + $0x68] sm:$0x1]
          %s2776 = scalar_lea.vmem [#allocation6], 336
          %v2777 = vld [vmem:[%s2776] sm:$0xff]
          %v2778 = vld [vmem:[%s2776 + $0x8] sm:$0xff]
          %v2779 = vld [vmem:[%s2776 + $0x10] sm:$0xff]
          %v2780 = vld [vmem:[%s2776 + $0x18] sm:$0xff]
          %v2781 = vld [vmem:[%s2776 + $0x20] sm:$0xff]
          %v2782 = vld [vmem:[%s2776 + $0x28] sm:$0xff]
          %v2783 = vld [vmem:[%s2776 + $0x30] sm:$0xff]
          %v2784 = vld [vmem:[%s2776 + $0x38] sm:$0xff]
          %v2785 = vld [vmem:[%s2776 + $0x40] sm:$0xff]
          %v2786 = vld [vmem:[%s2776 + $0x48] sm:$0xff]
          %v2787 = vld [vmem:[%s2776 + $0x50] sm:$0xff]
          %v2788 = vld [vmem:[%s2776 + $0x58] sm:$0xff]
          %v2789 = vld [vmem:[%s2776 + $0x60] sm:$0x1]
          %v2790 = vld [vmem:[%s2776 + $0x68] sm:$0x1]
          %v2791 = vrot.slane %v2441, 3
          %v2792 = vsel %vm2681, %v2791, 0
          %v2795 = vsel %vm542, %v2789, 0
          %v2798 = vsel %vm542, %v2790, 0
          %2800 = vmatprep.subr.mxu0 %v2778
          %2801 = vmatpush1.msra.mxu0 %v2777
          %2802 = vmatprep.subr.mxu0 %v2780
          %2803 = vmatpush1.msra.mxu0 %v2779
          %2804 = vmatprep.subr.mxu0 %v2782
          %2805 = vmatpush1.msra.mxu0 %v2781
          %2806 = vmatprep.subr.mxu0 %v2784
          %2807 = vmatpush1.msra.mxu0 %v2783
          %2808 = vmatprep.subr.mxu0 %v2786
          %2809 = vmatpush1.msra.mxu0 %v2785
          %2810 = vmatprep.subr.mxu0 %v2788
          %2811 = vmatpush1.msra.mxu0 %v2787
          %2812 = vmatprep.subr.mxu0 %v2798
          %2813 = vmatpush1.msra.mxu0 %v2795
          %2814 = vmatprep.subr.mxu0 0.0
          %2815 = vmatpush1.msra.mxu0 0.0
          %2816 = vmatprep.subr.mxu0 0.0
          %2817 = vmatpush1.msra.mxu0 0.0
          %2818 = vmatprep.subr.mxu0 0.0
          %2819 = vmatpush1.msra.mxu0 0.0
          %2820 = vmatprep.subr.mxu0 0.0
          %2821 = vmatpush1.msra.mxu0 0.0
          %2822 = vmatprep.subr.mxu0 0.0
          %2823 = vmatpush1.msra.mxu0 0.0
          %2824 = vmatprep.subr.mxu0 0.0
          %2825 = vmatpush1.msra.mxu0 0.0
          %2826 = vmatprep.subr.mxu0 0.0
          %2827 = vmatpush1.msra.mxu0 0.0
          %2828 = vmatprep.subr.mxu0 0.0
          %2829 = vmatpush1.msra.mxu0 0.0
          %2830 = vmatprep.subr.mxu0 0.0
          %2831 = vmatpush1.msra.mxu0 0.0
          %2832 = vmatprep.subr.mxu0 0.0
          %2833 = vmatpush1.msra.mxu0 0.0
          %2834 = vmatprep.subr.mxu0 0.0
          %2835 = vmatpush1.msra.mxu0 0.0
          %2836 = vmatprep.subr.mxu0 0.0
          %2837 = vmatpush1.msra.mxu0 0.0
          %2838 = vmatprep.subr.mxu0 0.0
          %2839 = vmatpush1.msra.mxu0 0.0
          %2840 = vmatprep.subr.mxu0 0.0
          %2841 = vmatpush1.msra.mxu0 0.0
          %2842 = vmatprep.subr.mxu0 0.0
          %2843 = vmatpush1.msra.mxu0 0.0
          %2844 = vmatprep.subr.mxu0 0.0
          %2845 = vmatpush1.msra.mxu0 0.0
          %2846 = vmatprep.subr.mxu0 0.0
          %2847 = vmatpush1.msra.mxu0 0.0
          %2848 = vmatprep.subr.mxu0 0.0
          %2849 = vmatpush1.msra.mxu0 0.0
          %2850 = vmatprep.subr.mxu0 0.0
          %2851 = vmatpush1.msra.mxu0 0.0
          %2852 = vmatprep.subr.mxu0 0.0
          %2853 = vmatpush1.msra.mxu0 0.0
          %2854 = vmatprep.subr.mxu0 0.0
          %2855 = vmatpush1.msra.mxu0 0.0
          %2856 = vmatprep.subr.mxu0 0.0
          %2857 = vmatpush1.msra.mxu0 0.0
          %2858 = vmatprep.subr.mxu0 0.0
          %2859 = vmatpush1.msra.mxu0 0.0
          %2860 = vmatprep.subr.mxu0 0.0
          %2861 = vmatpush1.msra.mxu0 0.0
          %2862 = vmatprep.subr.mxu0 0.0
          %2863 = vmatpush1.msra.mxu0 0.0
          %2864 = vmatprep.mubr.f32.mxu0 0.0
          %2865 = vmatmul.mubr.f32.gmra.mrb[0].mxu0 %v2792
          %v2866 = vpop.f32.mrb[0].mxu0
          %v2867 = vadd.f32 0.0, %v2866
          %v2868 = vpop.f32.mrb[0].mxu0
          %v2869 = vadd.f32 0.0, %v2868
          %2870 = vdwg.mxu0
          %s2871 = scalar_lea.vmem [#allocation6], 448
          %v2872 = vld [vmem:[%s2871] sm:$0xff]
          %v2873 = vld [vmem:[%s2871 + $0x8] sm:$0xff]
          %v2874 = vld [vmem:[%s2871 + $0x10] sm:$0xff]
          %v2875 = vld [vmem:[%s2871 + $0x18] sm:$0xff]
          %v2876 = vld [vmem:[%s2871 + $0x20] sm:$0xff]
          %v2877 = vld [vmem:[%s2871 + $0x28] sm:$0xff]
          %v2878 = vld [vmem:[%s2871 + $0x30] sm:$0xff]
          %v2879 = vld [vmem:[%s2871 + $0x38] sm:$0xff]
          %v2880 = vld [vmem:[%s2871 + $0x40] sm:$0xff]
          %v2881 = vld [vmem:[%s2871 + $0x48] sm:$0xff]
          %v2882 = vld [vmem:[%s2871 + $0x50] sm:$0xff]
          %v2883 = vld [vmem:[%s2871 + $0x58] sm:$0xff]
          %v2884 = vld [vmem:[%s2871 + $0x60] sm:$0x1]
          %v2885 = vld [vmem:[%s2871 + $0x68] sm:$0x1]
          %s2886 = scalar_lea.vmem [#allocation6], 560
          %v2887 = vld [vmem:[%s2886] sm:$0xff]
          %v2888 = vld [vmem:[%s2886 + $0x8] sm:$0xff]
          %v2889 = vld [vmem:[%s2886 + $0x10] sm:$0xff]
          %v2890 = vld [vmem:[%s2886 + $0x18] sm:$0xff]
          %v2891 = vld [vmem:[%s2886 + $0x20] sm:$0xff]
          %v2892 = vld [vmem:[%s2886 + $0x28] sm:$0xff]
          %v2893 = vld [vmem:[%s2886 + $0x30] sm:$0xff]
          %v2894 = vld [vmem:[%s2886 + $0x38] sm:$0xff]
          %v2895 = vld [vmem:[%s2886 + $0x40] sm:$0xff]
          %v2896 = vld [vmem:[%s2886 + $0x48] sm:$0xff]
          %v2897 = vld [vmem:[%s2886 + $0x50] sm:$0xff]
          %v2898 = vld [vmem:[%s2886 + $0x58] sm:$0xff]
          %v2899 = vld [vmem:[%s2886 + $0x60] sm:$0x1]
          %v2900 = vld [vmem:[%s2886 + $0x68] sm:$0x1]
          %v2901 = vrot.slane %v2441, 5
          %v2902 = vsel %vm2681, %v2901, 0
          %v2905 = vsel %vm542, %v2899, 0
          %v2908 = vsel %vm542, %v2900, 0
          %2910 = vmatprep.subr.mxu0 %v2888
          %2911 = vmatpush1.msra.mxu0 %v2887
          %2912 = vmatprep.subr.mxu0 %v2890
          %2913 = vmatpush1.msra.mxu0 %v2889
          %2914 = vmatprep.subr.mxu0 %v2892
          %2915 = vmatpush1.msra.mxu0 %v2891
          %2916 = vmatprep.subr.mxu0 %v2894
          %2917 = vmatpush1.msra.mxu0 %v2893
          %2918 = vmatprep.subr.mxu0 %v2896
          %2919 = vmatpush1.msra.mxu0 %v2895
          %2920 = vmatprep.subr.mxu0 %v2898
          %2921 = vmatpush1.msra.mxu0 %v2897
          %2922 = vmatprep.subr.mxu0 %v2908
          %2923 = vmatpush1.msra.mxu0 %v2905
          %2924 = vmatprep.subr.mxu0 0.0
          %2925 = vmatpush1.msra.mxu0 0.0
          %2926 = vmatprep.subr.mxu0 0.0
          %2927 = vmatpush1.msra.mxu0 0.0
          %2928 = vmatprep.subr.mxu0 0.0
          %2929 = vmatpush1.msra.mxu0 0.0
          %2930 = vmatprep.subr.mxu0 0.0
          %2931 = vmatpush1.msra.mxu0 0.0
          %2932 = vmatprep.subr.mxu0 0.0
          %2933 = vmatpush1.msra.mxu0 0.0
          %2934 = vmatprep.subr.mxu0 0.0
          %2935 = vmatpush1.msra.mxu0 0.0
          %2936 = vmatprep.subr.mxu0 0.0
          %2937 = vmatpush1.msra.mxu0 0.0
          %2938 = vmatprep.subr.mxu0 0.0
          %2939 = vmatpush1.msra.mxu0 0.0
          %2940 = vmatprep.subr.mxu0 0.0
          %2941 = vmatpush1.msra.mxu0 0.0
          %2942 = vmatprep.subr.mxu0 0.0
          %2943 = vmatpush1.msra.mxu0 0.0
          %2944 = vmatprep.subr.mxu0 0.0
          %2945 = vmatpush1.msra.mxu0 0.0
          %2946 = vmatprep.subr.mxu0 0.0
          %2947 = vmatpush1.msra.mxu0 0.0
          %2948 = vmatprep.subr.mxu0 0.0
          %2949 = vmatpush1.msra.mxu0 0.0
          %2950 = vmatprep.subr.mxu0 0.0
          %2951 = vmatpush1.msra.mxu0 0.0
          %2952 = vmatprep.subr.mxu0 0.0
          %2953 = vmatpush1.msra.mxu0 0.0
          %2954 = vmatprep.subr.mxu0 0.0
          %2955 = vmatpush1.msra.mxu0 0.0
          %2956 = vmatprep.subr.mxu0 0.0
          %2957 = vmatpush1.msra.mxu0 0.0
          %2958 = vmatprep.subr.mxu0 0.0
          %2959 = vmatpush1.msra.mxu0 0.0
          %2960 = vmatprep.subr.mxu0 0.0
          %2961 = vmatpush1.msra.mxu0 0.0
          %2962 = vmatprep.subr.mxu0 0.0
          %2963 = vmatpush1.msra.mxu0 0.0
          %2964 = vmatprep.subr.mxu0 0.0
          %2965 = vmatpush1.msra.mxu0 0.0
          %2966 = vmatprep.subr.mxu0 0.0
          %2967 = vmatpush1.msra.mxu0 0.0
          %2968 = vmatprep.subr.mxu0 0.0
          %2969 = vmatpush1.msra.mxu0 0.0
          %2970 = vmatprep.subr.mxu0 0.0
          %2971 = vmatpush1.msra.mxu0 0.0
          %2972 = vmatprep.subr.mxu0 0.0
          %2973 = vmatpush1.msra.mxu0 0.0
          %2974 = vmatprep.mubr.f32.mxu0 0.0
          %2975 = vmatmul.mubr.f32.gmra.mrb[0].mxu0 %v2902
          %v2976 = vpop.f32.mrb[0].mxu0
          %v2977 = vadd.f32 0.0, %v2976
          %v2978 = vpop.f32.mrb[0].mxu0
          %v2979 = vadd.f32 0.0, %v2978
          %2980 = vdwg.mxu0
          %s2981 = scalar_lea.vmem [#allocation6], 672
          %v2982 = vld [vmem:[%s2981] sm:$0xff]
          %v2983 = vld [vmem:[%s2981 + $0x8] sm:$0xff]
          %v2984 = vld [vmem:[%s2981 + $0x10] sm:$0xff]
          %v2985 = vld [vmem:[%s2981 + $0x18] sm:$0xff]
          %v2986 = vld [vmem:[%s2981 + $0x20] sm:$0xff]
          %v2987 = vld [vmem:[%s2981 + $0x28] sm:$0xff]
          %v2988 = vld [vmem:[%s2981 + $0x30] sm:$0xff]
          %v2989 = vld [vmem:[%s2981 + $0x38] sm:$0xff]
          %v2990 = vld [vmem:[%s2981 + $0x40] sm:$0xff]
          %v2991 = vld [vmem:[%s2981 + $0x48] sm:$0xff]
          %v2992 = vld [vmem:[%s2981 + $0x50] sm:$0xff]
          %v2993 = vld [vmem:[%s2981 + $0x58] sm:$0xff]
          %v2994 = vld [vmem:[%s2981 + $0x60] sm:$0x1]
          %v2995 = vld [vmem:[%s2981 + $0x68] sm:$0x1]
          %s2996 = scalar_lea.vmem [#allocation6], 784
          %v2997 = vld [vmem:[%s2996] sm:$0xff]
          %v2998 = vld [vmem:[%s2996 + $0x8] sm:$0xff]
          %v2999 = vld [vmem:[%s2996 + $0x10] sm:$0xff]
          %v3000 = vld [vmem:[%s2996 + $0x18] sm:$0xff]
          %v3001 = vld [vmem:[%s2996 + $0x20] sm:$0xff]
          %v3002 = vld [vmem:[%s2996 + $0x28] sm:$0xff]
          %v3003 = vld [vmem:[%s2996 + $0x30] sm:$0xff]
          %v3004 = vld [vmem:[%s2996 + $0x38] sm:$0xff]
          %v3005 = vld [vmem:[%s2996 + $0x40] sm:$0xff]
          %v3006 = vld [vmem:[%s2996 + $0x48] sm:$0xff]
          %v3007 = vld [vmem:[%s2996 + $0x50] sm:$0xff]
          %v3008 = vld [vmem:[%s2996 + $0x58] sm:$0xff]
          %v3009 = vld [vmem:[%s2996 + $0x60] sm:$0x1]
          %v3010 = vld [vmem:[%s2996 + $0x68] sm:$0x1]
          %v3011 = vrot.slane %v2441, 7
          %v3012 = vsel %vm2681, %v3011, 0
          %v3015 = vsel %vm542, %v3009, 0
          %v3018 = vsel %vm542, %v3010, 0
          %3020 = vmatprep.subr.mxu0 %v2998
          %3021 = vmatpush1.msra.mxu0 %v2997
          %3022 = vmatprep.subr.mxu0 %v3000
          %3023 = vmatpush1.msra.mxu0 %v2999
          %3024 = vmatprep.subr.mxu0 %v3002
          %3025 = vmatpush1.msra.mxu0 %v3001
          %3026 = vmatprep.subr.mxu0 %v3004
          %3027 = vmatpush1.msra.mxu0 %v3003
          %3028 = vmatprep.subr.mxu0 %v3006
          %3029 = vmatpush1.msra.mxu0 %v3005
          %3030 = vmatprep.subr.mxu0 %v3008
          %3031 = vmatpush1.msra.mxu0 %v3007
          %3032 = vmatprep.subr.mxu0 %v3018
          %3033 = vmatpush1.msra.mxu0 %v3015
          %3034 = vmatprep.subr.mxu0 0.0
          %3035 = vmatpush1.msra.mxu0 0.0
          %3036 = vmatprep.subr.mxu0 0.0
          %3037 = vmatpush1.msra.mxu0 0.0
          %3038 = vmatprep.subr.mxu0 0.0
          %3039 = vmatpush1.msra.mxu0 0.0
          %3040 = vmatprep.subr.mxu0 0.0
          %3041 = vmatpush1.msra.mxu0 0.0
          %3042 = vmatprep.subr.mxu0 0.0
          %3043 = vmatpush1.msra.mxu0 0.0
          %3044 = vmatprep.subr.mxu0 0.0
          %3045 = vmatpush1.msra.mxu0 0.0
          %3046 = vmatprep.subr.mxu0 0.0
          %3047 = vmatpush1.msra.mxu0 0.0
          %3048 = vmatprep.subr.mxu0 0.0
          %3049 = vmatpush1.msra.mxu0 0.0
          %3050 = vmatprep.subr.mxu0 0.0
          %3051 = vmatpush1.msra.mxu0 0.0
          %3052 = vmatprep.subr.mxu0 0.0
          %3053 = vmatpush1.msra.mxu0 0.0
          %3054 = vmatprep.subr.mxu0 0.0
          %3055 = vmatpush1.msra.mxu0 0.0
          %3056 = vmatprep.subr.mxu0 0.0
          %3057 = vmatpush1.msra.mxu0 0.0
          %3058 = vmatprep.subr.mxu0 0.0
          %3059 = vmatpush1.msra.mxu0 0.0
          %3060 = vmatprep.subr.mxu0 0.0
          %3061 = vmatpush1.msra.mxu0 0.0
          %3062 = vmatprep.subr.mxu0 0.0
          %3063 = vmatpush1.msra.mxu0 0.0
          %3064 = vmatprep.subr.mxu0 0.0
          %3065 = vmatpush1.msra.mxu0 0.0
          %3066 = vmatprep.subr.mxu0 0.0
          %3067 = vmatpush1.msra.mxu0 0.0
          %3068 = vmatprep.subr.mxu0 0.0
          %3069 = vmatpush1.msra.mxu0 0.0
          %3070 = vmatprep.subr.mxu0 0.0
          %3071 = vmatpush1.msra.mxu0 0.0
          %3072 = vmatprep.subr.mxu0 0.0
          %3073 = vmatpush1.msra.mxu0 0.0
          %3074 = vmatprep.subr.mxu0 0.0
          %3075 = vmatpush1.msra.mxu0 0.0
          %3076 = vmatprep.subr.mxu0 0.0
          %3077 = vmatpush1.msra.mxu0 0.0
          %3078 = vmatprep.subr.mxu0 0.0
          %3079 = vmatpush1.msra.mxu0 0.0
          %3080 = vmatprep.subr.mxu0 0.0
          %3081 = vmatpush1.msra.mxu0 0.0
          %3082 = vmatprep.subr.mxu0 0.0
          %3083 = vmatpush1.msra.mxu0 0.0
          %3084 = vmatprep.mubr.f32.mxu0 0.0
          %3085 = vmatmul.mubr.f32.gmra.mrb[0].mxu0 %v3012
          %v3086 = vpop.f32.mrb[0].mxu0
          %v3087 = vadd.f32 0.0, %v3086
          %v3088 = vpop.f32.mrb[0].mxu0
          %v3089 = vadd.f32 0.0, %v3088
          %3090 = vdwg.mxu0
          %s3091 = scalar_lea.vmem [#allocation6], 896
          %v3092 = vld [vmem:[%s3091] sm:$0xff]
          %v3093 = vld [vmem:[%s3091 + $0x8] sm:$0xff]
          %v3094 = vld [vmem:[%s3091 + $0x10] sm:$0xff]
          %v3095 = vld [vmem:[%s3091 + $0x18] sm:$0xff]
          %v3096 = vld [vmem:[%s3091 + $0x20] sm:$0xff]
          %v3097 = vld [vmem:[%s3091 + $0x28] sm:$0xff]
          %v3098 = vld [vmem:[%s3091 + $0x30] sm:$0xff]
          %v3099 = vld [vmem:[%s3091 + $0x38] sm:$0xff]
          %v3100 = vld [vmem:[%s3091 + $0x40] sm:$0xff]
          %v3101 = vld [vmem:[%s3091 + $0x48] sm:$0xff]
          %v3102 = vld [vmem:[%s3091 + $0x50] sm:$0xff]
          %v3103 = vld [vmem:[%s3091 + $0x58] sm:$0xff]
          %v3104 = vld [vmem:[%s3091 + $0x60] sm:$0x1]
          %v3105 = vld [vmem:[%s3091 + $0x68] sm:$0x1]
          %s3106 = scalar_lea.vmem [#allocation6], 1008
          %v3107 = vld [vmem:[%s3106] sm:$0xff]
          %v3108 = vld [vmem:[%s3106 + $0x8] sm:$0xff]
          %v3109 = vld [vmem:[%s3106 + $0x10] sm:$0xff]
          %v3110 = vld [vmem:[%s3106 + $0x18] sm:$0xff]
          %v3111 = vld [vmem:[%s3106 + $0x20] sm:$0xff]
          %v3112 = vld [vmem:[%s3106 + $0x28] sm:$0xff]
          %v3113 = vld [vmem:[%s3106 + $0x30] sm:$0xff]
          %v3114 = vld [vmem:[%s3106 + $0x38] sm:$0xff]
          %v3115 = vld [vmem:[%s3106 + $0x40] sm:$0xff]
          %v3116 = vld [vmem:[%s3106 + $0x48] sm:$0xff]
          %v3117 = vld [vmem:[%s3106 + $0x50] sm:$0xff]
          %v3118 = vld [vmem:[%s3106 + $0x58] sm:$0xff]
          %v3119 = vld [vmem:[%s3106 + $0x60] sm:$0x1]
          %v3120 = vld [vmem:[%s3106 + $0x68] sm:$0x1]
          %v3122 = vrot.slane %v2442, 1
          %v3123 = vsel %vm2681, %v3122, 0
          %v3126 = vsel %vm542, %v3119, 0
          %v3129 = vsel %vm542, %v3120, 0
          %3131 = vmatprep.subr.mxu0 %v3108
          %3132 = vmatpush1.msra.mxu0 %v3107
          %3133 = vmatprep.subr.mxu0 %v3110
          %3134 = vmatpush1.msra.mxu0 %v3109
          %3135 = vmatprep.subr.mxu0 %v3112
          %3136 = vmatpush1.msra.mxu0 %v3111
          %3137 = vmatprep.subr.mxu0 %v3114
          %3138 = vmatpush1.msra.mxu0 %v3113
          %3139 = vmatprep.subr.mxu0 %v3116
          %3140 = vmatpush1.msra.mxu0 %v3115
          %3141 = vmatprep.subr.mxu0 %v3118
          %3142 = vmatpush1.msra.mxu0 %v3117
          %3143 = vmatprep.subr.mxu0 %v3129
          %3144 = vmatpush1.msra.mxu0 %v3126
          %3145 = vmatprep.subr.mxu0 0.0
          %3146 = vmatpush1.msra.mxu0 0.0
          %3147 = vmatprep.subr.mxu0 0.0
          %3148 = vmatpush1.msra.mxu0 0.0
          %3149 = vmatprep.subr.mxu0 0.0
          %3150 = vmatpush1.msra.mxu0 0.0
          %3151 = vmatprep.subr.mxu0 0.0
          %3152 = vmatpush1.msra.mxu0 0.0
          %3153 = vmatprep.subr.mxu0 0.0
          %3154 = vmatpush1.msra.mxu0 0.0
          %3155 = vmatprep.subr.mxu0 0.0
          %3156 = vmatpush1.msra.mxu0 0.0
          %3157 = vmatprep.subr.mxu0 0.0
          %3158 = vmatpush1.msra.mxu0 0.0
          %3159 = vmatprep.subr.mxu0 0.0
          %3160 = vmatpush1.msra.mxu0 0.0
          %3161 = vmatprep.subr.mxu0 0.0
          %3162 = vmatpush1.msra.mxu0 0.0
          %3163 = vmatprep.subr.mxu0 0.0
          %3164 = vmatpush1.msra.mxu0 0.0
          %3165 = vmatprep.subr.mxu0 0.0
          %3166 = vmatpush1.msra.mxu0 0.0
          %3167 = vmatprep.subr.mxu0 0.0
          %3168 = vmatpush1.msra.mxu0 0.0
          %3169 = vmatprep.subr.mxu0 0.0
          %3170 = vmatpush1.msra.mxu0 0.0
          %3171 = vmatprep.subr.mxu0 0.0
          %3172 = vmatpush1.msra.mxu0 0.0
          %3173 = vmatprep.subr.mxu0 0.0
          %3174 = vmatpush1.msra.mxu0 0.0
          %3175 = vmatprep.subr.mxu0 0.0
          %3176 = vmatpush1.msra.mxu0 0.0
          %3177 = vmatprep.subr.mxu0 0.0
          %3178 = vmatpush1.msra.mxu0 0.0
          %3179 = vmatprep.subr.mxu0 0.0
          %3180 = vmatpush1.msra.mxu0 0.0
          %3181 = vmatprep.subr.mxu0 0.0
          %3182 = vmatpush1.msra.mxu0 0.0
          %3183 = vmatprep.subr.mxu0 0.0
          %3184 = vmatpush1.msra.mxu0 0.0
          %3185 = vmatprep.subr.mxu0 0.0
          %3186 = vmatpush1.msra.mxu0 0.0
          %3187 = vmatprep.subr.mxu0 0.0
          %3188 = vmatpush1.msra.mxu0 0.0
          %3189 = vmatprep.subr.mxu0 0.0
          %3190 = vmatpush1.msra.mxu0 0.0
          %3191 = vmatprep.subr.mxu0 0.0
          %3192 = vmatpush1.msra.mxu0 0.0
          %3193 = vmatprep.subr.mxu0 0.0
          %3194 = vmatpush1.msra.mxu0 0.0
          %3195 = vmatprep.mubr.f32.mxu0 0.0
          %3196 = vmatmul.mubr.f32.gmra.mrb[0].mxu0 %v3123
          %v3197 = vpop.f32.mrb[0].mxu0
          %v3198 = vadd.f32 0.0, %v3197
          %v3199 = vpop.f32.mrb[0].mxu0
          %v3200 = vadd.f32 0.0, %v3199
          %3201 = vdwg.mxu0
          %s3202 = scalar_lea.vmem [#allocation6], 1120
          %v3203 = vld [vmem:[%s3202] sm:$0xff]
          %v3204 = vld [vmem:[%s3202 + $0x8] sm:$0xff]
          %v3205 = vld [vmem:[%s3202 + $0x10] sm:$0xff]
          %v3206 = vld [vmem:[%s3202 + $0x18] sm:$0xff]
          %v3207 = vld [vmem:[%s3202 + $0x20] sm:$0xff]
          %v3208 = vld [vmem:[%s3202 + $0x28] sm:$0xff]
          %v3209 = vld [vmem:[%s3202 + $0x30] sm:$0xff]
          %v3210 = vld [vmem:[%s3202 + $0x38] sm:$0xff]
          %v3211 = vld [vmem:[%s3202 + $0x40] sm:$0xff]
          %v3212 = vld [vmem:[%s3202 + $0x48] sm:$0xff]
          %v3213 = vld [vmem:[%s3202 + $0x50] sm:$0xff]
          %v3214 = vld [vmem:[%s3202 + $0x58] sm:$0xff]
          %v3215 = vld [vmem:[%s3202 + $0x60] sm:$0x1]
          %v3216 = vld [vmem:[%s3202 + $0x68] sm:$0x1]
          %s3217 = scalar_lea.vmem [#allocation6], 1232
          %v3218 = vld [vmem:[%s3217] sm:$0xff]
          %v3219 = vld [vmem:[%s3217 + $0x8] sm:$0xff]
          %v3220 = vld [vmem:[%s3217 + $0x10] sm:$0xff]
          %v3221 = vld [vmem:[%s3217 + $0x18] sm:$0xff]
          %v3222 = vld [vmem:[%s3217 + $0x20] sm:$0xff]
          %v3223 = vld [vmem:[%s3217 + $0x28] sm:$0xff]
          %v3224 = vld [vmem:[%s3217 + $0x30] sm:$0xff]
          %v3225 = vld [vmem:[%s3217 + $0x38] sm:$0xff]
          %v3226 = vld [vmem:[%s3217 + $0x40] sm:$0xff]
          %v3227 = vld [vmem:[%s3217 + $0x48] sm:$0xff]
          %v3228 = vld [vmem:[%s3217 + $0x50] sm:$0xff]
          %v3229 = vld [vmem:[%s3217 + $0x58] sm:$0xff]
          %v3230 = vld [vmem:[%s3217 + $0x60] sm:$0x1]
          %v3231 = vld [vmem:[%s3217 + $0x68] sm:$0x1]
          %v3232 = vrot.slane %v2442, 3
          %v3233 = vsel %vm2681, %v3232, 0
          %v3236 = vsel %vm542, %v3230, 0
          %v3239 = vsel %vm542, %v3231, 0
          %3241 = vmatprep.subr.mxu0 %v3219
          %3242 = vmatpush1.msra.mxu0 %v3218
          %3243 = vmatprep.subr.mxu0 %v3221
          %3244 = vmatpush1.msra.mxu0 %v3220
          %3245 = vmatprep.subr.mxu0 %v3223
          %3246 = vmatpush1.msra.mxu0 %v3222
          %3247 = vmatprep.subr.mxu0 %v3225
          %3248 = vmatpush1.msra.mxu0 %v3224
          %3249 = vmatprep.subr.mxu0 %v3227
          %3250 = vmatpush1.msra.mxu0 %v3226
          %3251 = vmatprep.subr.mxu0 %v3229
          %3252 = vmatpush1.msra.mxu0 %v3228
          %3253 = vmatprep.subr.mxu0 %v3239
          %3254 = vmatpush1.msra.mxu0 %v3236
          %3255 = vmatprep.subr.mxu0 0.0
          %3256 = vmatpush1.msra.mxu0 0.0
          %3257 = vmatprep.subr.mxu0 0.0
          %3258 = vmatpush1.msra.mxu0 0.0
          %3259 = vmatprep.subr.mxu0 0.0
          %3260 = vmatpush1.msra.mxu0 0.0
          %3261 = vmatprep.subr.mxu0 0.0
          %3262 = vmatpush1.msra.mxu0 0.0
          %3263 = vmatprep.subr.mxu0 0.0
          %3264 = vmatpush1.msra.mxu0 0.0
          %3265 = vmatprep.subr.mxu0 0.0
          %3266 = vmatpush1.msra.mxu0 0.0
          %3267 = vmatprep.subr.mxu0 0.0
          %3268 = vmatpush1.msra.mxu0 0.0
          %3269 = vmatprep.subr.mxu0 0.0
          %3270 = vmatpush1.msra.mxu0 0.0
          %3271 = vmatprep.subr.mxu0 0.0
          %3272 = vmatpush1.msra.mxu0 0.0
          %3273 = vmatprep.subr.mxu0 0.0
          %3274 = vmatpush1.msra.mxu0 0.0
          %3275 = vmatprep.subr.mxu0 0.0
          %3276 = vmatpush1.msra.mxu0 0.0
          %3277 = vmatprep.subr.mxu0 0.0
          %3278 = vmatpush1.msra.mxu0 0.0
          %3279 = vmatprep.subr.mxu0 0.0
          %3280 = vmatpush1.msra.mxu0 0.0
          %3281 = vmatprep.subr.mxu0 0.0
          %3282 = vmatpush1.msra.mxu0 0.0
          %3283 = vmatprep.subr.mxu0 0.0
          %3284 = vmatpush1.msra.mxu0 0.0
          %3285 = vmatprep.subr.mxu0 0.0
          %3286 = vmatpush1.msra.mxu0 0.0
          %3287 = vmatprep.subr.mxu0 0.0
          %3288 = vmatpush1.msra.mxu0 0.0
          %3289 = vmatprep.subr.mxu0 0.0
          %3290 = vmatpush1.msra.mxu0 0.0
          %3291 = vmatprep.subr.mxu0 0.0
          %3292 = vmatpush1.msra.mxu0 0.0
          %3293 = vmatprep.subr.mxu0 0.0
          %3294 = vmatpush1.msra.mxu0 0.0
          %3295 = vmatprep.subr.mxu0 0.0
          %3296 = vmatpush1.msra.mxu0 0.0
          %3297 = vmatprep.subr.mxu0 0.0
          %3298 = vmatpush1.msra.mxu0 0.0
          %3299 = vmatprep.subr.mxu0 0.0
          %3300 = vmatpush1.msra.mxu0 0.0
          %3301 = vmatprep.subr.mxu0 0.0
          %3302 = vmatpush1.msra.mxu0 0.0
          %3303 = vmatprep.subr.mxu0 0.0
          %3304 = vmatpush1.msra.mxu0 0.0
          %3305 = vmatprep.mubr.f32.mxu0 0.0
          %3306 = vmatmul.mubr.f32.gmra.mrb[0].mxu0 %v3233
          %v3307 = vpop.f32.mrb[0].mxu0
          %v3308 = vadd.f32 0.0, %v3307
          %v3309 = vpop.f32.mrb[0].mxu0
          %v3310 = vadd.f32 0.0, %v3309
          %3311 = vdwg.mxu0
          %s3312 = scalar_lea.vmem [#allocation6], 1344
          %v3313 = vld [vmem:[%s3312] sm:$0xff]
          %v3314 = vld [vmem:[%s3312 + $0x8] sm:$0xff]
          %v3315 = vld [vmem:[%s3312 + $0x10] sm:$0xff]
          %v3316 = vld [vmem:[%s3312 + $0x18] sm:$0xff]
          %v3317 = vld [vmem:[%s3312 + $0x20] sm:$0xff]
          %v3318 = vld [vmem:[%s3312 + $0x28] sm:$0xff]
          %v3319 = vld [vmem:[%s3312 + $0x30] sm:$0xff]
          %v3320 = vld [vmem:[%s3312 + $0x38] sm:$0xff]
          %v3321 = vld [vmem:[%s3312 + $0x40] sm:$0xff]
          %v3322 = vld [vmem:[%s3312 + $0x48] sm:$0xff]
          %v3323 = vld [vmem:[%s3312 + $0x50] sm:$0xff]
          %v3324 = vld [vmem:[%s3312 + $0x58] sm:$0xff]
          %v3325 = vld [vmem:[%s3312 + $0x60] sm:$0x1]
          %v3326 = vld [vmem:[%s3312 + $0x68] sm:$0x1]
          %s3327 = scalar_lea.vmem [#allocation6], 1456
          %v3328 = vld [vmem:[%s3327] sm:$0xff]
          %v3329 = vld [vmem:[%s3327 + $0x8] sm:$0xff]
          %v3330 = vld [vmem:[%s3327 + $0x10] sm:$0xff]
          %v3331 = vld [vmem:[%s3327 + $0x18] sm:$0xff]
          %v3332 = vld [vmem:[%s3327 + $0x20] sm:$0xff]
          %v3333 = vld [vmem:[%s3327 + $0x28] sm:$0xff]
          %v3334 = vld [vmem:[%s3327 + $0x30] sm:$0xff]
          %v3335 = vld [vmem:[%s3327 + $0x38] sm:$0xff]
          %v3336 = vld [vmem:[%s3327 + $0x40] sm:$0xff]
          %v3337 = vld [vmem:[%s3327 + $0x48] sm:$0xff]
          %v3338 = vld [vmem:[%s3327 + $0x50] sm:$0xff]
          %v3339 = vld [vmem:[%s3327 + $0x58] sm:$0xff]
          %v3340 = vld [vmem:[%s3327 + $0x60] sm:$0x1]
          %v3341 = vld [vmem:[%s3327 + $0x68] sm:$0x1]
          %v3342 = vrot.slane %v2442, 5
          %v3343 = vsel %vm2681, %v3342, 0
          %v3346 = vsel %vm542, %v3340, 0
          %v3349 = vsel %vm542, %v3341, 0
          %3351 = vmatprep.subr.mxu0 %v3329
          %3352 = vmatpush1.msra.mxu0 %v3328
          %3353 = vmatprep.subr.mxu0 %v3331
          %3354 = vmatpush1.msra.mxu0 %v3330
          %3355 = vmatprep.subr.mxu0 %v3333
          %3356 = vmatpush1.msra.mxu0 %v3332
          %3357 = vmatprep.subr.mxu0 %v3335
          %3358 = vmatpush1.msra.mxu0 %v3334
          %3359 = vmatprep.subr.mxu0 %v3337
          %3360 = vmatpush1.msra.mxu0 %v3336
          %3361 = vmatprep.subr.mxu0 %v3339
          %3362 = vmatpush1.msra.mxu0 %v3338
          %3363 = vmatprep.subr.mxu0 %v3349
          %3364 = vmatpush1.msra.mxu0 %v3346
          %3365 = vmatprep.subr.mxu0 0.0
          %3366 = vmatpush1.msra.mxu0 0.0
          %3367 = vmatprep.subr.mxu0 0.0
          %3368 = vmatpush1.msra.mxu0 0.0
          %3369 = vmatprep.subr.mxu0 0.0
          %3370 = vmatpush1.msra.mxu0 0.0
          %3371 = vmatprep.subr.mxu0 0.0
          %3372 = vmatpush1.msra.mxu0 0.0
          %3373 = vmatprep.subr.mxu0 0.0
          %3374 = vmatpush1.msra.mxu0 0.0
          %3375 = vmatprep.subr.mxu0 0.0
          %3376 = vmatpush1.msra.mxu0 0.0
          %3377 = vmatprep.subr.mxu0 0.0
          %3378 = vmatpush1.msra.mxu0 0.0
          %3379 = vmatprep.subr.mxu0 0.0
          %3380 = vmatpush1.msra.mxu0 0.0
          %3381 = vmatprep.subr.mxu0 0.0
          %3382 = vmatpush1.msra.mxu0 0.0
          %3383 = vmatprep.subr.mxu0 0.0
          %3384 = vmatpush1.msra.mxu0 0.0
          %3385 = vmatprep.subr.mxu0 0.0
          %3386 = vmatpush1.msra.mxu0 0.0
          %3387 = vmatprep.subr.mxu0 0.0
          %3388 = vmatpush1.msra.mxu0 0.0
          %3389 = vmatprep.subr.mxu0 0.0
          %3390 = vmatpush1.msra.mxu0 0.0
          %3391 = vmatprep.subr.mxu0 0.0
          %3392 = vmatpush1.msra.mxu0 0.0
          %3393 = vmatprep.subr.mxu0 0.0
          %3394 = vmatpush1.msra.mxu0 0.0
          %3395 = vmatprep.subr.mxu0 0.0
          %3396 = vmatpush1.msra.mxu0 0.0
          %3397 = vmatprep.subr.mxu0 0.0
          %3398 = vmatpush1.msra.mxu0 0.0
          %3399 = vmatprep.subr.mxu0 0.0
          %3400 = vmatpush1.msra.mxu0 0.0
          %3401 = vmatprep.subr.mxu0 0.0
          %3402 = vmatpush1.msra.mxu0 0.0
          %3403 = vmatprep.subr.mxu0 0.0
          %3404 = vmatpush1.msra.mxu0 0.0
          %3405 = vmatprep.subr.mxu0 0.0
          %3406 = vmatpush1.msra.mxu0 0.0
          %3407 = vmatprep.subr.mxu0 0.0
          %3408 = vmatpush1.msra.mxu0 0.0
          %3409 = vmatprep.subr.mxu0 0.0
          %3410 = vmatpush1.msra.mxu0 0.0
          %3411 = vmatprep.subr.mxu0 0.0
          %3412 = vmatpush1.msra.mxu0 0.0
          %3413 = vmatprep.subr.mxu0 0.0
          %3414 = vmatpush1.msra.mxu0 0.0
          %3415 = vmatprep.mubr.f32.mxu0 0.0
          %3416 = vmatmul.mubr.f32.gmra.mrb[0].mxu0 %v3343
          %v3417 = vpop.f32.mrb[0].mxu0
          %v3418 = vadd.f32 0.0, %v3417
          %v3419 = vpop.f32.mrb[0].mxu0
          %v3420 = vadd.f32 0.0, %v3419
          %3421 = vdwg.mxu0
          %s3422 = scalar_lea.vmem [#allocation6], 1568
          %v3423 = vld [vmem:[%s3422] sm:$0xff]
          %v3424 = vld [vmem:[%s3422 + $0x8] sm:$0xff]
          %v3425 = vld [vmem:[%s3422 + $0x10] sm:$0xff]
          %v3426 = vld [vmem:[%s3422 + $0x18] sm:$0xff]
          %v3427 = vld [vmem:[%s3422 + $0x20] sm:$0xff]
          %v3428 = vld [vmem:[%s3422 + $0x28] sm:$0xff]
          %v3429 = vld [vmem:[%s3422 + $0x30] sm:$0xff]
          %v3430 = vld [vmem:[%s3422 + $0x38] sm:$0xff]
          %v3431 = vld [vmem:[%s3422 + $0x40] sm:$0xff]
          %v3432 = vld [vmem:[%s3422 + $0x48] sm:$0xff]
          %v3433 = vld [vmem:[%s3422 + $0x50] sm:$0xff]
          %v3434 = vld [vmem:[%s3422 + $0x58] sm:$0xff]
          %v3435 = vld [vmem:[%s3422 + $0x60] sm:$0x1]
          %v3436 = vld [vmem:[%s3422 + $0x68] sm:$0x1]
          %s3437 = scalar_lea.vmem [#allocation6], 1680
          %v3438 = vld [vmem:[%s3437] sm:$0xff]
          %v3439 = vld [vmem:[%s3437 + $0x8] sm:$0xff]
          %v3440 = vld [vmem:[%s3437 + $0x10] sm:$0xff]
          %v3441 = vld [vmem:[%s3437 + $0x18] sm:$0xff]
          %v3442 = vld [vmem:[%s3437 + $0x20] sm:$0xff]
          %v3443 = vld [vmem:[%s3437 + $0x28] sm:$0xff]
          %v3444 = vld [vmem:[%s3437 + $0x30] sm:$0xff]
          %v3445 = vld [vmem:[%s3437 + $0x38] sm:$0xff]
          %v3446 = vld [vmem:[%s3437 + $0x40] sm:$0xff]
          %v3447 = vld [vmem:[%s3437 + $0x48] sm:$0xff]
          %v3448 = vld [vmem:[%s3437 + $0x50] sm:$0xff]
          %v3449 = vld [vmem:[%s3437 + $0x58] sm:$0xff]
          %v3450 = vld [vmem:[%s3437 + $0x60] sm:$0x1]
          %v3451 = vld [vmem:[%s3437 + $0x68] sm:$0x1]
          %v3452 = vrot.slane %v2442, 7
          %v3453 = vsel %vm2681, %v3452, 0
          %v3456 = vsel %vm542, %v3450, 0
          %v3459 = vsel %vm542, %v3451, 0
          %3461 = vmatprep.subr.mxu0 %v3439
          %3462 = vmatpush1.msra.mxu0 %v3438
          %3463 = vmatprep.subr.mxu0 %v3441
          %3464 = vmatpush1.msra.mxu0 %v3440
          %3465 = vmatprep.subr.mxu0 %v3443
          %3466 = vmatpush1.msra.mxu0 %v3442
          %3467 = vmatprep.subr.mxu0 %v3445
          %3468 = vmatpush1.msra.mxu0 %v3444
          %3469 = vmatprep.subr.mxu0 %v3447
          %3470 = vmatpush1.msra.mxu0 %v3446
          %3471 = vmatprep.subr.mxu0 %v3449
          %3472 = vmatpush1.msra.mxu0 %v3448
          %3473 = vmatprep.subr.mxu0 %v3459
          %3474 = vmatpush1.msra.mxu0 %v3456
          %3475 = vmatprep.subr.mxu0 0.0
          %3476 = vmatpush1.msra.mxu0 0.0
          %3477 = vmatprep.subr.mxu0 0.0
          %3478 = vmatpush1.msra.mxu0 0.0
          %3479 = vmatprep.subr.mxu0 0.0
          %3480 = vmatpush1.msra.mxu0 0.0
          %3481 = vmatprep.subr.mxu0 0.0
          %3482 = vmatpush1.msra.mxu0 0.0
          %3483 = vmatprep.subr.mxu0 0.0
          %3484 = vmatpush1.msra.mxu0 0.0
          %3485 = vmatprep.subr.mxu0 0.0
          %3486 = vmatpush1.msra.mxu0 0.0
          %3487 = vmatprep.subr.mxu0 0.0
          %3488 = vmatpush1.msra.mxu0 0.0
          %3489 = vmatprep.subr.mxu0 0.0
          %3490 = vmatpush1.msra.mxu0 0.0
          %3491 = vmatprep.subr.mxu0 0.0
          %3492 = vmatpush1.msra.mxu0 0.0
          %3493 = vmatprep.subr.mxu0 0.0
          %3494 = vmatpush1.msra.mxu0 0.0
          %3495 = vmatprep.subr.mxu0 0.0
          %3496 = vmatpush1.msra.mxu0 0.0
          %3497 = vmatprep.subr.mxu0 0.0
          %3498 = vmatpush1.msra.mxu0 0.0
          %3499 = vmatprep.subr.mxu0 0.0
          %3500 = vmatpush1.msra.mxu0 0.0
          %3501 = vmatprep.subr.mxu0 0.0
          %3502 = vmatpush1.msra.mxu0 0.0
          %3503 = vmatprep.subr.mxu0 0.0
          %3504 = vmatpush1.msra.mxu0 0.0
          %3505 = vmatprep.subr.mxu0 0.0
          %3506 = vmatpush1.msra.mxu0 0.0
          %3507 = vmatprep.subr.mxu0 0.0
          %3508 = vmatpush1.msra.mxu0 0.0
          %3509 = vmatprep.subr.mxu0 0.0
          %3510 = vmatpush1.msra.mxu0 0.0
          %3511 = vmatprep.subr.mxu0 0.0
          %3512 = vmatpush1.msra.mxu0 0.0
          %3513 = vmatprep.subr.mxu0 0.0
          %3514 = vmatpush1.msra.mxu0 0.0
          %3515 = vmatprep.subr.mxu0 0.0
          %3516 = vmatpush1.msra.mxu0 0.0
          %3517 = vmatprep.subr.mxu0 0.0
          %3518 = vmatpush1.msra.mxu0 0.0
          %3519 = vmatprep.subr.mxu0 0.0
          %3520 = vmatpush1.msra.mxu0 0.0
          %3521 = vmatprep.subr.mxu0 0.0
          %3522 = vmatpush1.msra.mxu0 0.0
          %3523 = vmatprep.subr.mxu0 0.0
          %3524 = vmatpush1.msra.mxu0 0.0
          %3525 = vmatprep.mubr.f32.mxu0 0.0
          %3526 = vmatmul.mubr.f32.gmra.mrb[0].mxu0 %v3453
          %v3527 = vpop.f32.mrb[0].mxu0
          %v3528 = vadd.f32 0.0, %v3527
          %v3529 = vpop.f32.mrb[0].mxu0
          %v3530 = vadd.f32 0.0, %v3529
          %3531 = vdwg.mxu0
          %s3532 = scalar_lea.vmem [#allocation6], 1792
          %v3533 = vld [vmem:[%s3532] sm:$0xff]
          %v3534 = vld [vmem:[%s3532 + $0x8] sm:$0xff]
          %v3535 = vld [vmem:[%s3532 + $0x10] sm:$0xff]
          %v3536 = vld [vmem:[%s3532 + $0x18] sm:$0xff]
          %v3537 = vld [vmem:[%s3532 + $0x20] sm:$0xff]
          %v3538 = vld [vmem:[%s3532 + $0x28] sm:$0xff]
          %v3539 = vld [vmem:[%s3532 + $0x30] sm:$0xff]
          %v3540 = vld [vmem:[%s3532 + $0x38] sm:$0xff]
          %v3541 = vld [vmem:[%s3532 + $0x40] sm:$0xff]
          %v3542 = vld [vmem:[%s3532 + $0x48] sm:$0xff]
          %v3543 = vld [vmem:[%s3532 + $0x50] sm:$0xff]
          %v3544 = vld [vmem:[%s3532 + $0x58] sm:$0xff]
          %v3545 = vld [vmem:[%s3532 + $0x60] sm:$0x1]
          %v3546 = vld [vmem:[%s3532 + $0x68] sm:$0x1]
          %s3547 = scalar_lea.vmem [#allocation6], 1904
          %v3548 = vld [vmem:[%s3547] sm:$0xff]
          %v3549 = vld [vmem:[%s3547 + $0x8] sm:$0xff]
          %v3550 = vld [vmem:[%s3547 + $0x10] sm:$0xff]
          %v3551 = vld [vmem:[%s3547 + $0x18] sm:$0xff]
          %v3552 = vld [vmem:[%s3547 + $0x20] sm:$0xff]
          %v3553 = vld [vmem:[%s3547 + $0x28] sm:$0xff]
          %v3554 = vld [vmem:[%s3547 + $0x30] sm:$0xff]
          %v3555 = vld [vmem:[%s3547 + $0x38] sm:$0xff]
          %v3556 = vld [vmem:[%s3547 + $0x40] sm:$0xff]
          %v3557 = vld [vmem:[%s3547 + $0x48] sm:$0xff]
          %v3558 = vld [vmem:[%s3547 + $0x50] sm:$0xff]
          %v3559 = vld [vmem:[%s3547 + $0x58] sm:$0xff]
          %v3560 = vld [vmem:[%s3547 + $0x60] sm:$0x1]
          %v3561 = vld [vmem:[%s3547 + $0x68] sm:$0x1]
          %v3563 = vrot.slane %v2642, 1
          %v3564 = vsel %vm2681, %v3563, 0
          %v3567 = vsel %vm542, %v3560, 0
          %v3570 = vsel %vm542, %v3561, 0
          %3572 = vmatprep.subr.mxu0 %v3549
          %3573 = vmatpush1.msra.mxu0 %v3548
          %3574 = vmatprep.subr.mxu0 %v3551
          %3575 = vmatpush1.msra.mxu0 %v3550
          %3576 = vmatprep.subr.mxu0 %v3553
          %3577 = vmatpush1.msra.mxu0 %v3552
          %3578 = vmatprep.subr.mxu0 %v3555
          %3579 = vmatpush1.msra.mxu0 %v3554
          %3580 = vmatprep.subr.mxu0 %v3557
          %3581 = vmatpush1.msra.mxu0 %v3556
          %3582 = vmatprep.subr.mxu0 %v3559
          %3583 = vmatpush1.msra.mxu0 %v3558
          %3584 = vmatprep.subr.mxu0 %v3570
          %3585 = vmatpush1.msra.mxu0 %v3567
          %3586 = vmatprep.subr.mxu0 0.0
          %3587 = vmatpush1.msra.mxu0 0.0
          %3588 = vmatprep.subr.mxu0 0.0
          %3589 = vmatpush1.msra.mxu0 0.0
          %3590 = vmatprep.subr.mxu0 0.0
          %3591 = vmatpush1.msra.mxu0 0.0
          %3592 = vmatprep.subr.mxu0 0.0
          %3593 = vmatpush1.msra.mxu0 0.0
          %3594 = vmatprep.subr.mxu0 0.0
          %3595 = vmatpush1.msra.mxu0 0.0
          %3596 = vmatprep.subr.mxu0 0.0
          %3597 = vmatpush1.msra.mxu0 0.0
          %3598 = vmatprep.subr.mxu0 0.0
          %3599 = vmatpush1.msra.mxu0 0.0
          %3600 = vmatprep.subr.mxu0 0.0
          %3601 = vmatpush1.msra.mxu0 0.0
          %3602 = vmatprep.subr.mxu0 0.0
          %3603 = vmatpush1.msra.mxu0 0.0
          %3604 = vmatprep.subr.mxu0 0.0
          %3605 = vmatpush1.msra.mxu0 0.0
          %3606 = vmatprep.subr.mxu0 0.0
          %3607 = vmatpush1.msra.mxu0 0.0
          %3608 = vmatprep.subr.mxu0 0.0
          %3609 = vmatpush1.msra.mxu0 0.0
          %3610 = vmatprep.subr.mxu0 0.0
          %3611 = vmatpush1.msra.mxu0 0.0
          %3612 = vmatprep.subr.mxu0 0.0
          %3613 = vmatpush1.msra.mxu0 0.0
          %3614 = vmatprep.subr.mxu0 0.0
          %3615 = vmatpush1.msra.mxu0 0.0
          %3616 = vmatprep.subr.mxu0 0.0
          %3617 = vmatpush1.msra.mxu0 0.0
          %3618 = vmatprep.subr.mxu0 0.0
          %3619 = vmatpush1.msra.mxu0 0.0
          %3620 = vmatprep.subr.mxu0 0.0
          %3621 = vmatpush1.msra.mxu0 0.0
          %3622 = vmatprep.subr.mxu0 0.0
          %3623 = vmatpush1.msra.mxu0 0.0
          %3624 = vmatprep.subr.mxu0 0.0
          %3625 = vmatpush1.msra.mxu0 0.0
          %3626 = vmatprep.subr.mxu0 0.0
          %3627 = vmatpush1.msra.mxu0 0.0
          %3628 = vmatprep.subr.mxu0 0.0
          %3629 = vmatpush1.msra.mxu0 0.0
          %3630 = vmatprep.subr.mxu0 0.0
          %3631 = vmatpush1.msra.mxu0 0.0
          %3632 = vmatprep.subr.mxu0 0.0
          %3633 = vmatpush1.msra.mxu0 0.0
          %3634 = vmatprep.subr.mxu0 0.0
          %3635 = vmatpush1.msra.mxu0 0.0
          %3636 = vmatprep.mubr.f32.mxu0 0.0
          %3637 = vmatmul.mubr.f32.gmra.mrb[0].mxu0 %v3564
          %v3638 = vpop.f32.mrb[0].mxu0
          %v3639 = vadd.f32 0.0, %v3638
          %v3640 = vpop.f32.mrb[0].mxu0
          %v3641 = vadd.f32 0.0, %v3640
          %3642 = vdwg.mxu0
          %s3643 = scalar_lea.vmem [#allocation6], 2016
          %v3644 = vld [vmem:[%s3643] sm:$0xff]
          %v3645 = vld [vmem:[%s3643 + $0x8] sm:$0xff]
          %v3646 = vld [vmem:[%s3643 + $0x10] sm:$0xff]
          %v3647 = vld [vmem:[%s3643 + $0x18] sm:$0xff]
          %v3648 = vld [vmem:[%s3643 + $0x20] sm:$0xff]
          %v3649 = vld [vmem:[%s3643 + $0x28] sm:$0xff]
          %v3650 = vld [vmem:[%s3643 + $0x30] sm:$0xff]
          %v3651 = vld [vmem:[%s3643 + $0x38] sm:$0xff]
          %v3652 = vld [vmem:[%s3643 + $0x40] sm:$0xff]
          %v3653 = vld [vmem:[%s3643 + $0x48] sm:$0xff]
          %v3654 = vld [vmem:[%s3643 + $0x50] sm:$0xff]
          %v3655 = vld [vmem:[%s3643 + $0x58] sm:$0xff]
          %v3656 = vld [vmem:[%s3643 + $0x60] sm:$0x1]
          %v3657 = vld [vmem:[%s3643 + $0x68] sm:$0x1]
          %s3658 = scalar_lea.vmem [#allocation6], 2128
          %v3659 = vld [vmem:[%s3658] sm:$0xff]
          %v3660 = vld [vmem:[%s3658 + $0x8] sm:$0xff]
          %v3661 = vld [vmem:[%s3658 + $0x10] sm:$0xff]
          %v3662 = vld [vmem:[%s3658 + $0x18] sm:$0xff]
          %v3663 = vld [vmem:[%s3658 + $0x20] sm:$0xff]
          %v3664 = vld [vmem:[%s3658 + $0x28] sm:$0xff]
          %v3665 = vld [vmem:[%s3658 + $0x30] sm:$0xff]
          %v3666 = vld [vmem:[%s3658 + $0x38] sm:$0xff]
          %v3667 = vld [vmem:[%s3658 + $0x40] sm:$0xff]
          %v3668 = vld [vmem:[%s3658 + $0x48] sm:$0xff]
          %v3669 = vld [vmem:[%s3658 + $0x50] sm:$0xff]
          %v3670 = vld [vmem:[%s3658 + $0x58] sm:$0xff]
          %v3671 = vld [vmem:[%s3658 + $0x60] sm:$0x1]
          %v3672 = vld [vmem:[%s3658 + $0x68] sm:$0x1]
          %v3673 = vrot.slane %v2642, 3
          %v3674 = vsel %vm2681, %v3673, 0
          %v3677 = vsel %vm542, %v3671, 0
          %v3680 = vsel %vm542, %v3672, 0
          %3682 = vmatprep.subr.mxu0 %v3660
          %3683 = vmatpush1.msra.mxu0 %v3659
          %3684 = vmatprep.subr.mxu0 %v3662
          %3685 = vmatpush1.msra.mxu0 %v3661
          %3686 = vmatprep.subr.mxu0 %v3664
          %3687 = vmatpush1.msra.mxu0 %v3663
          %3688 = vmatprep.subr.mxu0 %v3666
          %3689 = vmatpush1.msra.mxu0 %v3665
          %3690 = vmatprep.subr.mxu0 %v3668
          %3691 = vmatpush1.msra.mxu0 %v3667
          %3692 = vmatprep.subr.mxu0 %v3670
          %3693 = vmatpush1.msra.mxu0 %v3669
          %3694 = vmatprep.subr.mxu0 %v3680
          %3695 = vmatpush1.msra.mxu0 %v3677
          %3696 = vmatprep.subr.mxu0 0.0
          %3697 = vmatpush1.msra.mxu0 0.0
          %3698 = vmatprep.subr.mxu0 0.0
          %3699 = vmatpush1.msra.mxu0 0.0
          %3700 = vmatprep.subr.mxu0 0.0
          %3701 = vmatpush1.msra.mxu0 0.0
          %3702 = vmatprep.subr.mxu0 0.0
          %3703 = vmatpush1.msra.mxu0 0.0
          %3704 = vmatprep.subr.mxu0 0.0
          %3705 = vmatpush1.msra.mxu0 0.0
          %3706 = vmatprep.subr.mxu0 0.0
          %3707 = vmatpush1.msra.mxu0 0.0
          %3708 = vmatprep.subr.mxu0 0.0
          %3709 = vmatpush1.msra.mxu0 0.0
          %3710 = vmatprep.subr.mxu0 0.0
          %3711 = vmatpush1.msra.mxu0 0.0
          %3712 = vmatprep.subr.mxu0 0.0
          %3713 = vmatpush1.msra.mxu0 0.0
          %3714 = vmatprep.subr.mxu0 0.0
          %3715 = vmatpush1.msra.mxu0 0.0
          %3716 = vmatprep.subr.mxu0 0.0
          %3717 = vmatpush1.msra.mxu0 0.0
          %3718 = vmatprep.subr.mxu0 0.0
          %3719 = vmatpush1.msra.mxu0 0.0
          %3720 = vmatprep.subr.mxu0 0.0
          %3721 = vmatpush1.msra.mxu0 0.0
          %3722 = vmatprep.subr.mxu0 0.0
          %3723 = vmatpush1.msra.mxu0 0.0
          %3724 = vmatprep.subr.mxu0 0.0
          %3725 = vmatpush1.msra.mxu0 0.0
          %3726 = vmatprep.subr.mxu0 0.0
          %3727 = vmatpush1.msra.mxu0 0.0
          %3728 = vmatprep.subr.mxu0 0.0
          %3729 = vmatpush1.msra.mxu0 0.0
          %3730 = vmatprep.subr.mxu0 0.0
          %3731 = vmatpush1.msra.mxu0 0.0
          %3732 = vmatprep.subr.mxu0 0.0
          %3733 = vmatpush1.msra.mxu0 0.0
          %3734 = vmatprep.subr.mxu0 0.0
          %3735 = vmatpush1.msra.mxu0 0.0
          %3736 = vmatprep.subr.mxu0 0.0
          %3737 = vmatpush1.msra.mxu0 0.0
          %3738 = vmatprep.subr.mxu0 0.0
          %3739 = vmatpush1.msra.mxu0 0.0
          %3740 = vmatprep.subr.mxu0 0.0
          %3741 = vmatpush1.msra.mxu0 0.0
          %3742 = vmatprep.subr.mxu0 0.0
          %3743 = vmatpush1.msra.mxu0 0.0
          %3744 = vmatprep.subr.mxu0 0.0
          %3745 = vmatpush1.msra.mxu0 0.0
          %3746 = vmatprep.mubr.f32.mxu0 0.0
          %3747 = vmatmul.mubr.f32.gmra.mrb[0].mxu0 %v3674
          %v3748 = vpop.f32.mrb[0].mxu0
          %v3749 = vadd.f32 0.0, %v3748
          %v3750 = vpop.f32.mrb[0].mxu0
          %v3751 = vadd.f32 0.0, %v3750
          %3752 = vdwg.mxu0
          %s3753 = scalar_lea.vmem [#allocation6], 2240
          %v3754 = vld [vmem:[%s3753] sm:$0xff]
          %v3755 = vld [vmem:[%s3753 + $0x8] sm:$0xff]
          %v3756 = vld [vmem:[%s3753 + $0x10] sm:$0xff]
          %v3757 = vld [vmem:[%s3753 + $0x18] sm:$0xff]
          %v3758 = vld [vmem:[%s3753 + $0x20] sm:$0xff]
          %v3759 = vld [vmem:[%s3753 + $0x28] sm:$0xff]
          %v3760 = vld [vmem:[%s3753 + $0x30] sm:$0xff]
          %v3761 = vld [vmem:[%s3753 + $0x38] sm:$0xff]
          %v3762 = vld [vmem:[%s3753 + $0x40] sm:$0xff]
          %v3763 = vld [vmem:[%s3753 + $0x48] sm:$0xff]
          %v3764 = vld [vmem:[%s3753 + $0x50] sm:$0xff]
          %v3765 = vld [vmem:[%s3753 + $0x58] sm:$0xff]
          %v3766 = vld [vmem:[%s3753 + $0x60] sm:$0x1]
          %v3767 = vld [vmem:[%s3753 + $0x68] sm:$0x1]
          %s3768 = scalar_lea.vmem [#allocation6], 2352
          %v3769 = vld [vmem:[%s3768] sm:$0xff]
          %v3770 = vld [vmem:[%s3768 + $0x8] sm:$0xff]
          %v3771 = vld [vmem:[%s3768 + $0x10] sm:$0xff]
          %v3772 = vld [vmem:[%s3768 + $0x18] sm:$0xff]
          %v3773 = vld [vmem:[%s3768 + $0x20] sm:$0xff]
          %v3774 = vld [vmem:[%s3768 + $0x28] sm:$0xff]
          %v3775 = vld [vmem:[%s3768 + $0x30] sm:$0xff]
          %v3776 = vld [vmem:[%s3768 + $0x38] sm:$0xff]
          %v3777 = vld [vmem:[%s3768 + $0x40] sm:$0xff]
          %v3778 = vld [vmem:[%s3768 + $0x48] sm:$0xff]
          %v3779 = vld [vmem:[%s3768 + $0x50] sm:$0xff]
          %v3780 = vld [vmem:[%s3768 + $0x58] sm:$0xff]
          %v3781 = vld [vmem:[%s3768 + $0x60] sm:$0x1]
          %v3782 = vld [vmem:[%s3768 + $0x68] sm:$0x1]
          %v3783 = vrot.slane %v2642, 5
          %v3784 = vsel %vm2681, %v3783, 0
          %v3787 = vsel %vm542, %v3781, 0
          %v3790 = vsel %vm542, %v3782, 0
          %3792 = vmatprep.subr.mxu0 %v3770
          %3793 = vmatpush1.msra.mxu0 %v3769
          %3794 = vmatprep.subr.mxu0 %v3772
          %3795 = vmatpush1.msra.mxu0 %v3771
          %3796 = vmatprep.subr.mxu0 %v3774
          %3797 = vmatpush1.msra.mxu0 %v3773
          %3798 = vmatprep.subr.mxu0 %v3776
          %3799 = vmatpush1.msra.mxu0 %v3775
          %3800 = vmatprep.subr.mxu0 %v3778
          %3801 = vmatpush1.msra.mxu0 %v3777
          %3802 = vmatprep.subr.mxu0 %v3780
          %3803 = vmatpush1.msra.mxu0 %v3779
          %3804 = vmatprep.subr.mxu0 %v3790
          %3805 = vmatpush1.msra.mxu0 %v3787
          %3806 = vmatprep.subr.mxu0 0.0
          %3807 = vmatpush1.msra.mxu0 0.0
          %3808 = vmatprep.subr.mxu0 0.0
          %3809 = vmatpush1.msra.mxu0 0.0
          %3810 = vmatprep.subr.mxu0 0.0
          %3811 = vmatpush1.msra.mxu0 0.0
          %3812 = vmatprep.subr.mxu0 0.0
          %3813 = vmatpush1.msra.mxu0 0.0
          %3814 = vmatprep.subr.mxu0 0.0
          %3815 = vmatpush1.msra.mxu0 0.0
          %3816 = vmatprep.subr.mxu0 0.0
          %3817 = vmatpush1.msra.mxu0 0.0
          %3818 = vmatprep.subr.mxu0 0.0
          %3819 = vmatpush1.msra.mxu0 0.0
          %3820 = vmatprep.subr.mxu0 0.0
          %3821 = vmatpush1.msra.mxu0 0.0
          %3822 = vmatprep.subr.mxu0 0.0
          %3823 = vmatpush1.msra.mxu0 0.0
          %3824 = vmatprep.subr.mxu0 0.0
          %3825 = vmatpush1.msra.mxu0 0.0
          %3826 = vmatprep.subr.mxu0 0.0
          %3827 = vmatpush1.msra.mxu0 0.0
          %3828 = vmatprep.subr.mxu0 0.0
          %3829 = vmatpush1.msra.mxu0 0.0
          %3830 = vmatprep.subr.mxu0 0.0
          %3831 = vmatpush1.msra.mxu0 0.0
          %3832 = vmatprep.subr.mxu0 0.0
          %3833 = vmatpush1.msra.mxu0 0.0
          %3834 = vmatprep.subr.mxu0 0.0
          %3835 = vmatpush1.msra.mxu0 0.0
          %3836 = vmatprep.subr.mxu0 0.0
          %3837 = vmatpush1.msra.mxu0 0.0
          %3838 = vmatprep.subr.mxu0 0.0
          %3839 = vmatpush1.msra.mxu0 0.0
          %3840 = vmatprep.subr.mxu0 0.0
          %3841 = vmatpush1.msra.mxu0 0.0
          %3842 = vmatprep.subr.mxu0 0.0
          %3843 = vmatpush1.msra.mxu0 0.0
          %3844 = vmatprep.subr.mxu0 0.0
          %3845 = vmatpush1.msra.mxu0 0.0
          %3846 = vmatprep.subr.mxu0 0.0
          %3847 = vmatpush1.msra.mxu0 0.0
          %3848 = vmatprep.subr.mxu0 0.0
          %3849 = vmatpush1.msra.mxu0 0.0
          %3850 = vmatprep.subr.mxu0 0.0
          %3851 = vmatpush1.msra.mxu0 0.0
          %3852 = vmatprep.subr.mxu0 0.0
          %3853 = vmatpush1.msra.mxu0 0.0
          %3854 = vmatprep.subr.mxu0 0.0
          %3855 = vmatpush1.msra.mxu0 0.0
          %3856 = vmatprep.mubr.f32.mxu0 0.0
          %3857 = vmatmul.mubr.f32.gmra.mrb[0].mxu0 %v3784
          %v3858 = vpop.f32.mrb[0].mxu0
          %v3859 = vadd.f32 0.0, %v3858
          %v3860 = vpop.f32.mrb[0].mxu0
          %v3861 = vadd.f32 0.0, %v3860
          %3862 = vdwg.mxu0
          %s3863 = scalar_lea.vmem [#allocation6], 2464
          %v3864 = vld [vmem:[%s3863] sm:$0xff]
          %v3865 = vld [vmem:[%s3863 + $0x8] sm:$0xff]
          %v3866 = vld [vmem:[%s3863 + $0x10] sm:$0xff]
          %v3867 = vld [vmem:[%s3863 + $0x18] sm:$0xff]
          %v3868 = vld [vmem:[%s3863 + $0x20] sm:$0xff]
          %v3869 = vld [vmem:[%s3863 + $0x28] sm:$0xff]
          %v3870 = vld [vmem:[%s3863 + $0x30] sm:$0xff]
          %v3871 = vld [vmem:[%s3863 + $0x38] sm:$0xff]
          %v3872 = vld [vmem:[%s3863 + $0x40] sm:$0xff]
          %v3873 = vld [vmem:[%s3863 + $0x48] sm:$0xff]
          %v3874 = vld [vmem:[%s3863 + $0x50] sm:$0xff]
          %v3875 = vld [vmem:[%s3863 + $0x58] sm:$0xff]
          %v3876 = vld [vmem:[%s3863 + $0x60] sm:$0x1]
          %v3877 = vld [vmem:[%s3863 + $0x68] sm:$0x1]
          %s3878 = scalar_lea.vmem [#allocation6], 2576
          %v3879 = vld [vmem:[%s3878] sm:$0xff]
          %v3880 = vld [vmem:[%s3878 + $0x8] sm:$0xff]
          %v3881 = vld [vmem:[%s3878 + $0x10] sm:$0xff]
          %v3882 = vld [vmem:[%s3878 + $0x18] sm:$0xff]
          %v3883 = vld [vmem:[%s3878 + $0x20] sm:$0xff]
          %v3884 = vld [vmem:[%s3878 + $0x28] sm:$0xff]
          %v3885 = vld [vmem:[%s3878 + $0x30] sm:$0xff]
          %v3886 = vld [vmem:[%s3878 + $0x38] sm:$0xff]
          %v3887 = vld [vmem:[%s3878 + $0x40] sm:$0xff]
          %v3888 = vld [vmem:[%s3878 + $0x48] sm:$0xff]
          %v3889 = vld [vmem:[%s3878 + $0x50] sm:$0xff]
          %v3890 = vld [vmem:[%s3878 + $0x58] sm:$0xff]
          %v3891 = vld [vmem:[%s3878 + $0x60] sm:$0x1]
          %v3892 = vld [vmem:[%s3878 + $0x68] sm:$0x1]
          %v3893 = vrot.slane %v2642, 7
          %v3894 = vsel %vm2681, %v3893, 0
          %v3897 = vsel %vm542, %v3891, 0
          %v3900 = vsel %vm542, %v3892, 0
          %3902 = vmatprep.subr.mxu0 %v3880
          %3903 = vmatpush1.msra.mxu0 %v3879
          %3904 = vmatprep.subr.mxu0 %v3882
          %3905 = vmatpush1.msra.mxu0 %v3881
          %3906 = vmatprep.subr.mxu0 %v3884
          %3907 = vmatpush1.msra.mxu0 %v3883
          %3908 = vmatprep.subr.mxu0 %v3886
          %3909 = vmatpush1.msra.mxu0 %v3885
          %3910 = vmatprep.subr.mxu0 %v3888
          %3911 = vmatpush1.msra.mxu0 %v3887
          %3912 = vmatprep.subr.mxu0 %v3890
          %3913 = vmatpush1.msra.mxu0 %v3889
          %3914 = vmatprep.subr.mxu0 %v3900
          %3915 = vmatpush1.msra.mxu0 %v3897
          %3916 = vmatprep.subr.mxu0 0.0
          %3917 = vmatpush1.msra.mxu0 0.0
          %3918 = vmatprep.subr.mxu0 0.0
          %3919 = vmatpush1.msra.mxu0 0.0
          %3920 = vmatprep.subr.mxu0 0.0
          %3921 = vmatpush1.msra.mxu0 0.0
          %3922 = vmatprep.subr.mxu0 0.0
          %3923 = vmatpush1.msra.mxu0 0.0
          %3924 = vmatprep.subr.mxu0 0.0
          %3925 = vmatpush1.msra.mxu0 0.0
          %3926 = vmatprep.subr.mxu0 0.0
          %3927 = vmatpush1.msra.mxu0 0.0
          %3928 = vmatprep.subr.mxu0 0.0
          %3929 = vmatpush1.msra.mxu0 0.0
          %3930 = vmatprep.subr.mxu0 0.0
          %3931 = vmatpush1.msra.mxu0 0.0
          %3932 = vmatprep.subr.mxu0 0.0
          %3933 = vmatpush1.msra.mxu0 0.0
          %3934 = vmatprep.subr.mxu0 0.0
          %3935 = vmatpush1.msra.mxu0 0.0
          %3936 = vmatprep.subr.mxu0 0.0
          %3937 = vmatpush1.msra.mxu0 0.0
          %3938 = vmatprep.subr.mxu0 0.0
          %3939 = vmatpush1.msra.mxu0 0.0
          %3940 = vmatprep.subr.mxu0 0.0
          %3941 = vmatpush1.msra.mxu0 0.0
          %3942 = vmatprep.subr.mxu0 0.0
          %3943 = vmatpush1.msra.mxu0 0.0
          %3944 = vmatprep.subr.mxu0 0.0
          %3945 = vmatpush1.msra.mxu0 0.0
          %3946 = vmatprep.subr.mxu0 0.0
          %3947 = vmatpush1.msra.mxu0 0.0
          %3948 = vmatprep.subr.mxu0 0.0
          %3949 = vmatpush1.msra.mxu0 0.0
          %3950 = vmatprep.subr.mxu0 0.0
          %3951 = vmatpush1.msra.mxu0 0.0
          %3952 = vmatprep.subr.mxu0 0.0
          %3953 = vmatpush1.msra.mxu0 0.0
          %3954 = vmatprep.subr.mxu0 0.0
          %3955 = vmatpush1.msra.mxu0 0.0
          %3956 = vmatprep.subr.mxu0 0.0
          %3957 = vmatpush1.msra.mxu0 0.0
          %3958 = vmatprep.subr.mxu0 0.0
          %3959 = vmatpush1.msra.mxu0 0.0
          %3960 = vmatprep.subr.mxu0 0.0
          %3961 = vmatpush1.msra.mxu0 0.0
          %3962 = vmatprep.subr.mxu0 0.0
          %3963 = vmatpush1.msra.mxu0 0.0
          %3964 = vmatprep.subr.mxu0 0.0
          %3965 = vmatpush1.msra.mxu0 0.0
          %3966 = vmatprep.mubr.f32.mxu0 0.0
          %3967 = vmatmul.mubr.f32.gmra.mrb[0].mxu0 %v3894
          %v3968 = vpop.f32.mrb[0].mxu0
          %v3969 = vadd.f32 0.0, %v3968
          %v3970 = vpop.f32.mrb[0].mxu0
          %v3971 = vadd.f32 0.0, %v3970
          %3972 = vdwg.mxu0
          %s3973 = scalar_lea.vmem [#allocation6], 2688
          %v3974 = vld [vmem:[%s3973] sm:$0xff]
          %v3975 = vld [vmem:[%s3973 + $0x8] sm:$0xff]
          %v3976 = vld [vmem:[%s3973 + $0x10] sm:$0xff]
          %v3977 = vld [vmem:[%s3973 + $0x18] sm:$0xff]
          %v3978 = vld [vmem:[%s3973 + $0x20] sm:$0xff]
          %v3979 = vld [vmem:[%s3973 + $0x28] sm:$0xff]
          %v3980 = vld [vmem:[%s3973 + $0x30] sm:$0xff]
          %v3981 = vld [vmem:[%s3973 + $0x38] sm:$0xff]
          %v3982 = vld [vmem:[%s3973 + $0x40] sm:$0xff]
          %v3983 = vld [vmem:[%s3973 + $0x48] sm:$0xff]
          %v3984 = vld [vmem:[%s3973 + $0x50] sm:$0xff]
          %v3985 = vld [vmem:[%s3973 + $0x58] sm:$0xff]
          %v3986 = vld [vmem:[%s3973 + $0x60] sm:$0x1]
          %v3987 = vld [vmem:[%s3973 + $0x68] sm:$0x1]
          %s3988 = scalar_lea.vmem [#allocation6], 2800
          %v3989 = vld [vmem:[%s3988] sm:$0xff]
          %v3990 = vld [vmem:[%s3988 + $0x8] sm:$0xff]
          %v3991 = vld [vmem:[%s3988 + $0x10] sm:$0xff]
          %v3992 = vld [vmem:[%s3988 + $0x18] sm:$0xff]
          %v3993 = vld [vmem:[%s3988 + $0x20] sm:$0xff]
          %v3994 = vld [vmem:[%s3988 + $0x28] sm:$0xff]
          %v3995 = vld [vmem:[%s3988 + $0x30] sm:$0xff]
          %v3996 = vld [vmem:[%s3988 + $0x38] sm:$0xff]
          %v3997 = vld [vmem:[%s3988 + $0x40] sm:$0xff]
          %v3998 = vld [vmem:[%s3988 + $0x48] sm:$0xff]
          %v3999 = vld [vmem:[%s3988 + $0x50] sm:$0xff]
          %v4000 = vld [vmem:[%s3988 + $0x58] sm:$0xff]
          %v4001 = vld [vmem:[%s3988 + $0x60] sm:$0x1]
          %v4002 = vld [vmem:[%s3988 + $0x68] sm:$0x1]
          %v4004 = vrot.slane %v2647, 1
          %v4005 = vsel %vm2681, %v4004, 0
          %v4008 = vsel %vm542, %v4001, 0
          %v4011 = vsel %vm542, %v4002, 0
          %4013 = vmatprep.subr.mxu0 %v3990
          %4014 = vmatpush1.msra.mxu0 %v3989
          %4015 = vmatprep.subr.mxu0 %v3992
          %4016 = vmatpush1.msra.mxu0 %v3991
          %4017 = vmatprep.subr.mxu0 %v3994
          %4018 = vmatpush1.msra.mxu0 %v3993
          %4019 = vmatprep.subr.mxu0 %v3996
          %4020 = vmatpush1.msra.mxu0 %v3995
          %4021 = vmatprep.subr.mxu0 %v3998
          %4022 = vmatpush1.msra.mxu0 %v3997
          %4023 = vmatprep.subr.mxu0 %v4000
          %4024 = vmatpush1.msra.mxu0 %v3999
          %4025 = vmatprep.subr.mxu0 %v4011
          %4026 = vmatpush1.msra.mxu0 %v4008
          %4027 = vmatprep.subr.mxu0 0.0
          %4028 = vmatpush1.msra.mxu0 0.0
          %4029 = vmatprep.subr.mxu0 0.0
          %4030 = vmatpush1.msra.mxu0 0.0
          %4031 = vmatprep.subr.mxu0 0.0
          %4032 = vmatpush1.msra.mxu0 0.0
          %4033 = vmatprep.subr.mxu0 0.0
          %4034 = vmatpush1.msra.mxu0 0.0
          %4035 = vmatprep.subr.mxu0 0.0
          %4036 = vmatpush1.msra.mxu0 0.0
          %4037 = vmatprep.subr.mxu0 0.0
          %4038 = vmatpush1.msra.mxu0 0.0
          %4039 = vmatprep.subr.mxu0 0.0
          %4040 = vmatpush1.msra.mxu0 0.0
          %4041 = vmatprep.subr.mxu0 0.0
          %4042 = vmatpush1.msra.mxu0 0.0
          %4043 = vmatprep.subr.mxu0 0.0
          %4044 = vmatpush1.msra.mxu0 0.0
          %4045 = vmatprep.subr.mxu0 0.0
          %4046 = vmatpush1.msra.mxu0 0.0
          %4047 = vmatprep.subr.mxu0 0.0
          %4048 = vmatpush1.msra.mxu0 0.0
          %4049 = vmatprep.subr.mxu0 0.0
          %4050 = vmatpush1.msra.mxu0 0.0
          %4051 = vmatprep.subr.mxu0 0.0
          %4052 = vmatpush1.msra.mxu0 0.0
          %4053 = vmatprep.subr.mxu0 0.0
          %4054 = vmatpush1.msra.mxu0 0.0
          %4055 = vmatprep.subr.mxu0 0.0
          %4056 = vmatpush1.msra.mxu0 0.0
          %4057 = vmatprep.subr.mxu0 0.0
          %4058 = vmatpush1.msra.mxu0 0.0
          %4059 = vmatprep.subr.mxu0 0.0
          %4060 = vmatpush1.msra.mxu0 0.0
          %4061 = vmatprep.subr.mxu0 0.0
          %4062 = vmatpush1.msra.mxu0 0.0
          %4063 = vmatprep.subr.mxu0 0.0
          %4064 = vmatpush1.msra.mxu0 0.0
          %4065 = vmatprep.subr.mxu0 0.0
          %4066 = vmatpush1.msra.mxu0 0.0
          %4067 = vmatprep.subr.mxu0 0.0
          %4068 = vmatpush1.msra.mxu0 0.0
          %4069 = vmatprep.subr.mxu0 0.0
          %4070 = vmatpush1.msra.mxu0 0.0
          %4071 = vmatprep.subr.mxu0 0.0
          %4072 = vmatpush1.msra.mxu0 0.0
          %4073 = vmatprep.subr.mxu0 0.0
          %4074 = vmatpush1.msra.mxu0 0.0
          %4075 = vmatprep.subr.mxu0 0.0
          %4076 = vmatpush1.msra.mxu0 0.0
          %4077 = vmatprep.mubr.f32.mxu0 0.0
          %4078 = vmatmul.mubr.f32.gmra.mrb[0].mxu0 %v4005
          %v4079 = vpop.f32.mrb[0].mxu0
          %v4080 = vadd.f32 0.0, %v4079
          %v4081 = vpop.f32.mrb[0].mxu0
          %v4082 = vadd.f32 0.0, %v4081
          %4083 = vdwg.mxu0
          %s4084 = scalar_lea.vmem [#allocation6], 2912
          %v4085 = vld [vmem:[%s4084] sm:$0xff]
          %v4086 = vld [vmem:[%s4084 + $0x8] sm:$0xff]
          %v4087 = vld [vmem:[%s4084 + $0x10] sm:$0xff]
          %v4088 = vld [vmem:[%s4084 + $0x18] sm:$0xff]
          %v4089 = vld [vmem:[%s4084 + $0x20] sm:$0xff]
          %v4090 = vld [vmem:[%s4084 + $0x28] sm:$0xff]
          %v4091 = vld [vmem:[%s4084 + $0x30] sm:$0xff]
          %v4092 = vld [vmem:[%s4084 + $0x38] sm:$0xff]
          %v4093 = vld [vmem:[%s4084 + $0x40] sm:$0xff]
          %v4094 = vld [vmem:[%s4084 + $0x48] sm:$0xff]
          %v4095 = vld [vmem:[%s4084 + $0x50] sm:$0xff]
          %v4096 = vld [vmem:[%s4084 + $0x58] sm:$0xff]
          %v4097 = vld [vmem:[%s4084 + $0x60] sm:$0x1]
          %v4098 = vld [vmem:[%s4084 + $0x68] sm:$0x1]
          %s4099 = scalar_lea.vmem [#allocation6], 3024
          %v4100 = vld [vmem:[%s4099] sm:$0xff]
          %v4101 = vld [vmem:[%s4099 + $0x8] sm:$0xff]
          %v4102 = vld [vmem:[%s4099 + $0x10] sm:$0xff]
          %v4103 = vld [vmem:[%s4099 + $0x18] sm:$0xff]
          %v4104 = vld [vmem:[%s4099 + $0x20] sm:$0xff]
          %v4105 = vld [vmem:[%s4099 + $0x28] sm:$0xff]
          %v4106 = vld [vmem:[%s4099 + $0x30] sm:$0xff]
          %v4107 = vld [vmem:[%s4099 + $0x38] sm:$0xff]
          %v4108 = vld [vmem:[%s4099 + $0x40] sm:$0xff]
          %v4109 = vld [vmem:[%s4099 + $0x48] sm:$0xff]
          %v4110 = vld [vmem:[%s4099 + $0x50] sm:$0xff]
          %v4111 = vld [vmem:[%s4099 + $0x58] sm:$0xff]
          %v4112 = vld [vmem:[%s4099 + $0x60] sm:$0x1]
          %v4113 = vld [vmem:[%s4099 + $0x68] sm:$0x1]
          %v4114 = vrot.slane %v2647, 3
          %v4115 = vsel %vm2681, %v4114, 0
          %v4118 = vsel %vm542, %v4112, 0
          %v4121 = vsel %vm542, %v4113, 0
          %4123 = vmatprep.subr.mxu0 %v4101
          %4124 = vmatpush1.msra.mxu0 %v4100
          %4125 = vmatprep.subr.mxu0 %v4103
          %4126 = vmatpush1.msra.mxu0 %v4102
          %4127 = vmatprep.subr.mxu0 %v4105
          %4128 = vmatpush1.msra.mxu0 %v4104
          %4129 = vmatprep.subr.mxu0 %v4107
          %4130 = vmatpush1.msra.mxu0 %v4106
          %4131 = vmatprep.subr.mxu0 %v4109
          %4132 = vmatpush1.msra.mxu0 %v4108
          %4133 = vmatprep.subr.mxu0 %v4111
          %4134 = vmatpush1.msra.mxu0 %v4110
          %4135 = vmatprep.subr.mxu0 %v4121
          %4136 = vmatpush1.msra.mxu0 %v4118
          %4137 = vmatprep.subr.mxu0 0.0
          %4138 = vmatpush1.msra.mxu0 0.0
          %4139 = vmatprep.subr.mxu0 0.0
          %4140 = vmatpush1.msra.mxu0 0.0
          %4141 = vmatprep.subr.mxu0 0.0
          %4142 = vmatpush1.msra.mxu0 0.0
          %4143 = vmatprep.subr.mxu0 0.0
          %4144 = vmatpush1.msra.mxu0 0.0
          %4145 = vmatprep.subr.mxu0 0.0
          %4146 = vmatpush1.msra.mxu0 0.0
          %4147 = vmatprep.subr.mxu0 0.0
          %4148 = vmatpush1.msra.mxu0 0.0
          %4149 = vmatprep.subr.mxu0 0.0
          %4150 = vmatpush1.msra.mxu0 0.0
          %4151 = vmatprep.subr.mxu0 0.0
          %4152 = vmatpush1.msra.mxu0 0.0
          %4153 = vmatprep.subr.mxu0 0.0
          %4154 = vmatpush1.msra.mxu0 0.0
          %4155 = vmatprep.subr.mxu0 0.0
          %4156 = vmatpush1.msra.mxu0 0.0
          %4157 = vmatprep.subr.mxu0 0.0
          %4158 = vmatpush1.msra.mxu0 0.0
          %4159 = vmatprep.subr.mxu0 0.0
          %4160 = vmatpush1.msra.mxu0 0.0
          %4161 = vmatprep.subr.mxu0 0.0
          %4162 = vmatpush1.msra.mxu0 0.0
          %4163 = vmatprep.subr.mxu0 0.0
          %4164 = vmatpush1.msra.mxu0 0.0
          %4165 = vmatprep.subr.mxu0 0.0
          %4166 = vmatpush1.msra.mxu0 0.0
          %4167 = vmatprep.subr.mxu0 0.0
          %4168 = vmatpush1.msra.mxu0 0.0
          %4169 = vmatprep.subr.mxu0 0.0
          %4170 = vmatpush1.msra.mxu0 0.0
          %4171 = vmatprep.subr.mxu0 0.0
          %4172 = vmatpush1.msra.mxu0 0.0
          %4173 = vmatprep.subr.mxu0 0.0
          %4174 = vmatpush1.msra.mxu0 0.0
          %4175 = vmatprep.subr.mxu0 0.0
          %4176 = vmatpush1.msra.mxu0 0.0
          %4177 = vmatprep.subr.mxu0 0.0
          %4178 = vmatpush1.msra.mxu0 0.0
          %4179 = vmatprep.subr.mxu0 0.0
          %4180 = vmatpush1.msra.mxu0 0.0
          %4181 = vmatprep.subr.mxu0 0.0
          %4182 = vmatpush1.msra.mxu0 0.0
          %4183 = vmatprep.subr.mxu0 0.0
          %4184 = vmatpush1.msra.mxu0 0.0
          %4185 = vmatprep.subr.mxu0 0.0
          %4186 = vmatpush1.msra.mxu0 0.0
          %4187 = vmatprep.mubr.f32.mxu0 0.0
          %4188 = vmatmul.mubr.f32.gmra.mrb[0].mxu0 %v4115
          %v4189 = vpop.f32.mrb[0].mxu0
          %v4190 = vadd.f32 0.0, %v4189
          %v4191 = vpop.f32.mrb[0].mxu0
          %v4192 = vadd.f32 0.0, %v4191
          %4193 = vdwg.mxu0
          %s4194 = scalar_lea.vmem [#allocation6], 3136
          %v4195 = vld [vmem:[%s4194] sm:$0xff]
          %v4196 = vld [vmem:[%s4194 + $0x8] sm:$0xff]
          %v4197 = vld [vmem:[%s4194 + $0x10] sm:$0xff]
          %v4198 = vld [vmem:[%s4194 + $0x18] sm:$0xff]
          %v4199 = vld [vmem:[%s4194 + $0x20] sm:$0xff]
          %v4200 = vld [vmem:[%s4194 + $0x28] sm:$0xff]
          %v4201 = vld [vmem:[%s4194 + $0x30] sm:$0xff]
          %v4202 = vld [vmem:[%s4194 + $0x38] sm:$0xff]
          %v4203 = vld [vmem:[%s4194 + $0x40] sm:$0xff]
          %v4204 = vld [vmem:[%s4194 + $0x48] sm:$0xff]
          %v4205 = vld [vmem:[%s4194 + $0x50] sm:$0xff]
          %v4206 = vld [vmem:[%s4194 + $0x58] sm:$0xff]
          %v4207 = vld [vmem:[%s4194 + $0x60] sm:$0x1]
          %v4208 = vld [vmem:[%s4194 + $0x68] sm:$0x1]
          %s4209 = scalar_lea.vmem [#allocation6], 3248
          %v4210 = vld [vmem:[%s4209] sm:$0xff]
          %v4211 = vld [vmem:[%s4209 + $0x8] sm:$0xff]
          %v4212 = vld [vmem:[%s4209 + $0x10] sm:$0xff]
          %v4213 = vld [vmem:[%s4209 + $0x18] sm:$0xff]
          %v4214 = vld [vmem:[%s4209 + $0x20] sm:$0xff]
          %v4215 = vld [vmem:[%s4209 + $0x28] sm:$0xff]
          %v4216 = vld [vmem:[%s4209 + $0x30] sm:$0xff]
          %v4217 = vld [vmem:[%s4209 + $0x38] sm:$0xff]
          %v4218 = vld [vmem:[%s4209 + $0x40] sm:$0xff]
          %v4219 = vld [vmem:[%s4209 + $0x48] sm:$0xff]
          %v4220 = vld [vmem:[%s4209 + $0x50] sm:$0xff]
          %v4221 = vld [vmem:[%s4209 + $0x58] sm:$0xff]
          %v4222 = vld [vmem:[%s4209 + $0x60] sm:$0x1]
          %v4223 = vld [vmem:[%s4209 + $0x68] sm:$0x1]
          %v4224 = vrot.slane %v2647, 5
          %v4225 = vsel %vm2681, %v4224, 0
          %v4228 = vsel %vm542, %v4222, 0
          %v4231 = vsel %vm542, %v4223, 0
          %4233 = vmatprep.subr.mxu0 %v4211
          %4234 = vmatpush1.msra.mxu0 %v4210
          %4235 = vmatprep.subr.mxu0 %v4213
          %4236 = vmatpush1.msra.mxu0 %v4212
          %4237 = vmatprep.subr.mxu0 %v4215
          %4238 = vmatpush1.msra.mxu0 %v4214
          %4239 = vmatprep.subr.mxu0 %v4217
          %4240 = vmatpush1.msra.mxu0 %v4216
          %4241 = vmatprep.subr.mxu0 %v4219
          %4242 = vmatpush1.msra.mxu0 %v4218
          %4243 = vmatprep.subr.mxu0 %v4221
          %4244 = vmatpush1.msra.mxu0 %v4220
          %4245 = vmatprep.subr.mxu0 %v4231
          %4246 = vmatpush1.msra.mxu0 %v4228
          %4247 = vmatprep.subr.mxu0 0.0
          %4248 = vmatpush1.msra.mxu0 0.0
          %4249 = vmatprep.subr.mxu0 0.0
          %4250 = vmatpush1.msra.mxu0 0.0
          %4251 = vmatprep.subr.mxu0 0.0
          %4252 = vmatpush1.msra.mxu0 0.0
          %4253 = vmatprep.subr.mxu0 0.0
          %4254 = vmatpush1.msra.mxu0 0.0
          %4255 = vmatprep.subr.mxu0 0.0
          %4256 = vmatpush1.msra.mxu0 0.0
          %4257 = vmatprep.subr.mxu0 0.0
          %4258 = vmatpush1.msra.mxu0 0.0
          %4259 = vmatprep.subr.mxu0 0.0
          %4260 = vmatpush1.msra.mxu0 0.0
          %4261 = vmatprep.subr.mxu0 0.0
          %4262 = vmatpush1.msra.mxu0 0.0
          %4263 = vmatprep.subr.mxu0 0.0
          %4264 = vmatpush1.msra.mxu0 0.0
          %4265 = vmatprep.subr.mxu0 0.0
          %4266 = vmatpush1.msra.mxu0 0.0
          %4267 = vmatprep.subr.mxu0 0.0
          %4268 = vmatpush1.msra.mxu0 0.0
          %4269 = vmatprep.subr.mxu0 0.0
          %4270 = vmatpush1.msra.mxu0 0.0
          %4271 = vmatprep.subr.mxu0 0.0
          %4272 = vmatpush1.msra.mxu0 0.0
          %4273 = vmatprep.subr.mxu0 0.0
          %4274 = vmatpush1.msra.mxu0 0.0
          %4275 = vmatprep.subr.mxu0 0.0
          %4276 = vmatpush1.msra.mxu0 0.0
          %4277 = vmatprep.subr.mxu0 0.0
          %4278 = vmatpush1.msra.mxu0 0.0
          %4279 = vmatprep.subr.mxu0 0.0
          %4280 = vmatpush1.msra.mxu0 0.0
          %4281 = vmatprep.subr.mxu0 0.0
          %4282 = vmatpush1.msra.mxu0 0.0
          %4283 = vmatprep.subr.mxu0 0.0
          %4284 = vmatpush1.msra.mxu0 0.0
          %4285 = vmatprep.subr.mxu0 0.0
          %4286 = vmatpush1.msra.mxu0 0.0
          %4287 = vmatprep.subr.mxu0 0.0
          %4288 = vmatpush1.msra.mxu0 0.0
          %4289 = vmatprep.subr.mxu0 0.0
          %4290 = vmatpush1.msra.mxu0 0.0
          %4291 = vmatprep.subr.mxu0 0.0
          %4292 = vmatpush1.msra.mxu0 0.0
          %4293 = vmatprep.subr.mxu0 0.0
          %4294 = vmatpush1.msra.mxu0 0.0
          %4295 = vmatprep.subr.mxu0 0.0
          %4296 = vmatpush1.msra.mxu0 0.0
          %4297 = vmatprep.mubr.f32.mxu0 0.0
          %4298 = vmatmul.mubr.f32.gmra.mrb[0].mxu0 %v4225
          %v4299 = vpop.f32.mrb[0].mxu0
          %v4300 = vadd.f32 0.0, %v4299
          %v4301 = vpop.f32.mrb[0].mxu0
          %v4302 = vadd.f32 0.0, %v4301
          %4303 = vdwg.mxu0
          %s4304 = scalar_lea.vmem [#allocation6], 3360
          %v4305 = vld [vmem:[%s4304] sm:$0xff]
          %v4306 = vld [vmem:[%s4304 + $0x8] sm:$0xff]
          %v4307 = vld [vmem:[%s4304 + $0x10] sm:$0xff]
          %v4308 = vld [vmem:[%s4304 + $0x18] sm:$0xff]
          %v4309 = vld [vmem:[%s4304 + $0x20] sm:$0xff]
          %v4310 = vld [vmem:[%s4304 + $0x28] sm:$0xff]
          %v4311 = vld [vmem:[%s4304 + $0x30] sm:$0xff]
          %v4312 = vld [vmem:[%s4304 + $0x38] sm:$0xff]
          %v4313 = vld [vmem:[%s4304 + $0x40] sm:$0xff]
          %v4314 = vld [vmem:[%s4304 + $0x48] sm:$0xff]
          %v4315 = vld [vmem:[%s4304 + $0x50] sm:$0xff]
          %v4316 = vld [vmem:[%s4304 + $0x58] sm:$0xff]
          %v4317 = vld [vmem:[%s4304 + $0x60] sm:$0x1]
          %v4318 = vld [vmem:[%s4304 + $0x68] sm:$0x1]
          %s4319 = scalar_lea.vmem [#allocation6], 3472
          %v4320 = vld [vmem:[%s4319] sm:$0xff]
          %v4321 = vld [vmem:[%s4319 + $0x8] sm:$0xff]
          %v4322 = vld [vmem:[%s4319 + $0x10] sm:$0xff]
          %v4323 = vld [vmem:[%s4319 + $0x18] sm:$0xff]
          %v4324 = vld [vmem:[%s4319 + $0x20] sm:$0xff]
          %v4325 = vld [vmem:[%s4319 + $0x28] sm:$0xff]
          %v4326 = vld [vmem:[%s4319 + $0x30] sm:$0xff]
          %v4327 = vld [vmem:[%s4319 + $0x38] sm:$0xff]
          %v4328 = vld [vmem:[%s4319 + $0x40] sm:$0xff]
          %v4329 = vld [vmem:[%s4319 + $0x48] sm:$0xff]
          %v4330 = vld [vmem:[%s4319 + $0x50] sm:$0xff]
          %v4331 = vld [vmem:[%s4319 + $0x58] sm:$0xff]
          %v4332 = vld [vmem:[%s4319 + $0x60] sm:$0x1]
          %v4333 = vld [vmem:[%s4319 + $0x68] sm:$0x1]
          %v4334 = vrot.slane %v2647, 7
          %v4335 = vsel %vm2681, %v4334, 0
          %v4338 = vsel %vm542, %v4332, 0
          %v4341 = vsel %vm542, %v4333, 0
          %4343 = vmatprep.subr.mxu0 %v4321
          %4344 = vmatpush1.msra.mxu0 %v4320
          %4345 = vmatprep.subr.mxu0 %v4323
          %4346 = vmatpush1.msra.mxu0 %v4322
          %4347 = vmatprep.subr.mxu0 %v4325
          %4348 = vmatpush1.msra.mxu0 %v4324
          %4349 = vmatprep.subr.mxu0 %v4327
          %4350 = vmatpush1.msra.mxu0 %v4326
          %4351 = vmatprep.subr.mxu0 %v4329
          %4352 = vmatpush1.msra.mxu0 %v4328
          %4353 = vmatprep.subr.mxu0 %v4331
          %4354 = vmatpush1.msra.mxu0 %v4330
          %4355 = vmatprep.subr.mxu0 %v4341
          %4356 = vmatpush1.msra.mxu0 %v4338
          %4357 = vmatprep.subr.mxu0 0.0
          %4358 = vmatpush1.msra.mxu0 0.0
          %4359 = vmatprep.subr.mxu0 0.0
          %4360 = vmatpush1.msra.mxu0 0.0
          %4361 = vmatprep.subr.mxu0 0.0
          %4362 = vmatpush1.msra.mxu0 0.0
          %4363 = vmatprep.subr.mxu0 0.0
          %4364 = vmatpush1.msra.mxu0 0.0
          %4365 = vmatprep.subr.mxu0 0.0
          %4366 = vmatpush1.msra.mxu0 0.0
          %4367 = vmatprep.subr.mxu0 0.0
          %4368 = vmatpush1.msra.mxu0 0.0
          %4369 = vmatprep.subr.mxu0 0.0
          %4370 = vmatpush1.msra.mxu0 0.0
          %4371 = vmatprep.subr.mxu0 0.0
          %4372 = vmatpush1.msra.mxu0 0.0
          %4373 = vmatprep.subr.mxu0 0.0
          %4374 = vmatpush1.msra.mxu0 0.0
          %4375 = vmatprep.subr.mxu0 0.0
          %4376 = vmatpush1.msra.mxu0 0.0
          %4377 = vmatprep.subr.mxu0 0.0
          %4378 = vmatpush1.msra.mxu0 0.0
          %4379 = vmatprep.subr.mxu0 0.0
          %4380 = vmatpush1.msra.mxu0 0.0
          %4381 = vmatprep.subr.mxu0 0.0
          %4382 = vmatpush1.msra.mxu0 0.0
          %4383 = vmatprep.subr.mxu0 0.0
          %4384 = vmatpush1.msra.mxu0 0.0
          %4385 = vmatprep.subr.mxu0 0.0
          %4386 = vmatpush1.msra.mxu0 0.0
          %4387 = vmatprep.subr.mxu0 0.0
          %4388 = vmatpush1.msra.mxu0 0.0
          %4389 = vmatprep.subr.mxu0 0.0
          %4390 = vmatpush1.msra.mxu0 0.0
          %4391 = vmatprep.subr.mxu0 0.0
          %4392 = vmatpush1.msra.mxu0 0.0
          %4393 = vmatprep.subr.mxu0 0.0
          %4394 = vmatpush1.msra.mxu0 0.0
          %4395 = vmatprep.subr.mxu0 0.0
          %4396 = vmatpush1.msra.mxu0 0.0
          %4397 = vmatprep.subr.mxu0 0.0
          %4398 = vmatpush1.msra.mxu0 0.0
          %4399 = vmatprep.subr.mxu0 0.0
          %4400 = vmatpush1.msra.mxu0 0.0
          %4401 = vmatprep.subr.mxu0 0.0
          %4402 = vmatpush1.msra.mxu0 0.0
          %4403 = vmatprep.subr.mxu0 0.0
          %4404 = vmatpush1.msra.mxu0 0.0
          %4405 = vmatprep.subr.mxu0 0.0
          %4406 = vmatpush1.msra.mxu0 0.0
          %4407 = vmatprep.mubr.f32.mxu0 0.0
          %4408 = vmatmul.mubr.f32.gmra.mrb[0].mxu0 %v4335
          %v4409 = vpop.f32.mrb[0].mxu0
          %v4410 = vadd.f32 0.0, %v4409
          %v4411 = vpop.f32.mrb[0].mxu0
          %v4412 = vadd.f32 0.0, %v4411
          %4413 = vdwg.mxu0
          %v4414 = vsel %vm2681, %v2441, 0
          %v4417 = vsel %vm542, %v2662, 0
          %v4420 = vsel %vm542, %v2663, 0
          %4422 = vmatprep.subr.mxu0 %v2651
          %4423 = vmatpush1.msra.mxu0 %v2650
          %4424 = vmatprep.subr.mxu0 %v2653
          %4425 = vmatpush1.msra.mxu0 %v2652
          %4426 = vmatprep.subr.mxu0 %v2655
          %4427 = vmatpush1.msra.mxu0 %v2654
          %4428 = vmatprep.subr.mxu0 %v2657
          %4429 = vmatpush1.msra.mxu0 %v2656
          %4430 = vmatprep.subr.mxu0 %v2659
          %4431 = vmatpush1.msra.mxu0 %v2658
          %4432 = vmatprep.subr.mxu0 %v2661
          %4433 = vmatpush1.msra.mxu0 %v2660
          %4434 = vmatprep.subr.mxu0 %v4420
          %4435 = vmatpush1.msra.mxu0 %v4417
          %4436 = vmatprep.subr.mxu0 0.0
          %4437 = vmatpush1.msra.mxu0 0.0
          %4438 = vmatprep.subr.mxu0 0.0
          %4439 = vmatpush1.msra.mxu0 0.0
          %4440 = vmatprep.subr.mxu0 0.0
          %4441 = vmatpush1.msra.mxu0 0.0
          %4442 = vmatprep.subr.mxu0 0.0
          %4443 = vmatpush1.msra.mxu0 0.0
          %4444 = vmatprep.subr.mxu0 0.0
          %4445 = vmatpush1.msra.mxu0 0.0
          %4446 = vmatprep.subr.mxu0 0.0
          %4447 = vmatpush1.msra.mxu0 0.0
          %4448 = vmatprep.subr.mxu0 0.0
          %4449 = vmatpush1.msra.mxu0 0.0
          %4450 = vmatprep.subr.mxu0 0.0
          %4451 = vmatpush1.msra.mxu0 0.0
          %4452 = vmatprep.subr.mxu0 0.0
          %4453 = vmatpush1.msra.mxu0 0.0
          %4454 = vmatprep.subr.mxu0 0.0
          %4455 = vmatpush1.msra.mxu0 0.0
          %4456 = vmatprep.subr.mxu0 0.0
          %4457 = vmatpush1.msra.mxu0 0.0
          %4458 = vmatprep.subr.mxu0 0.0
          %4459 = vmatpush1.msra.mxu0 0.0
          %4460 = vmatprep.subr.mxu0 0.0
          %4461 = vmatpush1.msra.mxu0 0.0
          %4462 = vmatprep.subr.mxu0 0.0
          %4463 = vmatpush1.msra.mxu0 0.0
          %4464 = vmatprep.subr.mxu0 0.0
          %4465 = vmatpush1.msra.mxu0 0.0
          %4466 = vmatprep.subr.mxu0 0.0
          %4467 = vmatpush1.msra.mxu0 0.0
          %4468 = vmatprep.subr.mxu0 0.0
          %4469 = vmatpush1.msra.mxu0 0.0
          %4470 = vmatprep.subr.mxu0 0.0
          %4471 = vmatpush1.msra.mxu0 0.0
          %4472 = vmatprep.subr.mxu0 0.0
          %4473 = vmatpush1.msra.mxu0 0.0
          %4474 = vmatprep.subr.mxu0 0.0
          %4475 = vmatpush1.msra.mxu0 0.0
          %4476 = vmatprep.subr.mxu0 0.0
          %4477 = vmatpush1.msra.mxu0 0.0
          %4478 = vmatprep.subr.mxu0 0.0
          %4479 = vmatpush1.msra.mxu0 0.0
          %4480 = vmatprep.subr.mxu0 0.0
          %4481 = vmatpush1.msra.mxu0 0.0
          %4482 = vmatprep.subr.mxu0 0.0
          %4483 = vmatpush1.msra.mxu0 0.0
          %4484 = vmatprep.subr.mxu0 0.0
          %4485 = vmatpush1.msra.mxu0 0.0
          %4486 = vmatprep.mubr.f32.mxu0 0.0
          %4487 = vmatmul.mubr.f32.gmra.mrb[0].mxu0 %v4414
          %v4488 = vpop.f32.mrb[0].mxu0
          %v4489 = vadd.f32 %v2757, %v4488
          %v4490 = vpop.f32.mrb[0].mxu0
          %v4491 = vadd.f32 %v2759, %v4490
          %4492 = vdwg.mxu0
          %v4493 = vrot.slane %v2441, 2
          %v4494 = vsel %vm2681, %v4493, 0
          %v4497 = vsel %vm542, %v2774, 0
          %v4500 = vsel %vm542, %v2775, 0
          %4502 = vmatprep.subr.mxu0 %v2763
          %4503 = vmatpush1.msra.mxu0 %v2762
          %4504 = vmatprep.subr.mxu0 %v2765
          %4505 = vmatpush1.msra.mxu0 %v2764
          %4506 = vmatprep.subr.mxu0 %v2767
          %4507 = vmatpush1.msra.mxu0 %v2766
          %4508 = vmatprep.subr.mxu0 %v2769
          %4509 = vmatpush1.msra.mxu0 %v2768
          %4510 = vmatprep.subr.mxu0 %v2771
          %4511 = vmatpush1.msra.mxu0 %v2770
          %4512 = vmatprep.subr.mxu0 %v2773
          %4513 = vmatpush1.msra.mxu0 %v2772
          %4514 = vmatprep.subr.mxu0 %v4500
          %4515 = vmatpush1.msra.mxu0 %v4497
          %4516 = vmatprep.subr.mxu0 0.0
          %4517 = vmatpush1.msra.mxu0 0.0
          %4518 = vmatprep.subr.mxu0 0.0
          %4519 = vmatpush1.msra.mxu0 0.0
          %4520 = vmatprep.subr.mxu0 0.0
          %4521 = vmatpush1.msra.mxu0 0.0
          %4522 = vmatprep.subr.mxu0 0.0
          %4523 = vmatpush1.msra.mxu0 0.0
          %4524 = vmatprep.subr.mxu0 0.0
          %4525 = vmatpush1.msra.mxu0 0.0
          %4526 = vmatprep.subr.mxu0 0.0
          %4527 = vmatpush1.msra.mxu0 0.0
          %4528 = vmatprep.subr.mxu0 0.0
          %4529 = vmatpush1.msra.mxu0 0.0
          %4530 = vmatprep.subr.mxu0 0.0
          %4531 = vmatpush1.msra.mxu0 0.0
          %4532 = vmatprep.subr.mxu0 0.0
          %4533 = vmatpush1.msra.mxu0 0.0
          %4534 = vmatprep.subr.mxu0 0.0
          %4535 = vmatpush1.msra.mxu0 0.0
          %4536 = vmatprep.subr.mxu0 0.0
          %4537 = vmatpush1.msra.mxu0 0.0
          %4538 = vmatprep.subr.mxu0 0.0
          %4539 = vmatpush1.msra.mxu0 0.0
          %4540 = vmatprep.subr.mxu0 0.0
          %4541 = vmatpush1.msra.mxu0 0.0
          %4542 = vmatprep.subr.mxu0 0.0
          %4543 = vmatpush1.msra.mxu0 0.0
          %4544 = vmatprep.subr.mxu0 0.0
          %4545 = vmatpush1.msra.mxu0 0.0
          %4546 = vmatprep.subr.mxu0 0.0
          %4547 = vmatpush1.msra.mxu0 0.0
          %4548 = vmatprep.subr.mxu0 0.0
          %4549 = vmatpush1.msra.mxu0 0.0
          %4550 = vmatprep.subr.mxu0 0.0
          %4551 = vmatpush1.msra.mxu0 0.0
          %4552 = vmatprep.subr.mxu0 0.0
          %4553 = vmatpush1.msra.mxu0 0.0
          %4554 = vmatprep.subr.mxu0 0.0
          %4555 = vmatpush1.msra.mxu0 0.0
          %4556 = vmatprep.subr.mxu0 0.0
          %4557 = vmatpush1.msra.mxu0 0.0
          %4558 = vmatprep.subr.mxu0 0.0
          %4559 = vmatpush1.msra.mxu0 0.0
          %4560 = vmatprep.subr.mxu0 0.0
          %4561 = vmatpush1.msra.mxu0 0.0
          %4562 = vmatprep.subr.mxu0 0.0
          %4563 = vmatpush1.msra.mxu0 0.0
          %4564 = vmatprep.subr.mxu0 0.0
          %4565 = vmatpush1.msra.mxu0 0.0
          %4566 = vmatprep.mubr.f32.mxu0 0.0
          %4567 = vmatmul.mubr.f32.gmra.mrb[0].mxu0 %v4494
          %v4568 = vpop.f32.mrb[0].mxu0
          %v4569 = vadd.f32 %v2867, %v4568
          %v4570 = vpop.f32.mrb[0].mxu0
          %v4571 = vadd.f32 %v2869, %v4570
          %4572 = vdwg.mxu0
          %v4573 = vrot.slane %v2441, 4
          %v4574 = vsel %vm2681, %v4573, 0
          %v4577 = vsel %vm542, %v2884, 0
          %v4580 = vsel %vm542, %v2885, 0
          %4582 = vmatprep.subr.mxu0 %v2873
          %4583 = vmatpush1.msra.mxu0 %v2872
          %4584 = vmatprep.subr.mxu0 %v2875
          %4585 = vmatpush1.msra.mxu0 %v2874
          %4586 = vmatprep.subr.mxu0 %v2877
          %4587 = vmatpush1.msra.mxu0 %v2876
          %4588 = vmatprep.subr.mxu0 %v2879
          %4589 = vmatpush1.msra.mxu0 %v2878
          %4590 = vmatprep.subr.mxu0 %v2881
          %4591 = vmatpush1.msra.mxu0 %v2880
          %4592 = vmatprep.subr.mxu0 %v2883
          %4593 = vmatpush1.msra.mxu0 %v2882
          %4594 = vmatprep.subr.mxu0 %v4580
          %4595 = vmatpush1.msra.mxu0 %v4577
          %4596 = vmatprep.subr.mxu0 0.0
          %4597 = vmatpush1.msra.mxu0 0.0
          %4598 = vmatprep.subr.mxu0 0.0
          %4599 = vmatpush1.msra.mxu0 0.0
          %4600 = vmatprep.subr.mxu0 0.0
          %4601 = vmatpush1.msra.mxu0 0.0
          %4602 = vmatprep.subr.mxu0 0.0
          %4603 = vmatpush1.msra.mxu0 0.0
          %4604 = vmatprep.subr.mxu0 0.0
          %4605 = vmatpush1.msra.mxu0 0.0
          %4606 = vmatprep.subr.mxu0 0.0
          %4607 = vmatpush1.msra.mxu0 0.0
          %4608 = vmatprep.subr.mxu0 0.0
          %4609 = vmatpush1.msra.mxu0 0.0
          %4610 = vmatprep.subr.mxu0 0.0
          %4611 = vmatpush1.msra.mxu0 0.0
          %4612 = vmatprep.subr.mxu0 0.0
          %4613 = vmatpush1.msra.mxu0 0.0
          %4614 = vmatprep.subr.mxu0 0.0
          %4615 = vmatpush1.msra.mxu0 0.0
          %4616 = vmatprep.subr.mxu0 0.0
          %4617 = vmatpush1.msra.mxu0 0.0
          %4618 = vmatprep.subr.mxu0 0.0
          %4619 = vmatpush1.msra.mxu0 0.0
          %4620 = vmatprep.subr.mxu0 0.0
          %4621 = vmatpush1.msra.mxu0 0.0
          %4622 = vmatprep.subr.mxu0 0.0
          %4623 = vmatpush1.msra.mxu0 0.0
          %4624 = vmatprep.subr.mxu0 0.0
          %4625 = vmatpush1.msra.mxu0 0.0
          %4626 = vmatprep.subr.mxu0 0.0
          %4627 = vmatpush1.msra.mxu0 0.0
          %4628 = vmatprep.subr.mxu0 0.0
          %4629 = vmatpush1.msra.mxu0 0.0
          %4630 = vmatprep.subr.mxu0 0.0
          %4631 = vmatpush1.msra.mxu0 0.0
          %4632 = vmatprep.subr.mxu0 0.0
          %4633 = vmatpush1.msra.mxu0 0.0
          %4634 = vmatprep.subr.mxu0 0.0
          %4635 = vmatpush1.msra.mxu0 0.0
          %4636 = vmatprep.subr.mxu0 0.0
          %4637 = vmatpush1.msra.mxu0 0.0
          %4638 = vmatprep.subr.mxu0 0.0
          %4639 = vmatpush1.msra.mxu0 0.0
          %4640 = vmatprep.subr.mxu0 0.0
          %4641 = vmatpush1.msra.mxu0 0.0
          %4642 = vmatprep.subr.mxu0 0.0
          %4643 = vmatpush1.msra.mxu0 0.0
          %4644 = vmatprep.subr.mxu0 0.0
          %4645 = vmatpush1.msra.mxu0 0.0
          %4646 = vmatprep.mubr.f32.mxu0 0.0
          %4647 = vmatmul.mubr.f32.gmra.mrb[0].mxu0 %v4574
          %v4648 = vpop.f32.mrb[0].mxu0
          %v4649 = vadd.f32 %v2977, %v4648
          %v4650 = vpop.f32.mrb[0].mxu0
          %v4651 = vadd.f32 %v2979, %v4650
          %4652 = vdwg.mxu0
          %v4653 = vrot.slane %v2441, 6
          %v4654 = vsel %vm2681, %v4653, 0
          %v4657 = vsel %vm542, %v2994, 0
          %v4660 = vsel %vm542, %v2995, 0
          %4662 = vmatprep.subr.mxu0 %v2983
          %4663 = vmatpush1.msra.mxu0 %v2982
          %4664 = vmatprep.subr.mxu0 %v2985
          %4665 = vmatpush1.msra.mxu0 %v2984
          %4666 = vmatprep.subr.mxu0 %v2987
          %4667 = vmatpush1.msra.mxu0 %v2986
          %4668 = vmatprep.subr.mxu0 %v2989
          %4669 = vmatpush1.msra.mxu0 %v2988
          %4670 = vmatprep.subr.mxu0 %v2991
          %4671 = vmatpush1.msra.mxu0 %v2990
          %4672 = vmatprep.subr.mxu0 %v2993
          %4673 = vmatpush1.msra.mxu0 %v2992
          %4674 = vmatprep.subr.mxu0 %v4660
          %4675 = vmatpush1.msra.mxu0 %v4657
          %4676 = vmatprep.subr.mxu0 0.0
          %4677 = vmatpush1.msra.mxu0 0.0
          %4678 = vmatprep.subr.mxu0 0.0
          %4679 = vmatpush1.msra.mxu0 0.0
          %4680 = vmatprep.subr.mxu0 0.0
          %4681 = vmatpush1.msra.mxu0 0.0
          %4682 = vmatprep.subr.mxu0 0.0
          %4683 = vmatpush1.msra.mxu0 0.0
          %4684 = vmatprep.subr.mxu0 0.0
          %4685 = vmatpush1.msra.mxu0 0.0
          %4686 = vmatprep.subr.mxu0 0.0
          %4687 = vmatpush1.msra.mxu0 0.0
          %4688 = vmatprep.subr.mxu0 0.0
          %4689 = vmatpush1.msra.mxu0 0.0
          %4690 = vmatprep.subr.mxu0 0.0
          %4691 = vmatpush1.msra.mxu0 0.0
          %4692 = vmatprep.subr.mxu0 0.0
          %4693 = vmatpush1.msra.mxu0 0.0
          %4694 = vmatprep.subr.mxu0 0.0
          %4695 = vmatpush1.msra.mxu0 0.0
          %4696 = vmatprep.subr.mxu0 0.0
          %4697 = vmatpush1.msra.mxu0 0.0
          %4698 = vmatprep.subr.mxu0 0.0
          %4699 = vmatpush1.msra.mxu0 0.0
          %4700 = vmatprep.subr.mxu0 0.0
          %4701 = vmatpush1.msra.mxu0 0.0
          %4702 = vmatprep.subr.mxu0 0.0
          %4703 = vmatpush1.msra.mxu0 0.0
          %4704 = vmatprep.subr.mxu0 0.0
          %4705 = vmatpush1.msra.mxu0 0.0
          %4706 = vmatprep.subr.mxu0 0.0
          %4707 = vmatpush1.msra.mxu0 0.0
          %4708 = vmatprep.subr.mxu0 0.0
          %4709 = vmatpush1.msra.mxu0 0.0
          %4710 = vmatprep.subr.mxu0 0.0
          %4711 = vmatpush1.msra.mxu0 0.0
          %4712 = vmatprep.subr.mxu0 0.0
          %4713 = vmatpush1.msra.mxu0 0.0
          %4714 = vmatprep.subr.mxu0 0.0
          %4715 = vmatpush1.msra.mxu0 0.0
          %4716 = vmatprep.subr.mxu0 0.0
          %4717 = vmatpush1.msra.mxu0 0.0
          %4718 = vmatprep.subr.mxu0 0.0
          %4719 = vmatpush1.msra.mxu0 0.0
          %4720 = vmatprep.subr.mxu0 0.0
          %4721 = vmatpush1.msra.mxu0 0.0
          %4722 = vmatprep.subr.mxu0 0.0
          %4723 = vmatpush1.msra.mxu0 0.0
          %4724 = vmatprep.subr.mxu0 0.0
          %4725 = vmatpush1.msra.mxu0 0.0
          %4726 = vmatprep.mubr.f32.mxu0 0.0
          %4727 = vmatmul.mubr.f32.gmra.mrb[0].mxu0 %v4654
          %v4728 = vpop.f32.mrb[0].mxu0
          %v4729 = vadd.f32 %v3087, %v4728
          %v4730 = vpop.f32.mrb[0].mxu0
          %v4731 = vadd.f32 %v3089, %v4730
          %4732 = vdwg.mxu0
          %v4733 = vsel %vm2681, %v2442, 0
          %v4736 = vsel %vm542, %v3104, 0
          %v4739 = vsel %vm542, %v3105, 0
          %4741 = vmatprep.subr.mxu0 %v3093
          %4742 = vmatpush1.msra.mxu0 %v3092
          %4743 = vmatprep.subr.mxu0 %v3095
          %4744 = vmatpush1.msra.mxu0 %v3094
          %4745 = vmatprep.subr.mxu0 %v3097
          %4746 = vmatpush1.msra.mxu0 %v3096
          %4747 = vmatprep.subr.mxu0 %v3099
          %4748 = vmatpush1.msra.mxu0 %v3098
          %4749 = vmatprep.subr.mxu0 %v3101
          %4750 = vmatpush1.msra.mxu0 %v3100
          %4751 = vmatprep.subr.mxu0 %v3103
          %4752 = vmatpush1.msra.mxu0 %v3102
          %4753 = vmatprep.subr.mxu0 %v4739
          %4754 = vmatpush1.msra.mxu0 %v4736
          %4755 = vmatprep.subr.mxu0 0.0
          %4756 = vmatpush1.msra.mxu0 0.0
          %4757 = vmatprep.subr.mxu0 0.0
          %4758 = vmatpush1.msra.mxu0 0.0
          %4759 = vmatprep.subr.mxu0 0.0
          %4760 = vmatpush1.msra.mxu0 0.0
          %4761 = vmatprep.subr.mxu0 0.0
          %4762 = vmatpush1.msra.mxu0 0.0
          %4763 = vmatprep.subr.mxu0 0.0
          %4764 = vmatpush1.msra.mxu0 0.0
          %4765 = vmatprep.subr.mxu0 0.0
          %4766 = vmatpush1.msra.mxu0 0.0
          %4767 = vmatprep.subr.mxu0 0.0
          %4768 = vmatpush1.msra.mxu0 0.0
          %4769 = vmatprep.subr.mxu0 0.0
          %4770 = vmatpush1.msra.mxu0 0.0
          %4771 = vmatprep.subr.mxu0 0.0
          %4772 = vmatpush1.msra.mxu0 0.0
          %4773 = vmatprep.subr.mxu0 0.0
          %4774 = vmatpush1.msra.mxu0 0.0
          %4775 = vmatprep.subr.mxu0 0.0
          %4776 = vmatpush1.msra.mxu0 0.0
          %4777 = vmatprep.subr.mxu0 0.0
          %4778 = vmatpush1.msra.mxu0 0.0
          %4779 = vmatprep.subr.mxu0 0.0
          %4780 = vmatpush1.msra.mxu0 0.0
          %4781 = vmatprep.subr.mxu0 0.0
          %4782 = vmatpush1.msra.mxu0 0.0
          %4783 = vmatprep.subr.mxu0 0.0
          %4784 = vmatpush1.msra.mxu0 0.0
          %4785 = vmatprep.subr.mxu0 0.0
          %4786 = vmatpush1.msra.mxu0 0.0
          %4787 = vmatprep.subr.mxu0 0.0
          %4788 = vmatpush1.msra.mxu0 0.0
          %4789 = vmatprep.subr.mxu0 0.0
          %4790 = vmatpush1.msra.mxu0 0.0
          %4791 = vmatprep.subr.mxu0 0.0
          %4792 = vmatpush1.msra.mxu0 0.0
          %4793 = vmatprep.subr.mxu0 0.0
          %4794 = vmatpush1.msra.mxu0 0.0
          %4795 = vmatprep.subr.mxu0 0.0
          %4796 = vmatpush1.msra.mxu0 0.0
          %4797 = vmatprep.subr.mxu0 0.0
          %4798 = vmatpush1.msra.mxu0 0.0
          %4799 = vmatprep.subr.mxu0 0.0
          %4800 = vmatpush1.msra.mxu0 0.0
          %4801 = vmatprep.subr.mxu0 0.0
          %4802 = vmatpush1.msra.mxu0 0.0
          %4803 = vmatprep.subr.mxu0 0.0
          %4804 = vmatpush1.msra.mxu0 0.0
          %4805 = vmatprep.mubr.f32.mxu0 0.0
          %4806 = vmatmul.mubr.f32.gmra.mrb[0].mxu0 %v4733
          %v4807 = vpop.f32.mrb[0].mxu0
          %v4808 = vadd.f32 %v3198, %v4807
          %v4809 = vpop.f32.mrb[0].mxu0
          %v4810 = vadd.f32 %v3200, %v4809
          %4811 = vdwg.mxu0
          %v4812 = vrot.slane %v2442, 2
          %v4813 = vsel %vm2681, %v4812, 0
          %v4816 = vsel %vm542, %v3215, 0
          %v4819 = vsel %vm542, %v3216, 0
          %4821 = vmatprep.subr.mxu0 %v3204
          %4822 = vmatpush1.msra.mxu0 %v3203
          %4823 = vmatprep.subr.mxu0 %v3206
          %4824 = vmatpush1.msra.mxu0 %v3205
          %4825 = vmatprep.subr.mxu0 %v3208
          %4826 = vmatpush1.msra.mxu0 %v3207
          %4827 = vmatprep.subr.mxu0 %v3210
          %4828 = vmatpush1.msra.mxu0 %v3209
          %4829 = vmatprep.subr.mxu0 %v3212
          %4830 = vmatpush1.msra.mxu0 %v3211
          %4831 = vmatprep.subr.mxu0 %v3214
          %4832 = vmatpush1.msra.mxu0 %v3213
          %4833 = vmatprep.subr.mxu0 %v4819
          %4834 = vmatpush1.msra.mxu0 %v4816
          %4835 = vmatprep.subr.mxu0 0.0
          %4836 = vmatpush1.msra.mxu0 0.0
          %4837 = vmatprep.subr.mxu0 0.0
          %4838 = vmatpush1.msra.mxu0 0.0
          %4839 = vmatprep.subr.mxu0 0.0
          %4840 = vmatpush1.msra.mxu0 0.0
          %4841 = vmatprep.subr.mxu0 0.0
          %4842 = vmatpush1.msra.mxu0 0.0
          %4843 = vmatprep.subr.mxu0 0.0
          %4844 = vmatpush1.msra.mxu0 0.0
          %4845 = vmatprep.subr.mxu0 0.0
          %4846 = vmatpush1.msra.mxu0 0.0
          %4847 = vmatprep.subr.mxu0 0.0
          %4848 = vmatpush1.msra.mxu0 0.0
          %4849 = vmatprep.subr.mxu0 0.0
          %4850 = vmatpush1.msra.mxu0 0.0
          %4851 = vmatprep.subr.mxu0 0.0
          %4852 = vmatpush1.msra.mxu0 0.0
          %4853 = vmatprep.subr.mxu0 0.0
          %4854 = vmatpush1.msra.mxu0 0.0
          %4855 = vmatprep.subr.mxu0 0.0
          %4856 = vmatpush1.msra.mxu0 0.0
          %4857 = vmatprep.subr.mxu0 0.0
          %4858 = vmatpush1.msra.mxu0 0.0
          %4859 = vmatprep.subr.mxu0 0.0
          %4860 = vmatpush1.msra.mxu0 0.0
          %4861 = vmatprep.subr.mxu0 0.0
          %4862 = vmatpush1.msra.mxu0 0.0
          %4863 = vmatprep.subr.mxu0 0.0
          %4864 = vmatpush1.msra.mxu0 0.0
          %4865 = vmatprep.subr.mxu0 0.0
          %4866 = vmatpush1.msra.mxu0 0.0
          %4867 = vmatprep.subr.mxu0 0.0
          %4868 = vmatpush1.msra.mxu0 0.0
          %4869 = vmatprep.subr.mxu0 0.0
          %4870 = vmatpush1.msra.mxu0 0.0
          %4871 = vmatprep.subr.mxu0 0.0
          %4872 = vmatpush1.msra.mxu0 0.0
          %4873 = vmatprep.subr.mxu0 0.0
          %4874 = vmatpush1.msra.mxu0 0.0
          %4875 = vmatprep.subr.mxu0 0.0
          %4876 = vmatpush1.msra.mxu0 0.0
          %4877 = vmatprep.subr.mxu0 0.0
          %4878 = vmatpush1.msra.mxu0 0.0
          %4879 = vmatprep.subr.mxu0 0.0
          %4880 = vmatpush1.msra.mxu0 0.0
          %4881 = vmatprep.subr.mxu0 0.0
          %4882 = vmatpush1.msra.mxu0 0.0
          %4883 = vmatprep.subr.mxu0 0.0
          %4884 = vmatpush1.msra.mxu0 0.0
          %4885 = vmatprep.mubr.f32.mxu0 0.0
          %4886 = vmatmul.mubr.f32.gmra.mrb[0].mxu0 %v4813
          %v4887 = vpop.f32.mrb[0].mxu0
          %v4888 = vadd.f32 %v3308, %v4887
          %v4889 = vpop.f32.mrb[0].mxu0
          %v4890 = vadd.f32 %v3310, %v4889
          %4891 = vdwg.mxu0
          %v4892 = vrot.slane %v2442, 4
          %v4893 = vsel %vm2681, %v4892, 0
          %v4896 = vsel %vm542, %v3325, 0
          %v4899 = vsel %vm542, %v3326, 0
          %4901 = vmatprep.subr.mxu0 %v3314
          %4902 = vmatpush1.msra.mxu0 %v3313
          %4903 = vmatprep.subr.mxu0 %v3316
          %4904 = vmatpush1.msra.mxu0 %v3315
          %4905 = vmatprep.subr.mxu0 %v3318
          %4906 = vmatpush1.msra.mxu0 %v3317
          %4907 = vmatprep.subr.mxu0 %v3320
          %4908 = vmatpush1.msra.mxu0 %v3319
          %4909 = vmatprep.subr.mxu0 %v3322
          %4910 = vmatpush1.msra.mxu0 %v3321
          %4911 = vmatprep.subr.mxu0 %v3324
          %4912 = vmatpush1.msra.mxu0 %v3323
          %4913 = vmatprep.subr.mxu0 %v4899
          %4914 = vmatpush1.msra.mxu0 %v4896
          %4915 = vmatprep.subr.mxu0 0.0
          %4916 = vmatpush1.msra.mxu0 0.0
          %4917 = vmatprep.subr.mxu0 0.0
          %4918 = vmatpush1.msra.mxu0 0.0
          %4919 = vmatprep.subr.mxu0 0.0
          %4920 = vmatpush1.msra.mxu0 0.0
          %4921 = vmatprep.subr.mxu0 0.0
          %4922 = vmatpush1.msra.mxu0 0.0
          %4923 = vmatprep.subr.mxu0 0.0
          %4924 = vmatpush1.msra.mxu0 0.0
          %4925 = vmatprep.subr.mxu0 0.0
          %4926 = vmatpush1.msra.mxu0 0.0
          %4927 = vmatprep.subr.mxu0 0.0
          %4928 = vmatpush1.msra.mxu0 0.0
          %4929 = vmatprep.subr.mxu0 0.0
          %4930 = vmatpush1.msra.mxu0 0.0
          %4931 = vmatprep.subr.mxu0 0.0
          %4932 = vmatpush1.msra.mxu0 0.0
          %4933 = vmatprep.subr.mxu0 0.0
          %4934 = vmatpush1.msra.mxu0 0.0
          %4935 = vmatprep.subr.mxu0 0.0
          %4936 = vmatpush1.msra.mxu0 0.0
          %4937 = vmatprep.subr.mxu0 0.0
          %4938 = vmatpush1.msra.mxu0 0.0
          %4939 = vmatprep.subr.mxu0 0.0
          %4940 = vmatpush1.msra.mxu0 0.0
          %4941 = vmatprep.subr.mxu0 0.0
          %4942 = vmatpush1.msra.mxu0 0.0
          %4943 = vmatprep.subr.mxu0 0.0
          %4944 = vmatpush1.msra.mxu0 0.0
          %4945 = vmatprep.subr.mxu0 0.0
          %4946 = vmatpush1.msra.mxu0 0.0
          %4947 = vmatprep.subr.mxu0 0.0
          %4948 = vmatpush1.msra.mxu0 0.0
          %4949 = vmatprep.subr.mxu0 0.0
          %4950 = vmatpush1.msra.mxu0 0.0
          %4951 = vmatprep.subr.mxu0 0.0
          %4952 = vmatpush1.msra.mxu0 0.0
          %4953 = vmatprep.subr.mxu0 0.0
          %4954 = vmatpush1.msra.mxu0 0.0
          %4955 = vmatprep.subr.mxu0 0.0
          %4956 = vmatpush1.msra.mxu0 0.0
          %4957 = vmatprep.subr.mxu0 0.0
          %4958 = vmatpush1.msra.mxu0 0.0
          %4959 = vmatprep.subr.mxu0 0.0
          %4960 = vmatpush1.msra.mxu0 0.0
          %4961 = vmatprep.subr.mxu0 0.0
          %4962 = vmatpush1.msra.mxu0 0.0
          %4963 = vmatprep.subr.mxu0 0.0
          %4964 = vmatpush1.msra.mxu0 0.0
          %4965 = vmatprep.mubr.f32.mxu0 0.0
          %4966 = vmatmul.mubr.f32.gmra.mrb[0].mxu0 %v4893
          %v4967 = vpop.f32.mrb[0].mxu0
          %v4968 = vadd.f32 %v3418, %v4967
          %v4969 = vpop.f32.mrb[0].mxu0
          %v4970 = vadd.f32 %v3420, %v4969
          %4971 = vdwg.mxu0
          %v4972 = vrot.slane %v2442, 6
          %v4973 = vsel %vm2681, %v4972, 0
          %v4976 = vsel %vm542, %v3435, 0
          %v4979 = vsel %vm542, %v3436, 0
          %4981 = vmatprep.subr.mxu0 %v3424
          %4982 = vmatpush1.msra.mxu0 %v3423
          %4983 = vmatprep.subr.mxu0 %v3426
          %4984 = vmatpush1.msra.mxu0 %v3425
          %4985 = vmatprep.subr.mxu0 %v3428
          %4986 = vmatpush1.msra.mxu0 %v3427
          %4987 = vmatprep.subr.mxu0 %v3430
          %4988 = vmatpush1.msra.mxu0 %v3429
          %4989 = vmatprep.subr.mxu0 %v3432
          %4990 = vmatpush1.msra.mxu0 %v3431
          %4991 = vmatprep.subr.mxu0 %v3434
          %4992 = vmatpush1.msra.mxu0 %v3433
          %4993 = vmatprep.subr.mxu0 %v4979
          %4994 = vmatpush1.msra.mxu0 %v4976
          %4995 = vmatprep.subr.mxu0 0.0
          %4996 = vmatpush1.msra.mxu0 0.0
          %4997 = vmatprep.subr.mxu0 0.0
          %4998 = vmatpush1.msra.mxu0 0.0
          %4999 = vmatprep.subr.mxu0 0.0
          %5000 = vmatpush1.msra.mxu0 0.0
          %5001 = vmatprep.subr.mxu0 0.0
          %5002 = vmatpush1.msra.mxu0 0.0
          %5003 = vmatprep.subr.mxu0 0.0
          %5004 = vmatpush1.msra.mxu0 0.0
          %5005 = vmatprep.subr.mxu0 0.0
          %5006 = vmatpush1.msra.mxu0 0.0
          %5007 = vmatprep.subr.mxu0 0.0
          %5008 = vmatpush1.msra.mxu0 0.0
          %5009 = vmatprep.subr.mxu0 0.0
          %5010 = vmatpush1.msra.mxu0 0.0
          %5011 = vmatprep.subr.mxu0 0.0
          %5012 = vmatpush1.msra.mxu0 0.0
          %5013 = vmatprep.subr.mxu0 0.0
          %5014 = vmatpush1.msra.mxu0 0.0
          %5015 = vmatprep.subr.mxu0 0.0
          %5016 = vmatpush1.msra.mxu0 0.0
          %5017 = vmatprep.subr.mxu0 0.0
          %5018 = vmatpush1.msra.mxu0 0.0
          %5019 = vmatprep.subr.mxu0 0.0
          %5020 = vmatpush1.msra.mxu0 0.0
          %5021 = vmatprep.subr.mxu0 0.0
          %5022 = vmatpush1.msra.mxu0 0.0
          %5023 = vmatprep.subr.mxu0 0.0
          %5024 = vmatpush1.msra.mxu0 0.0
          %5025 = vmatprep.subr.mxu0 0.0
          %5026 = vmatpush1.msra.mxu0 0.0
          %5027 = vmatprep.subr.mxu0 0.0
          %5028 = vmatpush1.msra.mxu0 0.0
          %5029 = vmatprep.subr.mxu0 0.0
          %5030 = vmatpush1.msra.mxu0 0.0
          %5031 = vmatprep.subr.mxu0 0.0
          %5032 = vmatpush1.msra.mxu0 0.0
          %5033 = vmatprep.subr.mxu0 0.0
          %5034 = vmatpush1.msra.mxu0 0.0
          %5035 = vmatprep.subr.mxu0 0.0
          %5036 = vmatpush1.msra.mxu0 0.0
          %5037 = vmatprep.subr.mxu0 0.0
          %5038 = vmatpush1.msra.mxu0 0.0
          %5039 = vmatprep.subr.mxu0 0.0
          %5040 = vmatpush1.msra.mxu0 0.0
          %5041 = vmatprep.subr.mxu0 0.0
          %5042 = vmatpush1.msra.mxu0 0.0
          %5043 = vmatprep.subr.mxu0 0.0
          %5044 = vmatpush1.msra.mxu0 0.0
          %5045 = vmatprep.mubr.f32.mxu0 0.0
          %5046 = vmatmul.mubr.f32.gmra.mrb[0].mxu0 %v4973
          %v5047 = vpop.f32.mrb[0].mxu0
          %v5048 = vadd.f32 %v3528, %v5047
          %v5049 = vpop.f32.mrb[0].mxu0
          %v5050 = vadd.f32 %v3530, %v5049
          %5051 = vdwg.mxu0
          %v5052 = vadd.f32 %v4489, %v4569
          %v5053 = vadd.f32 %v4491, %v4571
          %v5054 = vadd.f32 %v4649, %v4729
          %v5055 = vadd.f32 %v4651, %v4731
          %v5056 = vadd.f32 %v4808, %v4888
          %v5057 = vadd.f32 %v4810, %v4890
          %v5058 = vadd.f32 %v4968, %v5048
          %v5059 = vadd.f32 %v4970, %v5050
          %v5060 = vadd.f32 %v5052, %v5054
          %v5061 = vadd.f32 %v5053, %v5055
          %v5062 = vadd.f32 %v5056, %v5058
          %v5063 = vadd.f32 %v5057, %v5059
          %v5064 = vadd.f32 %v5060, %v5062
          %v5065 = vadd.f32 %v5061, %v5063
          %v5066 = vld [vmem:[%s3] ss:$4 sm:$0x3]
          %v5068 = vlaneseq
          %v5069 = vshrl.u32 %v5068, 7
          %v5070 = vsub.s32 0, %v5069
          %v5071 = vrot.slane %v5066, %v5070
          %v5072 = vlaneseq
          %v5073 = vshrl.u32 %v5072, 7
          %v5074 = vsub.s32 1, %v5073
          %v5075 = vrot.slane %v5066, %v5074
          %v5078 = vadd.f32 %v5064, %v5071
          %v5079 = vadd.f32 %v5065, %v5075
          %v5080 = vsel %vm2681, %v2642, 0
          %v5083 = vsel %vm542, %v3545, 0
          %v5086 = vsel %vm542, %v3546, 0
          %5088 = vmatprep.subr.mxu0 %v3534
          %5089 = vmatpush1.msra.mxu0 %v3533
          %5090 = vmatprep.subr.mxu0 %v3536
          %5091 = vmatpush1.msra.mxu0 %v3535
          %5092 = vmatprep.subr.mxu0 %v3538
          %5093 = vmatpush1.msra.mxu0 %v3537
          %5094 = vmatprep.subr.mxu0 %v3540
          %5095 = vmatpush1.msra.mxu0 %v3539
          %5096 = vmatprep.subr.mxu0 %v3542
          %5097 = vmatpush1.msra.mxu0 %v3541
          %5098 = vmatprep.subr.mxu0 %v3544
          %5099 = vmatpush1.msra.mxu0 %v3543
          %5100 = vmatprep.subr.mxu0 %v5086
          %5101 = vmatpush1.msra.mxu0 %v5083
          %5102 = vmatprep.subr.mxu0 0.0
          %5103 = vmatpush1.msra.mxu0 0.0
          %5104 = vmatprep.subr.mxu0 0.0
          %5105 = vmatpush1.msra.mxu0 0.0
          %5106 = vmatprep.subr.mxu0 0.0
          %5107 = vmatpush1.msra.mxu0 0.0
          %5108 = vmatprep.subr.mxu0 0.0
          %5109 = vmatpush1.msra.mxu0 0.0
          %5110 = vmatprep.subr.mxu0 0.0
          %5111 = vmatpush1.msra.mxu0 0.0
          %5112 = vmatprep.subr.mxu0 0.0
          %5113 = vmatpush1.msra.mxu0 0.0
          %5114 = vmatprep.subr.mxu0 0.0
          %5115 = vmatpush1.msra.mxu0 0.0
          %5116 = vmatprep.subr.mxu0 0.0
          %5117 = vmatpush1.msra.mxu0 0.0
          %5118 = vmatprep.subr.mxu0 0.0
          %5119 = vmatpush1.msra.mxu0 0.0
          %5120 = vmatprep.subr.mxu0 0.0
          %5121 = vmatpush1.msra.mxu0 0.0
          %5122 = vmatprep.subr.mxu0 0.0
          %5123 = vmatpush1.msra.mxu0 0.0
          %5124 = vmatprep.subr.mxu0 0.0
          %5125 = vmatpush1.msra.mxu0 0.0
          %5126 = vmatprep.subr.mxu0 0.0
          %5127 = vmatpush1.msra.mxu0 0.0
          %5128 = vmatprep.subr.mxu0 0.0
          %5129 = vmatpush1.msra.mxu0 0.0
          %5130 = vmatprep.subr.mxu0 0.0
          %5131 = vmatpush1.msra.mxu0 0.0
          %5132 = vmatprep.subr.mxu0 0.0
          %5133 = vmatpush1.msra.mxu0 0.0
          %5134 = vmatprep.subr.mxu0 0.0
          %5135 = vmatpush1.msra.mxu0 0.0
          %5136 = vmatprep.subr.mxu0 0.0
          %5137 = vmatpush1.msra.mxu0 0.0
          %5138 = vmatprep.subr.mxu0 0.0
          %5139 = vmatpush1.msra.mxu0 0.0
          %5140 = vmatprep.subr.mxu0 0.0
          %5141 = vmatpush1.msra.mxu0 0.0
          %5142 = vmatprep.subr.mxu0 0.0
          %5143 = vmatpush1.msra.mxu0 0.0
          %5144 = vmatprep.subr.mxu0 0.0
          %5145 = vmatpush1.msra.mxu0 0.0
          %5146 = vmatprep.subr.mxu0 0.0
          %5147 = vmatpush1.msra.mxu0 0.0
          %5148 = vmatprep.subr.mxu0 0.0
          %5149 = vmatpush1.msra.mxu0 0.0
          %5150 = vmatprep.subr.mxu0 0.0
          %5151 = vmatpush1.msra.mxu0 0.0
          %5152 = vmatprep.mubr.f32.mxu0 0.0
          %5153 = vmatmul.mubr.f32.gmra.mrb[0].mxu0 %v5080
          %v5154 = vpop.f32.mrb[0].mxu0
          %v5155 = vadd.f32 %v3639, %v5154
          %v5156 = vpop.f32.mrb[0].mxu0
          %v5157 = vadd.f32 %v3641, %v5156
          %5158 = vdwg.mxu0
          %v5159 = vrot.slane %v2642, 2
          %v5160 = vsel %vm2681, %v5159, 0
          %v5163 = vsel %vm542, %v3656, 0
          %v5166 = vsel %vm542, %v3657, 0
          %5168 = vmatprep.subr.mxu0 %v3645
          %5169 = vmatpush1.msra.mxu0 %v3644
          %5170 = vmatprep.subr.mxu0 %v3647
          %5171 = vmatpush1.msra.mxu0 %v3646
          %5172 = vmatprep.subr.mxu0 %v3649
          %5173 = vmatpush1.msra.mxu0 %v3648
          %5174 = vmatprep.subr.mxu0 %v3651
          %5175 = vmatpush1.msra.mxu0 %v3650
          %5176 = vmatprep.subr.mxu0 %v3653
          %5177 = vmatpush1.msra.mxu0 %v3652
          %5178 = vmatprep.subr.mxu0 %v3655
          %5179 = vmatpush1.msra.mxu0 %v3654
          %5180 = vmatprep.subr.mxu0 %v5166
          %5181 = vmatpush1.msra.mxu0 %v5163
          %5182 = vmatprep.subr.mxu0 0.0
          %5183 = vmatpush1.msra.mxu0 0.0
          %5184 = vmatprep.subr.mxu0 0.0
          %5185 = vmatpush1.msra.mxu0 0.0
          %5186 = vmatprep.subr.mxu0 0.0
          %5187 = vmatpush1.msra.mxu0 0.0
          %5188 = vmatprep.subr.mxu0 0.0
          %5189 = vmatpush1.msra.mxu0 0.0
          %5190 = vmatprep.subr.mxu0 0.0
          %5191 = vmatpush1.msra.mxu0 0.0
          %5192 = vmatprep.subr.mxu0 0.0
          %5193 = vmatpush1.msra.mxu0 0.0
          %5194 = vmatprep.subr.mxu0 0.0
          %5195 = vmatpush1.msra.mxu0 0.0
          %5196 = vmatprep.subr.mxu0 0.0
          %5197 = vmatpush1.msra.mxu0 0.0
          %5198 = vmatprep.subr.mxu0 0.0
          %5199 = vmatpush1.msra.mxu0 0.0
          %5200 = vmatprep.subr.mxu0 0.0
          %5201 = vmatpush1.msra.mxu0 0.0
          %5202 = vmatprep.subr.mxu0 0.0
          %5203 = vmatpush1.msra.mxu0 0.0
          %5204 = vmatprep.subr.mxu0 0.0
          %5205 = vmatpush1.msra.mxu0 0.0
          %5206 = vmatprep.subr.mxu0 0.0
          %5207 = vmatpush1.msra.mxu0 0.0
          %5208 = vmatprep.subr.mxu0 0.0
          %5209 = vmatpush1.msra.mxu0 0.0
          %5210 = vmatprep.subr.mxu0 0.0
          %5211 = vmatpush1.msra.mxu0 0.0
          %5212 = vmatprep.subr.mxu0 0.0
          %5213 = vmatpush1.msra.mxu0 0.0
          %5214 = vmatprep.subr.mxu0 0.0
          %5215 = vmatpush1.msra.mxu0 0.0
          %5216 = vmatprep.subr.mxu0 0.0
          %5217 = vmatpush1.msra.mxu0 0.0
          %5218 = vmatprep.subr.mxu0 0.0
          %5219 = vmatpush1.msra.mxu0 0.0
          %5220 = vmatprep.subr.mxu0 0.0
          %5221 = vmatpush1.msra.mxu0 0.0
          %5222 = vmatprep.subr.mxu0 0.0
          %5223 = vmatpush1.msra.mxu0 0.0
          %5224 = vmatprep.subr.mxu0 0.0
          %5225 = vmatpush1.msra.mxu0 0.0
          %5226 = vmatprep.subr.mxu0 0.0
          %5227 = vmatpush1.msra.mxu0 0.0
          %5228 = vmatprep.subr.mxu0 0.0
          %5229 = vmatpush1.msra.mxu0 0.0
          %5230 = vmatprep.subr.mxu0 0.0
          %5231 = vmatpush1.msra.mxu0 0.0
          %5232 = vmatprep.mubr.f32.mxu0 0.0
          %5233 = vmatmul.mubr.f32.gmra.mrb[0].mxu0 %v5160
          %v5234 = vpop.f32.mrb[0].mxu0
          %v5235 = vadd.f32 %v3749, %v5234
          %v5236 = vpop.f32.mrb[0].mxu0
          %v5237 = vadd.f32 %v3751, %v5236
          %5238 = vdwg.mxu0
          %v5239 = vrot.slane %v2642, 4
          %v5240 = vsel %vm2681, %v5239, 0
          %v5243 = vsel %vm542, %v3766, 0
          %v5246 = vsel %vm542, %v3767, 0
          %5248 = vmatprep.subr.mxu0 %v3755
          %5249 = vmatpush1.msra.mxu0 %v3754
          %5250 = vmatprep.subr.mxu0 %v3757
          %5251 = vmatpush1.msra.mxu0 %v3756
          %5252 = vmatprep.subr.mxu0 %v3759
          %5253 = vmatpush1.msra.mxu0 %v3758
          %5254 = vmatprep.subr.mxu0 %v3761
          %5255 = vmatpush1.msra.mxu0 %v3760
          %5256 = vmatprep.subr.mxu0 %v3763
          %5257 = vmatpush1.msra.mxu0 %v3762
          %5258 = vmatprep.subr.mxu0 %v3765
          %5259 = vmatpush1.msra.mxu0 %v3764
          %5260 = vmatprep.subr.mxu0 %v5246
          %5261 = vmatpush1.msra.mxu0 %v5243
          %5262 = vmatprep.subr.mxu0 0.0
          %5263 = vmatpush1.msra.mxu0 0.0
          %5264 = vmatprep.subr.mxu0 0.0
          %5265 = vmatpush1.msra.mxu0 0.0
          %5266 = vmatprep.subr.mxu0 0.0
          %5267 = vmatpush1.msra.mxu0 0.0
          %5268 = vmatprep.subr.mxu0 0.0
          %5269 = vmatpush1.msra.mxu0 0.0
          %5270 = vmatprep.subr.mxu0 0.0
          %5271 = vmatpush1.msra.mxu0 0.0
          %5272 = vmatprep.subr.mxu0 0.0
          %5273 = vmatpush1.msra.mxu0 0.0
          %5274 = vmatprep.subr.mxu0 0.0
          %5275 = vmatpush1.msra.mxu0 0.0
          %5276 = vmatprep.subr.mxu0 0.0
          %5277 = vmatpush1.msra.mxu0 0.0
          %5278 = vmatprep.subr.mxu0 0.0
          %5279 = vmatpush1.msra.mxu0 0.0
          %5280 = vmatprep.subr.mxu0 0.0
          %5281 = vmatpush1.msra.mxu0 0.0
          %5282 = vmatprep.subr.mxu0 0.0
          %5283 = vmatpush1.msra.mxu0 0.0
          %5284 = vmatprep.subr.mxu0 0.0
          %5285 = vmatpush1.msra.mxu0 0.0
          %5286 = vmatprep.subr.mxu0 0.0
          %5287 = vmatpush1.msra.mxu0 0.0
          %5288 = vmatprep.subr.mxu0 0.0
          %5289 = vmatpush1.msra.mxu0 0.0
          %5290 = vmatprep.subr.mxu0 0.0
          %5291 = vmatpush1.msra.mxu0 0.0
          %5292 = vmatprep.subr.mxu0 0.0
          %5293 = vmatpush1.msra.mxu0 0.0
          %5294 = vmatprep.subr.mxu0 0.0
          %5295 = vmatpush1.msra.mxu0 0.0
          %5296 = vmatprep.subr.mxu0 0.0
          %5297 = vmatpush1.msra.mxu0 0.0
          %5298 = vmatprep.subr.mxu0 0.0
          %5299 = vmatpush1.msra.mxu0 0.0
          %5300 = vmatprep.subr.mxu0 0.0
          %5301 = vmatpush1.msra.mxu0 0.0
          %5302 = vmatprep.subr.mxu0 0.0
          %5303 = vmatpush1.msra.mxu0 0.0
          %5304 = vmatprep.subr.mxu0 0.0
          %5305 = vmatpush1.msra.mxu0 0.0
          %5306 = vmatprep.subr.mxu0 0.0
          %5307 = vmatpush1.msra.mxu0 0.0
          %5308 = vmatprep.subr.mxu0 0.0
          %5309 = vmatpush1.msra.mxu0 0.0
          %5310 = vmatprep.subr.mxu0 0.0
          %5311 = vmatpush1.msra.mxu0 0.0
          %5312 = vmatprep.mubr.f32.mxu0 0.0
          %5313 = vmatmul.mubr.f32.gmra.mrb[0].mxu0 %v5240
          %v5314 = vpop.f32.mrb[0].mxu0
          %v5315 = vadd.f32 %v3859, %v5314
          %v5316 = vpop.f32.mrb[0].mxu0
          %v5317 = vadd.f32 %v3861, %v5316
          %5318 = vdwg.mxu0
          %v5319 = vrot.slane %v2642, 6
          %v5320 = vsel %vm2681, %v5319, 0
          %v5323 = vsel %vm542, %v3876, 0
          %v5326 = vsel %vm542, %v3877, 0
          %5328 = vmatprep.subr.mxu0 %v3865
          %5329 = vmatpush1.msra.mxu0 %v3864
          %5330 = vmatprep.subr.mxu0 %v3867
          %5331 = vmatpush1.msra.mxu0 %v3866
          %5332 = vmatprep.subr.mxu0 %v3869
          %5333 = vmatpush1.msra.mxu0 %v3868
          %5334 = vmatprep.subr.mxu0 %v3871
          %5335 = vmatpush1.msra.mxu0 %v3870
          %5336 = vmatprep.subr.mxu0 %v3873
          %5337 = vmatpush1.msra.mxu0 %v3872
          %5338 = vmatprep.subr.mxu0 %v3875
          %5339 = vmatpush1.msra.mxu0 %v3874
          %5340 = vmatprep.subr.mxu0 %v5326
          %5341 = vmatpush1.msra.mxu0 %v5323
          %5342 = vmatprep.subr.mxu0 0.0
          %5343 = vmatpush1.msra.mxu0 0.0
          %5344 = vmatprep.subr.mxu0 0.0
          %5345 = vmatpush1.msra.mxu0 0.0
          %5346 = vmatprep.subr.mxu0 0.0
          %5347 = vmatpush1.msra.mxu0 0.0
          %5348 = vmatprep.subr.mxu0 0.0
          %5349 = vmatpush1.msra.mxu0 0.0
          %5350 = vmatprep.subr.mxu0 0.0
          %5351 = vmatpush1.msra.mxu0 0.0
          %5352 = vmatprep.subr.mxu0 0.0
          %5353 = vmatpush1.msra.mxu0 0.0
          %5354 = vmatprep.subr.mxu0 0.0
          %5355 = vmatpush1.msra.mxu0 0.0
          %5356 = vmatprep.subr.mxu0 0.0
          %5357 = vmatpush1.msra.mxu0 0.0
          %5358 = vmatprep.subr.mxu0 0.0
          %5359 = vmatpush1.msra.mxu0 0.0
          %5360 = vmatprep.subr.mxu0 0.0
          %5361 = vmatpush1.msra.mxu0 0.0
          %5362 = vmatprep.subr.mxu0 0.0
          %5363 = vmatpush1.msra.mxu0 0.0
          %5364 = vmatprep.subr.mxu0 0.0
          %5365 = vmatpush1.msra.mxu0 0.0
          %5366 = vmatprep.subr.mxu0 0.0
          %5367 = vmatpush1.msra.mxu0 0.0
          %5368 = vmatprep.subr.mxu0 0.0
          %5369 = vmatpush1.msra.mxu0 0.0
          %5370 = vmatprep.subr.mxu0 0.0
          %5371 = vmatpush1.msra.mxu0 0.0
          %5372 = vmatprep.subr.mxu0 0.0
          %5373 = vmatpush1.msra.mxu0 0.0
          %5374 = vmatprep.subr.mxu0 0.0
          %5375 = vmatpush1.msra.mxu0 0.0
          %5376 = vmatprep.subr.mxu0 0.0
          %5377 = vmatpush1.msra.mxu0 0.0
          %5378 = vmatprep.subr.mxu0 0.0
          %5379 = vmatpush1.msra.mxu0 0.0
          %5380 = vmatprep.subr.mxu0 0.0
          %5381 = vmatpush1.msra.mxu0 0.0
          %5382 = vmatprep.subr.mxu0 0.0
          %5383 = vmatpush1.msra.mxu0 0.0
          %5384 = vmatprep.subr.mxu0 0.0
          %5385 = vmatpush1.msra.mxu0 0.0
          %5386 = vmatprep.subr.mxu0 0.0
          %5387 = vmatpush1.msra.mxu0 0.0
          %5388 = vmatprep.subr.mxu0 0.0
          %5389 = vmatpush1.msra.mxu0 0.0
          %5390 = vmatprep.subr.mxu0 0.0
          %5391 = vmatpush1.msra.mxu0 0.0
          %5392 = vmatprep.mubr.f32.mxu0 0.0
          %5393 = vmatmul.mubr.f32.gmra.mrb[0].mxu0 %v5320
          %v5394 = vpop.f32.mrb[0].mxu0
          %v5395 = vadd.f32 %v3969, %v5394
          %v5396 = vpop.f32.mrb[0].mxu0
          %v5397 = vadd.f32 %v3971, %v5396
          %5398 = vdwg.mxu0
          %v5399 = vsel %vm2681, %v2647, 0
          %v5402 = vsel %vm542, %v3986, 0
          %v5405 = vsel %vm542, %v3987, 0
          %5407 = vmatprep.subr.mxu0 %v3975
          %5408 = vmatpush1.msra.mxu0 %v3974
          %5409 = vmatprep.subr.mxu0 %v3977
          %5410 = vmatpush1.msra.mxu0 %v3976
          %5411 = vmatprep.subr.mxu0 %v3979
          %5412 = vmatpush1.msra.mxu0 %v3978
          %5413 = vmatprep.subr.mxu0 %v3981
          %5414 = vmatpush1.msra.mxu0 %v3980
          %5415 = vmatprep.subr.mxu0 %v3983
          %5416 = vmatpush1.msra.mxu0 %v3982
          %5417 = vmatprep.subr.mxu0 %v3985
          %5418 = vmatpush1.msra.mxu0 %v3984
          %5419 = vmatprep.subr.mxu0 %v5405
          %5420 = vmatpush1.msra.mxu0 %v5402
          %5421 = vmatprep.subr.mxu0 0.0
          %5422 = vmatpush1.msra.mxu0 0.0
          %5423 = vmatprep.subr.mxu0 0.0
          %5424 = vmatpush1.msra.mxu0 0.0
          %5425 = vmatprep.subr.mxu0 0.0
          %5426 = vmatpush1.msra.mxu0 0.0
          %5427 = vmatprep.subr.mxu0 0.0
          %5428 = vmatpush1.msra.mxu0 0.0
          %5429 = vmatprep.subr.mxu0 0.0
          %5430 = vmatpush1.msra.mxu0 0.0
          %5431 = vmatprep.subr.mxu0 0.0
          %5432 = vmatpush1.msra.mxu0 0.0
          %5433 = vmatprep.subr.mxu0 0.0
          %5434 = vmatpush1.msra.mxu0 0.0
          %5435 = vmatprep.subr.mxu0 0.0
          %5436 = vmatpush1.msra.mxu0 0.0
          %5437 = vmatprep.subr.mxu0 0.0
          %5438 = vmatpush1.msra.mxu0 0.0
          %5439 = vmatprep.subr.mxu0 0.0
          %5440 = vmatpush1.msra.mxu0 0.0
          %5441 = vmatprep.subr.mxu0 0.0
          %5442 = vmatpush1.msra.mxu0 0.0
          %5443 = vmatprep.subr.mxu0 0.0
          %5444 = vmatpush1.msra.mxu0 0.0
          %5445 = vmatprep.subr.mxu0 0.0
          %5446 = vmatpush1.msra.mxu0 0.0
          %5447 = vmatprep.subr.mxu0 0.0
          %5448 = vmatpush1.msra.mxu0 0.0
          %5449 = vmatprep.subr.mxu0 0.0
          %5450 = vmatpush1.msra.mxu0 0.0
          %5451 = vmatprep.subr.mxu0 0.0
          %5452 = vmatpush1.msra.mxu0 0.0
          %5453 = vmatprep.subr.mxu0 0.0
          %5454 = vmatpush1.msra.mxu0 0.0
          %5455 = vmatprep.subr.mxu0 0.0
          %5456 = vmatpush1.msra.mxu0 0.0
          %5457 = vmatprep.subr.mxu0 0.0
          %5458 = vmatpush1.msra.mxu0 0.0
          %5459 = vmatprep.subr.mxu0 0.0
          %5460 = vmatpush1.msra.mxu0 0.0
          %5461 = vmatprep.subr.mxu0 0.0
          %5462 = vmatpush1.msra.mxu0 0.0
          %5463 = vmatprep.subr.mxu0 0.0
          %5464 = vmatpush1.msra.mxu0 0.0
          %5465 = vmatprep.subr.mxu0 0.0
          %5466 = vmatpush1.msra.mxu0 0.0
          %5467 = vmatprep.subr.mxu0 0.0
          %5468 = vmatpush1.msra.mxu0 0.0
          %5469 = vmatprep.subr.mxu0 0.0
          %5470 = vmatpush1.msra.mxu0 0.0
          %5471 = vmatprep.mubr.f32.mxu0 0.0
          %5472 = vmatmul.mubr.f32.gmra.mrb[0].mxu0 %v5399
          %v5473 = vpop.f32.mrb[0].mxu0
          %v5474 = vadd.f32 %v4080, %v5473
          %v5475 = vpop.f32.mrb[0].mxu0
          %v5476 = vadd.f32 %v4082, %v5475
          %5477 = vdwg.mxu0
          %v5478 = vrot.slane %v2647, 2
          %v5479 = vsel %vm2681, %v5478, 0
          %v5482 = vsel %vm542, %v4097, 0
          %v5485 = vsel %vm542, %v4098, 0
          %5487 = vmatprep.subr.mxu0 %v4086
          %5488 = vmatpush1.msra.mxu0 %v4085
          %5489 = vmatprep.subr.mxu0 %v4088
          %5490 = vmatpush1.msra.mxu0 %v4087
          %5491 = vmatprep.subr.mxu0 %v4090
          %5492 = vmatpush1.msra.mxu0 %v4089
          %5493 = vmatprep.subr.mxu0 %v4092
          %5494 = vmatpush1.msra.mxu0 %v4091
          %5495 = vmatprep.subr.mxu0 %v4094
          %5496 = vmatpush1.msra.mxu0 %v4093
          %5497 = vmatprep.subr.mxu0 %v4096
          %5498 = vmatpush1.msra.mxu0 %v4095
          %5499 = vmatprep.subr.mxu0 %v5485
          %5500 = vmatpush1.msra.mxu0 %v5482
          %5501 = vmatprep.subr.mxu0 0.0
          %5502 = vmatpush1.msra.mxu0 0.0
          %5503 = vmatprep.subr.mxu0 0.0
          %5504 = vmatpush1.msra.mxu0 0.0
          %5505 = vmatprep.subr.mxu0 0.0
          %5506 = vmatpush1.msra.mxu0 0.0
          %5507 = vmatprep.subr.mxu0 0.0
          %5508 = vmatpush1.msra.mxu0 0.0
          %5509 = vmatprep.subr.mxu0 0.0
          %5510 = vmatpush1.msra.mxu0 0.0
          %5511 = vmatprep.subr.mxu0 0.0
          %5512 = vmatpush1.msra.mxu0 0.0
          %5513 = vmatprep.subr.mxu0 0.0
          %5514 = vmatpush1.msra.mxu0 0.0
          %5515 = vmatprep.subr.mxu0 0.0
          %5516 = vmatpush1.msra.mxu0 0.0
          %5517 = vmatprep.subr.mxu0 0.0
          %5518 = vmatpush1.msra.mxu0 0.0
          %5519 = vmatprep.subr.mxu0 0.0
          %5520 = vmatpush1.msra.mxu0 0.0
          %5521 = vmatprep.subr.mxu0 0.0
          %5522 = vmatpush1.msra.mxu0 0.0
          %5523 = vmatprep.subr.mxu0 0.0
          %5524 = vmatpush1.msra.mxu0 0.0
          %5525 = vmatprep.subr.mxu0 0.0
          %5526 = vmatpush1.msra.mxu0 0.0
          %5527 = vmatprep.subr.mxu0 0.0
          %5528 = vmatpush1.msra.mxu0 0.0
          %5529 = vmatprep.subr.mxu0 0.0
          %5530 = vmatpush1.msra.mxu0 0.0
          %5531 = vmatprep.subr.mxu0 0.0
          %5532 = vmatpush1.msra.mxu0 0.0
          %5533 = vmatprep.subr.mxu0 0.0
          %5534 = vmatpush1.msra.mxu0 0.0
          %5535 = vmatprep.subr.mxu0 0.0
          %5536 = vmatpush1.msra.mxu0 0.0
          %5537 = vmatprep.subr.mxu0 0.0
          %5538 = vmatpush1.msra.mxu0 0.0
          %5539 = vmatprep.subr.mxu0 0.0
          %5540 = vmatpush1.msra.mxu0 0.0
          %5541 = vmatprep.subr.mxu0 0.0
          %5542 = vmatpush1.msra.mxu0 0.0
          %5543 = vmatprep.subr.mxu0 0.0
          %5544 = vmatpush1.msra.mxu0 0.0
          %5545 = vmatprep.subr.mxu0 0.0
          %5546 = vmatpush1.msra.mxu0 0.0
          %5547 = vmatprep.subr.mxu0 0.0
          %5548 = vmatpush1.msra.mxu0 0.0
          %5549 = vmatprep.subr.mxu0 0.0
          %5550 = vmatpush1.msra.mxu0 0.0
          %5551 = vmatprep.mubr.f32.mxu0 0.0
          %5552 = vmatmul.mubr.f32.gmra.mrb[0].mxu0 %v5479
          %v5553 = vpop.f32.mrb[0].mxu0
          %v5554 = vadd.f32 %v4190, %v5553
          %v5555 = vpop.f32.mrb[0].mxu0
          %v5556 = vadd.f32 %v4192, %v5555
          %5557 = vdwg.mxu0
          %v5558 = vrot.slane %v2647, 4
          %v5559 = vsel %vm2681, %v5558, 0
          %v5562 = vsel %vm542, %v4207, 0
          %v5565 = vsel %vm542, %v4208, 0
          %5567 = vmatprep.subr.mxu0 %v4196
          %5568 = vmatpush1.msra.mxu0 %v4195
          %5569 = vmatprep.subr.mxu0 %v4198
          %5570 = vmatpush1.msra.mxu0 %v4197
          %5571 = vmatprep.subr.mxu0 %v4200
          %5572 = vmatpush1.msra.mxu0 %v4199
          %5573 = vmatprep.subr.mxu0 %v4202
          %5574 = vmatpush1.msra.mxu0 %v4201
          %5575 = vmatprep.subr.mxu0 %v4204
          %5576 = vmatpush1.msra.mxu0 %v4203
          %5577 = vmatprep.subr.mxu0 %v4206
          %5578 = vmatpush1.msra.mxu0 %v4205
          %5579 = vmatprep.subr.mxu0 %v5565
          %5580 = vmatpush1.msra.mxu0 %v5562
          %5581 = vmatprep.subr.mxu0 0.0
          %5582 = vmatpush1.msra.mxu0 0.0
          %5583 = vmatprep.subr.mxu0 0.0
          %5584 = vmatpush1.msra.mxu0 0.0
          %5585 = vmatprep.subr.mxu0 0.0
          %5586 = vmatpush1.msra.mxu0 0.0
          %5587 = vmatprep.subr.mxu0 0.0
          %5588 = vmatpush1.msra.mxu0 0.0
          %5589 = vmatprep.subr.mxu0 0.0
          %5590 = vmatpush1.msra.mxu0 0.0
          %5591 = vmatprep.subr.mxu0 0.0
          %5592 = vmatpush1.msra.mxu0 0.0
          %5593 = vmatprep.subr.mxu0 0.0
          %5594 = vmatpush1.msra.mxu0 0.0
          %5595 = vmatprep.subr.mxu0 0.0
          %5596 = vmatpush1.msra.mxu0 0.0
          %5597 = vmatprep.subr.mxu0 0.0
          %5598 = vmatpush1.msra.mxu0 0.0
          %5599 = vmatprep.subr.mxu0 0.0
          %5600 = vmatpush1.msra.mxu0 0.0
          %5601 = vmatprep.subr.mxu0 0.0
          %5602 = vmatpush1.msra.mxu0 0.0
          %5603 = vmatprep.subr.mxu0 0.0
          %5604 = vmatpush1.msra.mxu0 0.0
          %5605 = vmatprep.subr.mxu0 0.0
          %5606 = vmatpush1.msra.mxu0 0.0
          %5607 = vmatprep.subr.mxu0 0.0
          %5608 = vmatpush1.msra.mxu0 0.0
          %5609 = vmatprep.subr.mxu0 0.0
          %5610 = vmatpush1.msra.mxu0 0.0
          %5611 = vmatprep.subr.mxu0 0.0
          %5612 = vmatpush1.msra.mxu0 0.0
          %5613 = vmatprep.subr.mxu0 0.0
          %5614 = vmatpush1.msra.mxu0 0.0
          %5615 = vmatprep.subr.mxu0 0.0
          %5616 = vmatpush1.msra.mxu0 0.0
          %5617 = vmatprep.subr.mxu0 0.0
          %5618 = vmatpush1.msra.mxu0 0.0
          %5619 = vmatprep.subr.mxu0 0.0
          %5620 = vmatpush1.msra.mxu0 0.0
          %5621 = vmatprep.subr.mxu0 0.0
          %5622 = vmatpush1.msra.mxu0 0.0
          %5623 = vmatprep.subr.mxu0 0.0
          %5624 = vmatpush1.msra.mxu0 0.0
          %5625 = vmatprep.subr.mxu0 0.0
          %5626 = vmatpush1.msra.mxu0 0.0
          %5627 = vmatprep.subr.mxu0 0.0
          %5628 = vmatpush1.msra.mxu0 0.0
          %5629 = vmatprep.subr.mxu0 0.0
          %5630 = vmatpush1.msra.mxu0 0.0
          %5631 = vmatprep.mubr.f32.mxu0 0.0
          %5632 = vmatmul.mubr.f32.gmra.mrb[0].mxu0 %v5559
          %v5633 = vpop.f32.mrb[0].mxu0
          %v5634 = vadd.f32 %v4300, %v5633
          %v5635 = vpop.f32.mrb[0].mxu0
          %v5636 = vadd.f32 %v4302, %v5635
          %5637 = vdwg.mxu0
          %v5638 = vrot.slane %v2647, 6
          %v5639 = vsel %vm2681, %v5638, 0
          %v5642 = vsel %vm542, %v4317, 0
          %v5645 = vsel %vm542, %v4318, 0
          %5647 = vmatprep.subr.mxu0 %v4306
          %5648 = vmatpush1.msra.mxu0 %v4305
          %5649 = vmatprep.subr.mxu0 %v4308
          %5650 = vmatpush1.msra.mxu0 %v4307
          %5651 = vmatprep.subr.mxu0 %v4310
          %5652 = vmatpush1.msra.mxu0 %v4309
          %5653 = vmatprep.subr.mxu0 %v4312
          %5654 = vmatpush1.msra.mxu0 %v4311
          %5655 = vmatprep.subr.mxu0 %v4314
          %5656 = vmatpush1.msra.mxu0 %v4313
          %5657 = vmatprep.subr.mxu0 %v4316
          %5658 = vmatpush1.msra.mxu0 %v4315
          %5659 = vmatprep.subr.mxu0 %v5645
          %5660 = vmatpush1.msra.mxu0 %v5642
          %5661 = vmatprep.subr.mxu0 0.0
          %5662 = vmatpush1.msra.mxu0 0.0
          %5663 = vmatprep.subr.mxu0 0.0
          %5664 = vmatpush1.msra.mxu0 0.0
          %5665 = vmatprep.subr.mxu0 0.0
          %5666 = vmatpush1.msra.mxu0 0.0
          %5667 = vmatprep.subr.mxu0 0.0
          %5668 = vmatpush1.msra.mxu0 0.0
          %5669 = vmatprep.subr.mxu0 0.0
          %5670 = vmatpush1.msra.mxu0 0.0
          %5671 = vmatprep.subr.mxu0 0.0
          %5672 = vmatpush1.msra.mxu0 0.0
          %5673 = vmatprep.subr.mxu0 0.0
          %5674 = vmatpush1.msra.mxu0 0.0
          %5675 = vmatprep.subr.mxu0 0.0
          %5676 = vmatpush1.msra.mxu0 0.0
          %5677 = vmatprep.subr.mxu0 0.0
          %5678 = vmatpush1.msra.mxu0 0.0
          %5679 = vmatprep.subr.mxu0 0.0
          %5680 = vmatpush1.msra.mxu0 0.0
          %5681 = vmatprep.subr.mxu0 0.0
          %5682 = vmatpush1.msra.mxu0 0.0
          %5683 = vmatprep.subr.mxu0 0.0
          %5684 = vmatpush1.msra.mxu0 0.0
          %5685 = vmatprep.subr.mxu0 0.0
          %5686 = vmatpush1.msra.mxu0 0.0
          %5687 = vmatprep.subr.mxu0 0.0
          %5688 = vmatpush1.msra.mxu0 0.0
          %5689 = vmatprep.subr.mxu0 0.0
          %5690 = vmatpush1.msra.mxu0 0.0
          %5691 = vmatprep.subr.mxu0 0.0
          %5692 = vmatpush1.msra.mxu0 0.0
          %5693 = vmatprep.subr.mxu0 0.0
          %5694 = vmatpush1.msra.mxu0 0.0
          %5695 = vmatprep.subr.mxu0 0.0
          %5696 = vmatpush1.msra.mxu0 0.0
          %5697 = vmatprep.subr.mxu0 0.0
          %5698 = vmatpush1.msra.mxu0 0.0
          %5699 = vmatprep.subr.mxu0 0.0
          %5700 = vmatpush1.msra.mxu0 0.0
          %5701 = vmatprep.subr.mxu0 0.0
          %5702 = vmatpush1.msra.mxu0 0.0
          %5703 = vmatprep.subr.mxu0 0.0
          %5704 = vmatpush1.msra.mxu0 0.0
          %5705 = vmatprep.subr.mxu0 0.0
          %5706 = vmatpush1.msra.mxu0 0.0
          %5707 = vmatprep.subr.mxu0 0.0
          %5708 = vmatpush1.msra.mxu0 0.0
          %5709 = vmatprep.subr.mxu0 0.0
          %5710 = vmatpush1.msra.mxu0 0.0
          %5711 = vmatprep.mubr.f32.mxu0 0.0
          %5712 = vmatmul.mubr.f32.gmra.mrb[0].mxu0 %v5639
          %v5713 = vpop.f32.mrb[0].mxu0
          %v5714 = vadd.f32 %v4410, %v5713
          %v5715 = vpop.f32.mrb[0].mxu0
          %v5716 = vadd.f32 %v4412, %v5715
          %5717 = vdwg.mxu0
          %v5718 = vadd.f32 %v5155, %v5235
          %v5719 = vadd.f32 %v5157, %v5237
          %v5720 = vadd.f32 %v5315, %v5395
          %v5721 = vadd.f32 %v5317, %v5397
          %v5722 = vadd.f32 %v5474, %v5554
          %v5723 = vadd.f32 %v5476, %v5556
          %v5724 = vadd.f32 %v5634, %v5714
          %v5725 = vadd.f32 %v5636, %v5716
          %v5726 = vadd.f32 %v5718, %v5720
          %v5727 = vadd.f32 %v5719, %v5721
          %v5728 = vadd.f32 %v5722, %v5724
          %v5729 = vadd.f32 %v5723, %v5725
          %v5730 = vadd.f32 %v5726, %v5728
          %v5731 = vadd.f32 %v5727, %v5729
          %s5732 = scalar_lea.vmem %s3, 1
          %v5733 = vld [vmem:[%s5732] ss:$4 sm:$0x3]
          %v5735 = vlaneseq
          %v5736 = vshrl.u32 %v5735, 7
          %v5737 = vsub.s32 0, %v5736
          %v5738 = vrot.slane %v5733, %v5737
          %v5739 = vlaneseq
          %v5740 = vshrl.u32 %v5739, 7
          %v5741 = vsub.s32 1, %v5740
          %v5742 = vrot.slane %v5733, %v5741
          %v5745 = vadd.f32 %v5730, %v5738
          %v5746 = vadd.f32 %v5731, %v5742
          %s5747 = scalar_lea.vmem %s3, 2
          %v5748 = vld [vmem:[%s5747] ss:$4 sm:$0x3]
          %vm5749 = vcmp.ge.f32.partialorder %v5078, 0.0
          %vm5750 = vcmp.ge.f32.partialorder %v5079, 0.0
          %v5753 = vcombine.low %v5078, %v5079
          %v5755 = vunpack.c.l.s4 1966171168
          %v5756 = vunpack.c.0.s8 %v5755
          %v5757 = vlaneseq
          %v5758 = vshrl.u32 %v5757, 7
          %v5759 = vsub.s32 %v5756, %v5758
          %v5760 = vrot.slane %v5753, %v5759
          %v5762 = vunpack.c.l.s4 1966171168
          %v5763 = vunpack.c.0.s8 %v5762
          %v5764 = vlaneseq
          %v5765 = vshrl.u32 %v5764, 7
          %v5766 = vsub.s32 %v5763, %v5765
          %v5767 = vrot.slane %v5760, %v5766
          %v5769 = vmul.f32 %v5748, %v5767
          %v5771 = vlaneseq
          %v5772 = vshrl.u32 %v5771, 7
          %v5773 = vsub.s32 0, %v5772
          %v5774 = vrot.slane %v5769, %v5773
          %v5775 = vlaneseq
          %v5776 = vshrl.u32 %v5775, 7
          %v5777 = vsub.s32 1, %v5776
          %v5778 = vrot.slane %v5769, %v5777
          %v5781 = vsel %vm5749, %v5078, %v5774
          %v5782 = vsel %vm5750, %v5079, %v5778
          %vm5783 = vcmp.ge.f32.partialorder %v5745, 0.0
          %vm5784 = vcmp.ge.f32.partialorder %v5746, 0.0
          %v5787 = vcombine.low %v5745, %v5746
          %v5789 = vunpack.c.l.s4 1966171168
          %v5790 = vunpack.c.0.s8 %v5789
          %v5791 = vlaneseq
          %v5792 = vshrl.u32 %v5791, 7
          %v5793 = vsub.s32 %v5790, %v5792
          %v5794 = vrot.slane %v5787, %v5793
          %v5796 = vunpack.c.l.s4 1966171168
          %v5797 = vunpack.c.0.s8 %v5796
          %v5798 = vlaneseq
          %v5799 = vshrl.u32 %v5798, 7
          %v5800 = vsub.s32 %v5797, %v5799
          %v5801 = vrot.slane %v5794, %v5800
          %v5803 = vmul.f32 %v5748, %v5801
          %v5805 = vlaneseq
          %v5806 = vshrl.u32 %v5805, 7
          %v5807 = vsub.s32 0, %v5806
          %v5808 = vrot.slane %v5803, %v5807
          %v5809 = vlaneseq
          %v5810 = vshrl.u32 %v5809, 7
          %v5811 = vsub.s32 1, %v5810
          %v5812 = vrot.slane %v5803, %v5811
          %v5815 = vsel %vm5783, %v5745, %v5808
          %v5816 = vsel %vm5784, %v5746, %v5812
          %v5817 = vld [vmem:[%s4] sm:$0xff]
          %v5818 = vld [vmem:[%s4 + $0x8] sm:$0xff]
          %v5819 = vld [vmem:[%s4 + $0x10] sm:$0xff]
          %v5820 = vld [vmem:[%s4 + $0x18] sm:$0xff]
          %v5821 = vld [vmem:[%s4 + $0x20] sm:$0xff]
          %v5822 = vld [vmem:[%s4 + $0x28] sm:$0xff]
          %v5823 = vld [vmem:[%s4 + $0x30] sm:$0xff]
          %v5824 = vld [vmem:[%s4 + $0x38] sm:$0xff]
          %v5825 = vld [vmem:[%s4 + $0x40] sm:$0xff]
          %v5826 = vld [vmem:[%s4 + $0x48] sm:$0xff]
          %v5827 = vld [vmem:[%s4 + $0x50] sm:$0xff]
          %v5828 = vld [vmem:[%s4 + $0x58] sm:$0xff]
          %v5829 = vld [vmem:[%s4 + $0x60] sm:$0xff]
          %v5830 = vld [vmem:[%s4 + $0x68] sm:$0xff]
          %v5831 = vld [vmem:[%s4 + $0x70] sm:$0xff]
          %v5832 = vld [vmem:[%s4 + $0x78] sm:$0xff]
          %v5833 = vld [vmem:[%s4 + $0x80] sm:$0xff]
          %v5834 = vld [vmem:[%s4 + $0x88] sm:$0xff]
          %v5835 = vld [vmem:[%s4 + $0x90] sm:$0xff]
          %v5836 = vld [vmem:[%s4 + $0x98] sm:$0xff]
          %v5837 = vld [vmem:[%s4 + $0xa0] sm:$0xff]
          %v5838 = vld [vmem:[%s4 + $0xa8] sm:$0xff]
          %v5839 = vld [vmem:[%s4 + $0xb0] sm:$0xff]
          %v5840 = vld [vmem:[%s4 + $0xb8] sm:$0xff]
          %v5841 = vld [vmem:[%s4 + $0xc0] sm:$0xff]
          %v5842 = vld [vmem:[%s4 + $0xc8] sm:$0xff]
          %v5843 = vld [vmem:[%s4 + $0xd0] sm:$0xff]
          %v5844 = vld [vmem:[%s4 + $0xd8] sm:$0xff]
          %v5845 = vld [vmem:[%s4 + $0xe0] sm:$0xff]
          %v5846 = vld [vmem:[%s4 + $0xe8] sm:$0xff]
          %v5847 = vld [vmem:[%s4 + $0xf0] sm:$0xff]
          %v5848 = vld [vmem:[%s4 + $0xf8] sm:$0xff]
          %v5849 = vld [vmem:[%s4 + $0x100] sm:$0xff]
          %v5850 = vld [vmem:[%s4 + $0x108] sm:$0xff]
          %v5851 = vld [vmem:[%s4 + $0x110] sm:$0xff]
          %v5852 = vld [vmem:[%s4 + $0x118] sm:$0xff]
          %v5853 = vld [vmem:[%s4 + $0x120] sm:$0xff]
          %v5854 = vld [vmem:[%s4 + $0x128] sm:$0xff]
          %v5855 = vld [vmem:[%s4 + $0x130] sm:$0xff]
          %v5856 = vld [vmem:[%s4 + $0x138] sm:$0xff]
          %v5857 = vld [vmem:[%s4 + $0x140] sm:$0xff]
          %v5858 = vld [vmem:[%s4 + $0x148] sm:$0xff]
          %v5859 = vld [vmem:[%s4 + $0x150] sm:$0xff]
          %v5860 = vld [vmem:[%s4 + $0x158] sm:$0xff]
          %v5861 = vld [vmem:[%s4 + $0x160] sm:$0xff]
          %v5862 = vld [vmem:[%s4 + $0x168] sm:$0xff]
          %v5863 = vld [vmem:[%s4 + $0x170] sm:$0xff]
          %v5864 = vld [vmem:[%s4 + $0x178] sm:$0xff]
          %v5865 = vld [vmem:[%s4 + $0x180] sm:$0xff]
          %v5866 = vld [vmem:[%s4 + $0x188] sm:$0xff]
          %v5867 = vld [vmem:[%s4 + $0x190] sm:$0xff]
          %v5868 = vld [vmem:[%s4 + $0x198] sm:$0xff]
          %v5869 = vld [vmem:[%s4 + $0x1a0] sm:$0xff]
          %v5870 = vld [vmem:[%s4 + $0x1a8] sm:$0xff]
          %v5871 = vld [vmem:[%s4 + $0x1b0] sm:$0xff]
          %v5872 = vld [vmem:[%s4 + $0x1b8] sm:$0xff]
          %v5873 = vld [vmem:[%s4 + $0x1c0] sm:$0xff]
          %v5874 = vld [vmem:[%s4 + $0x1c8] sm:$0xff]
          %v5875 = vld [vmem:[%s4 + $0x1d0] sm:$0xff]
          %v5876 = vld [vmem:[%s4 + $0x1d8] sm:$0xff]
          %v5877 = vld [vmem:[%s4 + $0x1e0] sm:$0xff]
          %v5878 = vld [vmem:[%s4 + $0x1e8] sm:$0xff]
          %v5879 = vld [vmem:[%s4 + $0x1f0] sm:$0xff]
          %v5880 = vld [vmem:[%s4 + $0x1f8] sm:$0xff]
          %5881 = vmatprep.subr.mxu0 0.0
          %5882 = vmatpush1.msra.mxu0 %v5849
          %5883 = vmatprep.subr.mxu0 0.0
          %5884 = vmatpush1.msra.mxu0 %v5850
          %5885 = vmatprep.subr.mxu0 0.0
          %5886 = vmatpush1.msra.mxu0 %v5851
          %5887 = vmatprep.subr.mxu0 0.0
          %5888 = vmatpush1.msra.mxu0 %v5852
          %5889 = vmatprep.subr.mxu0 0.0
          %5890 = vmatpush1.msra.mxu0 %v5853
          %5891 = vmatprep.subr.mxu0 0.0
          %5892 = vmatpush1.msra.mxu0 %v5854
          %5893 = vmatprep.subr.mxu0 0.0
          %5894 = vmatpush1.msra.mxu0 %v5855
          %5895 = vmatprep.subr.mxu0 0.0
          %5896 = vmatpush1.msra.mxu0 %v5856
          %5897 = vmatprep.subr.mxu0 0.0
          %5898 = vmatpush1.msra.mxu0 %v5857
          %5899 = vmatprep.subr.mxu0 0.0
          %5900 = vmatpush1.msra.mxu0 %v5858
          %5901 = vmatprep.subr.mxu0 0.0
          %5902 = vmatpush1.msra.mxu0 %v5859
          %5903 = vmatprep.subr.mxu0 0.0
          %5904 = vmatpush1.msra.mxu0 %v5860
          %5905 = vmatprep.subr.mxu0 0.0
          %5906 = vmatpush1.msra.mxu0 %v5861
          %5907 = vmatprep.subr.mxu0 0.0
          %5908 = vmatpush1.msra.mxu0 %v5862
          %5909 = vmatprep.subr.mxu0 0.0
          %5910 = vmatpush1.msra.mxu0 %v5863
          %5911 = vmatprep.subr.mxu0 0.0
          %5912 = vmatpush1.msra.mxu0 %v5864
          %5913 = vmatprep.subr.mxu0 0.0
          %5914 = vmatpush1.msra.mxu0 %v5865
          %5915 = vmatprep.subr.mxu0 0.0
          %5916 = vmatpush1.msra.mxu0 %v5866
          %5917 = vmatprep.subr.mxu0 0.0
          %5918 = vmatpush1.msra.mxu0 %v5867
          %5919 = vmatprep.subr.mxu0 0.0
          %5920 = vmatpush1.msra.mxu0 %v5868
          %5921 = vmatprep.subr.mxu0 0.0
          %5922 = vmatpush1.msra.mxu0 %v5869
          %5923 = vmatprep.subr.mxu0 0.0
          %5924 = vmatpush1.msra.mxu0 %v5870
          %5925 = vmatprep.subr.mxu0 0.0
          %5926 = vmatpush1.msra.mxu0 %v5871
          %5927 = vmatprep.subr.mxu0 0.0
          %5928 = vmatpush1.msra.mxu0 %v5872
          %5929 = vmatprep.subr.mxu0 0.0
          %5930 = vmatpush1.msra.mxu0 %v5873
          %5931 = vmatprep.subr.mxu0 0.0
          %5932 = vmatpush1.msra.mxu0 %v5874
          %5933 = vmatprep.subr.mxu0 0.0
          %5934 = vmatpush1.msra.mxu0 %v5875
          %5935 = vmatprep.subr.mxu0 0.0
          %5936 = vmatpush1.msra.mxu0 %v5876
          %5937 = vmatprep.subr.mxu0 0.0
          %5938 = vmatpush1.msra.mxu0 %v5877
          %5939 = vmatprep.subr.mxu0 0.0
          %5940 = vmatpush1.msra.mxu0 %v5878
          %5941 = vmatprep.subr.mxu0 0.0
          %5942 = vmatpush1.msra.mxu0 %v5879
          %5943 = vmatprep.subr.mxu0 0.0
          %5944 = vmatpush1.msra.mxu0 %v5880
          %5945 = vmatprep.mubr.f32.mxu0 %v5816
          %5946 = vmatmul.mubr.f32.gmra.mrb[0].mxu0 %v5815
          %v5947 = vpop.f32.mrb[0].mxu0
          %v5948 = vadd.f32 0.0, %v5947
          %v5949 = vpop.f32.mrb[0].mxu0
          %5950 = vdwg.mxu0
          %5951 = vmatprep.subr.mxu0 0.0
          %5952 = vmatpush1.msra.mxu0 %v5817
          %5953 = vmatprep.subr.mxu0 0.0
          %5954 = vmatpush1.msra.mxu0 %v5818
          %5955 = vmatprep.subr.mxu0 0.0
          %5956 = vmatpush1.msra.mxu0 %v5819
          %5957 = vmatprep.subr.mxu0 0.0
          %5958 = vmatpush1.msra.mxu0 %v5820
          %5959 = vmatprep.subr.mxu0 0.0
          %5960 = vmatpush1.msra.mxu0 %v5821
          %5961 = vmatprep.subr.mxu0 0.0
          %5962 = vmatpush1.msra.mxu0 %v5822
          %5963 = vmatprep.subr.mxu0 0.0
          %5964 = vmatpush1.msra.mxu0 %v5823
          %5965 = vmatprep.subr.mxu0 0.0
          %5966 = vmatpush1.msra.mxu0 %v5824
          %5967 = vmatprep.subr.mxu0 0.0
          %5968 = vmatpush1.msra.mxu0 %v5825
          %5969 = vmatprep.subr.mxu0 0.0
          %5970 = vmatpush1.msra.mxu0 %v5826
          %5971 = vmatprep.subr.mxu0 0.0
          %5972 = vmatpush1.msra.mxu0 %v5827
          %5973 = vmatprep.subr.mxu0 0.0
          %5974 = vmatpush1.msra.mxu0 %v5828
          %5975 = vmatprep.subr.mxu0 0.0
          %5976 = vmatpush1.msra.mxu0 %v5829
          %5977 = vmatprep.subr.mxu0 0.0
          %5978 = vmatpush1.msra.mxu0 %v5830
          %5979 = vmatprep.subr.mxu0 0.0
          %5980 = vmatpush1.msra.mxu0 %v5831
          %5981 = vmatprep.subr.mxu0 0.0
          %5982 = vmatpush1.msra.mxu0 %v5832
          %5983 = vmatprep.subr.mxu0 0.0
          %5984 = vmatpush1.msra.mxu0 %v5833
          %5985 = vmatprep.subr.mxu0 0.0
          %5986 = vmatpush1.msra.mxu0 %v5834
          %5987 = vmatprep.subr.mxu0 0.0
          %5988 = vmatpush1.msra.mxu0 %v5835
          %5989 = vmatprep.subr.mxu0 0.0
          %5990 = vmatpush1.msra.mxu0 %v5836
          %5991 = vmatprep.subr.mxu0 0.0
          %5992 = vmatpush1.msra.mxu0 %v5837
          %5993 = vmatprep.subr.mxu0 0.0
          %5994 = vmatpush1.msra.mxu0 %v5838
          %5995 = vmatprep.subr.mxu0 0.0
          %5996 = vmatpush1.msra.mxu0 %v5839
          %5997 = vmatprep.subr.mxu0 0.0
          %5998 = vmatpush1.msra.mxu0 %v5840
          %5999 = vmatprep.subr.mxu0 0.0
          %6000 = vmatpush1.msra.mxu0 %v5841
          %6001 = vmatprep.subr.mxu0 0.0
          %6002 = vmatpush1.msra.mxu0 %v5842
          %6003 = vmatprep.subr.mxu0 0.0
          %6004 = vmatpush1.msra.mxu0 %v5843
          %6005 = vmatprep.subr.mxu0 0.0
          %6006 = vmatpush1.msra.mxu0 %v5844
          %6007 = vmatprep.subr.mxu0 0.0
          %6008 = vmatpush1.msra.mxu0 %v5845
          %6009 = vmatprep.subr.mxu0 0.0
          %6010 = vmatpush1.msra.mxu0 %v5846
          %6011 = vmatprep.subr.mxu0 0.0
          %6012 = vmatpush1.msra.mxu0 %v5847
          %6013 = vmatprep.subr.mxu0 0.0
          %6014 = vmatpush1.msra.mxu0 %v5848
          %6015 = vmatprep.mubr.f32.mxu0 %v5782
          %6016 = vmatmul.mubr.f32.gmra.mrb[0].mxu0 %v5781
          %v6017 = vpop.f32.mrb[0].mxu0
          %v6018 = vadd.f32 %v5948, %v6017
          %v6019 = vpop.f32.mrb[0].mxu0
          %6020 = vdwg.mxu0
          %v6021 = vld [vmem:[%s5] sm:$0x1]
          %v6022 = vadd.f32 %v6018, %v6021
          %v6023 = vld [vmem:[%s5 + $0x1] sm:$0x1]
          %vm6024 = vcmp.ge.f32.partialorder %v6022, 0.0
          %v6025 = vmul.f32 %v6023, %v6022
          %v6026 = vsel %vm6024, %v6022, %v6025
          %v6027 = vld [vmem:[%s6] sm:$0xff]
          %v6028 = vld [vmem:[%s6 + $0x8] sm:$0xff]
          %v6029 = vld [vmem:[%s6 + $0x10] sm:$0xff]
          %v6030 = vld [vmem:[%s6 + $0x18] sm:$0xff]
          %v6031 = vld [vmem:[%s6 + $0x20] sm:$0xff]
          %v6032 = vld [vmem:[%s6 + $0x28] sm:$0xff]
          %v6033 = vld [vmem:[%s6 + $0x30] sm:$0xff]
          %v6034 = vld [vmem:[%s6 + $0x38] sm:$0xff]
          %v6035 = vld [vmem:[%s7] sm:$0x1]
          %vm6036 = vcmask 523264
          %v6038 = vsel %vm6036, %v6026, 0
          %6040 = vmatprep.subr.mxu0 0.0
          %6041 = vmatpush1.msra.mxu0 %v6027
          %6042 = vmatprep.subr.mxu0 0.0
          %6043 = vmatpush1.msra.mxu0 %v6028
          %6044 = vmatprep.subr.mxu0 0.0
          %6045 = vmatpush1.msra.mxu0 %v6029
          %6046 = vmatprep.subr.mxu0 0.0
          %6047 = vmatpush1.msra.mxu0 %v6030
          %6048 = vmatprep.subr.mxu0 0.0
          %6049 = vmatpush1.msra.mxu0 %v6031
          %6050 = vmatprep.subr.mxu0 0.0
          %6051 = vmatpush1.msra.mxu0 %v6032
          %6052 = vmatprep.subr.mxu0 0.0
          %6053 = vmatpush1.msra.mxu0 %v6033
          %6054 = vmatprep.subr.mxu0 0.0
          %6055 = vmatpush1.msra.mxu0 %v6034
          %6056 = vmatprep.subr.mxu0 0.0
          %6057 = vmatpush1.msra.mxu0 0.0
          %6058 = vmatprep.subr.mxu0 0.0
          %6059 = vmatpush1.msra.mxu0 0.0
          %6060 = vmatprep.subr.mxu0 0.0
          %6061 = vmatpush1.msra.mxu0 0.0
          %6062 = vmatprep.subr.mxu0 0.0
          %6063 = vmatpush1.msra.mxu0 0.0
          %6064 = vmatprep.subr.mxu0 0.0
          %6065 = vmatpush1.msra.mxu0 0.0
          %6066 = vmatprep.subr.mxu0 0.0
          %6067 = vmatpush1.msra.mxu0 0.0
          %6068 = vmatprep.subr.mxu0 0.0
          %6069 = vmatpush1.msra.mxu0 0.0
          %6070 = vmatprep.subr.mxu0 0.0
          %6071 = vmatpush1.msra.mxu0 0.0
          %6072 = vmatprep.subr.mxu0 0.0
          %6073 = vmatpush1.msra.mxu0 0.0
          %6074 = vmatprep.subr.mxu0 0.0
          %6075 = vmatpush1.msra.mxu0 0.0
          %6076 = vmatprep.subr.mxu0 0.0
          %6077 = vmatpush1.msra.mxu0 0.0
          %6078 = vmatprep.subr.mxu0 0.0
          %6079 = vmatpush1.msra.mxu0 0.0
          %6080 = vmatprep.subr.mxu0 0.0
          %6081 = vmatpush1.msra.mxu0 0.0
          %6082 = vmatprep.subr.mxu0 0.0
          %6083 = vmatpush1.msra.mxu0 0.0
          %6084 = vmatprep.subr.mxu0 0.0
          %6085 = vmatpush1.msra.mxu0 0.0
          %6086 = vmatprep.subr.mxu0 0.0
          %6087 = vmatpush1.msra.mxu0 0.0
          %6088 = vmatprep.subr.mxu0 0.0
          %6089 = vmatpush1.msra.mxu0 0.0
          %6090 = vmatprep.subr.mxu0 0.0
          %6091 = vmatpush1.msra.mxu0 0.0
          %6092 = vmatprep.subr.mxu0 0.0
          %6093 = vmatpush1.msra.mxu0 0.0
          %6094 = vmatprep.subr.mxu0 0.0
          %6095 = vmatpush1.msra.mxu0 0.0
          %6096 = vmatprep.subr.mxu0 0.0
          %6097 = vmatpush1.msra.mxu0 0.0
          %6098 = vmatprep.subr.mxu0 0.0
          %6099 = vmatpush1.msra.mxu0 0.0
          %6100 = vmatprep.subr.mxu0 0.0
          %6101 = vmatpush1.msra.mxu0 0.0
          %6102 = vmatprep.subr.mxu0 0.0
          %6103 = vmatpush1.msra.mxu0 0.0
          %6104 = vmatprep.mubr.f32.mxu0 0.0
          %6105 = vmatmul.mubr.f32.gmra.mrb[0].mxu0 %v6038
          %v6106 = vpop.f32.mrb[0].mxu0
          %v6107 = vadd.f32 %v6035, %v6106
          %v6108 = vpop.f32.mrb[0].mxu0
          %6109 = vdwg.mxu0
          %vm6110 = vcmask 24576
          %6111 = vst.msk [vmem:[#allocation8] sm:$0x1] %vm6110, %v6107
        $region169: #{tpu_custom_call.1} parent=51 // pred_fallthru
          _
        // Predicated region
        $region170: #{tpu_custom_call.1} parent=51 // pred_check
          %p6112 = pneg %p209
        $region171: #{tpu_custom_call.1} parent=51 // pred_check_branch
          %6114 = sbr.rel (%p6112) target = $region173
        $region172: #{tpu_custom_call.1} parent=51 // pred_region
          %s6116 = ssub.s32 16, 16
          %6117 = vsyncadd [#allocation9], %s6116
          %s6119 = sshll.u32 [#allocation8], 4
          %s6120 = int_to_ptr.vmem [resolvable:$true] %s6119
          %6122 = dma.vmem_to_hbm [thread:$0]  %s6120, 16, %s11, [#allocation9]
        $region173: #{tpu_custom_call.1} parent=51 // pred_fallthru
          _
        // Predicated region
        $region174: #{tpu_custom_call.1} parent=51 // pred_check
          %p6123 = pneg %p209
        $region175: #{tpu_custom_call.1} parent=51 // pred_check_branch
          %6125 = sbr.rel (%p6123) target = $region177
        $region176: #{tpu_custom_call.1} parent=51 // pred_region
          %6126 = dma.done [#allocation9], 16
        $region177: #{tpu_custom_call.1} parent=51 // pred_fallthru
          _
      $region52: #{tpu_custom_call.1} parent=5 // pred_fallthru
        _
      %p6127 = scmp.le.s32.totalorder 2, %s18
      // Predicated region
      $region178: #{tpu_custom_call.1} parent=5 // pred_check
        %p6128 = pneg %p6127
      $region179: #{tpu_custom_call.1} parent=5 // pred_check_branch
        %6130 = sbr.rel (%p6128) target = $region181
      $region180: #{tpu_custom_call.1} parent=5 // pred_region
        %s6131 = ssub.s32 %s18, 2
      $region181: #{tpu_custom_call.1} parent=5 // pred_fallthru
        _
    $region6: #{tpu_custom_call.1} parent=1 // loop_footer
      %s22 = sadd.s32 1, %s18
    $region7: #{tpu_custom_call.1} parent=1 // loop_footer_branch
      %17 = sbr.rel target = $region3
    $region8: #{tpu_custom_call.1} parent=1 // loop_exit
      _
    %6132 = vsyncpa [#allocation9], 1
    %s6133 = scalar_lea.sflag [#allocation9], 1
    %6134 = vsyncpa %s6133, 1
  %6135 = vsyncmov [#allocation7]
  %s6136 = vpop.sfrf %6135
  %p6137 = scmp.eq.s32.totalorder %s6136, 0
  %p6138 = pneg %p6137
  %6140 = shalt.err (%p6138)
  %s6141 = scalar_lea.sflag [#allocation7], 1
  %6142 = vsyncmov %s6141
  %s6143 = vpop.sfrf %6142
  %p6144 = scmp.eq.s32.totalorder %s6143, 0
  %p6145 = pneg %p6144
  %6147 = shalt.err (%p6145)
  %s6148 = scalar_lea.sflag [#allocation7], 2
  %6149 = vsyncmov %s6148
  %s6150 = vpop.sfrf %6149
  %p6151 = scmp.eq.s32.totalorder %s6150, 0
  %p6152 = pneg %p6151
  %6154 = shalt.err (%p6152)

</llo_original>
